<compile_context>
chip_gen: v5e
topology: v5e:2x2
jax: 0.10.0
libtpu: 0.0.40
codegen_flags: <defaults>
</compile_context>

<pallas_src>
import functools
import math

import jax
import jax.numpy as jnp
import numpy as np
from jax.experimental import pallas as pl
from jax.experimental.pallas import tpu as pltpu

BN_EPS = 1e-5
# Actual per-program VMEM footprint is ~2 MiB (double-buffered inputs + in-kernel values);
# 16 MiB leaves ample headroom and is safe on v5e/v6e (128 MiB) and v7x (64 MiB / TC).
_VMEM_LIMIT = 16 * 1024 * 1024


def _offsets3x3(wp):
    return tuple(di * wp + dj for di in range(3) for dj in range(3))


# ----------------------------------------------------------------------------- fused block kernel
def _block_kernel(*refs, wp, m, base, conv1_offsets, build_p1, in_affine, stem,
                  has_down, has_head, pool_scale):
    """One fused SE pre-act block (optionally with the 3->32 stem conv in front and/or the
    bn->relu->avgpool->fc head behind). One image per grid program, intermediates in VMEM.

    Activations use a 'padded full-width rows' layout: a [rows, C] slab where row
    base + i*wp + j holds pixel (i, j) (j < wp-2) and every other row/column is zero, so a
    KxK conv is K*K statically shifted row windows folded into one wide-K matmul."""
    it = iter(refs)
    x_ref = next(it)
    cmask_ref = next(it)
    wstem_ref = next(it) if stem else None
    bn1s_ref = bn1b_ref = None
    if in_affine:
        bn1s_ref, bn1b_ref = next(it), next(it)
    w1_ref = next(it)
    bn2s_ref, bn2b_ref = next(it), next(it)
    w2_ref = next(it)
    xres_ref = wd_ref = dns_ref = dnb_ref = None
    if has_down:
        xres_ref, wd_ref, dns_ref, dnb_ref = next(it), next(it), next(it), next(it)
    sew1_ref, seb1_ref, sew2_ref, seb2_ref = next(it), next(it), next(it), next(it)
    hbs_ref = hbb_ref = fcw_ref = fcb_ref = None
    if has_head:
        hbs_ref, hbb_ref, fcw_ref, fcb_ref = next(it), next(it), next(it), next(it)
    o_ref = next(it)

    cmask = cmask_ref[...]                                   # [m, 1] f32, 1 on real columns

    def conv_folded(buf, w_ref_, offsets):
        # im2col in VMEM: lane-concat the shifted row windows, then a single wide-K matmul.
        parts = [buf[off:off + m, :] for off in offsets]
        patch = parts[0] if len(parts) == 1 else jnp.concatenate(parts, axis=1)
        return jnp.dot(patch, w_ref_[...], preferred_element_type=jnp.float32)

    # ---- conv1 (+ fused bn1 + ReLU for stride-1 blocks) -------------------------------------
    if build_p1:                                             # 3x3 stride-1 path
        if stem:                                             # stem conv (3 -> 32), 9 taps K=3
            x0 = x_ref[...]
            w_st = wstem_ref[...]                            # [9, 3, C]
            x_rows = None
            for t, off in enumerate(_offsets3x3(wp)):
                p = jnp.dot(x0[off:off + m, :], w_st[t], preferred_element_type=jnp.float32)
                x_rows = p if x_rows is None else x_rows + p
        else:
            x_rows = x_ref[...].astype(jnp.float32)          # block input, full-width rows
        a1 = jnp.maximum(x_rows * bn1s_ref[...] + bn1b_ref[...], 0.0) * cmask
        a1 = a1.astype(jnp.bfloat16)
        zpad = jnp.zeros((base, a1.shape[1]), jnp.bfloat16)
        p1 = jnp.concatenate([zpad, a1, zpad], axis=0)       # padded conv1 input (VMEM only)
        h = conv_folded(p1, w1_ref, conv1_offsets)
    else:                                                    # space-to-depth 2x2 path
        x_rows = None                                        # shortcut comes via xres_ref
        h = conv_folded(x_ref[...], w1_ref, conv1_offsets)

    # ---- bn2 + ReLU + conv2 ------------------------------------------------------------------
    a2 = (jnp.maximum(h * bn2s_ref[...] + bn2b_ref[...], 0.0) * cmask).astype(jnp.bfloat16)
    zpad2 = jnp.zeros((base, a2.shape[1]), jnp.bfloat16)
    p2 = jnp.concatenate([zpad2, a2, zpad2], axis=0)
    h2 = conv_folded(p2, w2_ref, _offsets3x3(wp))            # [m, Cout] f32

    # ---- shortcut ----------------------------------------------------------------------------
    if has_down:                                             # 1x1 conv (stride 2) + BN on raw x
        res = jnp.dot(xres_ref[...], wd_ref[...], preferred_element_type=jnp.float32)
        res = res * dns_ref[...] + dnb_ref[...]
    else:
        res = x_rows                                         # identity shortcut

    # ---- squeeze-excite + residual add -------------------------------------------------------
    pooled = jnp.sum(h2 * cmask, axis=0, keepdims=True) * pool_scale
    z = jnp.maximum(jnp.dot(pooled, sew1_ref[...], preferred_element_type=jnp.float32)
                    + seb1_ref[...], 0.0)
    gate = jax.nn.sigmoid(jnp.dot(z, sew2_ref[...], preferred_element_type=jnp.float32)
                          + seb2_ref[...])
    out = h2 * gate + res                                    # [m, Cout] f32

    # ---- head (bn -> relu -> avgpool -> fc) or store the block output ------------------------
    if has_head:
        hh = jnp.maximum(out * hbs_ref[...] + hbb_ref[...], 0.0) * cmask
        pooled_h = jnp.sum(hh, axis=0, keepdims=True) * pool_scale
        logits = jnp.dot(pooled_h, fcw_ref[...], preferred_element_type=jnp.float32) + fcb_ref[...]
        o_ref[...] = logits.astype(o_ref.dtype)
    else:
        o_ref[...] = out.astype(o_ref.dtype)


# ----------------------------------------------------------------------------- pallas_call wrapper
def _rep_spec(arr):
    zeros = (0,) * arr.ndim

    def idx(i):
        return zeros
    return pl.BlockSpec(arr.shape, idx)


def _img_spec(arr):
    trail = (0,) * (arr.ndim - 1)

    def idx(i):
        return (i,) + trail
    return pl.BlockSpec((None,) + tuple(arr.shape[1:]), idx)


def _fused_block_call(x_in, cmask, blk, head_params, *, stem, wstem, wp, m, base,
                      conv1_offsets, build_p1, in_affine, has_down, has_head,
                      pool_scale, cout, xres, num_classes):
    B = x_in.shape[0]
    inputs, specs = [x_in, cmask], [_img_spec(x_in), _rep_spec(cmask)]
    if stem:
        inputs.append(wstem); specs.append(_rep_spec(wstem))
    if in_affine:
        inputs += [blk["bn1_s"], blk["bn1_b"]]
        specs += [_rep_spec(blk["bn1_s"]), _rep_spec(blk["bn1_b"])]
    inputs.append(blk["w1"]); specs.append(_rep_spec(blk["w1"]))
    inputs += [blk["bn2_s"], blk["bn2_b"]]
    specs += [_rep_spec(blk["bn2_s"]), _rep_spec(blk["bn2_b"])]
    inputs.append(blk["w2"]); specs.append(_rep_spec(blk["w2"]))
    if has_down:
        inputs += [xres, blk["wd"], blk["down_s"], blk["down_b"]]
        specs += [_img_spec(xres), _rep_spec(blk["wd"]),
                  _rep_spec(blk["down_s"]), _rep_spec(blk["down_b"])]
    for k in ("se_w1", "se_b1", "se_w2", "se_b2"):
        inputs.append(blk[k]); specs.append(_rep_spec(blk[k]))
    if has_head:
        for k in ("head_bn_s", "head_bn_b", "fc_w", "fc_b"):
            inputs.append(head_params[k]); specs.append(_rep_spec(head_params[k]))
        out_shape = jax.ShapeDtypeStruct((B, 1, num_classes), jnp.float32)
        out_spec = pl.BlockSpec((None, 1, num_classes), lambda i: (i, 0, 0))
    else:
        out_shape = jax.ShapeDtypeStruct((B, m, cout), jnp.bfloat16)
        out_spec = pl.BlockSpec((None, m, cout), lambda i: (i, 0, 0))

    kernel = functools.partial(
        _block_kernel, wp=wp, m=m, base=base, conv1_offsets=tuple(conv1_offsets),
        build_p1=build_p1, in_affine=in_affine, stem=stem, has_down=has_down,
        has_head=has_head, pool_scale=pool_scale)

    return pl.pallas_call(
        kernel,
        grid=(B,),                       # one image per program; B>=2 keeps both v7x TCs busy
        in_specs=specs,
        out_specs=out_spec,
        out_shape=out_shape,
        compiler_params=pltpu.CompilerParams(dimension_semantics=("parallel",),
                                             vmem_limit_bytes=_VMEM_LIMIT),
    )(*inputs)


# ----------------------------------------------------------------------------- XLA-side layout prep
def _prep_flat3x3(x):
    """[B,H,W,C] -> padded full-width-rows slab [B, H*(W+2) + 2*(W+3), C]; pixel (i,j) sits at
    row (W+3) + i*(W+2) + j and everything else is exact zero (3x3 pad-1 conv padding)."""
    B, H, W, C = x.shape
    wp = W + 2
    y = jnp.pad(x, ((0, 0), (1, 1), (0, 2), (0, 0))).reshape(B, (H + 2) * wp, C)
    return jnp.pad(y, ((0, 0), (1, 1), (0, 0)))


def _space_to_depth2(x):
    B, H, W, C = x.shape
    return (x.reshape(B, H // 2, 2, W // 2, 2, C)
             .transpose(0, 1, 3, 2, 4, 5)
             .reshape(B, H // 2, W // 2, 4 * C))


def _prep_s2d(a):
    """Pre-activated block input [B,H,W,C] -> padded full-width-rows slab for the equivalent
    stride-1 2x2 conv over its space-to-depth rearrangement: [B, (H/2+1)*(W/2+2) + 2, 4C]."""
    B, H, W, C = a.shape
    ap = jnp.pad(a, ((0, 0), (1, 1), (1, 1), (0, 0)))        # bake the conv's zero padding
    y = _space_to_depth2(ap)                                 # [B, H/2+1, W/2+1, 4C]
    y = jnp.pad(y, ((0, 0), (0, 0), (0, 1), (0, 0)))         # width -> W/2 + 2 (zero col)
    f = y.reshape(B, (H // 2 + 1) * (W // 2 + 2), 4 * C)
    return jnp.pad(f, ((0, 0), (0, 2), (0, 0)))              # tap-window slop


def _prep_residual(x):
    """Raw block input [B,H,W,C] -> stride-2 subsample in full-width-rows form
    [B, (H/2)*(W/2+2), C] (feeds the fused 1x1-conv + BN shortcut)."""
    B, H, W, C = x.shape
    xs = jnp.pad(x[:, ::2, ::2, :], ((0, 0), (0, 0), (0, 2), (0, 0)))
    return xs.reshape(B, (H // 2) * (W // 2 + 2), C)


def _col_mask(h, w, wp):
    mask = np.zeros((h * wp, 1), np.float32)
    for i in range(h):
        mask[i * wp:i * wp + w] = 1.0
    return jnp.asarray(mask)


# ----------------------------------------------------------------------------- params
def bn_affine(c):
    """Fold eval-mode BatchNorm2d(c) (fresh init) into per-channel scale/bias."""
    gamma = jnp.ones((1, c), jnp.float32)
    beta = jnp.zeros((1, c), jnp.float32)
    running_mean = jnp.zeros((1, c), jnp.float32)
    running_var = jnp.ones((1, c), jnp.float32)
    scale = gamma / jnp.sqrt(running_var + BN_EPS)
    bias = beta - running_mean * scale
    return scale, bias


def kaiming_conv(key, kh, kw, cin, cout):
    """kaiming_normal_ (fan_in, gain=sqrt(2)), laid out [kh, kw, cin, cout]."""
    fan_in = cin * kh * kw
    std = math.sqrt(2.0 / fan_in)
    return jax.random.normal(key, (kh, kw, cin, cout), jnp.float32) * std


def linear_params(key, fan_in, fan_out):
    kw_, kb_ = jax.random.split(key)
    bound = 1.0 / math.sqrt(fan_in)
    w = jax.random.uniform(kw_, (fan_in, fan_out), jnp.float32, -bound, bound)
    b = jax.random.uniform(kb_, (1, fan_out), jnp.float32, -bound, bound)
    return w, b


def make_s2d_weights(w3):
    """[3,3,Cin,Cout] stride-2 kernel -> folded [4*4*Cin, Cout] weights of the equivalent
    stride-1 2x2 conv over the space-to-depth input (tap-major, channel order (p,q,c))."""
    _, _, ci, co = w3.shape
    w = jnp.zeros((2, 2, 2, 2, ci, co), w3.dtype)            # [a, b, p, q, ci, co]
    for a in range(2):
        for p in range(2):
            di = 2 * a + p
            if di > 2:
                continue
            for b in range(2):
                for q in range(2):
                    dj = 2 * b + q
                    if dj > 2:
                        continue
                    w = w.at[a, b, p, q].set(w3[di, dj])
    return w.reshape(4 * 4 * ci, co)


def init_params(key, n_size=1, num_classes=10, reduction=16):
    keys = iter(jax.random.split(key, 256))
    params = {"conv1": kaiming_conv(next(keys), 3, 3, 3, 32).reshape(9, 3, 32).astype(jnp.bfloat16)}
    inplane = 32
    blocks, cfg = [], []
    # forward() of CifarSEPreActResNet only uses layer1..layer3; layer4-6 params are dead
    # weight for this forward pass and are not allocated.
    for planes, stride in [(32, 1), (64, 2), (128, 2)]:
        for s in [stride] + [1] * (n_size - 1):
            blk = {}
            blk["bn1_s"], blk["bn1_b"] = bn_affine(inplane)
            w3 = kaiming_conv(next(keys), 3, 3, inplane, planes)
            if s == 1:
                assert inplane == planes, "stride-1 block with channel change unsupported"
                blk["w1"] = w3.reshape(9 * inplane, planes).astype(jnp.bfloat16)
            else:
                blk["w1"] = make_s2d_weights(w3).astype(jnp.bfloat16)
                # downsample = 1x1 conv (stride 2, bias=False) + BN applied to the raw block
                # input (standard CifarSEPreActBasicBlock); identity when inplane == planes.
                blk["wd"] = (kaiming_conv(next(keys), 1, 1, inplane, planes)
                             .reshape(inplane, planes).astype(jnp.bfloat16))
                blk["down_s"], blk["down_b"] = bn_affine(planes)
            blk["bn2_s"], blk["bn2_b"] = bn_affine(planes)
            blk["w2"] = (kaiming_conv(next(keys), 3, 3, planes, planes)
                         .reshape(9 * planes, planes).astype(jnp.bfloat16))
            r = max(planes // reduction, 1)
            # TODO(synk): SELayer assumed to use nn.Linear with bias; drop se_b1/se_b2 if the
            # reference SELayer uses bias=False.
            blk["se_w1"], blk["se_b1"] = linear_params(next(keys), planes, r)
            blk["se_w2"], blk["se_b2"] = linear_params(next(keys), r, planes)
            blocks.append(blk)
            cfg.append((s, inplane, planes))
            inplane = planes
    params["blocks"] = blocks
    # TODO(synk): source sizes self.bn1 = BatchNorm2d(512) (inplane after layer6) but applies
    # it to layer3's 128-channel output, which would error in PyTorch; sized to 128 here.
    params["head_bn_s"], params["head_bn_b"] = bn_affine(inplane)
    # TODO(synk): self.avgpool / self.fc are used in forward() but never defined in the given
    # source; reconstructed as AdaptiveAvgPool2d(1) + Linear(128, num_classes).
    params["fc_w"], params["fc_b"] = linear_params(next(keys), inplane, num_classes)
    return params, tuple(cfg)


# ----------------------------------------------------------------------------- forward
def cifar_se_preact_resnet_forward(x_nchw, params, *, cfg):
    """x_nchw: [B,3,H,W] float32 (PyTorch layout) -> logits [B, num_classes].
    `cfg` is the static per-block (stride, cin, cout) tuple from init_params (Python ints)."""
    x = jnp.transpose(x_nchw, (0, 2, 3, 1)).astype(jnp.bfloat16)      # NHWC, bf16 activations
    B, H, W, _ = x.shape
    num_classes = params["fc_w"].shape[1]
    cur, hw = None, (H, W)
    for bi, (stride, cin, cout) in enumerate(cfg):
        blk = params["blocks"][bi]
        stem = bi == 0
        head = bi == len(cfg) - 1
        Hc, Wc = hw
        if stride == 1:
            wp, hw_out = Wc + 2, (Hc, Wc)
            x_in = _prep_flat3x3(x) if stem else cur
            xres = None
            conv1_offs = _offsets3x3(wp)
            build_p1, in_aff, has_down = True, True, False
        else:
            # Tiny XLA prep between blocks (fused with bn1+relu by XLA): undo the full-width
            # rows layout, pre-activate, space-to-depth for the stride-2 conv, subsample for
            # the 1x1 shortcut.
            prev = cur.reshape(B, Hc, Wc + 2, cin)[:, :, :Wc, :]
            act = jnp.maximum(prev.astype(jnp.float32) * blk["bn1_s"].reshape(1, 1, 1, cin)
                              + blk["bn1_b"].reshape(1, 1, 1, cin), 0.0).astype(jnp.bfloat16)
            x_in = _prep_s2d(act)
            xres = _prep_residual(prev)
            wp, hw_out = Wc // 2 + 2, (Hc // 2, Wc // 2)
            conv1_offs = (0, 1, wp, wp + 1)
            build_p1, in_aff, has_down = False, False, True
        m = hw_out[0] * wp
        cur = _fused_block_call(
            x_in, _col_mask(hw_out[0], hw_out[1], wp), blk, params if head else None,
            stem=stem, wstem=params["conv1"] if stem else None,
            wp=wp, m=m, base=wp + 1, conv1_offsets=conv1_offs, build_p1=build_p1,
            in_affine=in_aff, has_down=has_down, has_head=head,
            pool_scale=1.0 / (hw_out[0] * hw_out[1]), cout=cout, xres=xres,
            num_classes=num_classes)
        hw = hw_out
    # NOTE: the reference forward() has no return statement (returns None); we return logits.
    return cur.reshape(B, num_classes)


if __name__ == "__main__":
    key = jax.random.PRNGKey(0)
    pkey, xkey = jax.random.split(key)
    params, cfg = init_params(pkey, n_size=1, num_classes=10, reduction=16)
    x = jax.random.normal(xkey, (2, 3, 16, 16), jnp.float32)   # NCHW, like PyTorch
    fwd = jax.jit(functools.partial(cifar_se_preact_resnet_forward, cfg=cfg))
    out = jax.block_until_ready(fwd(x, params))
    assert out.shape == (2, 10) and out.dtype == jnp.float32
    assert bool(jnp.all(jnp.isfinite(out)))
    print("KERNEL_OK")
</pallas_src>

<mosaic_0001>
module attributes {stable_mosaic.version = 11 : i64} {
  func.func @_block_kernel(%arg0: i32, %arg1: memref<1x326x3xbf16, #tpu.memory_space<vmem>>, %arg2: memref<288x1xf32, #tpu.memory_space<vmem>>, %arg3: memref<9x3x32xbf16, #tpu.memory_space<vmem>>, %arg4: memref<1x32xf32, #tpu.memory_space<vmem>>, %arg5: memref<1x32xf32, #tpu.memory_space<vmem>>, %arg6: memref<288x32xbf16, #tpu.memory_space<vmem>>, %arg7: memref<1x32xf32, #tpu.memory_space<vmem>>, %arg8: memref<1x32xf32, #tpu.memory_space<vmem>>, %arg9: memref<288x32xbf16, #tpu.memory_space<vmem>>, %arg10: memref<32x2xf32, #tpu.memory_space<vmem>>, %arg11: memref<1x2xf32, #tpu.memory_space<vmem>>, %arg12: memref<2x32xf32, #tpu.memory_space<vmem>>, %arg13: memref<1x32xf32, #tpu.memory_space<vmem>>, %arg14: memref<1x288x32xbf16, #tpu.memory_space<vmem>>) attributes {dimension_semantics = [#tpu.dimension_semantics<parallel>], iteration_bounds = array<i64: 2>, scalar_prefetch = 0 : i64, scratch_operands = 0 : i64, tpu.core_type = #tpu.core_type<tc>, window_params = [{transform_indices = @transform_0, window_bounds = array<i64: 1, 326, 3>}, {pipeline_mode = #tpu.pipeline_mode<synchronous>, transform_indices = @transform_1, window_bounds = array<i64: 288, 1>}, {pipeline_mode = #tpu.pipeline_mode<synchronous>, transform_indices = @transform_2, window_bounds = array<i64: 9, 3, 32>}, {pipeline_mode = #tpu.pipeline_mode<synchronous>, transform_indices = @transform_3, window_bounds = array<i64: 1, 32>}, {pipeline_mode = #tpu.pipeline_mode<synchronous>, transform_indices = @transform_4, window_bounds = array<i64: 1, 32>}, {pipeline_mode = #tpu.pipeline_mode<synchronous>, transform_indices = @transform_5, window_bounds = array<i64: 288, 32>}, {pipeline_mode = #tpu.pipeline_mode<synchronous>, transform_indices = @transform_6, window_bounds = array<i64: 1, 32>}, {pipeline_mode = #tpu.pipeline_mode<synchronous>, transform_indices = @transform_7, window_bounds = array<i64: 1, 32>}, {pipeline_mode = #tpu.pipeline_mode<synchronous>, transform_indices = @transform_8, window_bounds = array<i64: 288, 32>}, {pipeline_mode = #tpu.pipeline_mode<synchronous>, transform_indices = @transform_9, window_bounds = array<i64: 32, 2>}, {pipeline_mode = #tpu.pipeline_mode<synchronous>, transform_indices = @transform_10, window_bounds = array<i64: 1, 2>}, {pipeline_mode = #tpu.pipeline_mode<synchronous>, transform_indices = @transform_11, window_bounds = array<i64: 2, 32>}, {pipeline_mode = #tpu.pipeline_mode<synchronous>, transform_indices = @transform_12, window_bounds = array<i64: 1, 32>}, {transform_indices = @transform_13, window_bounds = array<i64: 1, 288, 32>}]} {
    %c0 = arith.constant 0 : index
    %c0_0 = arith.constant 0 : index
    %0 = vector.load %arg2[%c0, %c0_0] : memref<288x1xf32, #tpu.memory_space<vmem>>, vector<288x1xf32>
    %c0_1 = arith.constant 0 : index
    %c0_2 = arith.constant 0 : index
    %c0_3 = arith.constant 0 : index
    %1 = vector.load %arg1[%c0_1, %c0_2, %c0_3] : memref<1x326x3xbf16, #tpu.memory_space<vmem>>, vector<1x326x3xbf16>
    %2 = vector.shape_cast %1 : vector<1x326x3xbf16> to vector<326x3xbf16>
    %c0_4 = arith.constant 0 : index
    %c0_5 = arith.constant 0 : index
    %c0_6 = arith.constant 0 : index
    %3 = vector.load %arg3[%c0_4, %c0_5, %c0_6] : memref<9x3x32xbf16, #tpu.memory_space<vmem>>, vector<9x3x32xbf16>
    %4 = vector.extract_strided_slice %2 {offsets = [0, 0], sizes = [288, 3], strides = [1, 1]} : vector<326x3xbf16> to vector<288x3xbf16>
    %5 = vector.extract_strided_slice %3 {offsets = [0, 0, 0], sizes = [1, 3, 32], strides = [1, 1, 1]} : vector<9x3x32xbf16> to vector<1x3x32xbf16>
    %6 = vector.shape_cast %5 : vector<1x3x32xbf16> to vector<3x32xbf16>
    %cst = arith.constant dense<0.000000e+00> : vector<288x32xf32>
    %7 = tpu.matmul %4, %6, %cst {dimension_numbers = #tpu.dot_dimension_numbers<[1], [0], [0], [1], [0, 0, 1, 1], [], []>} : vector<288x3xbf16>, vector<3x32xbf16>, vector<288x32xf32> -> vector<288x32xf32>
    %8 = vector.extract_strided_slice %2 {offsets = [1, 0], sizes = [288, 3], strides = [1, 1]} : vector<326x3xbf16> to vector<288x3xbf16>
    %9 = vector.extract_strided_slice %3 {offsets = [1, 0, 0], sizes = [1, 3, 32], strides = [1, 1, 1]} : vector<9x3x32xbf16> to vector<1x3x32xbf16>
    %10 = vector.shape_cast %9 : vector<1x3x32xbf16> to vector<3x32xbf16>
    %cst_7 = arith.constant dense<0.000000e+00> : vector<288x32xf32>
    %11 = tpu.matmul %8, %10, %cst_7 {dimension_numbers = #tpu.dot_dimension_numbers<[1], [0], [0], [1], [0, 0, 1, 1], [], []>} : vector<288x3xbf16>, vector<3x32xbf16>, vector<288x32xf32> -> vector<288x32xf32>
    %12 = arith.addf %7, %11 : vector<288x32xf32>
    %13 = vector.extract_strided_slice %2 {offsets = [2, 0], sizes = [288, 3], strides = [1, 1]} : vector<326x3xbf16> to vector<288x3xbf16>
    %14 = vector.extract_strided_slice %3 {offsets = [2, 0, 0], sizes = [1, 3, 32], strides = [1, 1, 1]} : vector<9x3x32xbf16> to vector<1x3x32xbf16>
    %15 = vector.shape_cast %14 : vector<1x3x32xbf16> to vector<3x32xbf16>
    %cst_8 = arith.constant dense<0.000000e+00> : vector<288x32xf32>
    %16 = tpu.matmul %13, %15, %cst_8 {dimension_numbers = #tpu.dot_dimension_numbers<[1], [0], [0], [1], [0, 0, 1, 1], [], []>} : vector<288x3xbf16>, vector<3x32xbf16>, vector<288x32xf32> -> vector<288x32xf32>
    %17 = arith.addf %12, %16 : vector<288x32xf32>
    %18 = vector.extract_strided_slice %2 {offsets = [18, 0], sizes = [288, 3], strides = [1, 1]} : vector<326x3xbf16> to vector<288x3xbf16>
    %19 = vector.extract_strided_slice %3 {offsets = [3, 0, 0], sizes = [1, 3, 32], strides = [1, 1, 1]} : vector<9x3x32xbf16> to vector<1x3x32xbf16>
    %20 = vector.shape_cast %19 : vector<1x3x32xbf16> to vector<3x32xbf16>
    %cst_9 = arith.constant dense<0.000000e+00> : vector<288x32xf32>
    %21 = tpu.matmul %18, %20, %cst_9 {dimension_numbers = #tpu.dot_dimension_numbers<[1], [0], [0], [1], [0, 0, 1, 1], [], []>} : vector<288x3xbf16>, vector<3x32xbf16>, vector<288x32xf32> -> vector<288x32xf32>
    %22 = arith.addf %17, %21 : vector<288x32xf32>
    %23 = vector.extract_strided_slice %2 {offsets = [19, 0], sizes = [288, 3], strides = [1, 1]} : vector<326x3xbf16> to vector<288x3xbf16>
    %24 = vector.extract_strided_slice %3 {offsets = [4, 0, 0], sizes = [1, 3, 32], strides = [1, 1, 1]} : vector<9x3x32xbf16> to vector<1x3x32xbf16>
    %25 = vector.shape_cast %24 : vector<1x3x32xbf16> to vector<3x32xbf16>
    %cst_10 = arith.constant dense<0.000000e+00> : vector<288x32xf32>
    %26 = tpu.matmul %23, %25, %cst_10 {dimension_numbers = #tpu.dot_dimension_numbers<[1], [0], [0], [1], [0, 0, 1, 1], [], []>} : vector<288x3xbf16>, vector<3x32xbf16>, vector<288x32xf32> -> vector<288x32xf32>
    %27 = arith.addf %22, %26 : vector<288x32xf32>
    %28 = vector.extract_strided_slice %2 {offsets = [20, 0], sizes = [288, 3], strides = [1, 1]} : vector<326x3xbf16> to vector<288x3xbf16>
    %29 = vector.extract_strided_slice %3 {offsets = [5, 0, 0], sizes = [1, 3, 32], strides = [1, 1, 1]} : vector<9x3x32xbf16> to vector<1x3x32xbf16>
    %30 = vector.shape_cast %29 : vector<1x3x32xbf16> to vector<3x32xbf16>
    %cst_11 = arith.constant dense<0.000000e+00> : vector<288x32xf32>
    %31 = tpu.matmul %28, %30, %cst_11 {dimension_numbers = #tpu.dot_dimension_numbers<[1], [0], [0], [1], [0, 0, 1, 1], [], []>} : vector<288x3xbf16>, vector<3x32xbf16>, vector<288x32xf32> -> vector<288x32xf32>
    %32 = arith.addf %27, %31 : vector<288x32xf32>
    %33 = vector.extract_strided_slice %2 {offsets = [36, 0], sizes = [288, 3], strides = [1, 1]} : vector<326x3xbf16> to vector<288x3xbf16>
    %34 = vector.extract_strided_slice %3 {offsets = [6, 0, 0], sizes = [1, 3, 32], strides = [1, 1, 1]} : vector<9x3x32xbf16> to vector<1x3x32xbf16>
    %35 = vector.shape_cast %34 : vector<1x3x32xbf16> to vector<3x32xbf16>
    %cst_12 = arith.constant dense<0.000000e+00> : vector<288x32xf32>
    %36 = tpu.matmul %33, %35, %cst_12 {dimension_numbers = #tpu.dot_dimension_numbers<[1], [0], [0], [1], [0, 0, 1, 1], [], []>} : vector<288x3xbf16>, vector<3x32xbf16>, vector<288x32xf32> -> vector<288x32xf32>
    %37 = arith.addf %32, %36 : vector<288x32xf32>
    %38 = vector.extract_strided_slice %2 {offsets = [37, 0], sizes = [288, 3], strides = [1, 1]} : vector<326x3xbf16> to vector<288x3xbf16>
    %39 = vector.extract_strided_slice %3 {offsets = [7, 0, 0], sizes = [1, 3, 32], strides = [1, 1, 1]} : vector<9x3x32xbf16> to vector<1x3x32xbf16>
    %40 = vector.shape_cast %39 : vector<1x3x32xbf16> to vector<3x32xbf16>
    %cst_13 = arith.constant dense<0.000000e+00> : vector<288x32xf32>
    %41 = tpu.matmul %38, %40, %cst_13 {dimension_numbers = #tpu.dot_dimension_numbers<[1], [0], [0], [1], [0, 0, 1, 1], [], []>} : vector<288x3xbf16>, vector<3x32xbf16>, vector<288x32xf32> -> vector<288x32xf32>
    %42 = arith.addf %37, %41 : vector<288x32xf32>
    %43 = vector.extract_strided_slice %2 {offsets = [38, 0], sizes = [288, 3], strides = [1, 1]} : vector<326x3xbf16> to vector<288x3xbf16>
    %44 = vector.extract_strided_slice %3 {offsets = [8, 0, 0], sizes = [1, 3, 32], strides = [1, 1, 1]} : vector<9x3x32xbf16> to vector<1x3x32xbf16>
    %45 = vector.shape_cast %44 : vector<1x3x32xbf16> to vector<3x32xbf16>
    %cst_14 = arith.constant dense<0.000000e+00> : vector<288x32xf32>
    %46 = tpu.matmul %43, %45, %cst_14 {dimension_numbers = #tpu.dot_dimension_numbers<[1], [0], [0], [1], [0, 0, 1, 1], [], []>} : vector<288x3xbf16>, vector<3x32xbf16>, vector<288x32xf32> -> vector<288x32xf32>
    %47 = arith.addf %42, %46 : vector<288x32xf32>
    %c0_15 = arith.constant 0 : index
    %c0_16 = arith.constant 0 : index
    %48 = vector.load %arg4[%c0_15, %c0_16] : memref<1x32xf32, #tpu.memory_space<vmem>>, vector<1x32xf32>
    %49 = vector.broadcast %48 : vector<1x32xf32> to vector<288x32xf32>
    %50 = arith.mulf %47, %49 : vector<288x32xf32>
    %c0_17 = arith.constant 0 : index
    %c0_18 = arith.constant 0 : index
    %51 = vector.load %arg5[%c0_17, %c0_18] : memref<1x32xf32, #tpu.memory_space<vmem>>, vector<1x32xf32>
    %52 = vector.broadcast %51 : vector<1x32xf32> to vector<288x32xf32>
    %53 = arith.addf %50, %52 : vector<288x32xf32>
    %cst_19 = arith.constant 0.000000e+00 : f32
    %54 = vector.broadcast %cst_19 : f32 to vector<288x32xf32>
    %55 = arith.maximumf %53, %54 : vector<288x32xf32>
    %56 = vector.broadcast %0 : vector<288x1xf32> to vector<288x32xf32>
    %57 = arith.mulf %55, %56 : vector<288x32xf32>
    %58 = arith.truncf %57 : vector<288x32xf32> to vector<288x32xbf16>
    %cst_20 = arith.constant 0.000000e+00 : bf16
    %59 = vector.broadcast %cst_20 : bf16 to vector<19x32xbf16>
    %60 = tpu.concatenate %59, %58, %59 in 0 : vector<19x32xbf16>, vector<288x32xbf16>, vector<19x32xbf16> -> vector<326x32xbf16>
    %61 = vector.extract_strided_slice %60 {offsets = [0, 0], sizes = [288, 32], strides = [1, 1]} : vector<326x32xbf16> to vector<288x32xbf16>
    %62 = vector.extract_strided_slice %60 {offsets = [1, 0], sizes = [288, 32], strides = [1, 1]} : vector<326x32xbf16> to vector<288x32xbf16>
    %63 = vector.extract_strided_slice %60 {offsets = [2, 0], sizes = [288, 32], strides = [1, 1]} : vector<326x32xbf16> to vector<288x32xbf16>
    %64 = vector.extract_strided_slice %60 {offsets = [18, 0], sizes = [288, 32], strides = [1, 1]} : vector<326x32xbf16> to vector<288x32xbf16>
    %65 = vector.extract_strided_slice %60 {offsets = [19, 0], sizes = [288, 32], strides = [1, 1]} : vector<326x32xbf16> to vector<288x32xbf16>
    %66 = vector.extract_strided_slice %60 {offsets = [20, 0], sizes = [288, 32], strides = [1, 1]} : vector<326x32xbf16> to vector<288x32xbf16>
    %67 = vector.extract_strided_slice %60 {offsets = [36, 0], sizes = [288, 32], strides = [1, 1]} : vector<326x32xbf16> to vector<288x32xbf16>
    %68 = vector.extract_strided_slice %60 {offsets = [37, 0], sizes = [288, 32], strides = [1, 1]} : vector<326x32xbf16> to vector<288x32xbf16>
    %69 = vector.extract_strided_slice %60 {offsets = [38, 0], sizes = [288, 32], strides = [1, 1]} : vector<326x32xbf16> to vector<288x32xbf16>
    %70 = tpu.concatenate %61, %62, %63, %64, %65, %66, %67, %68, %69 in 1 : vector<288x32xbf16>, vector<288x32xbf16>, vector<288x32xbf16>, vector<288x32xbf16>, vector<288x32xbf16>, vector<288x32xbf16>, vector<288x32xbf16>, vector<288x32xbf16>, vector<288x32xbf16> -> vector<288x288xbf16>
    %c0_21 = arith.constant 0 : index
    %c0_22 = arith.constant 0 : index
    %71 = vector.load %arg6[%c0_21, %c0_22] : memref<288x32xbf16, #tpu.memory_space<vmem>>, vector<288x32xbf16>
    %cst_23 = arith.constant dense<0.000000e+00> : vector<288x32xf32>
    %72 = tpu.matmul %70, %71, %cst_23 {dimension_numbers = #tpu.dot_dimension_numbers<[1], [0], [0], [1], [0, 0, 1, 1], [], []>} : vector<288x288xbf16>, vector<288x32xbf16>, vector<288x32xf32> -> vector<288x32xf32>
    %c0_24 = arith.constant 0 : index
    %c0_25 = arith.constant 0 : index
    %73 = vector.load %arg7[%c0_24, %c0_25] : memref<1x32xf32, #tpu.memory_space<vmem>>, vector<1x32xf32>
    %74 = vector.broadcast %73 : vector<1x32xf32> to vector<288x32xf32>
    %75 = arith.mulf %72, %74 : vector<288x32xf32>
    %c0_26 = arith.constant 0 : index
    %c0_27 = arith.constant 0 : index
    %76 = vector.load %arg8[%c0_26, %c0_27] : memref<1x32xf32, #tpu.memory_space<vmem>>, vector<1x32xf32>
    %77 = vector.broadcast %76 : vector<1x32xf32> to vector<288x32xf32>
    %78 = arith.addf %75, %77 : vector<288x32xf32>
    %cst_28 = arith.constant 0.000000e+00 : f32
    %79 = vector.broadcast %cst_28 : f32 to vector<288x32xf32>
    %80 = arith.maximumf %78, %79 : vector<288x32xf32>
    %81 = vector.broadcast %0 : vector<288x1xf32> to vector<288x32xf32>
    %82 = arith.mulf %80, %81 : vector<288x32xf32>
    %83 = arith.truncf %82 : vector<288x32xf32> to vector<288x32xbf16>
    %cst_29 = arith.constant 0.000000e+00 : bf16
    %84 = vector.broadcast %cst_29 : bf16 to vector<19x32xbf16>
    %85 = tpu.concatenate %84, %83, %84 in 0 : vector<19x32xbf16>, vector<288x32xbf16>, vector<19x32xbf16> -> vector<326x32xbf16>
    %86 = vector.extract_strided_slice %85 {offsets = [0, 0], sizes = [288, 32], strides = [1, 1]} : vector<326x32xbf16> to vector<288x32xbf16>
    %87 = vector.extract_strided_slice %85 {offsets = [1, 0], sizes = [288, 32], strides = [1, 1]} : vector<326x32xbf16> to vector<288x32xbf16>
    %88 = vector.extract_strided_slice %85 {offsets = [2, 0], sizes = [288, 32], strides = [1, 1]} : vector<326x32xbf16> to vector<288x32xbf16>
    %89 = vector.extract_strided_slice %85 {offsets = [18, 0], sizes = [288, 32], strides = [1, 1]} : vector<326x32xbf16> to vector<288x32xbf16>
    %90 = vector.extract_strided_slice %85 {offsets = [19, 0], sizes = [288, 32], strides = [1, 1]} : vector<326x32xbf16> to vector<288x32xbf16>
    %91 = vector.extract_strided_slice %85 {offsets = [20, 0], sizes = [288, 32], strides = [1, 1]} : vector<326x32xbf16> to vector<288x32xbf16>
    %92 = vector.extract_strided_slice %85 {offsets = [36, 0], sizes = [288, 32], strides = [1, 1]} : vector<326x32xbf16> to vector<288x32xbf16>
    %93 = vector.extract_strided_slice %85 {offsets = [37, 0], sizes = [288, 32], strides = [1, 1]} : vector<326x32xbf16> to vector<288x32xbf16>
    %94 = vector.extract_strided_slice %85 {offsets = [38, 0], sizes = [288, 32], strides = [1, 1]} : vector<326x32xbf16> to vector<288x32xbf16>
    %95 = tpu.concatenate %86, %87, %88, %89, %90, %91, %92, %93, %94 in 1 : vector<288x32xbf16>, vector<288x32xbf16>, vector<288x32xbf16>, vector<288x32xbf16>, vector<288x32xbf16>, vector<288x32xbf16>, vector<288x32xbf16>, vector<288x32xbf16>, vector<288x32xbf16> -> vector<288x288xbf16>
    %c0_30 = arith.constant 0 : index
    %c0_31 = arith.constant 0 : index
    %96 = vector.load %arg9[%c0_30, %c0_31] : memref<288x32xbf16, #tpu.memory_space<vmem>>, vector<288x32xbf16>
    %cst_32 = arith.constant dense<0.000000e+00> : vector<288x32xf32>
    %97 = tpu.matmul %95, %96, %cst_32 {dimension_numbers = #tpu.dot_dimension_numbers<[1], [0], [0], [1], [0, 0, 1, 1], [], []>} : vector<288x288xbf16>, vector<288x32xbf16>, vector<288x32xf32> -> vector<288x32xf32>
    %98 = vector.broadcast %0 : vector<288x1xf32> to vector<288x32xf32>
    %99 = arith.mulf %97, %98 : vector<288x32xf32>
    %cst_33 = arith.constant dense<0.000000e+00> : vector<32xf32>
    %100 = vector.multi_reduction <add>, %99, %cst_33 [0] : vector<288x32xf32> to vector<32xf32>
    %101 = vector.shape_cast %100 : vector<32xf32> to vector<1x32xf32>
    %cst_34 = arith.constant 3.906250e-03 : f32
    %102 = vector.broadcast %cst_34 : f32 to vector<1x32xf32>
    %103 = arith.mulf %101, %102 : vector<1x32xf32>
    %c0_35 = arith.constant 0 : index
    %c0_36 = arith.constant 0 : index
    %104 = vector.load %arg10[%c0_35, %c0_36] : memref<32x2xf32, #tpu.memory_space<vmem>>, vector<32x2xf32>
    %cst_37 = arith.constant dense<0.000000e+00> : vector<1x2xf32>
    %105 = tpu.matmul %103, %104, %cst_37 {dimension_numbers = #tpu.dot_dimension_numbers<[1], [0], [0], [1], [0, 0, 1, 1], [], []>} : vector<1x32xf32>, vector<32x2xf32>, vector<1x2xf32> -> vector<1x2xf32>
    %c0_38 = arith.constant 0 : index
    %c0_39 = arith.constant 0 : index
    %106 = vector.load %arg11[%c0_38, %c0_39] : memref<1x2xf32, #tpu.memory_space<vmem>>, vector<1x2xf32>
    %107 = arith.addf %105, %106 : vector<1x2xf32>
    %cst_40 = arith.constant 0.000000e+00 : f32
    %108 = vector.broadcast %cst_40 : f32 to vector<1x2xf32>
    %109 = arith.maximumf %107, %108 : vector<1x2xf32>
    %c0_41 = arith.constant 0 : index
    %c0_42 = arith.constant 0 : index
    %110 = vector.load %arg12[%c0_41, %c0_42] : memref<2x32xf32, #tpu.memory_space<vmem>>, vector<2x32xf32>
    %cst_43 = arith.constant dense<0.000000e+00> : vector<1x32xf32>
    %111 = tpu.matmul %109, %110, %cst_43 {dimension_numbers = #tpu.dot_dimension_numbers<[1], [0], [0], [1], [0, 0, 1, 1], [], []>} : vector<1x2xf32>, vector<2x32xf32>, vector<1x32xf32> -> vector<1x32xf32>
    %c0_44 = arith.constant 0 : index
    %c0_45 = arith.constant 0 : index
    %112 = vector.load %arg13[%c0_44, %c0_45] : memref<1x32xf32, #tpu.memory_space<vmem>>, vector<1x32xf32>
    %113 = arith.addf %111, %112 : vector<1x32xf32>
    %114 = arith.negf %113 : vector<1x32xf32>
    %115 = math.exp %114 : vector<1x32xf32>
    %cst_46 = arith.constant 1.000000e+00 : f32
    %116 = vector.broadcast %cst_46 : f32 to vector<1x32xf32>
    %117 = arith.addf %116, %115 : vector<1x32xf32>
    %118 = arith.divf %116, %117 : vector<1x32xf32>
    %119 = vector.broadcast %118 : vector<1x32xf32> to vector<288x32xf32>
    %120 = arith.mulf %97, %119 : vector<288x32xf32>
    %121 = arith.addf %120, %47 : vector<288x32xf32>
    %122 = arith.truncf %121 : vector<288x32xf32> to vector<288x32xbf16>
    %c0_47 = arith.constant 0 : index
    %c0_48 = arith.constant 0 : index
    %c0_49 = arith.constant 0 : index
    %123 = vector.load %arg14[%c0_47, %c0_48, %c0_49] : memref<1x288x32xbf16, #tpu.memory_space<vmem>>, vector<1x288x32xbf16>
    %124 = vector.shape_cast %123 : vector<1x288x32xbf16> to vector<288x32xbf16>
    %125 = vector.shape_cast %122 : vector<288x32xbf16> to vector<1x288x32xbf16>
    tpu.vector_store %arg14[%c0_47, %c0_48, %c0_49], %125 {strides = array<i32>} : memref<1x288x32xbf16, #tpu.memory_space<vmem>>, vector<1x288x32xbf16>,
    return
  }
  func.func @transform_0(%arg0: i32) -> (i32, i32, i32) {
    %c0_i32 = arith.constant 0 : i32
    %c0_i32_0 = arith.constant 0 : i32
    %c0_i32_1 = arith.constant 0 : i32
    return %arg0, %c0_i32, %c0_i32_0 : i32, i32, i32
  }
  func.func @transform_1(%arg0: i32) -> (i32, i32) {
    %c0_i32 = arith.constant 0 : i32
    %c0_i32_0 = arith.constant 0 : i32
    %c0_i32_1 = arith.constant 0 : i32
    return %c0_i32, %c0_i32_0 : i32, i32
  }
  func.func @transform_2(%arg0: i32) -> (i32, i32, i32) {
    %c0_i32 = arith.constant 0 : i32
    %c0_i32_0 = arith.constant 0 : i32
    %c0_i32_1 = arith.constant 0 : i32
    %c0_i32_2 = arith.constant 0 : i32
    return %c0_i32, %c0_i32_0, %c0_i32_1 : i32, i32, i32
  }
  func.func @transform_3(%arg0: i32) -> (i32, i32) {
    %c0_i32 = arith.constant 0 : i32
    %c0_i32_0 = arith.constant 0 : i32
    %c0_i32_1 = arith.constant 0 : i32
    return %c0_i32, %c0_i32_0 : i32, i32
  }
  func.func @transform_4(%arg0: i32) -> (i32, i32) {
    %c0_i32 = arith.constant 0 : i32
    %c0_i32_0 = arith.constant 0 : i32
    %c0_i32_1 = arith.constant 0 : i32
    return %c0_i32, %c0_i32_0 : i32, i32
  }
  func.func @transform_5(%arg0: i32) -> (i32, i32) {
    %c0_i32 = arith.constant 0 : i32
    %c0_i32_0 = arith.constant 0 : i32
    %c0_i32_1 = arith.constant 0 : i32
    return %c0_i32, %c0_i32_0 : i32, i32
  }
  func.func @transform_6(%arg0: i32) -> (i32, i32) {
    %c0_i32 = arith.constant 0 : i32
    %c0_i32_0 = arith.constant 0 : i32
    %c0_i32_1 = arith.constant 0 : i32
    return %c0_i32, %c0_i32_0 : i32, i32
  }
  func.func @transform_7(%arg0: i32) -> (i32, i32) {
    %c0_i32 = arith.constant 0 : i32
    %c0_i32_0 = arith.constant 0 : i32
    %c0_i32_1 = arith.constant 0 : i32
    return %c0_i32, %c0_i32_0 : i32, i32
  }
  func.func @transform_8(%arg0: i32) -> (i32, i32) {
    %c0_i32 = arith.constant 0 : i32
    %c0_i32_0 = arith.constant 0 : i32
    %c0_i32_1 = arith.constant 0 : i32
    return %c0_i32, %c0_i32_0 : i32, i32
  }
  func.func @transform_9(%arg0: i32) -> (i32, i32) {
    %c0_i32 = arith.constant 0 : i32
    %c0_i32_0 = arith.constant 0 : i32
    %c0_i32_1 = arith.constant 0 : i32
    return %c0_i32, %c0_i32_0 : i32, i32
  }
  func.func @transform_10(%arg0: i32) -> (i32, i32) {
    %c0_i32 = arith.constant 0 : i32
    %c0_i32_0 = arith.constant 0 : i32
    %c0_i32_1 = arith.constant 0 : i32
    return %c0_i32, %c0_i32_0 : i32, i32
  }
  func.func @transform_11(%arg0: i32) -> (i32, i32) {
    %c0_i32 = arith.constant 0 : i32
    %c0_i32_0 = arith.constant 0 : i32
    %c0_i32_1 = arith.constant 0 : i32
    return %c0_i32, %c0_i32_0 : i32, i32
  }
  func.func @transform_12(%arg0: i32) -> (i32, i32) {
    %c0_i32 = arith.constant 0 : i32
    %c0_i32_0 = arith.constant 0 : i32
    %c0_i32_1 = arith.constant 0 : i32
    return %c0_i32, %c0_i32_0 : i32, i32
  }
  func.func @transform_13(%arg0: i32) -> (i32, i32, i32) {
    %c0_i32 = arith.constant 0 : i32
    %c0_i32_0 = arith.constant 0 : i32
    %c0_i32_1 = arith.constant 0 : i32
    return %arg0, %c0_i32, %c0_i32_0 : i32, i32, i32
  }
}

module attributes {stable_mosaic.version = 11 : i64} {
  func.func @_block_kernel(%arg0: i32, %arg1: memref<1x92x128xbf16, #tpu.memory_space<vmem>>, %arg2: memref<80x1xf32, #tpu.memory_space<vmem>>, %arg3: memref<512x64xbf16, #tpu.memory_space<vmem>>, %arg4: memref<1x64xf32, #tpu.memory_space<vmem>>, %arg5: memref<1x64xf32, #tpu.memory_space<vmem>>, %arg6: memref<576x64xbf16, #tpu.memory_space<vmem>>, %arg7: memref<1x80x32xbf16, #tpu.memory_space<vmem>>, %arg8: memref<32x64xbf16, #tpu.memory_space<vmem>>, %arg9: memref<1x64xf32, #tpu.memory_space<vmem>>, %arg10: memref<1x64xf32, #tpu.memory_space<vmem>>, %arg11: memref<64x4xf32, #tpu.memory_space<vmem>>, %arg12: memref<1x4xf32, #tpu.memory_space<vmem>>, %arg13: memref<4x64xf32, #tpu.memory_space<vmem>>, %arg14: memref<1x64xf32, #tpu.memory_space<vmem>>, %arg15: memref<1x80x64xbf16, #tpu.memory_space<vmem>>) attributes {dimension_semantics = [#tpu.dimension_semantics<parallel>], iteration_bounds = array<i64: 2>, scalar_prefetch = 0 : i64, scratch_operands = 0 : i64, tpu.core_type = #tpu.core_type<tc>, window_params = [{transform_indices = @transform_0, window_bounds = array<i64: 1, 92, 128>}, {pipeline_mode = #tpu.pipeline_mode<synchronous>, transform_indices = @transform_1, window_bounds = array<i64: 80, 1>}, {pipeline_mode = #tpu.pipeline_mode<synchronous>, transform_indices = @transform_2, window_bounds = array<i64: 512, 64>}, {pipeline_mode = #tpu.pipeline_mode<synchronous>, transform_indices = @transform_3, window_bounds = array<i64: 1, 64>}, {pipeline_mode = #tpu.pipeline_mode<synchronous>, transform_indices = @transform_4, window_bounds = array<i64: 1, 64>}, {pipeline_mode = #tpu.pipeline_mode<synchronous>, transform_indices = @transform_5, window_bounds = array<i64: 576, 64>}, {transform_indices = @transform_6, window_bounds = array<i64: 1, 80, 32>}, {pipeline_mode = #tpu.pipeline_mode<synchronous>, transform_indices = @transform_7, window_bounds = array<i64: 32, 64>}, {pipeline_mode = #tpu.pipeline_mode<synchronous>, transform_indices = @transform_8, window_bounds = array<i64: 1, 64>}, {pipeline_mode = #tpu.pipeline_mode<synchronous>, transform_indices = @transform_9, window_bounds = array<i64: 1, 64>}, {pipeline_mode = #tpu.pipeline_mode<synchronous>, transform_indices = @transform_10, window_bounds = array<i64: 64, 4>}, {pipeline_mode = #tpu.pipeline_mode<synchronous>, transform_indices = @transform_11, window_bounds = array<i64: 1, 4>}, {pipeline_mode = #tpu.pipeline_mode<synchronous>, transform_indices = @transform_12, window_bounds = array<i64: 4, 64>}, {pipeline_mode = #tpu.pipeline_mode<synchronous>, transform_indices = @transform_13, window_bounds = array<i64: 1, 64>}, {transform_indices = @transform_14, window_bounds = array<i64: 1, 80, 64>}]} {
    %c0 = arith.constant 0 : index
    %c0_0 = arith.constant 0 : index
    %0 = vector.load %arg2[%c0, %c0_0] : memref<80x1xf32, #tpu.memory_space<vmem>>, vector<80x1xf32>
    %c0_1 = arith.constant 0 : index
    %c0_2 = arith.constant 0 : index
    %c0_3 = arith.constant 0 : index
    %1 = vector.load %arg1[%c0_1, %c0_2, %c0_3] : memref<1x92x128xbf16, #tpu.memory_space<vmem>>, vector<1x92x128xbf16>
    %2 = vector.shape_cast %1 : vector<1x92x128xbf16> to vector<92x128xbf16>
    %3 = vector.extract_strided_slice %2 {offsets = [0, 0], sizes = [80, 128], strides = [1, 1]} : vector<92x128xbf16> to vector<80x128xbf16>
    %4 = vector.extract_strided_slice %2 {offsets = [1, 0], sizes = [80, 128], strides = [1, 1]} : vector<92x128xbf16> to vector<80x128xbf16>
    %5 = vector.extract_strided_slice %2 {offsets = [10, 0], sizes = [80, 128], strides = [1, 1]} : vector<92x128xbf16> to vector<80x128xbf16>
    %6 = vector.extract_strided_slice %2 {offsets = [11, 0], sizes = [80, 128], strides = [1, 1]} : vector<92x128xbf16> to vector<80x128xbf16>
    %7 = tpu.concatenate %3, %4, %5, %6 in 1 : vector<80x128xbf16>, vector<80x128xbf16>, vector<80x128xbf16>, vector<80x128xbf16> -> vector<80x512xbf16>
    %c0_4 = arith.constant 0 : index
    %c0_5 = arith.constant 0 : index
    %8 = vector.load %arg3[%c0_4, %c0_5] : memref<512x64xbf16, #tpu.memory_space<vmem>>, vector<512x64xbf16>
    %cst = arith.constant dense<0.000000e+00> : vector<80x64xf32>
    %9 = tpu.matmul %7, %8, %cst {dimension_numbers = #tpu.dot_dimension_numbers<[1], [0], [0], [1], [0, 0, 1, 1], [], []>} : vector<80x512xbf16>, vector<512x64xbf16>, vector<80x64xf32> -> vector<80x64xf32>
    %c0_6 = arith.constant 0 : index
    %c0_7 = arith.constant 0 : index
    %10 = vector.load %arg4[%c0_6, %c0_7] : memref<1x64xf32, #tpu.memory_space<vmem>>, vector<1x64xf32>
    %11 = vector.broadcast %10 : vector<1x64xf32> to vector<80x64xf32>
    %12 = arith.mulf %9, %11 : vector<80x64xf32>
    %c0_8 = arith.constant 0 : index
    %c0_9 = arith.constant 0 : index
    %13 = vector.load %arg5[%c0_8, %c0_9] : memref<1x64xf32, #tpu.memory_space<vmem>>, vector<1x64xf32>
    %14 = vector.broadcast %13 : vector<1x64xf32> to vector<80x64xf32>
    %15 = arith.addf %12, %14 : vector<80x64xf32>
    %cst_10 = arith.constant 0.000000e+00 : f32
    %16 = vector.broadcast %cst_10 : f32 to vector<80x64xf32>
    %17 = arith.maximumf %15, %16 : vector<80x64xf32>
    %18 = vector.broadcast %0 : vector<80x1xf32> to vector<80x64xf32>
    %19 = arith.mulf %17, %18 : vector<80x64xf32>
    %20 = arith.truncf %19 : vector<80x64xf32> to vector<80x64xbf16>
    %cst_11 = arith.constant 0.000000e+00 : bf16
    %21 = vector.broadcast %cst_11 : bf16 to vector<11x64xbf16>
    %22 = tpu.concatenate %21, %20, %21 in 0 : vector<11x64xbf16>, vector<80x64xbf16>, vector<11x64xbf16> -> vector<102x64xbf16>
    %23 = vector.extract_strided_slice %22 {offsets = [0, 0], sizes = [80, 64], strides = [1, 1]} : vector<102x64xbf16> to vector<80x64xbf16>
    %24 = vector.extract_strided_slice %22 {offsets = [1, 0], sizes = [80, 64], strides = [1, 1]} : vector<102x64xbf16> to vector<80x64xbf16>
    %25 = vector.extract_strided_slice %22 {offsets = [2, 0], sizes = [80, 64], strides = [1, 1]} : vector<102x64xbf16> to vector<80x64xbf16>
    %26 = vector.extract_strided_slice %22 {offsets = [10, 0], sizes = [80, 64], strides = [1, 1]} : vector<102x64xbf16> to vector<80x64xbf16>
    %27 = vector.extract_strided_slice %22 {offsets = [11, 0], sizes = [80, 64], strides = [1, 1]} : vector<102x64xbf16> to vector<80x64xbf16>
    %28 = vector.extract_strided_slice %22 {offsets = [12, 0], sizes = [80, 64], strides = [1, 1]} : vector<102x64xbf16> to vector<80x64xbf16>
    %29 = vector.extract_strided_slice %22 {offsets = [20, 0], sizes = [80, 64], strides = [1, 1]} : vector<102x64xbf16> to vector<80x64xbf16>
    %30 = vector.extract_strided_slice %22 {offsets = [21, 0], sizes = [80, 64], strides = [1, 1]} : vector<102x64xbf16> to vector<80x64xbf16>
    %31 = vector.extract_strided_slice %22 {offsets = [22, 0], sizes = [80, 64], strides = [1, 1]} : vector<102x64xbf16> to vector<80x64xbf16>
    %32 = tpu.concatenate %23, %24, %25, %26, %27, %28, %29, %30, %31 in 1 : vector<80x64xbf16>, vector<80x64xbf16>, vector<80x64xbf16>, vector<80x64xbf16>, vector<80x64xbf16>, vector<80x64xbf16>, vector<80x64xbf16>, vector<80x64xbf16>, vector<80x64xbf16> -> vector<80x576xbf16>
    %c0_12 = arith.constant 0 : index
    %c0_13 = arith.constant 0 : index
    %33 = vector.load %arg6[%c0_12, %c0_13] : memref<576x64xbf16, #tpu.memory_space<vmem>>, vector<576x64xbf16>
    %cst_14 = arith.constant dense<0.000000e+00> : vector<80x64xf32>
    %34 = tpu.matmul %32, %33, %cst_14 {dimension_numbers = #tpu.dot_dimension_numbers<[1], [0], [0], [1], [0, 0, 1, 1], [], []>} : vector<80x576xbf16>, vector<576x64xbf16>, vector<80x64xf32> -> vector<80x64xf32>
    %c0_15 = arith.constant 0 : index
    %c0_16 = arith.constant 0 : index
    %c0_17 = arith.constant 0 : index
    %35 = vector.load %arg7[%c0_15, %c0_16, %c0_17] : memref<1x80x32xbf16, #tpu.memory_space<vmem>>, vector<1x80x32xbf16>
    %36 = vector.shape_cast %35 : vector<1x80x32xbf16> to vector<80x32xbf16>
    %c0_18 = arith.constant 0 : index
    %c0_19 = arith.constant 0 : index
    %37 = vector.load %arg8[%c0_18, %c0_19] : memref<32x64xbf16, #tpu.memory_space<vmem>>, vector<32x64xbf16>
    %cst_20 = arith.constant dense<0.000000e+00> : vector<80x64xf32>
    %38 = tpu.matmul %36, %37, %cst_20 {dimension_numbers = #tpu.dot_dimension_numbers<[1], [0], [0], [1], [0, 0, 1, 1], [], []>} : vector<80x32xbf16>, vector<32x64xbf16>, vector<80x64xf32> -> vector<80x64xf32>
    %c0_21 = arith.constant 0 : index
    %c0_22 = arith.constant 0 : index
    %39 = vector.load %arg9[%c0_21, %c0_22] : memref<1x64xf32, #tpu.memory_space<vmem>>, vector<1x64xf32>
    %40 = vector.broadcast %39 : vector<1x64xf32> to vector<80x64xf32>
    %41 = arith.mulf %38, %40 : vector<80x64xf32>
    %c0_23 = arith.constant 0 : index
    %c0_24 = arith.constant 0 : index
    %42 = vector.load %arg10[%c0_23, %c0_24] : memref<1x64xf32, #tpu.memory_space<vmem>>, vector<1x64xf32>
    %43 = vector.broadcast %42 : vector<1x64xf32> to vector<80x64xf32>
    %44 = arith.addf %41, %43 : vector<80x64xf32>
    %45 = vector.broadcast %0 : vector<80x1xf32> to vector<80x64xf32>
    %46 = arith.mulf %34, %45 : vector<80x64xf32>
    %cst_25 = arith.constant dense<0.000000e+00> : vector<64xf32>
    %47 = vector.multi_reduction <add>, %46, %cst_25 [0] : vector<80x64xf32> to vector<64xf32>
    %48 = vector.shape_cast %47 : vector<64xf32> to vector<1x64xf32>
    %cst_26 = arith.constant 1.562500e-02 : f32
    %49 = vector.broadcast %cst_26 : f32 to vector<1x64xf32>
    %50 = arith.mulf %48, %49 : vector<1x64xf32>
    %c0_27 = arith.constant 0 : index
    %c0_28 = arith.constant 0 : index
    %51 = vector.load %arg11[%c0_27, %c0_28] : memref<64x4xf32, #tpu.memory_space<vmem>>, vector<64x4xf32>
    %cst_29 = arith.constant dense<0.000000e+00> : vector<1x4xf32>
    %52 = tpu.matmul %50, %51, %cst_29 {dimension_numbers = #tpu.dot_dimension_numbers<[1], [0], [0], [1], [0, 0, 1, 1], [], []>} : vector<1x64xf32>, vector<64x4xf32>, vector<1x4xf32> -> vector<1x4xf32>
    %c0_30 = arith.constant 0 : index
    %c0_31 = arith.constant 0 : index
    %53 = vector.load %arg12[%c0_30, %c0_31] : memref<1x4xf32, #tpu.memory_space<vmem>>, vector<1x4xf32>
    %54 = arith.addf %52, %53 : vector<1x4xf32>
    %cst_32 = arith.constant 0.000000e+00 : f32
    %55 = vector.broadcast %cst_32 : f32 to vector<1x4xf32>
    %56 = arith.maximumf %54, %55 : vector<1x4xf32>
    %c0_33 = arith.constant 0 : index
    %c0_34 = arith.constant 0 : index
    %57 = vector.load %arg13[%c0_33, %c0_34] : memref<4x64xf32, #tpu.memory_space<vmem>>, vector<4x64xf32>
    %cst_35 = arith.constant dense<0.000000e+00> : vector<1x64xf32>
    %58 = tpu.matmul %56, %57, %cst_35 {dimension_numbers = #tpu.dot_dimension_numbers<[1], [0], [0], [1], [0, 0, 1, 1], [], []>} : vector<1x4xf32>, vector<4x64xf32>, vector<1x64xf32> -> vector<1x64xf32>
    %c0_36 = arith.constant 0 : index
    %c0_37 = arith.constant 0 : index
    %59 = vector.load %arg14[%c0_36, %c0_37] : memref<1x64xf32, #tpu.memory_space<vmem>>, vector<1x64xf32>
    %60 = arith.addf %58, %59 : vector<1x64xf32>
    %61 = arith.negf %60 : vector<1x64xf32>
    %62 = math.exp %61 : vector<1x64xf32>
    %cst_38 = arith.constant 1.000000e+00 : f32
    %63 = vector.broadcast %cst_38 : f32 to vector<1x64xf32>
    %64 = arith.addf %63, %62 : vector<1x64xf32>
    %65 = arith.divf %63, %64 : vector<1x64xf32>
    %66 = vector.broadcast %65 : vector<1x64xf32> to vector<80x64xf32>
    %67 = arith.mulf %34, %66 : vector<80x64xf32>
    %68 = arith.addf %67, %44 : vector<80x64xf32>
    %69 = arith.truncf %68 : vector<80x64xf32> to vector<80x64xbf16>
    %c0_39 = arith.constant 0 : index
    %c0_40 = arith.constant 0 : index
    %c0_41 = arith.constant 0 : index
    %70 = vector.load %arg15[%c0_39, %c0_40, %c0_41] : memref<1x80x64xbf16, #tpu.memory_space<vmem>>, vector<1x80x64xbf16>
    %71 = vector.shape_cast %70 : vector<1x80x64xbf16> to vector<80x64xbf16>
    %72 = vector.shape_cast %69 : vector<80x64xbf16> to vector<1x80x64xbf16>
    tpu.vector_store %arg15[%c0_39, %c0_40, %c0_41], %72 {strides = array<i32>} : memref<1x80x64xbf16, #tpu.memory_space<vmem>>, vector<1x80x64xbf16>,
    return
  }
  func.func @transform_0(%arg0: i32) -> (i32, i32, i32) {
    %c0_i32 = arith.constant 0 : i32
    %c0_i32_0 = arith.constant 0 : i32
    %c0_i32_1 = arith.constant 0 : i32
    return %arg0, %c0_i32, %c0_i32_0 : i32, i32, i32
  }
  func.func @transform_1(%arg0: i32) -> (i32, i32) {
    %c0_i32 = arith.constant 0 : i32
    %c0_i32_0 = arith.constant 0 : i32
    %c0_i32_1 = arith.constant 0 : i32
    return %c0_i32, %c0_i32_0 : i32, i32
  }
  func.func @transform_2(%arg0: i32) -> (i32, i32) {
    %c0_i32 = arith.constant 0 : i32
    %c0_i32_0 = arith.constant 0 : i32
    %c0_i32_1 = arith.constant 0 : i32
    return %c0_i32, %c0_i32_0 : i32, i32
  }
  func.func @transform_3(%arg0: i32) -> (i32, i32) {
    %c0_i32 = arith.constant 0 : i32
    %c0_i32_0 = arith.constant 0 : i32
    %c0_i32_1 = arith.constant 0 : i32
    return %c0_i32, %c0_i32_0 : i32, i32
  }
  func.func @transform_4(%arg0: i32) -> (i32, i32) {
    %c0_i32 = arith.constant 0 : i32
    %c0_i32_0 = arith.constant 0 : i32
    %c0_i32_1 = arith.constant 0 : i32
    return %c0_i32, %c0_i32_0 : i32, i32
  }
  func.func @transform_5(%arg0: i32) -> (i32, i32) {
    %c0_i32 = arith.constant 0 : i32
    %c0_i32_0 = arith.constant 0 : i32
    %c0_i32_1 = arith.constant 0 : i32
    return %c0_i32, %c0_i32_0 : i32, i32
  }
  func.func @transform_6(%arg0: i32) -> (i32, i32, i32) {
    %c0_i32 = arith.constant 0 : i32
    %c0_i32_0 = arith.constant 0 : i32
    %c0_i32_1 = arith.constant 0 : i32
    return %arg0, %c0_i32, %c0_i32_0 : i32, i32, i32
  }
  func.func @transform_7(%arg0: i32) -> (i32, i32) {
    %c0_i32 = arith.constant 0 : i32
    %c0_i32_0 = arith.constant 0 : i32
    %c0_i32_1 = arith.constant 0 : i32
    return %c0_i32, %c0_i32_0 : i32, i32
  }
  func.func @transform_8(%arg0: i32) -> (i32, i32) {
    %c0_i32 = arith.constant 0 : i32
    %c0_i32_0 = arith.constant 0 : i32
    %c0_i32_1 = arith.constant 0 : i32
    return %c0_i32, %c0_i32_0 : i32, i32
  }
  func.func @transform_9(%arg0: i32) -> (i32, i32) {
    %c0_i32 = arith.constant 0 : i32
    %c0_i32_0 = arith.constant 0 : i32
    %c0_i32_1 = arith.constant 0 : i32
    return %c0_i32, %c0_i32_0 : i32, i32
  }
  func.func @transform_10(%arg0: i32) -> (i32, i32) {
    %c0_i32 = arith.constant 0 : i32
    %c0_i32_0 = arith.constant 0 : i32
    %c0_i32_1 = arith.constant 0 : i32
    return %c0_i32, %c0_i32_0 : i32, i32
  }
  func.func @transform_11(%arg0: i32) -> (i32, i32) {
    %c0_i32 = arith.constant 0 : i32
    %c0_i32_0 = arith.constant 0 : i32
    %c0_i32_1 = arith.constant 0 : i32
    return %c0_i32, %c0_i32_0 : i32, i32
  }
  func.func @transform_12(%arg0: i32) -> (i32, i32) {
    %c0_i32 = arith.constant 0 : i32
    %c0_i32_0 = arith.constant 0 : i32
    %c0_i32_1 = arith.constant 0 : i32
    return %c0_i32, %c0_i32_0 : i32, i32
  }
  func.func @transform_13(%arg0: i32) -> (i32, i32) {
    %c0_i32 = arith.constant 0 : i32
    %c0_i32_0 = arith.constant 0 : i32
    %c0_i32_1 = arith.constant 0 : i32
    return %c0_i32, %c0_i32_0 : i32, i32
  }
  func.func @transform_14(%arg0: i32) -> (i32, i32, i32) {
    %c0_i32 = arith.constant 0 : i32
    %c0_i32_0 = arith.constant 0 : i32
    %c0_i32_1 = arith.constant 0 : i32
    return %arg0, %c0_i32, %c0_i32_0 : i32, i32, i32
  }
}

module attributes {stable_mosaic.version = 11 : i64} {
  func.func @_block_kernel(%arg0: i32, %arg1: memref<1x32x256xbf16, #tpu.memory_space<vmem>>, %arg2: memref<24x1xf32, #tpu.memory_space<vmem>>, %arg3: memref<1024x128xbf16, #tpu.memory_space<vmem>>, %arg4: memref<1x128xf32, #tpu.memory_space<vmem>>, %arg5: memref<1x128xf32, #tpu.memory_space<vmem>>, %arg6: memref<1152x128xbf16, #tpu.memory_space<vmem>>, %arg7: memref<1x24x64xbf16, #tpu.memory_space<vmem>>, %arg8: memref<64x128xbf16, #tpu.memory_space<vmem>>, %arg9: memref<1x128xf32, #tpu.memory_space<vmem>>, %arg10: memref<1x128xf32, #tpu.memory_space<vmem>>, %arg11: memref<128x8xf32, #tpu.memory_space<vmem>>, %arg12: memref<1x8xf32, #tpu.memory_space<vmem>>, %arg13: memref<8x128xf32, #tpu.memory_space<vmem>>, %arg14: memref<1x128xf32, #tpu.memory_space<vmem>>, %arg15: memref<1x128xf32, #tpu.memory_space<vmem>>, %arg16: memref<1x128xf32, #tpu.memory_space<vmem>>, %arg17: memref<128x10xf32, #tpu.memory_space<vmem>>, %arg18: memref<1x10xf32, #tpu.memory_space<vmem>>, %arg19: memref<1x1x10xf32, #tpu.memory_space<vmem>>) attributes {dimension_semantics = [#tpu.dimension_semantics<parallel>], iteration_bounds = array<i64: 2>, scalar_prefetch = 0 : i64, scratch_operands = 0 : i64, tpu.core_type = #tpu.core_type<tc>, window_params = [{transform_indices = @transform_0, window_bounds = array<i64: 1, 32, 256>}, {pipeline_mode = #tpu.pipeline_mode<synchronous>, transform_indices = @transform_1, window_bounds = array<i64: 24, 1>}, {pipeline_mode = #tpu.pipeline_mode<synchronous>, transform_indices = @transform_2, window_bounds = array<i64: 1024, 128>}, {pipeline_mode = #tpu.pipeline_mode<synchronous>, transform_indices = @transform_3, window_bounds = array<i64: 1, 128>}, {pipeline_mode = #tpu.pipeline_mode<synchronous>, transform_indices = @transform_4, window_bounds = array<i64: 1, 128>}, {pipeline_mode = #tpu.pipeline_mode<synchronous>, transform_indices = @transform_5, window_bounds = array<i64: 1152, 128>}, {transform_indices = @transform_6, window_bounds = array<i64: 1, 24, 64>}, {pipeline_mode = #tpu.pipeline_mode<synchronous>, transform_indices = @transform_7, window_bounds = array<i64: 64, 128>}, {pipeline_mode = #tpu.pipeline_mode<synchronous>, transform_indices = @transform_8, window_bounds = array<i64: 1, 128>}, {pipeline_mode = #tpu.pipeline_mode<synchronous>, transform_indices = @transform_9, window_bounds = array<i64: 1, 128>}, {pipeline_mode = #tpu.pipeline_mode<synchronous>, transform_indices = @transform_10, window_bounds = array<i64: 128, 8>}, {pipeline_mode = #tpu.pipeline_mode<synchronous>, transform_indices = @transform_11, window_bounds = array<i64: 1, 8>}, {pipeline_mode = #tpu.pipeline_mode<synchronous>, transform_indices = @transform_12, window_bounds = array<i64: 8, 128>}, {pipeline_mode = #tpu.pipeline_mode<synchronous>, transform_indices = @transform_13, window_bounds = array<i64: 1, 128>}, {pipeline_mode = #tpu.pipeline_mode<synchronous>, transform_indices = @transform_14, window_bounds = array<i64: 1, 128>}, {pipeline_mode = #tpu.pipeline_mode<synchronous>, transform_indices = @transform_15, window_bounds = array<i64: 1, 128>}, {pipeline_mode = #tpu.pipeline_mode<synchronous>, transform_indices = @transform_16, window_bounds = array<i64: 128, 10>}, {pipeline_mode = #tpu.pipeline_mode<synchronous>, transform_indices = @transform_17, window_bounds = array<i64: 1, 10>}, {transform_indices = @transform_18, window_bounds = array<i64: 1, 1, 10>}]} {
    %c0 = arith.constant 0 : index
    %c0_0 = arith.constant 0 : index
    %0 = vector.load %arg2[%c0, %c0_0] : memref<24x1xf32, #tpu.memory_space<vmem>>, vector<24x1xf32>
    %c0_1 = arith.constant 0 : index
    %c0_2 = arith.constant 0 : index
    %c0_3 = arith.constant 0 : index
    %1 = vector.load %arg1[%c0_1, %c0_2, %c0_3] : memref<1x32x256xbf16, #tpu.memory_space<vmem>>, vector<1x32x256xbf16>
    %2 = vector.shape_cast %1 : vector<1x32x256xbf16> to vector<32x256xbf16>
    %3 = vector.extract_strided_slice %2 {offsets = [0, 0], sizes = [24, 256], strides = [1, 1]} : vector<32x256xbf16> to vector<24x256xbf16>
    %4 = vector.extract_strided_slice %2 {offsets = [1, 0], sizes = [24, 256], strides = [1, 1]} : vector<32x256xbf16> to vector<24x256xbf16>
    %5 = vector.extract_strided_slice %2 {offsets = [6, 0], sizes = [24, 256], strides = [1, 1]} : vector<32x256xbf16> to vector<24x256xbf16>
    %6 = vector.extract_strided_slice %2 {offsets = [7, 0], sizes = [24, 256], strides = [1, 1]} : vector<32x256xbf16> to vector<24x256xbf16>
    %7 = tpu.concatenate %3, %4, %5, %6 in 1 : vector<24x256xbf16>, vector<24x256xbf16>, vector<24x256xbf16>, vector<24x256xbf16> -> vector<24x1024xbf16>
    %c0_4 = arith.constant 0 : index
    %c0_5 = arith.constant 0 : index
    %8 = vector.load %arg3[%c0_4, %c0_5] : memref<1024x128xbf16, #tpu.memory_space<vmem>>, vector<1024x128xbf16>
    %cst = arith.constant dense<0.000000e+00> : vector<24x128xf32>
    %9 = tpu.matmul %7, %8, %cst {dimension_numbers = #tpu.dot_dimension_numbers<[1], [0], [0], [1], [0, 0, 1, 1], [], []>} : vector<24x1024xbf16>, vector<1024x128xbf16>, vector<24x128xf32> -> vector<24x128xf32>
    %c0_6 = arith.constant 0 : index
    %c0_7 = arith.constant 0 : index
    %10 = vector.load %arg4[%c0_6, %c0_7] : memref<1x128xf32, #tpu.memory_space<vmem>>, vector<1x128xf32>
    %11 = vector.broadcast %10 : vector<1x128xf32> to vector<24x128xf32>
    %12 = arith.mulf %9, %11 : vector<24x128xf32>
    %c0_8 = arith.constant 0 : index
    %c0_9 = arith.constant 0 : index
    %13 = vector.load %arg5[%c0_8, %c0_9] : memref<1x128xf32, #tpu.memory_space<vmem>>, vector<1x128xf32>
    %14 = vector.broadcast %13 : vector<1x128xf32> to vector<24x128xf32>
    %15 = arith.addf %12, %14 : vector<24x128xf32>
    %cst_10 = arith.constant 0.000000e+00 : f32
    %16 = vector.broadcast %cst_10 : f32 to vector<24x128xf32>
    %17 = arith.maximumf %15, %16 : vector<24x128xf32>
    %18 = vector.broadcast %0 : vector<24x1xf32> to vector<24x128xf32>
    %19 = arith.mulf %17, %18 : vector<24x128xf32>
    %20 = arith.truncf %19 : vector<24x128xf32> to vector<24x128xbf16>
    %cst_11 = arith.constant 0.000000e+00 : bf16
    %21 = vector.broadcast %cst_11 : bf16 to vector<7x128xbf16>
    %22 = tpu.concatenate %21, %20, %21 in 0 : vector<7x128xbf16>, vector<24x128xbf16>, vector<7x128xbf16> -> vector<38x128xbf16>
    %23 = vector.extract_strided_slice %22 {offsets = [0, 0], sizes = [24, 128], strides = [1, 1]} : vector<38x128xbf16> to vector<24x128xbf16>
    %24 = vector.extract_strided_slice %22 {offsets = [1, 0], sizes = [24, 128], strides = [1, 1]} : vector<38x128xbf16> to vector<24x128xbf16>
    %25 = vector.extract_strided_slice %22 {offsets = [2, 0], sizes = [24, 128], strides = [1, 1]} : vector<38x128xbf16> to vector<24x128xbf16>
    %26 = vector.extract_strided_slice %22 {offsets = [6, 0], sizes = [24, 128], strides = [1, 1]} : vector<38x128xbf16> to vector<24x128xbf16>
    %27 = vector.extract_strided_slice %22 {offsets = [7, 0], sizes = [24, 128], strides = [1, 1]} : vector<38x128xbf16> to vector<24x128xbf16>
    %28 = vector.extract_strided_slice %22 {offsets = [8, 0], sizes = [24, 128], strides = [1, 1]} : vector<38x128xbf16> to vector<24x128xbf16>
    %29 = vector.extract_strided_slice %22 {offsets = [12, 0], sizes = [24, 128], strides = [1, 1]} : vector<38x128xbf16> to vector<24x128xbf16>
    %30 = vector.extract_strided_slice %22 {offsets = [13, 0], sizes = [24, 128], strides = [1, 1]} : vector<38x128xbf16> to vector<24x128xbf16>
    %31 = vector.extract_strided_slice %22 {offsets = [14, 0], sizes = [24, 128], strides = [1, 1]} : vector<38x128xbf16> to vector<24x128xbf16>
    %32 = tpu.concatenate %23, %24, %25, %26, %27, %28, %29, %30, %31 in 1 : vector<24x128xbf16>, vector<24x128xbf16>, vector<24x128xbf16>, vector<24x128xbf16>, vector<24x128xbf16>, vector<24x128xbf16>, vector<24x128xbf16>, vector<24x128xbf16>, vector<24x128xbf16> -> vector<24x1152xbf16>
    %c0_12 = arith.constant 0 : index
    %c0_13 = arith.constant 0 : index
    %33 = vector.load %arg6[%c0_12, %c0_13] : memref<1152x128xbf16, #tpu.memory_space<vmem>>, vector<1152x128xbf16>
    %cst_14 = arith.constant dense<0.000000e+00> : vector<24x128xf32>
    %34 = tpu.matmul %32, %33, %cst_14 {dimension_numbers = #tpu.dot_dimension_numbers<[1], [0], [0], [1], [0, 0, 1, 1], [], []>} : vector<24x1152xbf16>, vector<1152x128xbf16>, vector<24x128xf32> -> vector<24x128xf32>
    %c0_15 = arith.constant 0 : index
    %c0_16 = arith.constant 0 : index
    %c0_17 = arith.constant 0 : index
    %35 = vector.load %arg7[%c0_15, %c0_16, %c0_17] : memref<1x24x64xbf16, #tpu.memory_space<vmem>>, vector<1x24x64xbf16>
    %36 = vector.shape_cast %35 : vector<1x24x64xbf16> to vector<24x64xbf16>
    %c0_18 = arith.constant 0 : index
    %c0_19 = arith.constant 0 : index
    %37 = vector.load %arg8[%c0_18, %c0_19] : memref<64x128xbf16, #tpu.memory_space<vmem>>, vector<64x128xbf16>
    %cst_20 = arith.constant dense<0.000000e+00> : vector<24x128xf32>
    %38 = tpu.matmul %36, %37, %cst_20 {dimension_numbers = #tpu.dot_dimension_numbers<[1], [0], [0], [1], [0, 0, 1, 1], [], []>} : vector<24x64xbf16>, vector<64x128xbf16>, vector<24x128xf32> -> vector<24x128xf32>
    %c0_21 = arith.constant 0 : index
    %c0_22 = arith.constant 0 : index
    %39 = vector.load %arg9[%c0_21, %c0_22] : memref<1x128xf32, #tpu.memory_space<vmem>>, vector<1x128xf32>
    %40 = vector.broadcast %39 : vector<1x128xf32> to vector<24x128xf32>
    %41 = arith.mulf %38, %40 : vector<24x128xf32>
    %c0_23 = arith.constant 0 : index
    %c0_24 = arith.constant 0 : index
    %42 = vector.load %arg10[%c0_23, %c0_24] : memref<1x128xf32, #tpu.memory_space<vmem>>, vector<1x128xf32>
    %43 = vector.broadcast %42 : vector<1x128xf32> to vector<24x128xf32>
    %44 = arith.addf %41, %43 : vector<24x128xf32>
    %45 = vector.broadcast %0 : vector<24x1xf32> to vector<24x128xf32>
    %46 = arith.mulf %34, %45 : vector<24x128xf32>
    %cst_25 = arith.constant dense<0.000000e+00> : vector<128xf32>
    %47 = vector.multi_reduction <add>, %46, %cst_25 [0] : vector<24x128xf32> to vector<128xf32>
    %48 = vector.shape_cast %47 : vector<128xf32> to vector<1x128xf32>
    %cst_26 = arith.constant 6.250000e-02 : f32
    %49 = vector.broadcast %cst_26 : f32 to vector<1x128xf32>
    %50 = arith.mulf %48, %49 : vector<1x128xf32>
    %c0_27 = arith.constant 0 : index
    %c0_28 = arith.constant 0 : index
    %51 = vector.load %arg11[%c0_27, %c0_28] : memref<128x8xf32, #tpu.memory_space<vmem>>, vector<128x8xf32>
    %cst_29 = arith.constant dense<0.000000e+00> : vector<1x8xf32>
    %52 = tpu.matmul %50, %51, %cst_29 {dimension_numbers = #tpu.dot_dimension_numbers<[1], [0], [0], [1], [0, 0, 1, 1], [], []>} : vector<1x128xf32>, vector<128x8xf32>, vector<1x8xf32> -> vector<1x8xf32>
    %c0_30 = arith.constant 0 : index
    %c0_31 = arith.constant 0 : index
    %53 = vector.load %arg12[%c0_30, %c0_31] : memref<1x8xf32, #tpu.memory_space<vmem>>, vector<1x8xf32>
    %54 = arith.addf %52, %53 : vector<1x8xf32>
    %cst_32 = arith.constant 0.000000e+00 : f32
    %55 = vector.broadcast %cst_32 : f32 to vector<1x8xf32>
    %56 = arith.maximumf %54, %55 : vector<1x8xf32>
    %c0_33 = arith.constant 0 : index
    %c0_34 = arith.constant 0 : index
    %57 = vector.load %arg13[%c0_33, %c0_34] : memref<8x128xf32, #tpu.memory_space<vmem>>, vector<8x128xf32>
    %cst_35 = arith.constant dense<0.000000e+00> : vector<1x128xf32>
    %58 = tpu.matmul %56, %57, %cst_35 {dimension_numbers = #tpu.dot_dimension_numbers<[1], [0], [0], [1], [0, 0, 1, 1], [], []>} : vector<1x8xf32>, vector<8x128xf32>, vector<1x128xf32> -> vector<1x128xf32>
    %c0_36 = arith.constant 0 : index
    %c0_37 = arith.constant 0 : index
    %59 = vector.load %arg14[%c0_36, %c0_37] : memref<1x128xf32, #tpu.memory_space<vmem>>, vector<1x128xf32>
    %60 = arith.addf %58, %59 : vector<1x128xf32>
    %61 = arith.negf %60 : vector<1x128xf32>
    %62 = math.exp %61 : vector<1x128xf32>
    %cst_38 = arith.constant 1.000000e+00 : f32
    %63 = vector.broadcast %cst_38 : f32 to vector<1x128xf32>
    %64 = arith.addf %63, %62 : vector<1x128xf32>
    %65 = arith.divf %63, %64 : vector<1x128xf32>
    %66 = vector.broadcast %65 : vector<1x128xf32> to vector<24x128xf32>
    %67 = arith.mulf %34, %66 : vector<24x128xf32>
    %68 = arith.addf %67, %44 : vector<24x128xf32>
    %c0_39 = arith.constant 0 : index
    %c0_40 = arith.constant 0 : index
    %69 = vector.load %arg15[%c0_39, %c0_40] : memref<1x128xf32, #tpu.memory_space<vmem>>, vector<1x128xf32>
    %70 = vector.broadcast %69 : vector<1x128xf32> to vector<24x128xf32>
    %71 = arith.mulf %68, %70 : vector<24x128xf32>
    %c0_41 = arith.constant 0 : index
    %c0_42 = arith.constant 0 : index
    %72 = vector.load %arg16[%c0_41, %c0_42] : memref<1x128xf32, #tpu.memory_space<vmem>>, vector<1x128xf32>
    %73 = vector.broadcast %72 : vector<1x128xf32> to vector<24x128xf32>
    %74 = arith.addf %71, %73 : vector<24x128xf32>
    %cst_43 = arith.constant 0.000000e+00 : f32
    %75 = vector.broadcast %cst_43 : f32 to vector<24x128xf32>
    %76 = arith.maximumf %74, %75 : vector<24x128xf32>
    %77 = vector.broadcast %0 : vector<24x1xf32> to vector<24x128xf32>
    %78 = arith.mulf %76, %77 : vector<24x128xf32>
    %cst_44 = arith.constant dense<0.000000e+00> : vector<128xf32>
    %79 = vector.multi_reduction <add>, %78, %cst_44 [0] : vector<24x128xf32> to vector<128xf32>
    %80 = vector.shape_cast %79 : vector<128xf32> to vector<1x128xf32>
    %cst_45 = arith.constant 6.250000e-02 : f32
    %81 = vector.broadcast %cst_45 : f32 to vector<1x128xf32>
    %82 = arith.mulf %80, %81 : vector<1x128xf32>
    %c0_46 = arith.constant 0 : index
    %c0_47 = arith.constant 0 : index
    %83 = vector.load %arg17[%c0_46, %c0_47] : memref<128x10xf32, #tpu.memory_space<vmem>>, vector<128x10xf32>
    %cst_48 = arith.constant dense<0.000000e+00> : vector<1x10xf32>
    %84 = tpu.matmul %82, %83, %cst_48 {dimension_numbers = #tpu.dot_dimension_numbers<[1], [0], [0], [1], [0, 0, 1, 1], [], []>} : vector<1x128xf32>, vector<128x10xf32>, vector<1x10xf32> -> vector<1x10xf32>
    %c0_49 = arith.constant 0 : index
    %c0_50 = arith.constant 0 : index
    %85 = vector.load %arg18[%c0_49, %c0_50] : memref<1x10xf32, #tpu.memory_space<vmem>>, vector<1x10xf32>
    %86 = arith.addf %84, %85 : vector<1x10xf32>
    %c0_51 = arith.constant 0 : index
    %c0_52 = arith.constant 0 : index
    %c0_53 = arith.constant 0 : index
    %87 = vector.load %arg19[%c0_51, %c0_52, %c0_53] : memref<1x1x10xf32, #tpu.memory_space<vmem>>, vector<1x1x10xf32>
    %88 = vector.shape_cast %87 : vector<1x1x10xf32> to vector<1x10xf32>
    %89 = vector.shape_cast %86 : vector<1x10xf32> to vector<1x1x10xf32>
    tpu.vector_store %arg19[%c0_51, %c0_52, %c0_53], %89 {strides = array<i32>} : memref<1x1x10xf32, #tpu.memory_space<vmem>>, vector<1x1x10xf32>,
    return
  }
  func.func @transform_0(%arg0: i32) -> (i32, i32, i32) {
    %c0_i32 = arith.constant 0 : i32
    %c0_i32_0 = arith.constant 0 : i32
    %c0_i32_1 = arith.constant 0 : i32
    return %arg0, %c0_i32, %c0_i32_0 : i32, i32, i32
  }
  func.func @transform_1(%arg0: i32) -> (i32, i32) {
    %c0_i32 = arith.constant 0 : i32
    %c0_i32_0 = arith.constant 0 : i32
    %c0_i32_1 = arith.constant 0 : i32
    return %c0_i32, %c0_i32_0 : i32, i32
  }
  func.func @transform_2(%arg0: i32) -> (i32, i32) {
    %c0_i32 = arith.constant 0 : i32
    %c0_i32_0 = arith.constant 0 : i32
    %c0_i32_1 = arith.constant 0 : i32
    return %c0_i32, %c0_i32_0 : i32, i32
  }
  func.func @transform_3(%arg0: i32) -> (i32, i32) {
    %c0_i32 = arith.constant 0 : i32
    %c0_i32_0 = arith.constant 0 : i32
    %c0_i32_1 = arith.constant 0 : i32
    return %c0_i32, %c0_i32_0 : i32, i32
  }
  func.func @transform_4(%arg0: i32) -> (i32, i32) {
    %c0_i32 = arith.constant 0 : i32
    %c0_i32_0 = arith.constant 0 : i32
    %c0_i32_1 = arith.constant 0 : i32
    return %c0_i32, %c0_i32_0 : i32, i32
  }
  func.func @transform_5(%arg0: i32) -> (i32, i32) {
    %c0_i32 = arith.constant 0 : i32
    %c0_i32_0 = arith.constant 0 : i32
    %c0_i32_1 = arith.constant 0 : i32
    return %c0_i32, %c0_i32_0 : i32, i32
  }
  func.func @transform_6(%arg0: i32) -> (i32, i32, i32) {
    %c0_i32 = arith.constant 0 : i32
    %c0_i32_0 = arith.constant 0 : i32
    %c0_i32_1 = arith.constant 0 : i32
    return %arg0, %c0_i32, %c0_i32_0 : i32, i32, i32
  }
  func.func @transform_7(%arg0: i32) -> (i32, i32) {
    %c0_i32 = arith.constant 0 : i32
    %c0_i32_0 = arith.constant 0 : i32
    %c0_i32_1 = arith.constant 0 : i32
    return %c0_i32, %c0_i32_0 : i32, i32
  }
  func.func @transform_8(%arg0: i32) -> (i32, i32) {
    %c0_i32 = arith.constant 0 : i32
    %c0_i32_0 = arith.constant 0 : i32
    %c0_i32_1 = arith.constant 0 : i32
    return %c0_i32, %c0_i32_0 : i32, i32
  }
  func.func @transform_9(%arg0: i32) -> (i32, i32) {
    %c0_i32 = arith.constant 0 : i32
    %c0_i32_0 = arith.constant 0 : i32
    %c0_i32_1 = arith.constant 0 : i32
    return %c0_i32, %c0_i32_0 : i32, i32
  }
  func.func @transform_10(%arg0: i32) -> (i32, i32) {
    %c0_i32 = arith.constant 0 : i32
    %c0_i32_0 = arith.constant 0 : i32
    %c0_i32_1 = arith.constant 0 : i32
    return %c0_i32, %c0_i32_0 : i32, i32
  }
  func.func @transform_11(%arg0: i32) -> (i32, i32) {
    %c0_i32 = arith.constant 0 : i32
    %c0_i32_0 = arith.constant 0 : i32
    %c0_i32_1 = arith.constant 0 : i32
    return %c0_i32, %c0_i32_0 : i32, i32
  }
  func.func @transform_12(%arg0: i32) -> (i32, i32) {
    %c0_i32 = arith.constant 0 : i32
    %c0_i32_0 = arith.constant 0 : i32
    %c0_i32_1 = arith.constant 0 : i32
    return %c0_i32, %c0_i32_0 : i32, i32
  }
  func.func @transform_13(%arg0: i32) -> (i32, i32) {
    %c0_i32 = arith.constant 0 : i32
    %c0_i32_0 = arith.constant 0 : i32
    %c0_i32_1 = arith.constant 0 : i32
    return %c0_i32, %c0_i32_0 : i32, i32
  }
  func.func @transform_14(%arg0: i32) -> (i32, i32) {
    %c0_i32 = arith.constant 0 : i32
    %c0_i32_0 = arith.constant 0 : i32
    %c0_i32_1 = arith.constant 0 : i32
    return %c0_i32, %c0_i32_0 : i32, i32
  }
  func.func @transform_15(%arg0: i32) -> (i32, i32) {
    %c0_i32 = arith.constant 0 : i32
    %c0_i32_0 = arith.constant 0 : i32
    %c0_i32_1 = arith.constant 0 : i32
    return %c0_i32, %c0_i32_0 : i32, i32
  }
  func.func @transform_16(%arg0: i32) -> (i32, i32) {
    %c0_i32 = arith.constant 0 : i32
    %c0_i32_0 = arith.constant 0 : i32
    %c0_i32_1 = arith.constant 0 : i32
    return %c0_i32, %c0_i32_0 : i32, i32
  }
  func.func @transform_17(%arg0: i32) -> (i32, i32) {
    %c0_i32 = arith.constant 0 : i32
    %c0_i32_0 = arith.constant 0 : i32
    %c0_i32_1 = arith.constant 0 : i32
    return %c0_i32, %c0_i32_0 : i32, i32
  }
  func.func @transform_18(%arg0: i32) -> (i32, i32, i32) {
    %c0_i32 = arith.constant 0 : i32
    %c0_i32_0 = arith.constant 0 : i32
    %c0_i32_1 = arith.constant 0 : i32
    return %arg0, %c0_i32, %c0_i32_0 : i32, i32, i32
  }
}

</mosaic_0001>

<llo_original>
// kernel: cifar_se_preact_resnet_forward.3
$region0: #{cifar_se_preact_resnet_forward.3}
  #allocation0 [shape = 'u32[]', space=smem, size = 0x4, offset = 0x4, fixed_abs, tag = 'smem constant byte address 0x4 - core index']
  #allocation1 [shape = 'u32[72,128]{1,0:T(1,128)}', space=vmem, size = 0x9000, scoped, tag = 'internal scratch']
  %s0 = inlined_call_operand.vmem [shape: bf16[2,326,3], index: 0, kind: input, shape index: {}]
  %s1 = inlined_call_operand.vmem [shape: f32[288,1], index: 1, kind: input, shape index: {}]
  %s2 = inlined_call_operand.vmem [shape: bf16[9,3,32], index: 2, kind: input, shape index: {}]
  %s3 = inlined_call_operand.vmem [shape: f32[1,32], index: 3, kind: input, shape index: {}]
  %s4 = inlined_call_operand.vmem [shape: f32[1,32], index: 4, kind: input, shape index: {}]
  %s5 = inlined_call_operand.vmem [shape: bf16[288,32], index: 5, kind: input, shape index: {}]
  %s6 = inlined_call_operand.vmem [shape: f32[1,32], index: 6, kind: input, shape index: {}]
  %s7 = inlined_call_operand.vmem [shape: f32[1,32], index: 7, kind: input, shape index: {}]
  %s8 = inlined_call_operand.vmem [shape: bf16[288,32], index: 8, kind: input, shape index: {}]
  %s9 = inlined_call_operand.vmem [shape: f32[32,2], index: 9, kind: input, shape index: {}]
  %s10 = inlined_call_operand.vmem [shape: f32[1,2], index: 10, kind: input, shape index: {}]
  %s11 = inlined_call_operand.vmem [shape: f32[2,32], index: 11, kind: input, shape index: {}]
  %s12 = inlined_call_operand.vmem [shape: f32[1,32], index: 12, kind: input, shape index: {}]
  %s13 = inlined_call_operand.vmem [shape: bf16[2,288,32], index: 13, kind: output, shape index: {}]
  %s14 = sld [smem:[#allocation0]]
  $region85: #{cifar_se_preact_resnet_forward.3} parent=0
    _
  %s16 = ssub.s32 1, %s14
  %s17 = scalar_select 0, %s16, %s14
  loop: start=0, step=1, limit=4
  $region2: #{cifar_se_preact_resnet_forward.3} parent=0 // loop_pre_header
    _
  $region3: #{cifar_se_preact_resnet_forward.3} parent=0 // loop_header
    %s19 = sphi 0, %s23
    %p20 = scmp.ge.s32.totalorder %s19, 4
    %s29 = sphi 0, %s31
    %s32 = sphi 0, %s29
    %s33 = sphi 0, %s32
    %s49 = sphi 0, %s33
    %s53 = sphi 0, %s53
    %s55 = sphi 0, %s53
    %s56 = sphi 0, %s55
    %s70 = sphi 0, %s56
    %s74 = sphi 0, %s74
    %s76 = sphi 0, %s74
    %s77 = sphi 0, %s76
    %s91 = sphi 0, %s77
    %s95 = sphi 0, %s95
    %s97 = sphi 0, %s95
    %s98 = sphi 0, %s97
    %s112 = sphi 0, %s98
    %s116 = sphi 0, %s116
    %s118 = sphi 0, %s116
    %s119 = sphi 0, %s118
    %s133 = sphi 0, %s119
    %s137 = sphi 0, %s137
    %s139 = sphi 0, %s137
    %s140 = sphi 0, %s139
    %s154 = sphi 0, %s140
    %s158 = sphi 0, %s158
    %s160 = sphi 0, %s158
    %s161 = sphi 0, %s160
    %s175 = sphi 0, %s161
    %s179 = sphi 0, %s179
    %s181 = sphi 0, %s179
    %s182 = sphi 0, %s181
    %s196 = sphi 0, %s182
    %s200 = sphi 0, %s200
    %s202 = sphi 0, %s200
    %s203 = sphi 0, %s202
    %s217 = sphi 0, %s203
    %s221 = sphi 0, %s221
    %s223 = sphi 0, %s221
    %s224 = sphi 0, %s223
    %s238 = sphi 0, %s224
    %s242 = sphi 0, %s242
    %s244 = sphi 0, %s242
    %s245 = sphi 0, %s244
    %s259 = sphi 0, %s245
    %s263 = sphi 0, %s263
    %s265 = sphi 0, %s263
    %s266 = sphi 0, %s265
    %s280 = sphi 0, %s266
    %s284 = sphi 0, %s284
    %s286 = sphi 0, %s284
    %s287 = sphi 0, %s286
    %s301 = sphi 0, %s287
    %s307 = sphi 0, %s309
    %s310 = sphi 0, %s307
    %s311 = sphi 0, %s310
    %s327 = sphi 0, %s311
  $region4: #{cifar_se_preact_resnet_forward.3} parent=0 // loop_header_branch
    %22 = sbr.rel (%p20) target = $region8
  $region5: #{cifar_se_preact_resnet_forward.3} parent=0 // loop_body
    %s24 = ssub.s32 %s19, 1
    %s25 = ssub.s32 %s19, 2
    %s26 = sadd.s32 %s19, 1
    %s27 = ssub.s32 %s19, %s26
    %p28 = scmp.eq.s32.totalorder %s27, 0
    %s30 = sadd.s32 %s29, 1
    %s31 = scalar_select %p28, %s29, %s30
    %p34 = pneg %p28
    %p35 = scmp.eq.s32.totalorder %s19, 1
    %p36 = por %p34, %p35
    %p37 = scmp.ne.s32.totalorder %s29, %s32
    %p38 = scmp.eq.s32.totalorder %s19, 0
    %p39 = por %p37, %p38
    %p40 = scmp.ne.s32.totalorder %s29, %s32
    %p41 = scmp.eq.s32.totalorder %s24, 1
    %p42 = por %p40, %p41
    %p43 = scmp.ne.s32.totalorder %s32, %s33
    %p44 = scmp.eq.s32.totalorder %s24, 0
    %p45 = por %p43, %p44
    %p46 = scmp.ne.s32.totalorder %s32, %s33
    %p47 = scmp.eq.s32.totalorder %s25, 1
    %p48 = por %p46, %p47
    %p50 = scmp.ne.s32.totalorder %s33, %s49
    %p51 = scmp.eq.s32.totalorder %s25, 0
    %p52 = por %p50, %p51
    %s54 = sadd.s32 %s53, 1
    %p57 = scmp.eq.s32.totalorder %s19, 1
    %p58 = scmp.ne.s32.totalorder %s53, %s55
    %p59 = scmp.eq.s32.totalorder %s19, 0
    %p60 = por %p58, %p59
    %p61 = scmp.ne.s32.totalorder %s53, %s55
    %p62 = scmp.eq.s32.totalorder %s24, 1
    %p63 = por %p61, %p62
    %p64 = scmp.ne.s32.totalorder %s55, %s56
    %p65 = scmp.eq.s32.totalorder %s24, 0
    %p66 = por %p64, %p65
    %p67 = scmp.ne.s32.totalorder %s55, %s56
    %p68 = scmp.eq.s32.totalorder %s25, 1
    %p69 = por %p67, %p68
    %p71 = scmp.ne.s32.totalorder %s56, %s70
    %p72 = scmp.eq.s32.totalorder %s25, 0
    %p73 = por %p71, %p72
    %s75 = sadd.s32 %s74, 1
    %p78 = scmp.eq.s32.totalorder %s19, 1
    %p79 = scmp.ne.s32.totalorder %s74, %s76
    %p80 = scmp.eq.s32.totalorder %s19, 0
    %p81 = por %p79, %p80
    %p82 = scmp.ne.s32.totalorder %s74, %s76
    %p83 = scmp.eq.s32.totalorder %s24, 1
    %p84 = por %p82, %p83
    %p85 = scmp.ne.s32.totalorder %s76, %s77
    %p86 = scmp.eq.s32.totalorder %s24, 0
    %p87 = por %p85, %p86
    %p88 = scmp.ne.s32.totalorder %s76, %s77
    %p89 = scmp.eq.s32.totalorder %s25, 1
    %p90 = por %p88, %p89
    %p92 = scmp.ne.s32.totalorder %s77, %s91
    %p93 = scmp.eq.s32.totalorder %s25, 0
    %p94 = por %p92, %p93
    %s96 = sadd.s32 %s95, 1
    %p99 = scmp.eq.s32.totalorder %s19, 1
    %p100 = scmp.ne.s32.totalorder %s95, %s97
    %p101 = scmp.eq.s32.totalorder %s19, 0
    %p102 = por %p100, %p101
    %p103 = scmp.ne.s32.totalorder %s95, %s97
    %p104 = scmp.eq.s32.totalorder %s24, 1
    %p105 = por %p103, %p104
    %p106 = scmp.ne.s32.totalorder %s97, %s98
    %p107 = scmp.eq.s32.totalorder %s24, 0
    %p108 = por %p106, %p107
    %p109 = scmp.ne.s32.totalorder %s97, %s98
    %p110 = scmp.eq.s32.totalorder %s25, 1
    %p111 = por %p109, %p110
    %p113 = scmp.ne.s32.totalorder %s98, %s112
    %p114 = scmp.eq.s32.totalorder %s25, 0
    %p115 = por %p113, %p114
    %s117 = sadd.s32 %s116, 1
    %p120 = scmp.eq.s32.totalorder %s19, 1
    %p121 = scmp.ne.s32.totalorder %s116, %s118
    %p122 = scmp.eq.s32.totalorder %s19, 0
    %p123 = por %p121, %p122
    %p124 = scmp.ne.s32.totalorder %s116, %s118
    %p125 = scmp.eq.s32.totalorder %s24, 1
    %p126 = por %p124, %p125
    %p127 = scmp.ne.s32.totalorder %s118, %s119
    %p128 = scmp.eq.s32.totalorder %s24, 0
    %p129 = por %p127, %p128
    %p130 = scmp.ne.s32.totalorder %s118, %s119
    %p131 = scmp.eq.s32.totalorder %s25, 1
    %p132 = por %p130, %p131
    %p134 = scmp.ne.s32.totalorder %s119, %s133
    %p135 = scmp.eq.s32.totalorder %s25, 0
    %p136 = por %p134, %p135
    %s138 = sadd.s32 %s137, 1
    %p141 = scmp.eq.s32.totalorder %s19, 1
    %p142 = scmp.ne.s32.totalorder %s137, %s139
    %p143 = scmp.eq.s32.totalorder %s19, 0
    %p144 = por %p142, %p143
    %p145 = scmp.ne.s32.totalorder %s137, %s139
    %p146 = scmp.eq.s32.totalorder %s24, 1
    %p147 = por %p145, %p146
    %p148 = scmp.ne.s32.totalorder %s139, %s140
    %p149 = scmp.eq.s32.totalorder %s24, 0
    %p150 = por %p148, %p149
    %p151 = scmp.ne.s32.totalorder %s139, %s140
    %p152 = scmp.eq.s32.totalorder %s25, 1
    %p153 = por %p151, %p152
    %p155 = scmp.ne.s32.totalorder %s140, %s154
    %p156 = scmp.eq.s32.totalorder %s25, 0
    %p157 = por %p155, %p156
    %s159 = sadd.s32 %s158, 1
    %p162 = scmp.eq.s32.totalorder %s19, 1
    %p163 = scmp.ne.s32.totalorder %s158, %s160
    %p164 = scmp.eq.s32.totalorder %s19, 0
    %p165 = por %p163, %p164
    %p166 = scmp.ne.s32.totalorder %s158, %s160
    %p167 = scmp.eq.s32.totalorder %s24, 1
    %p168 = por %p166, %p167
    %p169 = scmp.ne.s32.totalorder %s160, %s161
    %p170 = scmp.eq.s32.totalorder %s24, 0
    %p171 = por %p169, %p170
    %p172 = scmp.ne.s32.totalorder %s160, %s161
    %p173 = scmp.eq.s32.totalorder %s25, 1
    %p174 = por %p172, %p173
    %p176 = scmp.ne.s32.totalorder %s161, %s175
    %p177 = scmp.eq.s32.totalorder %s25, 0
    %p178 = por %p176, %p177
    %s180 = sadd.s32 %s179, 1
    %p183 = scmp.eq.s32.totalorder %s19, 1
    %p184 = scmp.ne.s32.totalorder %s179, %s181
    %p185 = scmp.eq.s32.totalorder %s19, 0
    %p186 = por %p184, %p185
    %p187 = scmp.ne.s32.totalorder %s179, %s181
    %p188 = scmp.eq.s32.totalorder %s24, 1
    %p189 = por %p187, %p188
    %p190 = scmp.ne.s32.totalorder %s181, %s182
    %p191 = scmp.eq.s32.totalorder %s24, 0
    %p192 = por %p190, %p191
    %p193 = scmp.ne.s32.totalorder %s181, %s182
    %p194 = scmp.eq.s32.totalorder %s25, 1
    %p195 = por %p193, %p194
    %p197 = scmp.ne.s32.totalorder %s182, %s196
    %p198 = scmp.eq.s32.totalorder %s25, 0
    %p199 = por %p197, %p198
    %s201 = sadd.s32 %s200, 1
    %p204 = scmp.eq.s32.totalorder %s19, 1
    %p205 = scmp.ne.s32.totalorder %s200, %s202
    %p206 = scmp.eq.s32.totalorder %s19, 0
    %p207 = por %p205, %p206
    %p208 = scmp.ne.s32.totalorder %s200, %s202
    %p209 = scmp.eq.s32.totalorder %s24, 1
    %p210 = por %p208, %p209
    %p211 = scmp.ne.s32.totalorder %s202, %s203
    %p212 = scmp.eq.s32.totalorder %s24, 0
    %p213 = por %p211, %p212
    %p214 = scmp.ne.s32.totalorder %s202, %s203
    %p215 = scmp.eq.s32.totalorder %s25, 1
    %p216 = por %p214, %p215
    %p218 = scmp.ne.s32.totalorder %s203, %s217
    %p219 = scmp.eq.s32.totalorder %s25, 0
    %p220 = por %p218, %p219
    %s222 = sadd.s32 %s221, 1
    %p225 = scmp.eq.s32.totalorder %s19, 1
    %p226 = scmp.ne.s32.totalorder %s221, %s223
    %p227 = scmp.eq.s32.totalorder %s19, 0
    %p228 = por %p226, %p227
    %p229 = scmp.ne.s32.totalorder %s221, %s223
    %p230 = scmp.eq.s32.totalorder %s24, 1
    %p231 = por %p229, %p230
    %p232 = scmp.ne.s32.totalorder %s223, %s224
    %p233 = scmp.eq.s32.totalorder %s24, 0
    %p234 = por %p232, %p233
    %p235 = scmp.ne.s32.totalorder %s223, %s224
    %p236 = scmp.eq.s32.totalorder %s25, 1
    %p237 = por %p235, %p236
    %p239 = scmp.ne.s32.totalorder %s224, %s238
    %p240 = scmp.eq.s32.totalorder %s25, 0
    %p241 = por %p239, %p240
    %s243 = sadd.s32 %s242, 1
    %p246 = scmp.eq.s32.totalorder %s19, 1
    %p247 = scmp.ne.s32.totalorder %s242, %s244
    %p248 = scmp.eq.s32.totalorder %s19, 0
    %p249 = por %p247, %p248
    %p250 = scmp.ne.s32.totalorder %s242, %s244
    %p251 = scmp.eq.s32.totalorder %s24, 1
    %p252 = por %p250, %p251
    %p253 = scmp.ne.s32.totalorder %s244, %s245
    %p254 = scmp.eq.s32.totalorder %s24, 0
    %p255 = por %p253, %p254
    %p256 = scmp.ne.s32.totalorder %s244, %s245
    %p257 = scmp.eq.s32.totalorder %s25, 1
    %p258 = por %p256, %p257
    %p260 = scmp.ne.s32.totalorder %s245, %s259
    %p261 = scmp.eq.s32.totalorder %s25, 0
    %p262 = por %p260, %p261
    %s264 = sadd.s32 %s263, 1
    %p267 = scmp.eq.s32.totalorder %s19, 1
    %p268 = scmp.ne.s32.totalorder %s263, %s265
    %p269 = scmp.eq.s32.totalorder %s19, 0
    %p270 = por %p268, %p269
    %p271 = scmp.ne.s32.totalorder %s263, %s265
    %p272 = scmp.eq.s32.totalorder %s24, 1
    %p273 = por %p271, %p272
    %p274 = scmp.ne.s32.totalorder %s265, %s266
    %p275 = scmp.eq.s32.totalorder %s24, 0
    %p276 = por %p274, %p275
    %p277 = scmp.ne.s32.totalorder %s265, %s266
    %p278 = scmp.eq.s32.totalorder %s25, 1
    %p279 = por %p277, %p278
    %p281 = scmp.ne.s32.totalorder %s266, %s280
    %p282 = scmp.eq.s32.totalorder %s25, 0
    %p283 = por %p281, %p282
    %s285 = sadd.s32 %s284, 1
    %p288 = scmp.eq.s32.totalorder %s19, 1
    %p289 = scmp.ne.s32.totalorder %s284, %s286
    %p290 = scmp.eq.s32.totalorder %s19, 0
    %p291 = por %p289, %p290
    %p292 = scmp.ne.s32.totalorder %s284, %s286
    %p293 = scmp.eq.s32.totalorder %s24, 1
    %p294 = por %p292, %p293
    %p295 = scmp.ne.s32.totalorder %s286, %s287
    %p296 = scmp.eq.s32.totalorder %s24, 0
    %p297 = por %p295, %p296
    %p298 = scmp.ne.s32.totalorder %s286, %s287
    %p299 = scmp.eq.s32.totalorder %s25, 1
    %p300 = por %p298, %p299
    %p302 = scmp.ne.s32.totalorder %s287, %s301
    %p303 = scmp.eq.s32.totalorder %s25, 0
    %p304 = por %p302, %p303
    %s305 = ssub.s32 %s19, %s26
    %p306 = scmp.eq.s32.totalorder %s305, 0
    %s308 = sadd.s32 %s307, 1
    %s309 = scalar_select %p306, %s307, %s308
    %p312 = pneg %p306
    %p313 = scmp.eq.s32.totalorder %s19, 1
    %p314 = por %p312, %p313
    %p315 = scmp.ne.s32.totalorder %s307, %s310
    %p316 = scmp.eq.s32.totalorder %s19, 0
    %p317 = por %p315, %p316
    %p318 = scmp.ne.s32.totalorder %s307, %s310
    %p319 = scmp.eq.s32.totalorder %s24, 1
    %p320 = por %p318, %p319
    %p321 = scmp.ne.s32.totalorder %s310, %s311
    %p322 = scmp.eq.s32.totalorder %s24, 0
    %p323 = por %p321, %p322
    %p324 = scmp.ne.s32.totalorder %s310, %s311
    %p325 = scmp.eq.s32.totalorder %s25, 1
    %p326 = por %p324, %p325
    %p328 = scmp.ne.s32.totalorder %s311, %s327
    %p329 = scmp.eq.s32.totalorder %s25, 0
    %p330 = por %p328, %p329
    %p331 = scmp.le.s32.totalorder 1, %s19
    %p332 = scmp.lt.s32.totalorder %s19, 3
    %p333 = pnand %p331, %p332
    %p334 = pneg %p333
    // Predicated region
    $region9: #{cifar_se_preact_resnet_forward.3} parent=5 // pred_check
      _
    $region10: #{cifar_se_preact_resnet_forward.3} parent=5 // pred_check_branch
      %336 = sbr.rel (%p333) target = $region12
    $region11: #{cifar_se_preact_resnet_forward.3} parent=5 // pred_region
      %s337 = ssub.s32 %s19, 1
      // Predicated region
      $region13: #{cifar_se_preact_resnet_forward.3} parent=11 // pred_check
        %p338 = pneg %p66
      $region14: #{cifar_se_preact_resnet_forward.3} parent=11 // pred_check_branch
        %340 = sbr.rel (%p338) target = $region16
      $region15: #{cifar_se_preact_resnet_forward.3} parent=11 // pred_region
        _
      $region16: #{cifar_se_preact_resnet_forward.3} parent=11 // pred_fallthru
        _
      // Predicated region
      $region17: #{cifar_se_preact_resnet_forward.3} parent=11 // pred_check
        %p341 = pneg %p87
      $region18: #{cifar_se_preact_resnet_forward.3} parent=11 // pred_check_branch
        %343 = sbr.rel (%p341) target = $region20
      $region19: #{cifar_se_preact_resnet_forward.3} parent=11 // pred_region
        _
      $region20: #{cifar_se_preact_resnet_forward.3} parent=11 // pred_fallthru
        _
      // Predicated region
      $region21: #{cifar_se_preact_resnet_forward.3} parent=11 // pred_check
        %p344 = pneg %p108
      $region22: #{cifar_se_preact_resnet_forward.3} parent=11 // pred_check_branch
        %346 = sbr.rel (%p344) target = $region24
      $region23: #{cifar_se_preact_resnet_forward.3} parent=11 // pred_region
        _
      $region24: #{cifar_se_preact_resnet_forward.3} parent=11 // pred_fallthru
        _
      // Predicated region
      $region25: #{cifar_se_preact_resnet_forward.3} parent=11 // pred_check
        %p347 = pneg %p129
      $region26: #{cifar_se_preact_resnet_forward.3} parent=11 // pred_check_branch
        %349 = sbr.rel (%p347) target = $region28
      $region27: #{cifar_se_preact_resnet_forward.3} parent=11 // pred_region
        _
      $region28: #{cifar_se_preact_resnet_forward.3} parent=11 // pred_fallthru
        _
      // Predicated region
      $region29: #{cifar_se_preact_resnet_forward.3} parent=11 // pred_check
        %p350 = pneg %p150
      $region30: #{cifar_se_preact_resnet_forward.3} parent=11 // pred_check_branch
        %352 = sbr.rel (%p350) target = $region32
      $region31: #{cifar_se_preact_resnet_forward.3} parent=11 // pred_region
        _
      $region32: #{cifar_se_preact_resnet_forward.3} parent=11 // pred_fallthru
        _
      // Predicated region
      $region33: #{cifar_se_preact_resnet_forward.3} parent=11 // pred_check
        %p353 = pneg %p171
      $region34: #{cifar_se_preact_resnet_forward.3} parent=11 // pred_check_branch
        %355 = sbr.rel (%p353) target = $region36
      $region35: #{cifar_se_preact_resnet_forward.3} parent=11 // pred_region
        _
      $region36: #{cifar_se_preact_resnet_forward.3} parent=11 // pred_fallthru
        _
      // Predicated region
      $region37: #{cifar_se_preact_resnet_forward.3} parent=11 // pred_check
        %p356 = pneg %p192
      $region38: #{cifar_se_preact_resnet_forward.3} parent=11 // pred_check_branch
        %358 = sbr.rel (%p356) target = $region40
      $region39: #{cifar_se_preact_resnet_forward.3} parent=11 // pred_region
        _
      $region40: #{cifar_se_preact_resnet_forward.3} parent=11 // pred_fallthru
        _
      // Predicated region
      $region41: #{cifar_se_preact_resnet_forward.3} parent=11 // pred_check
        %p359 = pneg %p213
      $region42: #{cifar_se_preact_resnet_forward.3} parent=11 // pred_check_branch
        %361 = sbr.rel (%p359) target = $region44
      $region43: #{cifar_se_preact_resnet_forward.3} parent=11 // pred_region
        _
      $region44: #{cifar_se_preact_resnet_forward.3} parent=11 // pred_fallthru
        _
      // Predicated region
      $region45: #{cifar_se_preact_resnet_forward.3} parent=11 // pred_check
        %p362 = pneg %p234
      $region46: #{cifar_se_preact_resnet_forward.3} parent=11 // pred_check_branch
        %364 = sbr.rel (%p362) target = $region48
      $region47: #{cifar_se_preact_resnet_forward.3} parent=11 // pred_region
        _
      $region48: #{cifar_se_preact_resnet_forward.3} parent=11 // pred_fallthru
        _
      // Predicated region
      $region49: #{cifar_se_preact_resnet_forward.3} parent=11 // pred_check
        %p365 = pneg %p255
      $region50: #{cifar_se_preact_resnet_forward.3} parent=11 // pred_check_branch
        %367 = sbr.rel (%p365) target = $region52
      $region51: #{cifar_se_preact_resnet_forward.3} parent=11 // pred_region
        _
      $region52: #{cifar_se_preact_resnet_forward.3} parent=11 // pred_fallthru
        _
      // Predicated region
      $region53: #{cifar_se_preact_resnet_forward.3} parent=11 // pred_check
        %p368 = pneg %p276
      $region54: #{cifar_se_preact_resnet_forward.3} parent=11 // pred_check_branch
        %370 = sbr.rel (%p368) target = $region56
      $region55: #{cifar_se_preact_resnet_forward.3} parent=11 // pred_region
        _
      $region56: #{cifar_se_preact_resnet_forward.3} parent=11 // pred_fallthru
        _
      // Predicated region
      $region57: #{cifar_se_preact_resnet_forward.3} parent=11 // pred_check
        %p371 = pneg %p297
      $region58: #{cifar_se_preact_resnet_forward.3} parent=11 // pred_check_branch
        %373 = sbr.rel (%p371) target = $region60
      $region59: #{cifar_se_preact_resnet_forward.3} parent=11 // pred_region
        _
      $region60: #{cifar_se_preact_resnet_forward.3} parent=11 // pred_fallthru
        _
    $region12: #{cifar_se_preact_resnet_forward.3} parent=5 // pred_fallthru
      _
    %p374 = scmp.lt.s32.totalorder %s19, 2
    // Predicated region
    $region61: #{cifar_se_preact_resnet_forward.3} parent=5 // pred_check
      %p375 = pneg %p374
    $region62: #{cifar_se_preact_resnet_forward.3} parent=5 // pred_check_branch
      %377 = sbr.rel (%p375) target = $region64
    $region63: #{cifar_se_preact_resnet_forward.3} parent=5 // pred_region
      // Predicated region
      $region65: #{cifar_se_preact_resnet_forward.3} parent=63 // pred_check
        %p378 = pneg %p39
      $region66: #{cifar_se_preact_resnet_forward.3} parent=63 // pred_check_branch
        %380 = sbr.rel (%p378) target = $region68
      $region67: #{cifar_se_preact_resnet_forward.3} parent=63 // pred_region
        %p381 = scmp.lt.s32.totalorder %s19, 1
        %s382 = scalar_select %p381, %s19, 1
        %s383 = smul.addr %s382, 41
        %s384 = smul.addr %s383, 4
        %s385 = scalar_lea.vmem %s0, %s384
      $region68: #{cifar_se_preact_resnet_forward.3} parent=63 // pred_fallthru
        _
    $region64: #{cifar_se_preact_resnet_forward.3} parent=5 // pred_fallthru
      _
    %p386 = scmp.le.s32.totalorder 1, %s19
    %p387 = scmp.lt.s32.totalorder %s19, 3
    %p388 = pnand %p386, %p387
    %p389 = pneg %p388
    // Predicated region
    $region69: #{cifar_se_preact_resnet_forward.3} parent=5 // pred_check
      _
    $region70: #{cifar_se_preact_resnet_forward.3} parent=5 // pred_check_branch
      %391 = sbr.rel (%p388) target = $region72
    $region71: #{cifar_se_preact_resnet_forward.3} parent=5 // pred_region
      %s392 = ssub.s32 %s19, 1
      %p393 = scmp.lt.s32.totalorder %s24, 1
      %s394 = scalar_select %p393, %s24, 1
      %s395 = smul.addr %s394, 41
      %s396 = smul.addr %s395, 4
      %s397 = scalar_lea.vmem %s0, %s396
      %p398 = pneg %p45
      %p399 = pneg %p42
      %p400 = pneg %p66
      %p401 = pneg %p63
      %p402 = pneg %p87
      %p403 = pneg %p84
      %p404 = pneg %p108
      %p405 = pneg %p105
      %p406 = pneg %p129
      %p407 = pneg %p126
      %p408 = pneg %p150
      %p409 = pneg %p147
      %p410 = pneg %p171
      %p411 = pneg %p168
      %p412 = pneg %p192
      %p413 = pneg %p189
      %p414 = pneg %p213
      %p415 = pneg %p210
      %p416 = pneg %p234
      %p417 = pneg %p231
      %p418 = pneg %p255
      %p419 = pneg %p252
      %p420 = pneg %p276
      %p421 = pneg %p273
      %p422 = pneg %p297
      %p423 = pneg %p294
      %p424 = pneg %p323
      %p425 = pneg %p320
      %p426 = scmp.lt.s32.totalorder %s24, 1
      %s427 = scalar_select %p426, %s24, 1
      %s428 = smul.addr %s427, 36
      %s429 = smul.addr %s428, 4
      %s430 = scalar_lea.vmem %s13, %s429
      %p431 = scmp.lt.s32.totalorder %s24, 1
      %s432 = scalar_select %p431, %s24, 1
      %s433 = smul.addr %s432, 41
      %s434 = smul.addr %s433, 4
      %s435 = scalar_lea.vmem %s0, %s434
      %p436 = scmp.lt.s32.totalorder %s24, 1
      %s437 = scalar_select %p436, %s24, 1
      %s438 = smul.addr %s437, 36
      %s439 = smul.addr %s438, 4
      %s440 = scalar_lea.vmem %s13, %s439
      %v442 = vld [vmem:[%s1] sm:$0xff]
      %v443 = vld [vmem:[%s1 + $0x8] sm:$0xff]
      %v444 = vld [vmem:[%s1 + $0x10] sm:$0xff]
      %v445 = vld [vmem:[%s1 + $0x18] sm:$0xff]
      %v446 = vld [vmem:[%s1 + $0x20] sm:$0xff]
      %v447 = vld [vmem:[%s1 + $0x28] sm:$0xff]
      %v448 = vld [vmem:[%s1 + $0x30] sm:$0xff]
      %v449 = vld [vmem:[%s1 + $0x38] sm:$0xff]
      %v450 = vld [vmem:[%s1 + $0x40] sm:$0xff]
      %v451 = vld [vmem:[%s1 + $0x48] sm:$0xff]
      %v452 = vld [vmem:[%s1 + $0x50] sm:$0xff]
      %v453 = vld [vmem:[%s1 + $0x58] sm:$0xff]
      %v454 = vld [vmem:[%s1 + $0x60] sm:$0xff]
      %v455 = vld [vmem:[%s1 + $0x68] sm:$0xff]
      %v456 = vld [vmem:[%s1 + $0x70] sm:$0xff]
      %v457 = vld [vmem:[%s1 + $0x78] sm:$0xff]
      %v458 = vld [vmem:[%s1 + $0x80] sm:$0xff]
      %v459 = vld [vmem:[%s1 + $0x88] sm:$0xff]
      %v460 = vld [vmem:[%s1 + $0x90] sm:$0xff]
      %v461 = vld [vmem:[%s1 + $0x98] sm:$0xff]
      %v462 = vld [vmem:[%s1 + $0xa0] sm:$0xff]
      %v463 = vld [vmem:[%s1 + $0xa8] sm:$0xff]
      %v464 = vld [vmem:[%s1 + $0xb0] sm:$0xff]
      %v465 = vld [vmem:[%s1 + $0xb8] sm:$0xff]
      %v466 = vld [vmem:[%s1 + $0xc0] sm:$0xff]
      %v467 = vld [vmem:[%s1 + $0xc8] sm:$0xff]
      %v468 = vld [vmem:[%s1 + $0xd0] sm:$0xff]
      %v469 = vld [vmem:[%s1 + $0xd8] sm:$0xff]
      %v470 = vld [vmem:[%s1 + $0xe0] sm:$0xff]
      %v471 = vld [vmem:[%s1 + $0xe8] sm:$0xff]
      %v472 = vld [vmem:[%s1 + $0xf0] sm:$0xff]
      %v473 = vld [vmem:[%s1 + $0xf8] sm:$0xff]
      %v474 = vld [vmem:[%s1 + $0x100] sm:$0xff]
      %v475 = vld [vmem:[%s1 + $0x108] sm:$0xff]
      %v476 = vld [vmem:[%s1 + $0x110] sm:$0xff]
      %v477 = vld [vmem:[%s1 + $0x118] sm:$0xff]
      %v478 = vld [vmem:[%s435] sm:$0xf]
      %v479 = vld [vmem:[%s435 + $0x4] sm:$0xf]
      %v480 = vld [vmem:[%s435 + $0x8] sm:$0xf]
      %v481 = vld [vmem:[%s435 + $0xc] sm:$0xf]
      %v482 = vld [vmem:[%s435 + $0x10] sm:$0xf]
      %v483 = vld [vmem:[%s435 + $0x14] sm:$0xf]
      %v484 = vld [vmem:[%s435 + $0x18] sm:$0xf]
      %v485 = vld [vmem:[%s435 + $0x1c] sm:$0xf]
      %v486 = vld [vmem:[%s435 + $0x20] sm:$0xf]
      %v487 = vld [vmem:[%s435 + $0x24] sm:$0xf]
      %v488 = vld [vmem:[%s435 + $0x28] sm:$0xf]
      %v489 = vld [vmem:[%s435 + $0x2c] sm:$0xf]
      %v490 = vld [vmem:[%s435 + $0x30] sm:$0xf]
      %v491 = vld [vmem:[%s435 + $0x34] sm:$0xf]
      %v492 = vld [vmem:[%s435 + $0x38] sm:$0xf]
      %v493 = vld [vmem:[%s435 + $0x3c] sm:$0xf]
      %v494 = vld [vmem:[%s435 + $0x40] sm:$0xf]
      %v495 = vld [vmem:[%s435 + $0x44] sm:$0xf]
      %v496 = vld [vmem:[%s435 + $0x48] sm:$0xf]
      %v497 = vld [vmem:[%s435 + $0x4c] sm:$0xf]
      %v498 = vld [vmem:[%s435 + $0x50] sm:$0xf]
      %v499 = vld [vmem:[%s435 + $0x54] sm:$0xf]
      %v500 = vld [vmem:[%s435 + $0x58] sm:$0xf]
      %v501 = vld [vmem:[%s435 + $0x5c] sm:$0xf]
      %v502 = vld [vmem:[%s435 + $0x60] sm:$0xf]
      %v503 = vld [vmem:[%s435 + $0x64] sm:$0xf]
      %v504 = vld [vmem:[%s435 + $0x68] sm:$0xf]
      %v505 = vld [vmem:[%s435 + $0x6c] sm:$0xf]
      %v506 = vld [vmem:[%s435 + $0x70] sm:$0xf]
      %v507 = vld [vmem:[%s435 + $0x74] sm:$0xf]
      %v508 = vld [vmem:[%s435 + $0x78] sm:$0xf]
      %v509 = vld [vmem:[%s435 + $0x7c] sm:$0xf]
      %v510 = vld [vmem:[%s435 + $0x80] sm:$0xf]
      %v511 = vld [vmem:[%s435 + $0x84] sm:$0xf]
      %v512 = vld [vmem:[%s435 + $0x88] sm:$0xf]
      %v513 = vld [vmem:[%s435 + $0x8c] sm:$0xf]
      %v514 = vld [vmem:[%s435 + $0x90] sm:$0xf]
      %v515 = vld [vmem:[%s435 + $0x94] sm:$0xf]
      %v516 = vld [vmem:[%s435 + $0x98] sm:$0xf]
      %v517 = vld [vmem:[%s435 + $0x9c] sm:$0xf]
      %v518 = vld [vmem:[%s435 + $0xa0] sm:$0x7]
      %v519 = vld [vmem:[%s2] sm:$0x3]
      %v520 = vld [vmem:[%s2 + $0x2] sm:$0x3]
      %v521 = vld [vmem:[%s2 + $0x4] sm:$0x3]
      %v522 = vld [vmem:[%s2 + $0x6] sm:$0x3]
      %v523 = vld [vmem:[%s2 + $0x8] sm:$0x3]
      %v524 = vld [vmem:[%s2 + $0xa] sm:$0x3]
      %v525 = vld [vmem:[%s2 + $0xc] sm:$0x3]
      %v526 = vld [vmem:[%s2 + $0xe] sm:$0x3]
      %v527 = vld [vmem:[%s2 + $0x10] sm:$0x3]
      %v565 = vunpack.c.l.b16 %v478
      %v566 = vunpack.c.l.b16 %v479
      %v567 = vunpack.c.l.b16 %v480
      %v568 = vunpack.c.l.b16 %v481
      %v569 = vunpack.c.l.b16 %v482
      %v570 = vunpack.c.l.b16 %v483
      %v571 = vunpack.c.l.b16 %v484
      %v572 = vunpack.c.l.b16 %v485
      %v573 = vunpack.c.l.b16 %v486
      %v574 = vunpack.c.l.b16 %v487
      %v575 = vunpack.c.l.b16 %v488
      %v576 = vunpack.c.l.b16 %v489
      %v577 = vunpack.c.l.b16 %v490
      %v578 = vunpack.c.l.b16 %v491
      %v579 = vunpack.c.l.b16 %v492
      %v580 = vunpack.c.l.b16 %v493
      %v581 = vunpack.c.l.b16 %v494
      %v582 = vunpack.c.l.b16 %v495
      %v583 = vunpack.c.l.b16 %v496
      %v584 = vunpack.c.l.b16 %v497
      %v585 = vunpack.c.l.b16 %v498
      %v586 = vunpack.c.l.b16 %v499
      %v587 = vunpack.c.l.b16 %v500
      %v588 = vunpack.c.l.b16 %v501
      %v589 = vunpack.c.l.b16 %v502
      %v590 = vunpack.c.l.b16 %v503
      %v591 = vunpack.c.l.b16 %v504
      %v592 = vunpack.c.l.b16 %v505
      %v593 = vunpack.c.l.b16 %v506
      %v594 = vunpack.c.l.b16 %v507
      %v595 = vunpack.c.l.b16 %v508
      %v596 = vunpack.c.l.b16 %v509
      %v597 = vunpack.c.l.b16 %v510
      %v598 = vunpack.c.l.b16 %v511
      %v599 = vunpack.c.l.b16 %v512
      %v600 = vunpack.c.l.b16 %v513
      %v601 = vunpack.c.l.b16 %v514
      %v602 = vpack.c.b16 %v566, %v565
      %v603 = vpack.c.b16 %v568, %v567
      %v604 = vpack.c.b16 %v570, %v569
      %v605 = vpack.c.b16 %v572, %v571
      %v606 = vpack.c.b16 %v574, %v573
      %v607 = vpack.c.b16 %v576, %v575
      %v608 = vpack.c.b16 %v578, %v577
      %v609 = vpack.c.b16 %v580, %v579
      %v610 = vpack.c.b16 %v582, %v581
      %v611 = vpack.c.b16 %v584, %v583
      %v612 = vpack.c.b16 %v586, %v585
      %v613 = vpack.c.b16 %v588, %v587
      %v614 = vpack.c.b16 %v590, %v589
      %v615 = vpack.c.b16 %v592, %v591
      %v616 = vpack.c.b16 %v594, %v593
      %v617 = vpack.c.b16 %v596, %v595
      %v618 = vpack.c.b16 %v598, %v597
      %v619 = vpack.c.b16 %v600, %v599
      %v620 = vpack.c.b16 %v601, %v601
      %vm621 = vsmask.f32 7424
      %v623 = vshrl.u32 %v602, 16
      %v625 = vshll.u32 %v602, 16
      %v627 = vrot.slane %v625, 1
      %v628 = vor.u32 %v623, %v627
      %v630 = vshll.u32 %v603, 16
      %v632 = vrot.slane %v630, 1
      %v633 = vsel %vm621, %v628, %v632
      %v634 = vshrl.u32 %v603, 16
      %v636 = vor.u32 %v634, %v632
      %v638 = vshll.u32 %v604, 16
      %v640 = vrot.slane %v638, 1
      %v641 = vsel %vm621, %v636, %v640
      %v642 = vshrl.u32 %v604, 16
      %v644 = vor.u32 %v642, %v640
      %v646 = vshll.u32 %v605, 16
      %v648 = vrot.slane %v646, 1
      %v649 = vsel %vm621, %v644, %v648
      %v650 = vshrl.u32 %v605, 16
      %v652 = vor.u32 %v650, %v648
      %v654 = vshll.u32 %v606, 16
      %v656 = vrot.slane %v654, 1
      %v657 = vsel %vm621, %v652, %v656
      %v658 = vshrl.u32 %v606, 16
      %v660 = vor.u32 %v658, %v656
      %v662 = vshll.u32 %v607, 16
      %v664 = vrot.slane %v662, 1
      %v665 = vsel %vm621, %v660, %v664
      %v666 = vshrl.u32 %v607, 16
      %v668 = vor.u32 %v666, %v664
      %v670 = vshll.u32 %v608, 16
      %v672 = vrot.slane %v670, 1
      %v673 = vsel %vm621, %v668, %v672
      %v674 = vshrl.u32 %v608, 16
      %v676 = vor.u32 %v674, %v672
      %v678 = vshll.u32 %v609, 16
      %v680 = vrot.slane %v678, 1
      %v681 = vsel %vm621, %v676, %v680
      %v682 = vshrl.u32 %v609, 16
      %v684 = vor.u32 %v682, %v680
      %v686 = vshll.u32 %v610, 16
      %v688 = vrot.slane %v686, 1
      %v689 = vsel %vm621, %v684, %v688
      %v690 = vshrl.u32 %v610, 16
      %v692 = vor.u32 %v690, %v688
      %v694 = vshll.u32 %v611, 16
      %v696 = vrot.slane %v694, 1
      %v697 = vsel %vm621, %v692, %v696
      %v698 = vshrl.u32 %v611, 16
      %v700 = vor.u32 %v698, %v696
      %v702 = vshll.u32 %v612, 16
      %v704 = vrot.slane %v702, 1
      %v705 = vsel %vm621, %v700, %v704
      %v706 = vshrl.u32 %v612, 16
      %v708 = vor.u32 %v706, %v704
      %v710 = vshll.u32 %v613, 16
      %v712 = vrot.slane %v710, 1
      %v713 = vsel %vm621, %v708, %v712
      %v714 = vshrl.u32 %v613, 16
      %v716 = vor.u32 %v714, %v712
      %v718 = vshll.u32 %v614, 16
      %v720 = vrot.slane %v718, 1
      %v721 = vsel %vm621, %v716, %v720
      %v722 = vshrl.u32 %v614, 16
      %v724 = vor.u32 %v722, %v720
      %v726 = vshll.u32 %v615, 16
      %v728 = vrot.slane %v726, 1
      %v729 = vsel %vm621, %v724, %v728
      %v730 = vshrl.u32 %v615, 16
      %v732 = vor.u32 %v730, %v728
      %v734 = vshll.u32 %v616, 16
      %v736 = vrot.slane %v734, 1
      %v737 = vsel %vm621, %v732, %v736
      %v738 = vshrl.u32 %v616, 16
      %v740 = vor.u32 %v738, %v736
      %v742 = vshll.u32 %v617, 16
      %v744 = vrot.slane %v742, 1
      %v745 = vsel %vm621, %v740, %v744
      %v746 = vshrl.u32 %v617, 16
      %v748 = vor.u32 %v746, %v744
      %v750 = vshll.u32 %v618, 16
      %v752 = vrot.slane %v750, 1
      %v753 = vsel %vm621, %v748, %v752
      %v754 = vshrl.u32 %v618, 16
      %v756 = vor.u32 %v754, %v752
      %v758 = vshll.u32 %v619, 16
      %v760 = vrot.slane %v758, 1
      %v761 = vsel %vm621, %v756, %v760
      %v762 = vshrl.u32 %v619, 16
      %v764 = vor.u32 %v762, %v760
      %v766 = vshll.u32 %v620, 16
      %v768 = vrot.slane %v766, 1
      %v769 = vsel %vm621, %v764, %v768
      %vm770 = vcmask 23552
      %v772 = vsel %vm770, %v633, 0
      %v775 = vsel %vm770, %v641, 0
      %v778 = vsel %vm770, %v649, 0
      %v781 = vsel %vm770, %v657, 0
      %v784 = vsel %vm770, %v665, 0
      %v787 = vsel %vm770, %v673, 0
      %v790 = vsel %vm770, %v681, 0
      %v793 = vsel %vm770, %v689, 0
      %v796 = vsel %vm770, %v697, 0
      %v799 = vsel %vm770, %v705, 0
      %v802 = vsel %vm770, %v713, 0
      %v805 = vsel %vm770, %v721, 0
      %v808 = vsel %vm770, %v729, 0
      %v811 = vsel %vm770, %v737, 0
      %v814 = vsel %vm770, %v745, 0
      %v817 = vsel %vm770, %v753, 0
      %v820 = vsel %vm770, %v761, 0
      %v823 = vsel %vm770, %v769, 0
      %vm825 = vcmask 1040384
      %vm826 = vcmask 1041408
      %v827 = vsel %vm825, 4294967295, 65535
      %v828 = vsel %vm826, %v827, 0
      %v830 = vand.u32 %v520, %v828
      %832 = vmatpush.bf16.msra.mxu0 0
      %833 = vmatpush.bf16.msra.mxu0 0
      %834 = vmatpush.bf16.msra.mxu0 0
      %835 = vmatpush.bf16.msra.mxu0 0
      %836 = vmatpush.bf16.msra.mxu0 0
      %837 = vmatpush.bf16.msra.mxu0 0
      %838 = vmatpush.bf16.msra.mxu0 0
      %839 = vmatpush.bf16.msra.mxu0 %v830
      %840 = vmatmul.bf16.gmra.mxu0 %v772
      %v841 = vpop.f32.mrf.mxu0
      %v842 = vadd.f32 0.0, %v841
      %v843 = vpop.f32.mrf.mxu0
      %v844 = vadd.f32 0.0, %v843
      %845 = vmatmul.bf16.gmra.mxu0 %v775
      %v846 = vpop.f32.mrf.mxu0
      %v847 = vadd.f32 0.0, %v846
      %v848 = vpop.f32.mrf.mxu0
      %v849 = vadd.f32 0.0, %v848
      %850 = vmatmul.bf16.gmra.mxu0 %v778
      %v851 = vpop.f32.mrf.mxu0
      %v852 = vadd.f32 0.0, %v851
      %v853 = vpop.f32.mrf.mxu0
      %v854 = vadd.f32 0.0, %v853
      %855 = vmatmul.bf16.gmra.mxu0 %v781
      %v856 = vpop.f32.mrf.mxu0
      %v857 = vadd.f32 0.0, %v856
      %v858 = vpop.f32.mrf.mxu0
      %v859 = vadd.f32 0.0, %v858
      %860 = vmatmul.bf16.gmra.mxu0 %v784
      %v861 = vpop.f32.mrf.mxu0
      %v862 = vadd.f32 0.0, %v861
      %v863 = vpop.f32.mrf.mxu0
      %v864 = vadd.f32 0.0, %v863
      %865 = vmatmul.bf16.gmra.mxu0 %v787
      %v866 = vpop.f32.mrf.mxu0
      %v867 = vadd.f32 0.0, %v866
      %v868 = vpop.f32.mrf.mxu0
      %v869 = vadd.f32 0.0, %v868
      %870 = vmatmul.bf16.gmra.mxu0 %v790
      %v871 = vpop.f32.mrf.mxu0
      %v872 = vadd.f32 0.0, %v871
      %v873 = vpop.f32.mrf.mxu0
      %v874 = vadd.f32 0.0, %v873
      %875 = vmatmul.bf16.gmra.mxu0 %v793
      %v876 = vpop.f32.mrf.mxu0
      %v877 = vadd.f32 0.0, %v876
      %v878 = vpop.f32.mrf.mxu0
      %v879 = vadd.f32 0.0, %v878
      %880 = vmatmul.bf16.gmra.mxu0 %v796
      %v881 = vpop.f32.mrf.mxu0
      %v882 = vadd.f32 0.0, %v881
      %v883 = vpop.f32.mrf.mxu0
      %v884 = vadd.f32 0.0, %v883
      %885 = vmatmul.bf16.gmra.mxu0 %v799
      %v886 = vpop.f32.mrf.mxu0
      %v887 = vadd.f32 0.0, %v886
      %v888 = vpop.f32.mrf.mxu0
      %v889 = vadd.f32 0.0, %v888
      %890 = vmatmul.bf16.gmra.mxu0 %v802
      %v891 = vpop.f32.mrf.mxu0
      %v892 = vadd.f32 0.0, %v891
      %v893 = vpop.f32.mrf.mxu0
      %v894 = vadd.f32 0.0, %v893
      %895 = vmatmul.bf16.gmra.mxu0 %v805
      %v896 = vpop.f32.mrf.mxu0
      %v897 = vadd.f32 0.0, %v896
      %v898 = vpop.f32.mrf.mxu0
      %v899 = vadd.f32 0.0, %v898
      %900 = vmatmul.bf16.gmra.mxu0 %v808
      %v901 = vpop.f32.mrf.mxu0
      %v902 = vadd.f32 0.0, %v901
      %v903 = vpop.f32.mrf.mxu0
      %v904 = vadd.f32 0.0, %v903
      %905 = vmatmul.bf16.gmra.mxu0 %v811
      %v906 = vpop.f32.mrf.mxu0
      %v907 = vadd.f32 0.0, %v906
      %v908 = vpop.f32.mrf.mxu0
      %v909 = vadd.f32 0.0, %v908
      %910 = vmatmul.bf16.gmra.mxu0 %v814
      %v911 = vpop.f32.mrf.mxu0
      %v912 = vadd.f32 0.0, %v911
      %v913 = vpop.f32.mrf.mxu0
      %v914 = vadd.f32 0.0, %v913
      %915 = vmatmul.bf16.gmra.mxu0 %v817
      %v916 = vpop.f32.mrf.mxu0
      %v917 = vadd.f32 0.0, %v916
      %v918 = vpop.f32.mrf.mxu0
      %v919 = vadd.f32 0.0, %v918
      %920 = vmatmul.bf16.gmra.mxu0 %v820
      %v921 = vpop.f32.mrf.mxu0
      %v922 = vadd.f32 0.0, %v921
      %v923 = vpop.f32.mrf.mxu0
      %v924 = vadd.f32 0.0, %v923
      %925 = vmatmul.bf16.gmra.mxu0 %v823
      %v926 = vpop.f32.mrf.mxu0
      %v927 = vadd.f32 0.0, %v926
      %v928 = vpop.f32.mrf.mxu0
      %v929 = vadd.f32 0.0, %v928
      %930 = vdwg.mxu0
      %v931 = vsel %vm770, %v602, 0
      %v933 = vsel %vm770, %v603, 0
      %v935 = vsel %vm770, %v604, 0
      %v937 = vsel %vm770, %v605, 0
      %v939 = vsel %vm770, %v606, 0
      %v941 = vsel %vm770, %v607, 0
      %v943 = vsel %vm770, %v608, 0
      %v945 = vsel %vm770, %v609, 0
      %v947 = vsel %vm770, %v610, 0
      %v949 = vsel %vm770, %v611, 0
      %v951 = vsel %vm770, %v612, 0
      %v953 = vsel %vm770, %v613, 0
      %v955 = vsel %vm770, %v614, 0
      %v957 = vsel %vm770, %v615, 0
      %v959 = vsel %vm770, %v616, 0
      %v961 = vsel %vm770, %v617, 0
      %v963 = vsel %vm770, %v618, 0
      %v965 = vsel %vm770, %v619, 0
      %v968 = vand.u32 %v519, %v828
      %970 = vmatpush.bf16.msra.mxu0 0
      %971 = vmatpush.bf16.msra.mxu0 0
      %972 = vmatpush.bf16.msra.mxu0 0
      %973 = vmatpush.bf16.msra.mxu0 0
      %974 = vmatpush.bf16.msra.mxu0 0
      %975 = vmatpush.bf16.msra.mxu0 0
      %976 = vmatpush.bf16.msra.mxu0 0
      %977 = vmatpush.bf16.msra.mxu0 %v968
      %978 = vmatmul.bf16.gmra.mxu0 %v931
      %v979 = vpop.f32.mrf.mxu0
      %v980 = vadd.f32 %v842, %v979
      %v981 = vpop.f32.mrf.mxu0
      %v982 = vadd.f32 %v844, %v981
      %983 = vmatmul.bf16.gmra.mxu0 %v933
      %v984 = vpop.f32.mrf.mxu0
      %v985 = vadd.f32 %v847, %v984
      %v986 = vpop.f32.mrf.mxu0
      %v987 = vadd.f32 %v849, %v986
      %988 = vmatmul.bf16.gmra.mxu0 %v935
      %v989 = vpop.f32.mrf.mxu0
      %v990 = vadd.f32 %v852, %v989
      %v991 = vpop.f32.mrf.mxu0
      %v992 = vadd.f32 %v854, %v991
      %993 = vmatmul.bf16.gmra.mxu0 %v937
      %v994 = vpop.f32.mrf.mxu0
      %v995 = vadd.f32 %v857, %v994
      %v996 = vpop.f32.mrf.mxu0
      %v997 = vadd.f32 %v859, %v996
      %998 = vmatmul.bf16.gmra.mxu0 %v939
      %v999 = vpop.f32.mrf.mxu0
      %v1000 = vadd.f32 %v862, %v999
      %v1001 = vpop.f32.mrf.mxu0
      %v1002 = vadd.f32 %v864, %v1001
      %1003 = vmatmul.bf16.gmra.mxu0 %v941
      %v1004 = vpop.f32.mrf.mxu0
      %v1005 = vadd.f32 %v867, %v1004
      %v1006 = vpop.f32.mrf.mxu0
      %v1007 = vadd.f32 %v869, %v1006
      %1008 = vmatmul.bf16.gmra.mxu0 %v943
      %v1009 = vpop.f32.mrf.mxu0
      %v1010 = vadd.f32 %v872, %v1009
      %v1011 = vpop.f32.mrf.mxu0
      %v1012 = vadd.f32 %v874, %v1011
      %1013 = vmatmul.bf16.gmra.mxu0 %v945
      %v1014 = vpop.f32.mrf.mxu0
      %v1015 = vadd.f32 %v877, %v1014
      %v1016 = vpop.f32.mrf.mxu0
      %v1017 = vadd.f32 %v879, %v1016
      %1018 = vmatmul.bf16.gmra.mxu0 %v947
      %v1019 = vpop.f32.mrf.mxu0
      %v1020 = vadd.f32 %v882, %v1019
      %v1021 = vpop.f32.mrf.mxu0
      %v1022 = vadd.f32 %v884, %v1021
      %1023 = vmatmul.bf16.gmra.mxu0 %v949
      %v1024 = vpop.f32.mrf.mxu0
      %v1025 = vadd.f32 %v887, %v1024
      %v1026 = vpop.f32.mrf.mxu0
      %v1027 = vadd.f32 %v889, %v1026
      %1028 = vmatmul.bf16.gmra.mxu0 %v951
      %v1029 = vpop.f32.mrf.mxu0
      %v1030 = vadd.f32 %v892, %v1029
      %v1031 = vpop.f32.mrf.mxu0
      %v1032 = vadd.f32 %v894, %v1031
      %1033 = vmatmul.bf16.gmra.mxu0 %v953
      %v1034 = vpop.f32.mrf.mxu0
      %v1035 = vadd.f32 %v897, %v1034
      %v1036 = vpop.f32.mrf.mxu0
      %v1037 = vadd.f32 %v899, %v1036
      %1038 = vmatmul.bf16.gmra.mxu0 %v955
      %v1039 = vpop.f32.mrf.mxu0
      %v1040 = vadd.f32 %v902, %v1039
      %v1041 = vpop.f32.mrf.mxu0
      %v1042 = vadd.f32 %v904, %v1041
      %1043 = vmatmul.bf16.gmra.mxu0 %v957
      %v1044 = vpop.f32.mrf.mxu0
      %v1045 = vadd.f32 %v907, %v1044
      %v1046 = vpop.f32.mrf.mxu0
      %v1047 = vadd.f32 %v909, %v1046
      %1048 = vmatmul.bf16.gmra.mxu0 %v959
      %v1049 = vpop.f32.mrf.mxu0
      %v1050 = vadd.f32 %v912, %v1049
      %v1051 = vpop.f32.mrf.mxu0
      %v1052 = vadd.f32 %v914, %v1051
      %1053 = vmatmul.bf16.gmra.mxu0 %v961
      %v1054 = vpop.f32.mrf.mxu0
      %v1055 = vadd.f32 %v917, %v1054
      %v1056 = vpop.f32.mrf.mxu0
      %v1057 = vadd.f32 %v919, %v1056
      %1058 = vmatmul.bf16.gmra.mxu0 %v963
      %v1059 = vpop.f32.mrf.mxu0
      %v1060 = vadd.f32 %v922, %v1059
      %v1061 = vpop.f32.mrf.mxu0
      %v1062 = vadd.f32 %v924, %v1061
      %1063 = vmatmul.bf16.gmra.mxu0 %v965
      %v1064 = vpop.f32.mrf.mxu0
      %v1065 = vadd.f32 %v927, %v1064
      %v1066 = vpop.f32.mrf.mxu0
      %v1067 = vadd.f32 %v929, %v1066
      %1068 = vdwg.mxu0
      %vm1069 = vcmask 1046528
      %v1070 = vrot.slane %v602, 1
      %v1071 = vrot.slane %v603, 1
      %v1072 = vsel %vm1069, %v1070, %v1071
      %v1073 = vrot.slane %v604, 1
      %v1074 = vsel %vm1069, %v1071, %v1073
      %v1075 = vrot.slane %v605, 1
      %v1076 = vsel %vm1069, %v1073, %v1075
      %v1077 = vrot.slane %v606, 1
      %v1078 = vsel %vm1069, %v1075, %v1077
      %v1079 = vrot.slane %v607, 1
      %v1080 = vsel %vm1069, %v1077, %v1079
      %v1081 = vrot.slane %v608, 1
      %v1082 = vsel %vm1069, %v1079, %v1081
      %v1083 = vrot.slane %v609, 1
      %v1084 = vsel %vm1069, %v1081, %v1083
      %v1085 = vrot.slane %v610, 1
      %v1086 = vsel %vm1069, %v1083, %v1085
      %v1087 = vrot.slane %v611, 1
      %v1088 = vsel %vm1069, %v1085, %v1087
      %v1089 = vrot.slane %v612, 1
      %v1090 = vsel %vm1069, %v1087, %v1089
      %v1091 = vrot.slane %v613, 1
      %v1092 = vsel %vm1069, %v1089, %v1091
      %v1093 = vrot.slane %v614, 1
      %v1094 = vsel %vm1069, %v1091, %v1093
      %v1095 = vrot.slane %v615, 1
      %v1096 = vsel %vm1069, %v1093, %v1095
      %v1097 = vrot.slane %v616, 1
      %v1098 = vsel %vm1069, %v1095, %v1097
      %v1099 = vrot.slane %v617, 1
      %v1100 = vsel %vm1069, %v1097, %v1099
      %v1101 = vrot.slane %v618, 1
      %v1102 = vsel %vm1069, %v1099, %v1101
      %v1103 = vrot.slane %v619, 1
      %v1104 = vsel %vm1069, %v1101, %v1103
      %v1105 = vrot.slane %v620, 1
      %v1106 = vsel %vm1069, %v1103, %v1105
      %v1108 = vsel %vm770, %v1072, 0
      %v1111 = vsel %vm770, %v1074, 0
      %v1114 = vsel %vm770, %v1076, 0
      %v1117 = vsel %vm770, %v1078, 0
      %v1120 = vsel %vm770, %v1080, 0
      %v1123 = vsel %vm770, %v1082, 0
      %v1126 = vsel %vm770, %v1084, 0
      %v1129 = vsel %vm770, %v1086, 0
      %v1132 = vsel %vm770, %v1088, 0
      %v1135 = vsel %vm770, %v1090, 0
      %v1138 = vsel %vm770, %v1092, 0
      %v1141 = vsel %vm770, %v1094, 0
      %v1144 = vsel %vm770, %v1096, 0
      %v1147 = vsel %vm770, %v1098, 0
      %v1150 = vsel %vm770, %v1100, 0
      %v1153 = vsel %vm770, %v1102, 0
      %v1156 = vsel %vm770, %v1104, 0
      %v1159 = vsel %vm770, %v1106, 0
      %v1162 = vand.u32 %v521, %v828
      %1164 = vmatpush.bf16.msra.mxu0 0
      %1165 = vmatpush.bf16.msra.mxu0 0
      %1166 = vmatpush.bf16.msra.mxu0 0
      %1167 = vmatpush.bf16.msra.mxu0 0
      %1168 = vmatpush.bf16.msra.mxu0 0
      %1169 = vmatpush.bf16.msra.mxu0 0
      %1170 = vmatpush.bf16.msra.mxu0 0
      %1171 = vmatpush.bf16.msra.mxu0 %v1162
      %1172 = vmatmul.bf16.gmra.mxu0 %v1108
      %v1173 = vpop.f32.mrf.mxu0
      %v1174 = vadd.f32 0.0, %v1173
      %v1175 = vpop.f32.mrf.mxu0
      %v1176 = vadd.f32 0.0, %v1175
      %1177 = vmatmul.bf16.gmra.mxu0 %v1111
      %v1178 = vpop.f32.mrf.mxu0
      %v1179 = vadd.f32 0.0, %v1178
      %v1180 = vpop.f32.mrf.mxu0
      %v1181 = vadd.f32 0.0, %v1180
      %1182 = vmatmul.bf16.gmra.mxu0 %v1114
      %v1183 = vpop.f32.mrf.mxu0
      %v1184 = vadd.f32 0.0, %v1183
      %v1185 = vpop.f32.mrf.mxu0
      %v1186 = vadd.f32 0.0, %v1185
      %1187 = vmatmul.bf16.gmra.mxu0 %v1117
      %v1188 = vpop.f32.mrf.mxu0
      %v1189 = vadd.f32 0.0, %v1188
      %v1190 = vpop.f32.mrf.mxu0
      %v1191 = vadd.f32 0.0, %v1190
      %1192 = vmatmul.bf16.gmra.mxu0 %v1120
      %v1193 = vpop.f32.mrf.mxu0
      %v1194 = vadd.f32 0.0, %v1193
      %v1195 = vpop.f32.mrf.mxu0
      %v1196 = vadd.f32 0.0, %v1195
      %1197 = vmatmul.bf16.gmra.mxu0 %v1123
      %v1198 = vpop.f32.mrf.mxu0
      %v1199 = vadd.f32 0.0, %v1198
      %v1200 = vpop.f32.mrf.mxu0
      %v1201 = vadd.f32 0.0, %v1200
      %1202 = vmatmul.bf16.gmra.mxu0 %v1126
      %v1203 = vpop.f32.mrf.mxu0
      %v1204 = vadd.f32 0.0, %v1203
      %v1205 = vpop.f32.mrf.mxu0
      %v1206 = vadd.f32 0.0, %v1205
      %1207 = vmatmul.bf16.gmra.mxu0 %v1129
      %v1208 = vpop.f32.mrf.mxu0
      %v1209 = vadd.f32 0.0, %v1208
      %v1210 = vpop.f32.mrf.mxu0
      %v1211 = vadd.f32 0.0, %v1210
      %1212 = vmatmul.bf16.gmra.mxu0 %v1132
      %v1213 = vpop.f32.mrf.mxu0
      %v1214 = vadd.f32 0.0, %v1213
      %v1215 = vpop.f32.mrf.mxu0
      %v1216 = vadd.f32 0.0, %v1215
      %1217 = vmatmul.bf16.gmra.mxu0 %v1135
      %v1218 = vpop.f32.mrf.mxu0
      %v1219 = vadd.f32 0.0, %v1218
      %v1220 = vpop.f32.mrf.mxu0
      %v1221 = vadd.f32 0.0, %v1220
      %1222 = vmatmul.bf16.gmra.mxu0 %v1138
      %v1223 = vpop.f32.mrf.mxu0
      %v1224 = vadd.f32 0.0, %v1223
      %v1225 = vpop.f32.mrf.mxu0
      %v1226 = vadd.f32 0.0, %v1225
      %1227 = vmatmul.bf16.gmra.mxu0 %v1141
      %v1228 = vpop.f32.mrf.mxu0
      %v1229 = vadd.f32 0.0, %v1228
      %v1230 = vpop.f32.mrf.mxu0
      %v1231 = vadd.f32 0.0, %v1230
      %1232 = vmatmul.bf16.gmra.mxu0 %v1144
      %v1233 = vpop.f32.mrf.mxu0
      %v1234 = vadd.f32 0.0, %v1233
      %v1235 = vpop.f32.mrf.mxu0
      %v1236 = vadd.f32 0.0, %v1235
      %1237 = vmatmul.bf16.gmra.mxu0 %v1147
      %v1238 = vpop.f32.mrf.mxu0
      %v1239 = vadd.f32 0.0, %v1238
      %v1240 = vpop.f32.mrf.mxu0
      %v1241 = vadd.f32 0.0, %v1240
      %1242 = vmatmul.bf16.gmra.mxu0 %v1150
      %v1243 = vpop.f32.mrf.mxu0
      %v1244 = vadd.f32 0.0, %v1243
      %v1245 = vpop.f32.mrf.mxu0
      %v1246 = vadd.f32 0.0, %v1245
      %1247 = vmatmul.bf16.gmra.mxu0 %v1153
      %v1248 = vpop.f32.mrf.mxu0
      %v1249 = vadd.f32 0.0, %v1248
      %v1250 = vpop.f32.mrf.mxu0
      %v1251 = vadd.f32 0.0, %v1250
      %1252 = vmatmul.bf16.gmra.mxu0 %v1156
      %v1253 = vpop.f32.mrf.mxu0
      %v1254 = vadd.f32 0.0, %v1253
      %v1255 = vpop.f32.mrf.mxu0
      %v1256 = vadd.f32 0.0, %v1255
      %1257 = vmatmul.bf16.gmra.mxu0 %v1159
      %v1258 = vpop.f32.mrf.mxu0
      %v1259 = vadd.f32 0.0, %v1258
      %v1260 = vpop.f32.mrf.mxu0
      %v1261 = vadd.f32 0.0, %v1260
      %1262 = vdwg.mxu0
      %v1263 = vadd.f32 %v980, %v1174
      %v1264 = vadd.f32 %v982, %v1176
      %v1265 = vadd.f32 %v985, %v1179
      %v1266 = vadd.f32 %v987, %v1181
      %v1267 = vadd.f32 %v990, %v1184
      %v1268 = vadd.f32 %v992, %v1186
      %v1269 = vadd.f32 %v995, %v1189
      %v1270 = vadd.f32 %v997, %v1191
      %v1271 = vadd.f32 %v1000, %v1194
      %v1272 = vadd.f32 %v1002, %v1196
      %v1273 = vadd.f32 %v1005, %v1199
      %v1274 = vadd.f32 %v1007, %v1201
      %v1275 = vadd.f32 %v1010, %v1204
      %v1276 = vadd.f32 %v1012, %v1206
      %v1277 = vadd.f32 %v1015, %v1209
      %v1278 = vadd.f32 %v1017, %v1211
      %v1279 = vadd.f32 %v1020, %v1214
      %v1280 = vadd.f32 %v1022, %v1216
      %v1281 = vadd.f32 %v1025, %v1219
      %v1282 = vadd.f32 %v1027, %v1221
      %v1283 = vadd.f32 %v1030, %v1224
      %v1284 = vadd.f32 %v1032, %v1226
      %v1285 = vadd.f32 %v1035, %v1229
      %v1286 = vadd.f32 %v1037, %v1231
      %v1287 = vadd.f32 %v1040, %v1234
      %v1288 = vadd.f32 %v1042, %v1236
      %v1289 = vadd.f32 %v1045, %v1239
      %v1290 = vadd.f32 %v1047, %v1241
      %v1291 = vadd.f32 %v1050, %v1244
      %v1292 = vadd.f32 %v1052, %v1246
      %v1293 = vadd.f32 %v1055, %v1249
      %v1294 = vadd.f32 %v1057, %v1251
      %v1295 = vadd.f32 %v1060, %v1254
      %v1296 = vadd.f32 %v1062, %v1256
      %v1297 = vadd.f32 %v1065, %v1259
      %v1298 = vadd.f32 %v1067, %v1261
      %v1301 = vunpack.c.l.b16 %v515
      %v1302 = vunpack.c.l.b16 %v516
      %v1303 = vpack.c.b16 %v1301, %v601
      %v1304 = vpack.c.b16 %v1302, %v1302
      %v1305 = vrot.slane %v1303, 1
      %v1306 = vsel %vm1069, %v1103, %v1305
      %v1307 = vrot.slane %v1304, 1
      %v1308 = vsel %vm1069, %v1305, %v1307
      %v1310 = vsel %vm770, %v1306, 0
      %v1313 = vsel %vm770, %v1308, 0
      %v1316 = vand.u32 %v522, %v828
      %1318 = vmatpush.bf16.msra.mxu0 0
      %1319 = vmatpush.bf16.msra.mxu0 0
      %1320 = vmatpush.bf16.msra.mxu0 0
      %1321 = vmatpush.bf16.msra.mxu0 0
      %1322 = vmatpush.bf16.msra.mxu0 0
      %1323 = vmatpush.bf16.msra.mxu0 0
      %1324 = vmatpush.bf16.msra.mxu0 0
      %1325 = vmatpush.bf16.msra.mxu0 %v1316
      %1326 = vmatmul.bf16.gmra.mxu0 %v1111
      %v1327 = vpop.f32.mrf.mxu0
      %v1328 = vadd.f32 0.0, %v1327
      %v1329 = vpop.f32.mrf.mxu0
      %v1330 = vadd.f32 0.0, %v1329
      %1331 = vmatmul.bf16.gmra.mxu0 %v1114
      %v1332 = vpop.f32.mrf.mxu0
      %v1333 = vadd.f32 0.0, %v1332
      %v1334 = vpop.f32.mrf.mxu0
      %v1335 = vadd.f32 0.0, %v1334
      %1336 = vmatmul.bf16.gmra.mxu0 %v1117
      %v1337 = vpop.f32.mrf.mxu0
      %v1338 = vadd.f32 0.0, %v1337
      %v1339 = vpop.f32.mrf.mxu0
      %v1340 = vadd.f32 0.0, %v1339
      %1341 = vmatmul.bf16.gmra.mxu0 %v1120
      %v1342 = vpop.f32.mrf.mxu0
      %v1343 = vadd.f32 0.0, %v1342
      %v1344 = vpop.f32.mrf.mxu0
      %v1345 = vadd.f32 0.0, %v1344
      %1346 = vmatmul.bf16.gmra.mxu0 %v1123
      %v1347 = vpop.f32.mrf.mxu0
      %v1348 = vadd.f32 0.0, %v1347
      %v1349 = vpop.f32.mrf.mxu0
      %v1350 = vadd.f32 0.0, %v1349
      %1351 = vmatmul.bf16.gmra.mxu0 %v1126
      %v1352 = vpop.f32.mrf.mxu0
      %v1353 = vadd.f32 0.0, %v1352
      %v1354 = vpop.f32.mrf.mxu0
      %v1355 = vadd.f32 0.0, %v1354
      %1356 = vmatmul.bf16.gmra.mxu0 %v1129
      %v1357 = vpop.f32.mrf.mxu0
      %v1358 = vadd.f32 0.0, %v1357
      %v1359 = vpop.f32.mrf.mxu0
      %v1360 = vadd.f32 0.0, %v1359
      %1361 = vmatmul.bf16.gmra.mxu0 %v1132
      %v1362 = vpop.f32.mrf.mxu0
      %v1363 = vadd.f32 0.0, %v1362
      %v1364 = vpop.f32.mrf.mxu0
      %v1365 = vadd.f32 0.0, %v1364
      %1366 = vmatmul.bf16.gmra.mxu0 %v1135
      %v1367 = vpop.f32.mrf.mxu0
      %v1368 = vadd.f32 0.0, %v1367
      %v1369 = vpop.f32.mrf.mxu0
      %v1370 = vadd.f32 0.0, %v1369
      %1371 = vmatmul.bf16.gmra.mxu0 %v1138
      %v1372 = vpop.f32.mrf.mxu0
      %v1373 = vadd.f32 0.0, %v1372
      %v1374 = vpop.f32.mrf.mxu0
      %v1375 = vadd.f32 0.0, %v1374
      %1376 = vmatmul.bf16.gmra.mxu0 %v1141
      %v1377 = vpop.f32.mrf.mxu0
      %v1378 = vadd.f32 0.0, %v1377
      %v1379 = vpop.f32.mrf.mxu0
      %v1380 = vadd.f32 0.0, %v1379
      %1381 = vmatmul.bf16.gmra.mxu0 %v1144
      %v1382 = vpop.f32.mrf.mxu0
      %v1383 = vadd.f32 0.0, %v1382
      %v1384 = vpop.f32.mrf.mxu0
      %v1385 = vadd.f32 0.0, %v1384
      %1386 = vmatmul.bf16.gmra.mxu0 %v1147
      %v1387 = vpop.f32.mrf.mxu0
      %v1388 = vadd.f32 0.0, %v1387
      %v1389 = vpop.f32.mrf.mxu0
      %v1390 = vadd.f32 0.0, %v1389
      %1391 = vmatmul.bf16.gmra.mxu0 %v1150
      %v1392 = vpop.f32.mrf.mxu0
      %v1393 = vadd.f32 0.0, %v1392
      %v1394 = vpop.f32.mrf.mxu0
      %v1395 = vadd.f32 0.0, %v1394
      %1396 = vmatmul.bf16.gmra.mxu0 %v1153
      %v1397 = vpop.f32.mrf.mxu0
      %v1398 = vadd.f32 0.0, %v1397
      %v1399 = vpop.f32.mrf.mxu0
      %v1400 = vadd.f32 0.0, %v1399
      %1401 = vmatmul.bf16.gmra.mxu0 %v1156
      %v1402 = vpop.f32.mrf.mxu0
      %v1403 = vadd.f32 0.0, %v1402
      %v1404 = vpop.f32.mrf.mxu0
      %v1405 = vadd.f32 0.0, %v1404
      %1406 = vmatmul.bf16.gmra.mxu0 %v1310
      %v1407 = vpop.f32.mrf.mxu0
      %v1408 = vadd.f32 0.0, %v1407
      %v1409 = vpop.f32.mrf.mxu0
      %v1410 = vadd.f32 0.0, %v1409
      %1411 = vmatmul.bf16.gmra.mxu0 %v1313
      %v1412 = vpop.f32.mrf.mxu0
      %v1413 = vadd.f32 0.0, %v1412
      %v1414 = vpop.f32.mrf.mxu0
      %v1415 = vadd.f32 0.0, %v1414
      %1416 = vdwg.mxu0
      %v1417 = vadd.f32 %v1263, %v1328
      %v1418 = vadd.f32 %v1264, %v1330
      %v1419 = vadd.f32 %v1265, %v1333
      %v1420 = vadd.f32 %v1266, %v1335
      %v1421 = vadd.f32 %v1267, %v1338
      %v1422 = vadd.f32 %v1268, %v1340
      %v1423 = vadd.f32 %v1269, %v1343
      %v1424 = vadd.f32 %v1270, %v1345
      %v1425 = vadd.f32 %v1271, %v1348
      %v1426 = vadd.f32 %v1272, %v1350
      %v1427 = vadd.f32 %v1273, %v1353
      %v1428 = vadd.f32 %v1274, %v1355
      %v1429 = vadd.f32 %v1275, %v1358
      %v1430 = vadd.f32 %v1276, %v1360
      %v1431 = vadd.f32 %v1277, %v1363
      %v1432 = vadd.f32 %v1278, %v1365
      %v1433 = vadd.f32 %v1279, %v1368
      %v1434 = vadd.f32 %v1280, %v1370
      %v1435 = vadd.f32 %v1281, %v1373
      %v1436 = vadd.f32 %v1282, %v1375
      %v1437 = vadd.f32 %v1283, %v1378
      %v1438 = vadd.f32 %v1284, %v1380
      %v1439 = vadd.f32 %v1285, %v1383
      %v1440 = vadd.f32 %v1286, %v1385
      %v1441 = vadd.f32 %v1287, %v1388
      %v1442 = vadd.f32 %v1288, %v1390
      %v1443 = vadd.f32 %v1289, %v1393
      %v1444 = vadd.f32 %v1290, %v1395
      %v1445 = vadd.f32 %v1291, %v1398
      %v1446 = vadd.f32 %v1292, %v1400
      %v1447 = vadd.f32 %v1293, %v1403
      %v1448 = vadd.f32 %v1294, %v1405
      %v1449 = vadd.f32 %v1295, %v1408
      %v1450 = vadd.f32 %v1296, %v1410
      %v1451 = vadd.f32 %v1297, %v1413
      %v1452 = vadd.f32 %v1298, %v1415
      %vm1453 = vsmask.f32 6400
      %v1454 = vrot.slane %v634, 1
      %v1455 = vrot.slane %v630, 2
      %v1456 = vor.u32 %v1454, %v1455
      %v1457 = vrot.slane %v642, 1
      %v1458 = vrot.slane %v638, 2
      %v1459 = vor.u32 %v1457, %v1458
      %v1460 = vsel %vm1453, %v1456, %v1459
      %v1461 = vrot.slane %v650, 1
      %v1462 = vrot.slane %v646, 2
      %v1463 = vor.u32 %v1461, %v1462
      %v1464 = vsel %vm1453, %v1459, %v1463
      %v1465 = vrot.slane %v658, 1
      %v1466 = vrot.slane %v654, 2
      %v1467 = vor.u32 %v1465, %v1466
      %v1468 = vsel %vm1453, %v1463, %v1467
      %v1469 = vrot.slane %v666, 1
      %v1470 = vrot.slane %v662, 2
      %v1471 = vor.u32 %v1469, %v1470
      %v1472 = vsel %vm1453, %v1467, %v1471
      %v1473 = vrot.slane %v674, 1
      %v1474 = vrot.slane %v670, 2
      %v1475 = vor.u32 %v1473, %v1474
      %v1476 = vsel %vm1453, %v1471, %v1475
      %v1477 = vrot.slane %v682, 1
      %v1478 = vrot.slane %v678, 2
      %v1479 = vor.u32 %v1477, %v1478
      %v1480 = vsel %vm1453, %v1475, %v1479
      %v1481 = vrot.slane %v690, 1
      %v1482 = vrot.slane %v686, 2
      %v1483 = vor.u32 %v1481, %v1482
      %v1484 = vsel %vm1453, %v1479, %v1483
      %v1485 = vrot.slane %v698, 1
      %v1486 = vrot.slane %v694, 2
      %v1487 = vor.u32 %v1485, %v1486
      %v1488 = vsel %vm1453, %v1483, %v1487
      %v1489 = vrot.slane %v706, 1
      %v1490 = vrot.slane %v702, 2
      %v1491 = vor.u32 %v1489, %v1490
      %v1492 = vsel %vm1453, %v1487, %v1491
      %v1493 = vrot.slane %v714, 1
      %v1494 = vrot.slane %v710, 2
      %v1495 = vor.u32 %v1493, %v1494
      %v1496 = vsel %vm1453, %v1491, %v1495
      %v1497 = vrot.slane %v722, 1
      %v1498 = vrot.slane %v718, 2
      %v1499 = vor.u32 %v1497, %v1498
      %v1500 = vsel %vm1453, %v1495, %v1499
      %v1501 = vrot.slane %v730, 1
      %v1502 = vrot.slane %v726, 2
      %v1503 = vor.u32 %v1501, %v1502
      %v1504 = vsel %vm1453, %v1499, %v1503
      %v1505 = vrot.slane %v738, 1
      %v1506 = vrot.slane %v734, 2
      %v1507 = vor.u32 %v1505, %v1506
      %v1508 = vsel %vm1453, %v1503, %v1507
      %v1509 = vrot.slane %v746, 1
      %v1510 = vrot.slane %v742, 2
      %v1511 = vor.u32 %v1509, %v1510
      %v1512 = vsel %vm1453, %v1507, %v1511
      %v1513 = vrot.slane %v754, 1
      %v1514 = vrot.slane %v750, 2
      %v1515 = vor.u32 %v1513, %v1514
      %v1516 = vsel %vm1453, %v1511, %v1515
      %v1517 = vrot.slane %v762, 1
      %v1518 = vrot.slane %v758, 2
      %v1519 = vor.u32 %v1517, %v1518
      %v1520 = vsel %vm1453, %v1515, %v1519
      %v1522 = vshrl.u32 %v1303, 16
      %v1524 = vrot.slane %v1522, 1
      %v1525 = vshll.u32 %v1303, 16
      %v1527 = vrot.slane %v1525, 2
      %v1528 = vor.u32 %v1524, %v1527
      %v1529 = vsel %vm1453, %v1519, %v1528
      %v1531 = vshrl.u32 %v1304, 16
      %v1533 = vrot.slane %v1531, 1
      %v1534 = vshll.u32 %v1304, 16
      %v1536 = vrot.slane %v1534, 2
      %v1537 = vor.u32 %v1533, %v1536
      %v1538 = vsel %vm1453, %v1528, %v1537
      %v1540 = vsel %vm770, %v1460, 0
      %v1543 = vsel %vm770, %v1464, 0
      %v1546 = vsel %vm770, %v1468, 0
      %v1549 = vsel %vm770, %v1472, 0
      %v1552 = vsel %vm770, %v1476, 0
      %v1555 = vsel %vm770, %v1480, 0
      %v1558 = vsel %vm770, %v1484, 0
      %v1561 = vsel %vm770, %v1488, 0
      %v1564 = vsel %vm770, %v1492, 0
      %v1567 = vsel %vm770, %v1496, 0
      %v1570 = vsel %vm770, %v1500, 0
      %v1573 = vsel %vm770, %v1504, 0
      %v1576 = vsel %vm770, %v1508, 0
      %v1579 = vsel %vm770, %v1512, 0
      %v1582 = vsel %vm770, %v1516, 0
      %v1585 = vsel %vm770, %v1520, 0
      %v1588 = vsel %vm770, %v1529, 0
      %v1591 = vsel %vm770, %v1538, 0
      %v1594 = vand.u32 %v523, %v828
      %1596 = vmatpush.bf16.msra.mxu0 0
      %1597 = vmatpush.bf16.msra.mxu0 0
      %1598 = vmatpush.bf16.msra.mxu0 0
      %1599 = vmatpush.bf16.msra.mxu0 0
      %1600 = vmatpush.bf16.msra.mxu0 0
      %1601 = vmatpush.bf16.msra.mxu0 0
      %1602 = vmatpush.bf16.msra.mxu0 0
      %1603 = vmatpush.bf16.msra.mxu0 %v1594
      %1604 = vmatmul.bf16.gmra.mxu0 %v1540
      %v1605 = vpop.f32.mrf.mxu0
      %v1606 = vadd.f32 0.0, %v1605
      %v1607 = vpop.f32.mrf.mxu0
      %v1608 = vadd.f32 0.0, %v1607
      %1609 = vmatmul.bf16.gmra.mxu0 %v1543
      %v1610 = vpop.f32.mrf.mxu0
      %v1611 = vadd.f32 0.0, %v1610
      %v1612 = vpop.f32.mrf.mxu0
      %v1613 = vadd.f32 0.0, %v1612
      %1614 = vmatmul.bf16.gmra.mxu0 %v1546
      %v1615 = vpop.f32.mrf.mxu0
      %v1616 = vadd.f32 0.0, %v1615
      %v1617 = vpop.f32.mrf.mxu0
      %v1618 = vadd.f32 0.0, %v1617
      %1619 = vmatmul.bf16.gmra.mxu0 %v1549
      %v1620 = vpop.f32.mrf.mxu0
      %v1621 = vadd.f32 0.0, %v1620
      %v1622 = vpop.f32.mrf.mxu0
      %v1623 = vadd.f32 0.0, %v1622
      %1624 = vmatmul.bf16.gmra.mxu0 %v1552
      %v1625 = vpop.f32.mrf.mxu0
      %v1626 = vadd.f32 0.0, %v1625
      %v1627 = vpop.f32.mrf.mxu0
      %v1628 = vadd.f32 0.0, %v1627
      %1629 = vmatmul.bf16.gmra.mxu0 %v1555
      %v1630 = vpop.f32.mrf.mxu0
      %v1631 = vadd.f32 0.0, %v1630
      %v1632 = vpop.f32.mrf.mxu0
      %v1633 = vadd.f32 0.0, %v1632
      %1634 = vmatmul.bf16.gmra.mxu0 %v1558
      %v1635 = vpop.f32.mrf.mxu0
      %v1636 = vadd.f32 0.0, %v1635
      %v1637 = vpop.f32.mrf.mxu0
      %v1638 = vadd.f32 0.0, %v1637
      %1639 = vmatmul.bf16.gmra.mxu0 %v1561
      %v1640 = vpop.f32.mrf.mxu0
      %v1641 = vadd.f32 0.0, %v1640
      %v1642 = vpop.f32.mrf.mxu0
      %v1643 = vadd.f32 0.0, %v1642
      %1644 = vmatmul.bf16.gmra.mxu0 %v1564
      %v1645 = vpop.f32.mrf.mxu0
      %v1646 = vadd.f32 0.0, %v1645
      %v1647 = vpop.f32.mrf.mxu0
      %v1648 = vadd.f32 0.0, %v1647
      %1649 = vmatmul.bf16.gmra.mxu0 %v1567
      %v1650 = vpop.f32.mrf.mxu0
      %v1651 = vadd.f32 0.0, %v1650
      %v1652 = vpop.f32.mrf.mxu0
      %v1653 = vadd.f32 0.0, %v1652
      %1654 = vmatmul.bf16.gmra.mxu0 %v1570
      %v1655 = vpop.f32.mrf.mxu0
      %v1656 = vadd.f32 0.0, %v1655
      %v1657 = vpop.f32.mrf.mxu0
      %v1658 = vadd.f32 0.0, %v1657
      %1659 = vmatmul.bf16.gmra.mxu0 %v1573
      %v1660 = vpop.f32.mrf.mxu0
      %v1661 = vadd.f32 0.0, %v1660
      %v1662 = vpop.f32.mrf.mxu0
      %v1663 = vadd.f32 0.0, %v1662
      %1664 = vmatmul.bf16.gmra.mxu0 %v1576
      %v1665 = vpop.f32.mrf.mxu0
      %v1666 = vadd.f32 0.0, %v1665
      %v1667 = vpop.f32.mrf.mxu0
      %v1668 = vadd.f32 0.0, %v1667
      %1669 = vmatmul.bf16.gmra.mxu0 %v1579
      %v1670 = vpop.f32.mrf.mxu0
      %v1671 = vadd.f32 0.0, %v1670
      %v1672 = vpop.f32.mrf.mxu0
      %v1673 = vadd.f32 0.0, %v1672
      %1674 = vmatmul.bf16.gmra.mxu0 %v1582
      %v1675 = vpop.f32.mrf.mxu0
      %v1676 = vadd.f32 0.0, %v1675
      %v1677 = vpop.f32.mrf.mxu0
      %v1678 = vadd.f32 0.0, %v1677
      %1679 = vmatmul.bf16.gmra.mxu0 %v1585
      %v1680 = vpop.f32.mrf.mxu0
      %v1681 = vadd.f32 0.0, %v1680
      %v1682 = vpop.f32.mrf.mxu0
      %v1683 = vadd.f32 0.0, %v1682
      %1684 = vmatmul.bf16.gmra.mxu0 %v1588
      %v1685 = vpop.f32.mrf.mxu0
      %v1686 = vadd.f32 0.0, %v1685
      %v1687 = vpop.f32.mrf.mxu0
      %v1688 = vadd.f32 0.0, %v1687
      %1689 = vmatmul.bf16.gmra.mxu0 %v1591
      %v1690 = vpop.f32.mrf.mxu0
      %v1691 = vadd.f32 0.0, %v1690
      %v1692 = vpop.f32.mrf.mxu0
      %v1693 = vadd.f32 0.0, %v1692
      %1694 = vdwg.mxu0
      %v1695 = vadd.f32 %v1417, %v1606
      %v1696 = vadd.f32 %v1418, %v1608
      %v1697 = vadd.f32 %v1419, %v1611
      %v1698 = vadd.f32 %v1420, %v1613
      %v1699 = vadd.f32 %v1421, %v1616
      %v1700 = vadd.f32 %v1422, %v1618
      %v1701 = vadd.f32 %v1423, %v1621
      %v1702 = vadd.f32 %v1424, %v1623
      %v1703 = vadd.f32 %v1425, %v1626
      %v1704 = vadd.f32 %v1426, %v1628
      %v1705 = vadd.f32 %v1427, %v1631
      %v1706 = vadd.f32 %v1428, %v1633
      %v1707 = vadd.f32 %v1429, %v1636
      %v1708 = vadd.f32 %v1430, %v1638
      %v1709 = vadd.f32 %v1431, %v1641
      %v1710 = vadd.f32 %v1432, %v1643
      %v1711 = vadd.f32 %v1433, %v1646
      %v1712 = vadd.f32 %v1434, %v1648
      %v1713 = vadd.f32 %v1435, %v1651
      %v1714 = vadd.f32 %v1436, %v1653
      %v1715 = vadd.f32 %v1437, %v1656
      %v1716 = vadd.f32 %v1438, %v1658
      %v1717 = vadd.f32 %v1439, %v1661
      %v1718 = vadd.f32 %v1440, %v1663
      %v1719 = vadd.f32 %v1441, %v1666
      %v1720 = vadd.f32 %v1442, %v1668
      %v1721 = vadd.f32 %v1443, %v1671
      %v1722 = vadd.f32 %v1444, %v1673
      %v1723 = vadd.f32 %v1445, %v1676
      %v1724 = vadd.f32 %v1446, %v1678
      %v1725 = vadd.f32 %v1447, %v1681
      %v1726 = vadd.f32 %v1448, %v1683
      %v1727 = vadd.f32 %v1449, %v1686
      %v1728 = vadd.f32 %v1450, %v1688
      %v1729 = vadd.f32 %v1451, %v1691
      %v1730 = vadd.f32 %v1452, %v1693
      %vm1731 = vcmask 1045504
      %v1732 = vrot.slane %v603, 2
      %v1733 = vrot.slane %v604, 2
      %v1734 = vsel %vm1731, %v1732, %v1733
      %v1735 = vrot.slane %v605, 2
      %v1736 = vsel %vm1731, %v1733, %v1735
      %v1737 = vrot.slane %v606, 2
      %v1738 = vsel %vm1731, %v1735, %v1737
      %v1739 = vrot.slane %v607, 2
      %v1740 = vsel %vm1731, %v1737, %v1739
      %v1741 = vrot.slane %v608, 2
      %v1742 = vsel %vm1731, %v1739, %v1741
      %v1743 = vrot.slane %v609, 2
      %v1744 = vsel %vm1731, %v1741, %v1743
      %v1745 = vrot.slane %v610, 2
      %v1746 = vsel %vm1731, %v1743, %v1745
      %v1747 = vrot.slane %v611, 2
      %v1748 = vsel %vm1731, %v1745, %v1747
      %v1749 = vrot.slane %v612, 2
      %v1750 = vsel %vm1731, %v1747, %v1749
      %v1751 = vrot.slane %v613, 2
      %v1752 = vsel %vm1731, %v1749, %v1751
      %v1753 = vrot.slane %v614, 2
      %v1754 = vsel %vm1731, %v1751, %v1753
      %v1755 = vrot.slane %v615, 2
      %v1756 = vsel %vm1731, %v1753, %v1755
      %v1757 = vrot.slane %v616, 2
      %v1758 = vsel %vm1731, %v1755, %v1757
      %v1759 = vrot.slane %v617, 2
      %v1760 = vsel %vm1731, %v1757, %v1759
      %v1761 = vrot.slane %v618, 2
      %v1762 = vsel %vm1731, %v1759, %v1761
      %v1763 = vrot.slane %v619, 2
      %v1764 = vsel %vm1731, %v1761, %v1763
      %v1765 = vrot.slane %v1303, 2
      %v1766 = vsel %vm1731, %v1763, %v1765
      %v1767 = vrot.slane %v1304, 2
      %v1768 = vsel %vm1731, %v1765, %v1767
      %v1770 = vsel %vm770, %v1734, 0
      %v1773 = vsel %vm770, %v1736, 0
      %v1776 = vsel %vm770, %v1738, 0
      %v1779 = vsel %vm770, %v1740, 0
      %v1782 = vsel %vm770, %v1742, 0
      %v1785 = vsel %vm770, %v1744, 0
      %v1788 = vsel %vm770, %v1746, 0
      %v1791 = vsel %vm770, %v1748, 0
      %v1794 = vsel %vm770, %v1750, 0
      %v1797 = vsel %vm770, %v1752, 0
      %v1800 = vsel %vm770, %v1754, 0
      %v1803 = vsel %vm770, %v1756, 0
      %v1806 = vsel %vm770, %v1758, 0
      %v1809 = vsel %vm770, %v1760, 0
      %v1812 = vsel %vm770, %v1762, 0
      %v1815 = vsel %vm770, %v1764, 0
      %v1818 = vsel %vm770, %v1766, 0
      %v1821 = vsel %vm770, %v1768, 0
      %v1824 = vand.u32 %v524, %v828
      %1826 = vmatpush.bf16.msra.mxu0 0
      %1827 = vmatpush.bf16.msra.mxu0 0
      %1828 = vmatpush.bf16.msra.mxu0 0
      %1829 = vmatpush.bf16.msra.mxu0 0
      %1830 = vmatpush.bf16.msra.mxu0 0
      %1831 = vmatpush.bf16.msra.mxu0 0
      %1832 = vmatpush.bf16.msra.mxu0 0
      %1833 = vmatpush.bf16.msra.mxu0 %v1824
      %1834 = vmatmul.bf16.gmra.mxu0 %v1770
      %v1835 = vpop.f32.mrf.mxu0
      %v1836 = vadd.f32 0.0, %v1835
      %v1837 = vpop.f32.mrf.mxu0
      %v1838 = vadd.f32 0.0, %v1837
      %1839 = vmatmul.bf16.gmra.mxu0 %v1773
      %v1840 = vpop.f32.mrf.mxu0
      %v1841 = vadd.f32 0.0, %v1840
      %v1842 = vpop.f32.mrf.mxu0
      %v1843 = vadd.f32 0.0, %v1842
      %1844 = vmatmul.bf16.gmra.mxu0 %v1776
      %v1845 = vpop.f32.mrf.mxu0
      %v1846 = vadd.f32 0.0, %v1845
      %v1847 = vpop.f32.mrf.mxu0
      %v1848 = vadd.f32 0.0, %v1847
      %1849 = vmatmul.bf16.gmra.mxu0 %v1779
      %v1850 = vpop.f32.mrf.mxu0
      %v1851 = vadd.f32 0.0, %v1850
      %v1852 = vpop.f32.mrf.mxu0
      %v1853 = vadd.f32 0.0, %v1852
      %1854 = vmatmul.bf16.gmra.mxu0 %v1782
      %v1855 = vpop.f32.mrf.mxu0
      %v1856 = vadd.f32 0.0, %v1855
      %v1857 = vpop.f32.mrf.mxu0
      %v1858 = vadd.f32 0.0, %v1857
      %1859 = vmatmul.bf16.gmra.mxu0 %v1785
      %v1860 = vpop.f32.mrf.mxu0
      %v1861 = vadd.f32 0.0, %v1860
      %v1862 = vpop.f32.mrf.mxu0
      %v1863 = vadd.f32 0.0, %v1862
      %1864 = vmatmul.bf16.gmra.mxu0 %v1788
      %v1865 = vpop.f32.mrf.mxu0
      %v1866 = vadd.f32 0.0, %v1865
      %v1867 = vpop.f32.mrf.mxu0
      %v1868 = vadd.f32 0.0, %v1867
      %1869 = vmatmul.bf16.gmra.mxu0 %v1791
      %v1870 = vpop.f32.mrf.mxu0
      %v1871 = vadd.f32 0.0, %v1870
      %v1872 = vpop.f32.mrf.mxu0
      %v1873 = vadd.f32 0.0, %v1872
      %1874 = vmatmul.bf16.gmra.mxu0 %v1794
      %v1875 = vpop.f32.mrf.mxu0
      %v1876 = vadd.f32 0.0, %v1875
      %v1877 = vpop.f32.mrf.mxu0
      %v1878 = vadd.f32 0.0, %v1877
      %1879 = vmatmul.bf16.gmra.mxu0 %v1797
      %v1880 = vpop.f32.mrf.mxu0
      %v1881 = vadd.f32 0.0, %v1880
      %v1882 = vpop.f32.mrf.mxu0
      %v1883 = vadd.f32 0.0, %v1882
      %1884 = vmatmul.bf16.gmra.mxu0 %v1800
      %v1885 = vpop.f32.mrf.mxu0
      %v1886 = vadd.f32 0.0, %v1885
      %v1887 = vpop.f32.mrf.mxu0
      %v1888 = vadd.f32 0.0, %v1887
      %1889 = vmatmul.bf16.gmra.mxu0 %v1803
      %v1890 = vpop.f32.mrf.mxu0
      %v1891 = vadd.f32 0.0, %v1890
      %v1892 = vpop.f32.mrf.mxu0
      %v1893 = vadd.f32 0.0, %v1892
      %1894 = vmatmul.bf16.gmra.mxu0 %v1806
      %v1895 = vpop.f32.mrf.mxu0
      %v1896 = vadd.f32 0.0, %v1895
      %v1897 = vpop.f32.mrf.mxu0
      %v1898 = vadd.f32 0.0, %v1897
      %1899 = vmatmul.bf16.gmra.mxu0 %v1809
      %v1900 = vpop.f32.mrf.mxu0
      %v1901 = vadd.f32 0.0, %v1900
      %v1902 = vpop.f32.mrf.mxu0
      %v1903 = vadd.f32 0.0, %v1902
      %1904 = vmatmul.bf16.gmra.mxu0 %v1812
      %v1905 = vpop.f32.mrf.mxu0
      %v1906 = vadd.f32 0.0, %v1905
      %v1907 = vpop.f32.mrf.mxu0
      %v1908 = vadd.f32 0.0, %v1907
      %1909 = vmatmul.bf16.gmra.mxu0 %v1815
      %v1910 = vpop.f32.mrf.mxu0
      %v1911 = vadd.f32 0.0, %v1910
      %v1912 = vpop.f32.mrf.mxu0
      %v1913 = vadd.f32 0.0, %v1912
      %1914 = vmatmul.bf16.gmra.mxu0 %v1818
      %v1915 = vpop.f32.mrf.mxu0
      %v1916 = vadd.f32 0.0, %v1915
      %v1917 = vpop.f32.mrf.mxu0
      %v1918 = vadd.f32 0.0, %v1917
      %1919 = vmatmul.bf16.gmra.mxu0 %v1821
      %v1920 = vpop.f32.mrf.mxu0
      %v1921 = vadd.f32 0.0, %v1920
      %v1922 = vpop.f32.mrf.mxu0
      %v1923 = vadd.f32 0.0, %v1922
      %1924 = vdwg.mxu0
      %v1925 = vadd.f32 %v1695, %v1836
      %v1926 = vadd.f32 %v1696, %v1838
      %v1927 = vadd.f32 %v1697, %v1841
      %v1928 = vadd.f32 %v1698, %v1843
      %v1929 = vadd.f32 %v1699, %v1846
      %v1930 = vadd.f32 %v1700, %v1848
      %v1931 = vadd.f32 %v1701, %v1851
      %v1932 = vadd.f32 %v1702, %v1853
      %v1933 = vadd.f32 %v1703, %v1856
      %v1934 = vadd.f32 %v1704, %v1858
      %v1935 = vadd.f32 %v1705, %v1861
      %v1936 = vadd.f32 %v1706, %v1863
      %v1937 = vadd.f32 %v1707, %v1866
      %v1938 = vadd.f32 %v1708, %v1868
      %v1939 = vadd.f32 %v1709, %v1871
      %v1940 = vadd.f32 %v1710, %v1873
      %v1941 = vadd.f32 %v1711, %v1876
      %v1942 = vadd.f32 %v1712, %v1878
      %v1943 = vadd.f32 %v1713, %v1881
      %v1944 = vadd.f32 %v1714, %v1883
      %v1945 = vadd.f32 %v1715, %v1886
      %v1946 = vadd.f32 %v1716, %v1888
      %v1947 = vadd.f32 %v1717, %v1891
      %v1948 = vadd.f32 %v1718, %v1893
      %v1949 = vadd.f32 %v1719, %v1896
      %v1950 = vadd.f32 %v1720, %v1898
      %v1951 = vadd.f32 %v1721, %v1901
      %v1952 = vadd.f32 %v1722, %v1903
      %v1953 = vadd.f32 %v1723, %v1906
      %v1954 = vadd.f32 %v1724, %v1908
      %v1955 = vadd.f32 %v1725, %v1911
      %v1956 = vadd.f32 %v1726, %v1913
      %v1957 = vadd.f32 %v1727, %v1916
      %v1958 = vadd.f32 %v1728, %v1918
      %v1959 = vadd.f32 %v1729, %v1921
      %v1960 = vadd.f32 %v1730, %v1923
      %v1963 = vunpack.c.l.b16 %v517
      %v1964 = vunpack.c.l.b16 %v518
      %v1965 = vpack.c.b16 %v1963, %v1302
      %v1966 = vpack.c.b16 %v1964, %v1964
      %v1967 = vrot.slane %v1965, 2
      %v1968 = vsel %vm1731, %v1765, %v1967
      %v1969 = vrot.slane %v1966, 2
      %v1970 = vsel %vm1731, %v1967, %v1969
      %v1972 = vsel %vm770, %v1968, 0
      %v1975 = vsel %vm770, %v1970, 0
      %v1978 = vand.u32 %v525, %v828
      %1980 = vmatpush.bf16.msra.mxu0 0
      %1981 = vmatpush.bf16.msra.mxu0 0
      %1982 = vmatpush.bf16.msra.mxu0 0
      %1983 = vmatpush.bf16.msra.mxu0 0
      %1984 = vmatpush.bf16.msra.mxu0 0
      %1985 = vmatpush.bf16.msra.mxu0 0
      %1986 = vmatpush.bf16.msra.mxu0 0
      %1987 = vmatpush.bf16.msra.mxu0 %v1978
      %1988 = vmatmul.bf16.gmra.mxu0 %v1773
      %v1989 = vpop.f32.mrf.mxu0
      %v1990 = vadd.f32 0.0, %v1989
      %v1991 = vpop.f32.mrf.mxu0
      %v1992 = vadd.f32 0.0, %v1991
      %1993 = vmatmul.bf16.gmra.mxu0 %v1776
      %v1994 = vpop.f32.mrf.mxu0
      %v1995 = vadd.f32 0.0, %v1994
      %v1996 = vpop.f32.mrf.mxu0
      %v1997 = vadd.f32 0.0, %v1996
      %1998 = vmatmul.bf16.gmra.mxu0 %v1779
      %v1999 = vpop.f32.mrf.mxu0
      %v2000 = vadd.f32 0.0, %v1999
      %v2001 = vpop.f32.mrf.mxu0
      %v2002 = vadd.f32 0.0, %v2001
      %2003 = vmatmul.bf16.gmra.mxu0 %v1782
      %v2004 = vpop.f32.mrf.mxu0
      %v2005 = vadd.f32 0.0, %v2004
      %v2006 = vpop.f32.mrf.mxu0
      %v2007 = vadd.f32 0.0, %v2006
      %2008 = vmatmul.bf16.gmra.mxu0 %v1785
      %v2009 = vpop.f32.mrf.mxu0
      %v2010 = vadd.f32 0.0, %v2009
      %v2011 = vpop.f32.mrf.mxu0
      %v2012 = vadd.f32 0.0, %v2011
      %2013 = vmatmul.bf16.gmra.mxu0 %v1788
      %v2014 = vpop.f32.mrf.mxu0
      %v2015 = vadd.f32 0.0, %v2014
      %v2016 = vpop.f32.mrf.mxu0
      %v2017 = vadd.f32 0.0, %v2016
      %2018 = vmatmul.bf16.gmra.mxu0 %v1791
      %v2019 = vpop.f32.mrf.mxu0
      %v2020 = vadd.f32 0.0, %v2019
      %v2021 = vpop.f32.mrf.mxu0
      %v2022 = vadd.f32 0.0, %v2021
      %2023 = vmatmul.bf16.gmra.mxu0 %v1794
      %v2024 = vpop.f32.mrf.mxu0
      %v2025 = vadd.f32 0.0, %v2024
      %v2026 = vpop.f32.mrf.mxu0
      %v2027 = vadd.f32 0.0, %v2026
      %2028 = vmatmul.bf16.gmra.mxu0 %v1797
      %v2029 = vpop.f32.mrf.mxu0
      %v2030 = vadd.f32 0.0, %v2029
      %v2031 = vpop.f32.mrf.mxu0
      %v2032 = vadd.f32 0.0, %v2031
      %2033 = vmatmul.bf16.gmra.mxu0 %v1800
      %v2034 = vpop.f32.mrf.mxu0
      %v2035 = vadd.f32 0.0, %v2034
      %v2036 = vpop.f32.mrf.mxu0
      %v2037 = vadd.f32 0.0, %v2036
      %2038 = vmatmul.bf16.gmra.mxu0 %v1803
      %v2039 = vpop.f32.mrf.mxu0
      %v2040 = vadd.f32 0.0, %v2039
      %v2041 = vpop.f32.mrf.mxu0
      %v2042 = vadd.f32 0.0, %v2041
      %2043 = vmatmul.bf16.gmra.mxu0 %v1806
      %v2044 = vpop.f32.mrf.mxu0
      %v2045 = vadd.f32 0.0, %v2044
      %v2046 = vpop.f32.mrf.mxu0
      %v2047 = vadd.f32 0.0, %v2046
      %2048 = vmatmul.bf16.gmra.mxu0 %v1809
      %v2049 = vpop.f32.mrf.mxu0
      %v2050 = vadd.f32 0.0, %v2049
      %v2051 = vpop.f32.mrf.mxu0
      %v2052 = vadd.f32 0.0, %v2051
      %2053 = vmatmul.bf16.gmra.mxu0 %v1812
      %v2054 = vpop.f32.mrf.mxu0
      %v2055 = vadd.f32 0.0, %v2054
      %v2056 = vpop.f32.mrf.mxu0
      %v2057 = vadd.f32 0.0, %v2056
      %2058 = vmatmul.bf16.gmra.mxu0 %v1815
      %v2059 = vpop.f32.mrf.mxu0
      %v2060 = vadd.f32 0.0, %v2059
      %v2061 = vpop.f32.mrf.mxu0
      %v2062 = vadd.f32 0.0, %v2061
      %2063 = vmatmul.bf16.gmra.mxu0 %v1818
      %v2064 = vpop.f32.mrf.mxu0
      %v2065 = vadd.f32 0.0, %v2064
      %v2066 = vpop.f32.mrf.mxu0
      %v2067 = vadd.f32 0.0, %v2066
      %2068 = vmatmul.bf16.gmra.mxu0 %v1972
      %v2069 = vpop.f32.mrf.mxu0
      %v2070 = vadd.f32 0.0, %v2069
      %v2071 = vpop.f32.mrf.mxu0
      %v2072 = vadd.f32 0.0, %v2071
      %2073 = vmatmul.bf16.gmra.mxu0 %v1975
      %v2074 = vpop.f32.mrf.mxu0
      %v2075 = vadd.f32 0.0, %v2074
      %v2076 = vpop.f32.mrf.mxu0
      %v2077 = vadd.f32 0.0, %v2076
      %2078 = vdwg.mxu0
      %v2079 = vadd.f32 %v1925, %v1990
      %v2080 = vadd.f32 %v1926, %v1992
      %v2081 = vadd.f32 %v1927, %v1995
      %v2082 = vadd.f32 %v1928, %v1997
      %v2083 = vadd.f32 %v1929, %v2000
      %v2084 = vadd.f32 %v1930, %v2002
      %v2085 = vadd.f32 %v1931, %v2005
      %v2086 = vadd.f32 %v1932, %v2007
      %v2087 = vadd.f32 %v1933, %v2010
      %v2088 = vadd.f32 %v1934, %v2012
      %v2089 = vadd.f32 %v1935, %v2015
      %v2090 = vadd.f32 %v1936, %v2017
      %v2091 = vadd.f32 %v1937, %v2020
      %v2092 = vadd.f32 %v1938, %v2022
      %v2093 = vadd.f32 %v1939, %v2025
      %v2094 = vadd.f32 %v1940, %v2027
      %v2095 = vadd.f32 %v1941, %v2030
      %v2096 = vadd.f32 %v1942, %v2032
      %v2097 = vadd.f32 %v1943, %v2035
      %v2098 = vadd.f32 %v1944, %v2037
      %v2099 = vadd.f32 %v1945, %v2040
      %v2100 = vadd.f32 %v1946, %v2042
      %v2101 = vadd.f32 %v1947, %v2045
      %v2102 = vadd.f32 %v1948, %v2047
      %v2103 = vadd.f32 %v1949, %v2050
      %v2104 = vadd.f32 %v1950, %v2052
      %v2105 = vadd.f32 %v1951, %v2055
      %v2106 = vadd.f32 %v1952, %v2057
      %v2107 = vadd.f32 %v1953, %v2060
      %v2108 = vadd.f32 %v1954, %v2062
      %v2109 = vadd.f32 %v1955, %v2065
      %v2110 = vadd.f32 %v1956, %v2067
      %v2111 = vadd.f32 %v1957, %v2070
      %v2112 = vadd.f32 %v1958, %v2072
      %v2113 = vadd.f32 %v1959, %v2075
      %v2114 = vadd.f32 %v1960, %v2077
      %vm2115 = vsmask.f32 5376
      %v2116 = vrot.slane %v642, 2
      %v2117 = vrot.slane %v638, 3
      %v2118 = vor.u32 %v2116, %v2117
      %v2119 = vrot.slane %v650, 2
      %v2120 = vrot.slane %v646, 3
      %v2121 = vor.u32 %v2119, %v2120
      %v2122 = vsel %vm2115, %v2118, %v2121
      %v2123 = vrot.slane %v658, 2
      %v2124 = vrot.slane %v654, 3
      %v2125 = vor.u32 %v2123, %v2124
      %v2126 = vsel %vm2115, %v2121, %v2125
      %v2127 = vrot.slane %v666, 2
      %v2128 = vrot.slane %v662, 3
      %v2129 = vor.u32 %v2127, %v2128
      %v2130 = vsel %vm2115, %v2125, %v2129
      %v2131 = vrot.slane %v674, 2
      %v2132 = vrot.slane %v670, 3
      %v2133 = vor.u32 %v2131, %v2132
      %v2134 = vsel %vm2115, %v2129, %v2133
      %v2135 = vrot.slane %v682, 2
      %v2136 = vrot.slane %v678, 3
      %v2137 = vor.u32 %v2135, %v2136
      %v2138 = vsel %vm2115, %v2133, %v2137
      %v2139 = vrot.slane %v690, 2
      %v2140 = vrot.slane %v686, 3
      %v2141 = vor.u32 %v2139, %v2140
      %v2142 = vsel %vm2115, %v2137, %v2141
      %v2143 = vrot.slane %v698, 2
      %v2144 = vrot.slane %v694, 3
      %v2145 = vor.u32 %v2143, %v2144
      %v2146 = vsel %vm2115, %v2141, %v2145
      %v2147 = vrot.slane %v706, 2
      %v2148 = vrot.slane %v702, 3
      %v2149 = vor.u32 %v2147, %v2148
      %v2150 = vsel %vm2115, %v2145, %v2149
      %v2151 = vrot.slane %v714, 2
      %v2152 = vrot.slane %v710, 3
      %v2153 = vor.u32 %v2151, %v2152
      %v2154 = vsel %vm2115, %v2149, %v2153
      %v2155 = vrot.slane %v722, 2
      %v2156 = vrot.slane %v718, 3
      %v2157 = vor.u32 %v2155, %v2156
      %v2158 = vsel %vm2115, %v2153, %v2157
      %v2159 = vrot.slane %v730, 2
      %v2160 = vrot.slane %v726, 3
      %v2161 = vor.u32 %v2159, %v2160
      %v2162 = vsel %vm2115, %v2157, %v2161
      %v2163 = vrot.slane %v738, 2
      %v2164 = vrot.slane %v734, 3
      %v2165 = vor.u32 %v2163, %v2164
      %v2166 = vsel %vm2115, %v2161, %v2165
      %v2167 = vrot.slane %v746, 2
      %v2168 = vrot.slane %v742, 3
      %v2169 = vor.u32 %v2167, %v2168
      %v2170 = vsel %vm2115, %v2165, %v2169
      %v2171 = vrot.slane %v754, 2
      %v2172 = vrot.slane %v750, 3
      %v2173 = vor.u32 %v2171, %v2172
      %v2174 = vsel %vm2115, %v2169, %v2173
      %v2175 = vrot.slane %v762, 2
      %v2176 = vrot.slane %v758, 3
      %v2177 = vor.u32 %v2175, %v2176
      %v2178 = vsel %vm2115, %v2173, %v2177
      %v2179 = vrot.slane %v1522, 2
      %v2180 = vrot.slane %v1525, 3
      %v2181 = vor.u32 %v2179, %v2180
      %v2182 = vsel %vm2115, %v2177, %v2181
      %v2184 = vshrl.u32 %v1965, 16
      %v2186 = vrot.slane %v2184, 2
      %v2187 = vshll.u32 %v1965, 16
      %v2189 = vrot.slane %v2187, 3
      %v2190 = vor.u32 %v2186, %v2189
      %v2191 = vsel %vm2115, %v2181, %v2190
      %v2193 = vshrl.u32 %v1966, 16
      %v2195 = vrot.slane %v2193, 2
      %v2196 = vshll.u32 %v1966, 16
      %v2198 = vrot.slane %v2196, 3
      %v2199 = vor.u32 %v2195, %v2198
      %v2200 = vsel %vm2115, %v2190, %v2199
      %v2202 = vsel %vm770, %v2122, 0
      %v2205 = vsel %vm770, %v2126, 0
      %v2208 = vsel %vm770, %v2130, 0
      %v2211 = vsel %vm770, %v2134, 0
      %v2214 = vsel %vm770, %v2138, 0
      %v2217 = vsel %vm770, %v2142, 0
      %v2220 = vsel %vm770, %v2146, 0
      %v2223 = vsel %vm770, %v2150, 0
      %v2226 = vsel %vm770, %v2154, 0
      %v2229 = vsel %vm770, %v2158, 0
      %v2232 = vsel %vm770, %v2162, 0
      %v2235 = vsel %vm770, %v2166, 0
      %v2238 = vsel %vm770, %v2170, 0
      %v2241 = vsel %vm770, %v2174, 0
      %v2244 = vsel %vm770, %v2178, 0
      %v2247 = vsel %vm770, %v2182, 0
      %v2250 = vsel %vm770, %v2191, 0
      %v2253 = vsel %vm770, %v2200, 0
      %v2256 = vand.u32 %v526, %v828
      %2258 = vmatpush.bf16.msra.mxu0 0
      %2259 = vmatpush.bf16.msra.mxu0 0
      %2260 = vmatpush.bf16.msra.mxu0 0
      %2261 = vmatpush.bf16.msra.mxu0 0
      %2262 = vmatpush.bf16.msra.mxu0 0
      %2263 = vmatpush.bf16.msra.mxu0 0
      %2264 = vmatpush.bf16.msra.mxu0 0
      %2265 = vmatpush.bf16.msra.mxu0 %v2256
      %2266 = vmatmul.bf16.gmra.mxu0 %v2202
      %v2267 = vpop.f32.mrf.mxu0
      %v2268 = vadd.f32 0.0, %v2267
      %v2269 = vpop.f32.mrf.mxu0
      %v2270 = vadd.f32 0.0, %v2269
      %2271 = vmatmul.bf16.gmra.mxu0 %v2205
      %v2272 = vpop.f32.mrf.mxu0
      %v2273 = vadd.f32 0.0, %v2272
      %v2274 = vpop.f32.mrf.mxu0
      %v2275 = vadd.f32 0.0, %v2274
      %2276 = vmatmul.bf16.gmra.mxu0 %v2208
      %v2277 = vpop.f32.mrf.mxu0
      %v2278 = vadd.f32 0.0, %v2277
      %v2279 = vpop.f32.mrf.mxu0
      %v2280 = vadd.f32 0.0, %v2279
      %2281 = vmatmul.bf16.gmra.mxu0 %v2211
      %v2282 = vpop.f32.mrf.mxu0
      %v2283 = vadd.f32 0.0, %v2282
      %v2284 = vpop.f32.mrf.mxu0
      %v2285 = vadd.f32 0.0, %v2284
      %2286 = vmatmul.bf16.gmra.mxu0 %v2214
      %v2287 = vpop.f32.mrf.mxu0
      %v2288 = vadd.f32 0.0, %v2287
      %v2289 = vpop.f32.mrf.mxu0
      %v2290 = vadd.f32 0.0, %v2289
      %2291 = vmatmul.bf16.gmra.mxu0 %v2217
      %v2292 = vpop.f32.mrf.mxu0
      %v2293 = vadd.f32 0.0, %v2292
      %v2294 = vpop.f32.mrf.mxu0
      %v2295 = vadd.f32 0.0, %v2294
      %2296 = vmatmul.bf16.gmra.mxu0 %v2220
      %v2297 = vpop.f32.mrf.mxu0
      %v2298 = vadd.f32 0.0, %v2297
      %v2299 = vpop.f32.mrf.mxu0
      %v2300 = vadd.f32 0.0, %v2299
      %2301 = vmatmul.bf16.gmra.mxu0 %v2223
      %v2302 = vpop.f32.mrf.mxu0
      %v2303 = vadd.f32 0.0, %v2302
      %v2304 = vpop.f32.mrf.mxu0
      %v2305 = vadd.f32 0.0, %v2304
      %2306 = vmatmul.bf16.gmra.mxu0 %v2226
      %v2307 = vpop.f32.mrf.mxu0
      %v2308 = vadd.f32 0.0, %v2307
      %v2309 = vpop.f32.mrf.mxu0
      %v2310 = vadd.f32 0.0, %v2309
      %2311 = vmatmul.bf16.gmra.mxu0 %v2229
      %v2312 = vpop.f32.mrf.mxu0
      %v2313 = vadd.f32 0.0, %v2312
      %v2314 = vpop.f32.mrf.mxu0
      %v2315 = vadd.f32 0.0, %v2314
      %2316 = vmatmul.bf16.gmra.mxu0 %v2232
      %v2317 = vpop.f32.mrf.mxu0
      %v2318 = vadd.f32 0.0, %v2317
      %v2319 = vpop.f32.mrf.mxu0
      %v2320 = vadd.f32 0.0, %v2319
      %2321 = vmatmul.bf16.gmra.mxu0 %v2235
      %v2322 = vpop.f32.mrf.mxu0
      %v2323 = vadd.f32 0.0, %v2322
      %v2324 = vpop.f32.mrf.mxu0
      %v2325 = vadd.f32 0.0, %v2324
      %2326 = vmatmul.bf16.gmra.mxu0 %v2238
      %v2327 = vpop.f32.mrf.mxu0
      %v2328 = vadd.f32 0.0, %v2327
      %v2329 = vpop.f32.mrf.mxu0
      %v2330 = vadd.f32 0.0, %v2329
      %2331 = vmatmul.bf16.gmra.mxu0 %v2241
      %v2332 = vpop.f32.mrf.mxu0
      %v2333 = vadd.f32 0.0, %v2332
      %v2334 = vpop.f32.mrf.mxu0
      %v2335 = vadd.f32 0.0, %v2334
      %2336 = vmatmul.bf16.gmra.mxu0 %v2244
      %v2337 = vpop.f32.mrf.mxu0
      %v2338 = vadd.f32 0.0, %v2337
      %v2339 = vpop.f32.mrf.mxu0
      %v2340 = vadd.f32 0.0, %v2339
      %2341 = vmatmul.bf16.gmra.mxu0 %v2247
      %v2342 = vpop.f32.mrf.mxu0
      %v2343 = vadd.f32 0.0, %v2342
      %v2344 = vpop.f32.mrf.mxu0
      %v2345 = vadd.f32 0.0, %v2344
      %2346 = vmatmul.bf16.gmra.mxu0 %v2250
      %v2347 = vpop.f32.mrf.mxu0
      %v2348 = vadd.f32 0.0, %v2347
      %v2349 = vpop.f32.mrf.mxu0
      %v2350 = vadd.f32 0.0, %v2349
      %2351 = vmatmul.bf16.gmra.mxu0 %v2253
      %v2352 = vpop.f32.mrf.mxu0
      %v2353 = vadd.f32 0.0, %v2352
      %v2354 = vpop.f32.mrf.mxu0
      %v2355 = vadd.f32 0.0, %v2354
      %2356 = vdwg.mxu0
      %v2357 = vadd.f32 %v2079, %v2268
      %v2358 = vadd.f32 %v2080, %v2270
      %v2359 = vadd.f32 %v2081, %v2273
      %v2360 = vadd.f32 %v2082, %v2275
      %v2361 = vadd.f32 %v2083, %v2278
      %v2362 = vadd.f32 %v2084, %v2280
      %v2363 = vadd.f32 %v2085, %v2283
      %v2364 = vadd.f32 %v2086, %v2285
      %v2365 = vadd.f32 %v2087, %v2288
      %v2366 = vadd.f32 %v2088, %v2290
      %v2367 = vadd.f32 %v2089, %v2293
      %v2368 = vadd.f32 %v2090, %v2295
      %v2369 = vadd.f32 %v2091, %v2298
      %v2370 = vadd.f32 %v2092, %v2300
      %v2371 = vadd.f32 %v2093, %v2303
      %v2372 = vadd.f32 %v2094, %v2305
      %v2373 = vadd.f32 %v2095, %v2308
      %v2374 = vadd.f32 %v2096, %v2310
      %v2375 = vadd.f32 %v2097, %v2313
      %v2376 = vadd.f32 %v2098, %v2315
      %v2377 = vadd.f32 %v2099, %v2318
      %v2378 = vadd.f32 %v2100, %v2320
      %v2379 = vadd.f32 %v2101, %v2323
      %v2380 = vadd.f32 %v2102, %v2325
      %v2381 = vadd.f32 %v2103, %v2328
      %v2382 = vadd.f32 %v2104, %v2330
      %v2383 = vadd.f32 %v2105, %v2333
      %v2384 = vadd.f32 %v2106, %v2335
      %v2385 = vadd.f32 %v2107, %v2338
      %v2386 = vadd.f32 %v2108, %v2340
      %v2387 = vadd.f32 %v2109, %v2343
      %v2388 = vadd.f32 %v2110, %v2345
      %v2389 = vadd.f32 %v2111, %v2348
      %v2390 = vadd.f32 %v2112, %v2350
      %v2391 = vadd.f32 %v2113, %v2353
      %v2392 = vadd.f32 %v2114, %v2355
      %vm2393 = vcmask 1044480
      %v2394 = vrot.slane %v604, 3
      %v2395 = vrot.slane %v605, 3
      %v2396 = vsel %vm2393, %v2394, %v2395
      %v2397 = vrot.slane %v606, 3
      %v2398 = vsel %vm2393, %v2395, %v2397
      %v2399 = vrot.slane %v607, 3
      %v2400 = vsel %vm2393, %v2397, %v2399
      %v2401 = vrot.slane %v608, 3
      %v2402 = vsel %vm2393, %v2399, %v2401
      %v2403 = vrot.slane %v609, 3
      %v2404 = vsel %vm2393, %v2401, %v2403
      %v2405 = vrot.slane %v610, 3
      %v2406 = vsel %vm2393, %v2403, %v2405
      %v2407 = vrot.slane %v611, 3
      %v2408 = vsel %vm2393, %v2405, %v2407
      %v2409 = vrot.slane %v612, 3
      %v2410 = vsel %vm2393, %v2407, %v2409
      %v2411 = vrot.slane %v613, 3
      %v2412 = vsel %vm2393, %v2409, %v2411
      %v2413 = vrot.slane %v614, 3
      %v2414 = vsel %vm2393, %v2411, %v2413
      %v2415 = vrot.slane %v615, 3
      %v2416 = vsel %vm2393, %v2413, %v2415
      %v2417 = vrot.slane %v616, 3
      %v2418 = vsel %vm2393, %v2415, %v2417
      %v2419 = vrot.slane %v617, 3
      %v2420 = vsel %vm2393, %v2417, %v2419
      %v2421 = vrot.slane %v618, 3
      %v2422 = vsel %vm2393, %v2419, %v2421
      %v2423 = vrot.slane %v619, 3
      %v2424 = vsel %vm2393, %v2421, %v2423
      %v2425 = vrot.slane %v1303, 3
      %v2426 = vsel %vm2393, %v2423, %v2425
      %v2427 = vrot.slane %v1965, 3
      %v2428 = vsel %vm2393, %v2425, %v2427
      %v2429 = vrot.slane %v1966, 3
      %v2430 = vsel %vm2393, %v2427, %v2429
      %v2432 = vsel %vm770, %v2396, 0
      %v2435 = vsel %vm770, %v2398, 0
      %v2438 = vsel %vm770, %v2400, 0
      %v2441 = vsel %vm770, %v2402, 0
      %v2444 = vsel %vm770, %v2404, 0
      %v2447 = vsel %vm770, %v2406, 0
      %v2450 = vsel %vm770, %v2408, 0
      %v2453 = vsel %vm770, %v2410, 0
      %v2456 = vsel %vm770, %v2412, 0
      %v2459 = vsel %vm770, %v2414, 0
      %v2462 = vsel %vm770, %v2416, 0
      %v2465 = vsel %vm770, %v2418, 0
      %v2468 = vsel %vm770, %v2420, 0
      %v2471 = vsel %vm770, %v2422, 0
      %v2474 = vsel %vm770, %v2424, 0
      %v2477 = vsel %vm770, %v2426, 0
      %v2480 = vsel %vm770, %v2428, 0
      %v2483 = vsel %vm770, %v2430, 0
      %v2486 = vand.u32 %v527, %v828
      %2488 = vmatpush.bf16.msra.mxu0 0
      %2489 = vmatpush.bf16.msra.mxu0 0
      %2490 = vmatpush.bf16.msra.mxu0 0
      %2491 = vmatpush.bf16.msra.mxu0 0
      %2492 = vmatpush.bf16.msra.mxu0 0
      %2493 = vmatpush.bf16.msra.mxu0 0
      %2494 = vmatpush.bf16.msra.mxu0 0
      %2495 = vmatpush.bf16.msra.mxu0 %v2486
      %2496 = vmatmul.bf16.gmra.mxu0 %v2432
      %v2497 = vpop.f32.mrf.mxu0
      %v2498 = vadd.f32 0.0, %v2497
      %v2499 = vpop.f32.mrf.mxu0
      %v2500 = vadd.f32 0.0, %v2499
      %2501 = vmatmul.bf16.gmra.mxu0 %v2435
      %v2502 = vpop.f32.mrf.mxu0
      %v2503 = vadd.f32 0.0, %v2502
      %v2504 = vpop.f32.mrf.mxu0
      %v2505 = vadd.f32 0.0, %v2504
      %2506 = vmatmul.bf16.gmra.mxu0 %v2438
      %v2507 = vpop.f32.mrf.mxu0
      %v2508 = vadd.f32 0.0, %v2507
      %v2509 = vpop.f32.mrf.mxu0
      %v2510 = vadd.f32 0.0, %v2509
      %2511 = vmatmul.bf16.gmra.mxu0 %v2441
      %v2512 = vpop.f32.mrf.mxu0
      %v2513 = vadd.f32 0.0, %v2512
      %v2514 = vpop.f32.mrf.mxu0
      %v2515 = vadd.f32 0.0, %v2514
      %2516 = vmatmul.bf16.gmra.mxu0 %v2444
      %v2517 = vpop.f32.mrf.mxu0
      %v2518 = vadd.f32 0.0, %v2517
      %v2519 = vpop.f32.mrf.mxu0
      %v2520 = vadd.f32 0.0, %v2519
      %2521 = vmatmul.bf16.gmra.mxu0 %v2447
      %v2522 = vpop.f32.mrf.mxu0
      %v2523 = vadd.f32 0.0, %v2522
      %v2524 = vpop.f32.mrf.mxu0
      %v2525 = vadd.f32 0.0, %v2524
      %2526 = vmatmul.bf16.gmra.mxu0 %v2450
      %v2527 = vpop.f32.mrf.mxu0
      %v2528 = vadd.f32 0.0, %v2527
      %v2529 = vpop.f32.mrf.mxu0
      %v2530 = vadd.f32 0.0, %v2529
      %2531 = vmatmul.bf16.gmra.mxu0 %v2453
      %v2532 = vpop.f32.mrf.mxu0
      %v2533 = vadd.f32 0.0, %v2532
      %v2534 = vpop.f32.mrf.mxu0
      %v2535 = vadd.f32 0.0, %v2534
      %2536 = vmatmul.bf16.gmra.mxu0 %v2456
      %v2537 = vpop.f32.mrf.mxu0
      %v2538 = vadd.f32 0.0, %v2537
      %v2539 = vpop.f32.mrf.mxu0
      %v2540 = vadd.f32 0.0, %v2539
      %2541 = vmatmul.bf16.gmra.mxu0 %v2459
      %v2542 = vpop.f32.mrf.mxu0
      %v2543 = vadd.f32 0.0, %v2542
      %v2544 = vpop.f32.mrf.mxu0
      %v2545 = vadd.f32 0.0, %v2544
      %2546 = vmatmul.bf16.gmra.mxu0 %v2462
      %v2547 = vpop.f32.mrf.mxu0
      %v2548 = vadd.f32 0.0, %v2547
      %v2549 = vpop.f32.mrf.mxu0
      %v2550 = vadd.f32 0.0, %v2549
      %2551 = vmatmul.bf16.gmra.mxu0 %v2465
      %v2552 = vpop.f32.mrf.mxu0
      %v2553 = vadd.f32 0.0, %v2552
      %v2554 = vpop.f32.mrf.mxu0
      %v2555 = vadd.f32 0.0, %v2554
      %2556 = vmatmul.bf16.gmra.mxu0 %v2468
      %v2557 = vpop.f32.mrf.mxu0
      %v2558 = vadd.f32 0.0, %v2557
      %v2559 = vpop.f32.mrf.mxu0
      %v2560 = vadd.f32 0.0, %v2559
      %2561 = vmatmul.bf16.gmra.mxu0 %v2471
      %v2562 = vpop.f32.mrf.mxu0
      %v2563 = vadd.f32 0.0, %v2562
      %v2564 = vpop.f32.mrf.mxu0
      %v2565 = vadd.f32 0.0, %v2564
      %2566 = vmatmul.bf16.gmra.mxu0 %v2474
      %v2567 = vpop.f32.mrf.mxu0
      %v2568 = vadd.f32 0.0, %v2567
      %v2569 = vpop.f32.mrf.mxu0
      %v2570 = vadd.f32 0.0, %v2569
      %2571 = vmatmul.bf16.gmra.mxu0 %v2477
      %v2572 = vpop.f32.mrf.mxu0
      %v2573 = vadd.f32 0.0, %v2572
      %v2574 = vpop.f32.mrf.mxu0
      %v2575 = vadd.f32 0.0, %v2574
      %2576 = vmatmul.bf16.gmra.mxu0 %v2480
      %v2577 = vpop.f32.mrf.mxu0
      %v2578 = vadd.f32 0.0, %v2577
      %v2579 = vpop.f32.mrf.mxu0
      %v2580 = vadd.f32 0.0, %v2579
      %2581 = vmatmul.bf16.gmra.mxu0 %v2483
      %v2582 = vpop.f32.mrf.mxu0
      %v2583 = vadd.f32 0.0, %v2582
      %v2584 = vpop.f32.mrf.mxu0
      %v2585 = vadd.f32 0.0, %v2584
      %2586 = vdwg.mxu0
      %v2587 = vadd.f32 %v2357, %v2498
      %v2588 = vadd.f32 %v2358, %v2500
      %v2589 = vadd.f32 %v2359, %v2503
      %v2590 = vadd.f32 %v2360, %v2505
      %v2591 = vadd.f32 %v2361, %v2508
      %v2592 = vadd.f32 %v2362, %v2510
      %v2593 = vadd.f32 %v2363, %v2513
      %v2594 = vadd.f32 %v2364, %v2515
      %v2595 = vadd.f32 %v2365, %v2518
      %v2596 = vadd.f32 %v2366, %v2520
      %v2597 = vadd.f32 %v2367, %v2523
      %v2598 = vadd.f32 %v2368, %v2525
      %v2599 = vadd.f32 %v2369, %v2528
      %v2600 = vadd.f32 %v2370, %v2530
      %v2601 = vadd.f32 %v2371, %v2533
      %v2602 = vadd.f32 %v2372, %v2535
      %v2603 = vadd.f32 %v2373, %v2538
      %v2604 = vadd.f32 %v2374, %v2540
      %v2605 = vadd.f32 %v2375, %v2543
      %v2606 = vadd.f32 %v2376, %v2545
      %v2607 = vadd.f32 %v2377, %v2548
      %v2608 = vadd.f32 %v2378, %v2550
      %v2609 = vadd.f32 %v2379, %v2553
      %v2610 = vadd.f32 %v2380, %v2555
      %v2611 = vadd.f32 %v2381, %v2558
      %v2612 = vadd.f32 %v2382, %v2560
      %v2613 = vadd.f32 %v2383, %v2563
      %v2614 = vadd.f32 %v2384, %v2565
      %v2615 = vadd.f32 %v2385, %v2568
      %v2616 = vadd.f32 %v2386, %v2570
      %v2617 = vadd.f32 %v2387, %v2573
      %v2618 = vadd.f32 %v2388, %v2575
      %v2619 = vadd.f32 %v2389, %v2578
      %v2620 = vadd.f32 %v2390, %v2580
      %v2621 = vadd.f32 %v2391, %v2583
      %v2622 = vadd.f32 %v2392, %v2585
      %v2623 = vld [vmem:[%s3] sm:$0x1]
      %v2625 = vperm.slane %v2623, 0
      %v2627 = vmul.f32 %v2587, %v2625
      %v2628 = vmul.f32 %v2588, %v2625
      %v2629 = vmul.f32 %v2589, %v2625
      %v2630 = vmul.f32 %v2590, %v2625
      %v2631 = vmul.f32 %v2591, %v2625
      %v2632 = vmul.f32 %v2592, %v2625
      %v2633 = vmul.f32 %v2593, %v2625
      %v2634 = vmul.f32 %v2594, %v2625
      %v2635 = vmul.f32 %v2595, %v2625
      %v2636 = vmul.f32 %v2596, %v2625
      %v2637 = vmul.f32 %v2597, %v2625
      %v2638 = vmul.f32 %v2598, %v2625
      %v2639 = vmul.f32 %v2599, %v2625
      %v2640 = vmul.f32 %v2600, %v2625
      %v2641 = vmul.f32 %v2601, %v2625
      %v2642 = vmul.f32 %v2602, %v2625
      %v2643 = vmul.f32 %v2603, %v2625
      %v2644 = vmul.f32 %v2604, %v2625
      %v2645 = vmul.f32 %v2605, %v2625
      %v2646 = vmul.f32 %v2606, %v2625
      %v2647 = vmul.f32 %v2607, %v2625
      %v2648 = vmul.f32 %v2608, %v2625
      %v2649 = vmul.f32 %v2609, %v2625
      %v2650 = vmul.f32 %v2610, %v2625
      %v2651 = vmul.f32 %v2611, %v2625
      %v2652 = vmul.f32 %v2612, %v2625
      %v2653 = vmul.f32 %v2613, %v2625
      %v2654 = vmul.f32 %v2614, %v2625
      %v2655 = vmul.f32 %v2615, %v2625
      %v2656 = vmul.f32 %v2616, %v2625
      %v2657 = vmul.f32 %v2617, %v2625
      %v2658 = vmul.f32 %v2618, %v2625
      %v2659 = vmul.f32 %v2619, %v2625
      %v2660 = vmul.f32 %v2620, %v2625
      %v2661 = vmul.f32 %v2621, %v2625
      %v2662 = vmul.f32 %v2622, %v2625
      %v2663 = vld [vmem:[%s4] sm:$0x1]
      %v2665 = vperm.slane %v2663, 0
      %v2667 = vadd.f32 %v2627, %v2665
      %v2668 = vadd.f32 %v2628, %v2665
      %v2669 = vadd.f32 %v2629, %v2665
      %v2670 = vadd.f32 %v2630, %v2665
      %v2671 = vadd.f32 %v2631, %v2665
      %v2672 = vadd.f32 %v2632, %v2665
      %v2673 = vadd.f32 %v2633, %v2665
      %v2674 = vadd.f32 %v2634, %v2665
      %v2675 = vadd.f32 %v2635, %v2665
      %v2676 = vadd.f32 %v2636, %v2665
      %v2677 = vadd.f32 %v2637, %v2665
      %v2678 = vadd.f32 %v2638, %v2665
      %v2679 = vadd.f32 %v2639, %v2665
      %v2680 = vadd.f32 %v2640, %v2665
      %v2681 = vadd.f32 %v2641, %v2665
      %v2682 = vadd.f32 %v2642, %v2665
      %v2683 = vadd.f32 %v2643, %v2665
      %v2684 = vadd.f32 %v2644, %v2665
      %v2685 = vadd.f32 %v2645, %v2665
      %v2686 = vadd.f32 %v2646, %v2665
      %v2687 = vadd.f32 %v2647, %v2665
      %v2688 = vadd.f32 %v2648, %v2665
      %v2689 = vadd.f32 %v2649, %v2665
      %v2690 = vadd.f32 %v2650, %v2665
      %v2691 = vadd.f32 %v2651, %v2665
      %v2692 = vadd.f32 %v2652, %v2665
      %v2693 = vadd.f32 %v2653, %v2665
      %v2694 = vadd.f32 %v2654, %v2665
      %v2695 = vadd.f32 %v2655, %v2665
      %v2696 = vadd.f32 %v2656, %v2665
      %v2697 = vadd.f32 %v2657, %v2665
      %v2698 = vadd.f32 %v2658, %v2665
      %v2699 = vadd.f32 %v2659, %v2665
      %v2700 = vadd.f32 %v2660, %v2665
      %v2701 = vadd.f32 %v2661, %v2665
      %v2702 = vadd.f32 %v2662, %v2665
      %v2703 = vmax.f32 %v2667, 0.0
      %v2704 = vmax.f32 %v2668, 0.0
      %v2705 = vmax.f32 %v2669, 0.0
      %v2706 = vmax.f32 %v2670, 0.0
      %v2707 = vmax.f32 %v2671, 0.0
      %v2708 = vmax.f32 %v2672, 0.0
      %v2709 = vmax.f32 %v2673, 0.0
      %v2710 = vmax.f32 %v2674, 0.0
      %v2711 = vmax.f32 %v2675, 0.0
      %v2712 = vmax.f32 %v2676, 0.0
      %v2713 = vmax.f32 %v2677, 0.0
      %v2714 = vmax.f32 %v2678, 0.0
      %v2715 = vmax.f32 %v2679, 0.0
      %v2716 = vmax.f32 %v2680, 0.0
      %v2717 = vmax.f32 %v2681, 0.0
      %v2718 = vmax.f32 %v2682, 0.0
      %v2719 = vmax.f32 %v2683, 0.0
      %v2720 = vmax.f32 %v2684, 0.0
      %v2721 = vmax.f32 %v2685, 0.0
      %v2722 = vmax.f32 %v2686, 0.0
      %v2723 = vmax.f32 %v2687, 0.0
      %v2724 = vmax.f32 %v2688, 0.0
      %v2725 = vmax.f32 %v2689, 0.0
      %v2726 = vmax.f32 %v2690, 0.0
      %v2727 = vmax.f32 %v2691, 0.0
      %v2728 = vmax.f32 %v2692, 0.0
      %v2729 = vmax.f32 %v2693, 0.0
      %v2730 = vmax.f32 %v2694, 0.0
      %v2731 = vmax.f32 %v2695, 0.0
      %v2732 = vmax.f32 %v2696, 0.0
      %v2733 = vmax.f32 %v2697, 0.0
      %v2734 = vmax.f32 %v2698, 0.0
      %v2735 = vmax.f32 %v2699, 0.0
      %v2736 = vmax.f32 %v2700, 0.0
      %v2737 = vmax.f32 %v2701, 0.0
      %v2738 = vmax.f32 %v2702, 0.0
      %2740 = vset.pattern.permute.xlu0 0
      %2741 = vperm.xlu0 %2740, %v442
      %v2742 = vpop.permute.xlu0 %2741
      %2745 = vset.pattern.permute.xlu0 0
      %2746 = vperm.xlu0 %2745, %v443
      %v2747 = vpop.permute.xlu0 %2746
      %2750 = vset.pattern.permute.xlu0 0
      %2751 = vperm.xlu0 %2750, %v444
      %v2752 = vpop.permute.xlu0 %2751
      %2755 = vset.pattern.permute.xlu0 0
      %2756 = vperm.xlu0 %2755, %v445
      %v2757 = vpop.permute.xlu0 %2756
      %2760 = vset.pattern.permute.xlu0 0
      %2761 = vperm.xlu0 %2760, %v446
      %v2762 = vpop.permute.xlu0 %2761
      %2765 = vset.pattern.permute.xlu0 0
      %2766 = vperm.xlu0 %2765, %v447
      %v2767 = vpop.permute.xlu0 %2766
      %2770 = vset.pattern.permute.xlu0 0
      %2771 = vperm.xlu0 %2770, %v448
      %v2772 = vpop.permute.xlu0 %2771
      %2775 = vset.pattern.permute.xlu0 0
      %2776 = vperm.xlu0 %2775, %v449
      %v2777 = vpop.permute.xlu0 %2776
      %2780 = vset.pattern.permute.xlu0 0
      %2781 = vperm.xlu0 %2780, %v450
      %v2782 = vpop.permute.xlu0 %2781
      %2785 = vset.pattern.permute.xlu0 0
      %2786 = vperm.xlu0 %2785, %v451
      %v2787 = vpop.permute.xlu0 %2786
      %2790 = vset.pattern.permute.xlu0 0
      %2791 = vperm.xlu0 %2790, %v452
      %v2792 = vpop.permute.xlu0 %2791
      %2795 = vset.pattern.permute.xlu0 0
      %2796 = vperm.xlu0 %2795, %v453
      %v2797 = vpop.permute.xlu0 %2796
      %2800 = vset.pattern.permute.xlu0 0
      %2801 = vperm.xlu0 %2800, %v454
      %v2802 = vpop.permute.xlu0 %2801
      %2805 = vset.pattern.permute.xlu0 0
      %2806 = vperm.xlu0 %2805, %v455
      %v2807 = vpop.permute.xlu0 %2806
      %2810 = vset.pattern.permute.xlu0 0
      %2811 = vperm.xlu0 %2810, %v456
      %v2812 = vpop.permute.xlu0 %2811
      %2815 = vset.pattern.permute.xlu0 0
      %2816 = vperm.xlu0 %2815, %v457
      %v2817 = vpop.permute.xlu0 %2816
      %2820 = vset.pattern.permute.xlu0 0
      %2821 = vperm.xlu0 %2820, %v458
      %v2822 = vpop.permute.xlu0 %2821
      %2825 = vset.pattern.permute.xlu0 0
      %2826 = vperm.xlu0 %2825, %v459
      %v2827 = vpop.permute.xlu0 %2826
      %2830 = vset.pattern.permute.xlu0 0
      %2831 = vperm.xlu0 %2830, %v460
      %v2832 = vpop.permute.xlu0 %2831
      %2835 = vset.pattern.permute.xlu0 0
      %2836 = vperm.xlu0 %2835, %v461
      %v2837 = vpop.permute.xlu0 %2836
      %2840 = vset.pattern.permute.xlu0 0
      %2841 = vperm.xlu0 %2840, %v462
      %v2842 = vpop.permute.xlu0 %2841
      %2845 = vset.pattern.permute.xlu0 0
      %2846 = vperm.xlu0 %2845, %v463
      %v2847 = vpop.permute.xlu0 %2846
      %2850 = vset.pattern.permute.xlu0 0
      %2851 = vperm.xlu0 %2850, %v464
      %v2852 = vpop.permute.xlu0 %2851
      %2855 = vset.pattern.permute.xlu0 0
      %2856 = vperm.xlu0 %2855, %v465
      %v2857 = vpop.permute.xlu0 %2856
      %2860 = vset.pattern.permute.xlu0 0
      %2861 = vperm.xlu0 %2860, %v466
      %v2862 = vpop.permute.xlu0 %2861
      %2865 = vset.pattern.permute.xlu0 0
      %2866 = vperm.xlu0 %2865, %v467
      %v2867 = vpop.permute.xlu0 %2866
      %2870 = vset.pattern.permute.xlu0 0
      %2871 = vperm.xlu0 %2870, %v468
      %v2872 = vpop.permute.xlu0 %2871
      %2875 = vset.pattern.permute.xlu0 0
      %2876 = vperm.xlu0 %2875, %v469
      %v2877 = vpop.permute.xlu0 %2876
      %2880 = vset.pattern.permute.xlu0 0
      %2881 = vperm.xlu0 %2880, %v470
      %v2882 = vpop.permute.xlu0 %2881
      %2885 = vset.pattern.permute.xlu0 0
      %2886 = vperm.xlu0 %2885, %v471
      %v2887 = vpop.permute.xlu0 %2886
      %2890 = vset.pattern.permute.xlu0 0
      %2891 = vperm.xlu0 %2890, %v472
      %v2892 = vpop.permute.xlu0 %2891
      %2895 = vset.pattern.permute.xlu0 0
      %2896 = vperm.xlu0 %2895, %v473
      %v2897 = vpop.permute.xlu0 %2896
      %2900 = vset.pattern.permute.xlu0 0
      %2901 = vperm.xlu0 %2900, %v474
      %v2902 = vpop.permute.xlu0 %2901
      %2905 = vset.pattern.permute.xlu0 0
      %2906 = vperm.xlu0 %2905, %v475
      %v2907 = vpop.permute.xlu0 %2906
      %2910 = vset.pattern.permute.xlu0 0
      %2911 = vperm.xlu0 %2910, %v476
      %v2912 = vpop.permute.xlu0 %2911
      %2915 = vset.pattern.permute.xlu0 0
      %2916 = vperm.xlu0 %2915, %v477
      %v2917 = vpop.permute.xlu0 %2916
      %v2919 = vmul.f32 %v2703, %v2742
      %v2920 = vmul.f32 %v2704, %v2747
      %v2921 = vmul.f32 %v2705, %v2752
      %v2922 = vmul.f32 %v2706, %v2757
      %v2923 = vmul.f32 %v2707, %v2762
      %v2924 = vmul.f32 %v2708, %v2767
      %v2925 = vmul.f32 %v2709, %v2772
      %v2926 = vmul.f32 %v2710, %v2777
      %v2927 = vmul.f32 %v2711, %v2782
      %v2928 = vmul.f32 %v2712, %v2787
      %v2929 = vmul.f32 %v2713, %v2792
      %v2930 = vmul.f32 %v2714, %v2797
      %v2931 = vmul.f32 %v2715, %v2802
      %v2932 = vmul.f32 %v2716, %v2807
      %v2933 = vmul.f32 %v2717, %v2812
      %v2934 = vmul.f32 %v2718, %v2817
      %v2935 = vmul.f32 %v2719, %v2822
      %v2936 = vmul.f32 %v2720, %v2827
      %v2937 = vmul.f32 %v2721, %v2832
      %v2938 = vmul.f32 %v2722, %v2837
      %v2939 = vmul.f32 %v2723, %v2842
      %v2940 = vmul.f32 %v2724, %v2847
      %v2941 = vmul.f32 %v2725, %v2852
      %v2942 = vmul.f32 %v2726, %v2857
      %v2943 = vmul.f32 %v2727, %v2862
      %v2944 = vmul.f32 %v2728, %v2867
      %v2945 = vmul.f32 %v2729, %v2872
      %v2946 = vmul.f32 %v2730, %v2877
      %v2947 = vmul.f32 %v2731, %v2882
      %v2948 = vmul.f32 %v2732, %v2887
      %v2949 = vmul.f32 %v2733, %v2892
      %v2950 = vmul.f32 %v2734, %v2897
      %v2951 = vmul.f32 %v2735, %v2902
      %v2952 = vmul.f32 %v2736, %v2907
      %v2953 = vmul.f32 %v2737, %v2912
      %v2954 = vmul.f32 %v2738, %v2917
      %v2955 = vpack.c.bf16 %v2919, %v2919
      %v2956 = vpack.c.bf16 %v2920, %v2920
      %v2957 = vpack.c.bf16 %v2921, %v2921
      %v2958 = vpack.c.bf16 %v2922, %v2922
      %v2959 = vpack.c.bf16 %v2923, %v2923
      %v2960 = vpack.c.bf16 %v2924, %v2924
      %v2961 = vpack.c.bf16 %v2925, %v2925
      %v2962 = vpack.c.bf16 %v2926, %v2926
      %v2963 = vpack.c.bf16 %v2927, %v2927
      %v2964 = vpack.c.bf16 %v2928, %v2928
      %v2965 = vpack.c.bf16 %v2929, %v2929
      %v2966 = vpack.c.bf16 %v2930, %v2930
      %v2967 = vpack.c.bf16 %v2931, %v2931
      %v2968 = vpack.c.bf16 %v2932, %v2932
      %v2969 = vpack.c.bf16 %v2933, %v2933
      %v2970 = vpack.c.bf16 %v2934, %v2934
      %v2971 = vpack.c.bf16 %v2935, %v2935
      %v2972 = vpack.c.bf16 %v2936, %v2936
      %v2973 = vpack.c.bf16 %v2937, %v2937
      %v2974 = vpack.c.bf16 %v2938, %v2938
      %v2975 = vpack.c.bf16 %v2939, %v2939
      %v2976 = vpack.c.bf16 %v2940, %v2940
      %v2977 = vpack.c.bf16 %v2941, %v2941
      %v2978 = vpack.c.bf16 %v2942, %v2942
      %v2979 = vpack.c.bf16 %v2943, %v2943
      %v2980 = vpack.c.bf16 %v2944, %v2944
      %v2981 = vpack.c.bf16 %v2945, %v2945
      %v2982 = vpack.c.bf16 %v2946, %v2946
      %v2983 = vpack.c.bf16 %v2947, %v2947
      %v2984 = vpack.c.bf16 %v2948, %v2948
      %v2985 = vpack.c.bf16 %v2949, %v2949
      %v2986 = vpack.c.bf16 %v2950, %v2950
      %v2987 = vpack.c.bf16 %v2951, %v2951
      %v2988 = vpack.c.bf16 %v2952, %v2952
      %v2989 = vpack.c.bf16 %v2953, %v2953
      %v2990 = vpack.c.bf16 %v2954, %v2954
      %v3027 = vunpack.c.l.b16 %v2955
      %v3028 = vunpack.c.l.b16 %v2956
      %v3029 = vunpack.c.l.b16 %v2957
      %v3030 = vunpack.c.l.b16 %v2958
      %v3031 = vunpack.c.l.b16 %v2959
      %v3032 = vunpack.c.l.b16 %v2960
      %v3033 = vunpack.c.l.b16 %v2961
      %v3034 = vunpack.c.l.b16 %v2962
      %v3035 = vunpack.c.l.b16 %v2963
      %v3036 = vunpack.c.l.b16 %v2964
      %v3037 = vunpack.c.l.b16 %v2965
      %v3038 = vunpack.c.l.b16 %v2966
      %v3039 = vunpack.c.l.b16 %v2967
      %v3040 = vunpack.c.l.b16 %v2968
      %v3041 = vunpack.c.l.b16 %v2969
      %v3042 = vunpack.c.l.b16 %v2970
      %v3043 = vunpack.c.l.b16 %v2971
      %v3044 = vunpack.c.l.b16 %v2972
      %v3045 = vunpack.c.l.b16 %v2973
      %v3046 = vunpack.c.l.b16 %v2974
      %v3047 = vunpack.c.l.b16 %v2975
      %v3048 = vunpack.c.l.b16 %v2976
      %v3049 = vunpack.c.l.b16 %v2977
      %v3050 = vunpack.c.l.b16 %v2978
      %v3051 = vunpack.c.l.b16 %v2979
      %v3052 = vunpack.c.l.b16 %v2980
      %v3053 = vunpack.c.l.b16 %v2981
      %v3054 = vunpack.c.l.b16 %v2982
      %v3055 = vunpack.c.l.b16 %v2983
      %v3056 = vunpack.c.l.b16 %v2984
      %v3057 = vunpack.c.l.b16 %v2985
      %v3058 = vunpack.c.l.b16 %v2986
      %v3059 = vunpack.c.l.b16 %v2987
      %v3060 = vunpack.c.l.b16 %v2988
      %v3061 = vunpack.c.l.b16 %v2989
      %v3062 = vunpack.c.l.b16 %v2990
      %v3063 = vpack.c.b16 %v3028, %v3027
      %v3064 = vpack.c.b16 %v3030, %v3029
      %v3065 = vpack.c.b16 %v3032, %v3031
      %v3066 = vpack.c.b16 %v3034, %v3033
      %v3067 = vpack.c.b16 %v3036, %v3035
      %v3068 = vpack.c.b16 %v3038, %v3037
      %v3069 = vpack.c.b16 %v3040, %v3039
      %v3070 = vpack.c.b16 %v3042, %v3041
      %v3071 = vpack.c.b16 %v3044, %v3043
      %v3072 = vpack.c.b16 %v3046, %v3045
      %v3073 = vpack.c.b16 %v3048, %v3047
      %v3074 = vpack.c.b16 %v3050, %v3049
      %v3075 = vpack.c.b16 %v3052, %v3051
      %v3076 = vpack.c.b16 %v3054, %v3053
      %v3077 = vpack.c.b16 %v3056, %v3055
      %v3078 = vpack.c.b16 %v3058, %v3057
      %v3079 = vpack.c.b16 %v3060, %v3059
      %v3080 = vpack.c.b16 %v3062, %v3061
      %vm3081 = vsmask.f32 1280
      %v3083 = vshrl.u32 %v3063, 16
      %v3085 = vrot.slane %v3083, 6
      %v3086 = vshll.u32 %v3063, 16
      %v3088 = vrot.slane %v3086, 7
      %v3089 = vor.u32 %v3085, %v3088
      %v3091 = vshrl.u32 %v3064, 16
      %v3093 = vrot.slane %v3091, 6
      %v3094 = vshll.u32 %v3064, 16
      %v3096 = vrot.slane %v3094, 7
      %v3097 = vor.u32 %v3093, %v3096
      %v3098 = vsel %vm3081, %v3089, %v3097
      %v3100 = vshrl.u32 %v3065, 16
      %v3102 = vrot.slane %v3100, 6
      %v3103 = vshll.u32 %v3065, 16
      %v3105 = vrot.slane %v3103, 7
      %v3106 = vor.u32 %v3102, %v3105
      %v3107 = vsel %vm3081, %v3097, %v3106
      %v3109 = vshrl.u32 %v3066, 16
      %v3111 = vrot.slane %v3109, 6
      %v3112 = vshll.u32 %v3066, 16
      %v3114 = vrot.slane %v3112, 7
      %v3115 = vor.u32 %v3111, %v3114
      %v3116 = vsel %vm3081, %v3106, %v3115
      %v3118 = vshrl.u32 %v3067, 16
      %v3120 = vrot.slane %v3118, 6
      %v3121 = vshll.u32 %v3067, 16
      %v3123 = vrot.slane %v3121, 7
      %v3124 = vor.u32 %v3120, %v3123
      %v3125 = vsel %vm3081, %v3115, %v3124
      %v3127 = vshrl.u32 %v3068, 16
      %v3129 = vrot.slane %v3127, 6
      %v3130 = vshll.u32 %v3068, 16
      %v3132 = vrot.slane %v3130, 7
      %v3133 = vor.u32 %v3129, %v3132
      %v3134 = vsel %vm3081, %v3124, %v3133
      %v3136 = vshrl.u32 %v3069, 16
      %v3138 = vrot.slane %v3136, 6
      %v3139 = vshll.u32 %v3069, 16
      %v3141 = vrot.slane %v3139, 7
      %v3142 = vor.u32 %v3138, %v3141
      %v3143 = vsel %vm3081, %v3133, %v3142
      %v3145 = vshrl.u32 %v3070, 16
      %v3147 = vrot.slane %v3145, 6
      %v3148 = vshll.u32 %v3070, 16
      %v3150 = vrot.slane %v3148, 7
      %v3151 = vor.u32 %v3147, %v3150
      %v3152 = vsel %vm3081, %v3142, %v3151
      %v3154 = vshrl.u32 %v3071, 16
      %v3156 = vrot.slane %v3154, 6
      %v3157 = vshll.u32 %v3071, 16
      %v3159 = vrot.slane %v3157, 7
      %v3160 = vor.u32 %v3156, %v3159
      %v3161 = vsel %vm3081, %v3151, %v3160
      %v3163 = vshrl.u32 %v3072, 16
      %v3165 = vrot.slane %v3163, 6
      %v3166 = vshll.u32 %v3072, 16
      %v3168 = vrot.slane %v3166, 7
      %v3169 = vor.u32 %v3165, %v3168
      %v3170 = vsel %vm3081, %v3160, %v3169
      %v3172 = vshrl.u32 %v3073, 16
      %v3174 = vrot.slane %v3172, 6
      %v3175 = vshll.u32 %v3073, 16
      %v3177 = vrot.slane %v3175, 7
      %v3178 = vor.u32 %v3174, %v3177
      %v3179 = vsel %vm3081, %v3169, %v3178
      %v3181 = vshrl.u32 %v3074, 16
      %v3183 = vrot.slane %v3181, 6
      %v3184 = vshll.u32 %v3074, 16
      %v3186 = vrot.slane %v3184, 7
      %v3187 = vor.u32 %v3183, %v3186
      %v3188 = vsel %vm3081, %v3178, %v3187
      %v3190 = vshrl.u32 %v3075, 16
      %v3192 = vrot.slane %v3190, 6
      %v3193 = vshll.u32 %v3075, 16
      %v3195 = vrot.slane %v3193, 7
      %v3196 = vor.u32 %v3192, %v3195
      %v3197 = vsel %vm3081, %v3187, %v3196
      %v3199 = vshrl.u32 %v3076, 16
      %v3201 = vrot.slane %v3199, 6
      %v3202 = vshll.u32 %v3076, 16
      %v3204 = vrot.slane %v3202, 7
      %v3205 = vor.u32 %v3201, %v3204
      %v3206 = vsel %vm3081, %v3196, %v3205
      %v3208 = vshrl.u32 %v3077, 16
      %v3210 = vrot.slane %v3208, 6
      %v3211 = vshll.u32 %v3077, 16
      %v3213 = vrot.slane %v3211, 7
      %v3214 = vor.u32 %v3210, %v3213
      %v3215 = vsel %vm3081, %v3205, %v3214
      %v3217 = vshrl.u32 %v3078, 16
      %v3219 = vrot.slane %v3217, 6
      %v3220 = vshll.u32 %v3078, 16
      %v3222 = vrot.slane %v3220, 7
      %v3223 = vor.u32 %v3219, %v3222
      %v3224 = vsel %vm3081, %v3214, %v3223
      %v3226 = vshrl.u32 %v3079, 16
      %v3228 = vrot.slane %v3226, 6
      %v3229 = vshll.u32 %v3079, 16
      %v3231 = vrot.slane %v3229, 7
      %v3232 = vor.u32 %v3228, %v3231
      %v3233 = vsel %vm3081, %v3223, %v3232
      %v3235 = vshrl.u32 %v3080, 16
      %v3237 = vrot.slane %v3235, 6
      %v3238 = vshll.u32 %v3080, 16
      %v3240 = vrot.slane %v3238, 7
      %v3241 = vor.u32 %v3237, %v3240
      %v3242 = vsel %vm3081, %v3232, %v3241
      %vm3245 = vcmask 1041408
      %vm3246 = vmand %vm3245, %vm3081
      %v3247 = vsel %vm3246, 0, %v3089
      %v3248 = vsel %vm3246, %v3241, 0
      %v3250 = vshrl.u32 0, 16
      %v3252 = vshll.u32 0, 16
      %v3254 = vrot.slane %v3252, 1
      %v3255 = vor.u32 %v3250, %v3254
      %v3257 = vshll.u32 %v3247, 16
      %v3259 = vrot.slane %v3257, 1
      %v3260 = vsel %vm621, %v3255, %v3259
      %v3261 = vshrl.u32 %v3247, 16
      %v3263 = vor.u32 %v3261, %v3259
      %v3265 = vshll.u32 %v3098, 16
      %v3267 = vrot.slane %v3265, 1
      %v3268 = vsel %vm621, %v3263, %v3267
      %v3269 = vshrl.u32 %v3098, 16
      %v3271 = vor.u32 %v3269, %v3267
      %v3273 = vshll.u32 %v3107, 16
      %v3275 = vrot.slane %v3273, 1
      %v3276 = vsel %vm621, %v3271, %v3275
      %v3277 = vshrl.u32 %v3107, 16
      %v3279 = vor.u32 %v3277, %v3275
      %v3281 = vshll.u32 %v3116, 16
      %v3283 = vrot.slane %v3281, 1
      %v3284 = vsel %vm621, %v3279, %v3283
      %v3285 = vshrl.u32 %v3116, 16
      %v3287 = vor.u32 %v3285, %v3283
      %v3289 = vshll.u32 %v3125, 16
      %v3291 = vrot.slane %v3289, 1
      %v3292 = vsel %vm621, %v3287, %v3291
      %v3293 = vshrl.u32 %v3125, 16
      %v3295 = vor.u32 %v3293, %v3291
      %v3297 = vshll.u32 %v3134, 16
      %v3299 = vrot.slane %v3297, 1
      %v3300 = vsel %vm621, %v3295, %v3299
      %v3301 = vshrl.u32 %v3134, 16
      %v3303 = vor.u32 %v3301, %v3299
      %v3305 = vshll.u32 %v3143, 16
      %v3307 = vrot.slane %v3305, 1
      %v3308 = vsel %vm621, %v3303, %v3307
      %v3309 = vshrl.u32 %v3143, 16
      %v3311 = vor.u32 %v3309, %v3307
      %v3313 = vshll.u32 %v3152, 16
      %v3315 = vrot.slane %v3313, 1
      %v3316 = vsel %vm621, %v3311, %v3315
      %v3317 = vshrl.u32 %v3152, 16
      %v3319 = vor.u32 %v3317, %v3315
      %v3321 = vshll.u32 %v3161, 16
      %v3323 = vrot.slane %v3321, 1
      %v3324 = vsel %vm621, %v3319, %v3323
      %v3325 = vshrl.u32 %v3161, 16
      %v3327 = vor.u32 %v3325, %v3323
      %v3329 = vshll.u32 %v3170, 16
      %v3331 = vrot.slane %v3329, 1
      %v3332 = vsel %vm621, %v3327, %v3331
      %v3333 = vshrl.u32 %v3170, 16
      %v3335 = vor.u32 %v3333, %v3331
      %v3337 = vshll.u32 %v3179, 16
      %v3339 = vrot.slane %v3337, 1
      %v3340 = vsel %vm621, %v3335, %v3339
      %v3341 = vshrl.u32 %v3179, 16
      %v3343 = vor.u32 %v3341, %v3339
      %v3345 = vshll.u32 %v3188, 16
      %v3347 = vrot.slane %v3345, 1
      %v3348 = vsel %vm621, %v3343, %v3347
      %v3349 = vshrl.u32 %v3188, 16
      %v3351 = vor.u32 %v3349, %v3347
      %v3353 = vshll.u32 %v3197, 16
      %v3355 = vrot.slane %v3353, 1
      %v3356 = vsel %vm621, %v3351, %v3355
      %v3357 = vshrl.u32 %v3197, 16
      %v3359 = vor.u32 %v3357, %v3355
      %v3361 = vshll.u32 %v3206, 16
      %v3363 = vrot.slane %v3361, 1
      %v3364 = vsel %vm621, %v3359, %v3363
      %v3365 = vshrl.u32 %v3206, 16
      %v3367 = vor.u32 %v3365, %v3363
      %v3369 = vshll.u32 %v3215, 16
      %v3371 = vrot.slane %v3369, 1
      %v3372 = vsel %vm621, %v3367, %v3371
      %v3373 = vshrl.u32 %v3215, 16
      %v3375 = vor.u32 %v3373, %v3371
      %v3377 = vshll.u32 %v3224, 16
      %v3379 = vrot.slane %v3377, 1
      %v3380 = vsel %vm621, %v3375, %v3379
      %v3381 = vshrl.u32 %v3224, 16
      %v3383 = vor.u32 %v3381, %v3379
      %v3385 = vshll.u32 %v3233, 16
      %v3387 = vrot.slane %v3385, 1
      %v3388 = vsel %vm621, %v3383, %v3387
      %v3389 = vshrl.u32 %v3233, 16
      %v3391 = vor.u32 %v3389, %v3387
      %v3393 = vshll.u32 %v3242, 16
      %v3395 = vrot.slane %v3393, 1
      %v3396 = vsel %vm621, %v3391, %v3395
      %3397 = vrot.lane.b32.xlu0 %v3260, 32
      %v3398 = vpop.permute.xlu0 %3397
      %3399 = vrot.lane.b32.xlu0 %v3268, 32
      %v3400 = vpop.permute.xlu0 %3399
      %3401 = vrot.lane.b32.xlu0 %v3276, 32
      %v3402 = vpop.permute.xlu0 %3401
      %3403 = vrot.lane.b32.xlu0 %v3284, 32
      %v3404 = vpop.permute.xlu0 %3403
      %3405 = vrot.lane.b32.xlu0 %v3292, 32
      %v3406 = vpop.permute.xlu0 %3405
      %3407 = vrot.lane.b32.xlu0 %v3300, 32
      %v3408 = vpop.permute.xlu0 %3407
      %3409 = vrot.lane.b32.xlu0 %v3308, 32
      %v3410 = vpop.permute.xlu0 %3409
      %3411 = vrot.lane.b32.xlu0 %v3316, 32
      %v3412 = vpop.permute.xlu0 %3411
      %3413 = vrot.lane.b32.xlu0 %v3324, 32
      %v3414 = vpop.permute.xlu0 %3413
      %3415 = vrot.lane.b32.xlu0 %v3332, 32
      %v3416 = vpop.permute.xlu0 %3415
      %3417 = vrot.lane.b32.xlu0 %v3340, 32
      %v3418 = vpop.permute.xlu0 %3417
      %3419 = vrot.lane.b32.xlu0 %v3348, 32
      %v3420 = vpop.permute.xlu0 %3419
      %3421 = vrot.lane.b32.xlu0 %v3356, 32
      %v3422 = vpop.permute.xlu0 %3421
      %3423 = vrot.lane.b32.xlu0 %v3364, 32
      %v3424 = vpop.permute.xlu0 %3423
      %3425 = vrot.lane.b32.xlu0 %v3372, 32
      %v3426 = vpop.permute.xlu0 %3425
      %3427 = vrot.lane.b32.xlu0 %v3380, 32
      %v3428 = vpop.permute.xlu0 %3427
      %3429 = vrot.lane.b32.xlu0 %v3388, 32
      %v3430 = vpop.permute.xlu0 %3429
      %3431 = vrot.lane.b32.xlu0 %v3396, 32
      %v3432 = vpop.permute.xlu0 %3431
      %v3435 = vrot.slane 0, 1
      %v3436 = vrot.slane %v3247, 1
      %v3437 = vsel %vm1069, %v3435, %v3436
      %v3438 = vrot.slane %v3098, 1
      %v3439 = vsel %vm1069, %v3436, %v3438
      %v3440 = vrot.slane %v3107, 1
      %v3441 = vsel %vm1069, %v3438, %v3440
      %v3442 = vrot.slane %v3116, 1
      %v3443 = vsel %vm1069, %v3440, %v3442
      %v3444 = vrot.slane %v3125, 1
      %v3445 = vsel %vm1069, %v3442, %v3444
      %v3446 = vrot.slane %v3134, 1
      %v3447 = vsel %vm1069, %v3444, %v3446
      %v3448 = vrot.slane %v3143, 1
      %v3449 = vsel %vm1069, %v3446, %v3448
      %v3450 = vrot.slane %v3152, 1
      %v3451 = vsel %vm1069, %v3448, %v3450
      %v3452 = vrot.slane %v3161, 1
      %v3453 = vsel %vm1069, %v3450, %v3452
      %v3454 = vrot.slane %v3170, 1
      %v3455 = vsel %vm1069, %v3452, %v3454
      %v3456 = vrot.slane %v3179, 1
      %v3457 = vsel %vm1069, %v3454, %v3456
      %v3458 = vrot.slane %v3188, 1
      %v3459 = vsel %vm1069, %v3456, %v3458
      %v3460 = vrot.slane %v3197, 1
      %v3461 = vsel %vm1069, %v3458, %v3460
      %v3462 = vrot.slane %v3206, 1
      %v3463 = vsel %vm1069, %v3460, %v3462
      %v3464 = vrot.slane %v3215, 1
      %v3465 = vsel %vm1069, %v3462, %v3464
      %v3466 = vrot.slane %v3224, 1
      %v3467 = vsel %vm1069, %v3464, %v3466
      %v3468 = vrot.slane %v3233, 1
      %v3469 = vsel %vm1069, %v3466, %v3468
      %v3470 = vrot.slane %v3242, 1
      %v3471 = vsel %vm1069, %v3468, %v3470
      %3472 = vrot.lane.b32.xlu0 %v3437, 64
      %v3473 = vpop.permute.xlu0 %3472
      %3474 = vrot.lane.b32.xlu0 %v3439, 64
      %v3475 = vpop.permute.xlu0 %3474
      %3476 = vrot.lane.b32.xlu0 %v3441, 64
      %v3477 = vpop.permute.xlu0 %3476
      %3478 = vrot.lane.b32.xlu0 %v3443, 64
      %v3479 = vpop.permute.xlu0 %3478
      %3480 = vrot.lane.b32.xlu0 %v3445, 64
      %v3481 = vpop.permute.xlu0 %3480
      %3482 = vrot.lane.b32.xlu0 %v3447, 64
      %v3483 = vpop.permute.xlu0 %3482
      %3484 = vrot.lane.b32.xlu0 %v3449, 64
      %v3485 = vpop.permute.xlu0 %3484
      %3486 = vrot.lane.b32.xlu0 %v3451, 64
      %v3487 = vpop.permute.xlu0 %3486
      %3488 = vrot.lane.b32.xlu0 %v3453, 64
      %v3489 = vpop.permute.xlu0 %3488
      %3490 = vrot.lane.b32.xlu0 %v3455, 64
      %v3491 = vpop.permute.xlu0 %3490
      %3492 = vrot.lane.b32.xlu0 %v3457, 64
      %v3493 = vpop.permute.xlu0 %3492
      %3494 = vrot.lane.b32.xlu0 %v3459, 64
      %v3495 = vpop.permute.xlu0 %3494
      %3496 = vrot.lane.b32.xlu0 %v3461, 64
      %v3497 = vpop.permute.xlu0 %3496
      %3498 = vrot.lane.b32.xlu0 %v3463, 64
      %v3499 = vpop.permute.xlu0 %3498
      %3500 = vrot.lane.b32.xlu0 %v3465, 64
      %v3501 = vpop.permute.xlu0 %3500
      %3502 = vrot.lane.b32.xlu0 %v3467, 64
      %v3503 = vpop.permute.xlu0 %3502
      %3504 = vrot.lane.b32.xlu0 %v3469, 64
      %v3505 = vpop.permute.xlu0 %3504
      %3506 = vrot.lane.b32.xlu0 %v3471, 64
      %v3507 = vpop.permute.xlu0 %3506
      %v3509 = vrot.slane %v3248, 1
      %v3510 = vsel %vm1069, %v3470, %v3509
      %3511 = vrot.lane.b32.xlu0 %v3439, 96
      %v3512 = vpop.permute.xlu0 %3511
      %3513 = vrot.lane.b32.xlu0 %v3441, 96
      %v3514 = vpop.permute.xlu0 %3513
      %3515 = vrot.lane.b32.xlu0 %v3443, 96
      %v3516 = vpop.permute.xlu0 %3515
      %3517 = vrot.lane.b32.xlu0 %v3445, 96
      %v3518 = vpop.permute.xlu0 %3517
      %3519 = vrot.lane.b32.xlu0 %v3447, 96
      %v3520 = vpop.permute.xlu0 %3519
      %3521 = vrot.lane.b32.xlu0 %v3449, 96
      %v3522 = vpop.permute.xlu0 %3521
      %3523 = vrot.lane.b32.xlu0 %v3451, 96
      %v3524 = vpop.permute.xlu0 %3523
      %3525 = vrot.lane.b32.xlu0 %v3453, 96
      %v3526 = vpop.permute.xlu0 %3525
      %3527 = vrot.lane.b32.xlu0 %v3455, 96
      %v3528 = vpop.permute.xlu0 %3527
      %3529 = vrot.lane.b32.xlu0 %v3457, 96
      %v3530 = vpop.permute.xlu0 %3529
      %3531 = vrot.lane.b32.xlu0 %v3459, 96
      %v3532 = vpop.permute.xlu0 %3531
      %3533 = vrot.lane.b32.xlu0 %v3461, 96
      %v3534 = vpop.permute.xlu0 %3533
      %3535 = vrot.lane.b32.xlu0 %v3463, 96
      %v3536 = vpop.permute.xlu0 %3535
      %3537 = vrot.lane.b32.xlu0 %v3465, 96
      %v3538 = vpop.permute.xlu0 %3537
      %3539 = vrot.lane.b32.xlu0 %v3467, 96
      %v3540 = vpop.permute.xlu0 %3539
      %3541 = vrot.lane.b32.xlu0 %v3469, 96
      %v3542 = vpop.permute.xlu0 %3541
      %3543 = vrot.lane.b32.xlu0 %v3471, 96
      %v3544 = vpop.permute.xlu0 %3543
      %3545 = vrot.lane.b32.xlu0 %v3510, 96
      %v3546 = vpop.permute.xlu0 %3545
      %v3547 = vrot.slane %v3261, 1
      %v3548 = vrot.slane %v3257, 2
      %v3549 = vor.u32 %v3547, %v3548
      %v3550 = vrot.slane %v3269, 1
      %v3551 = vrot.slane %v3265, 2
      %v3552 = vor.u32 %v3550, %v3551
      %v3553 = vsel %vm1453, %v3549, %v3552
      %v3554 = vrot.slane %v3277, 1
      %v3555 = vrot.slane %v3273, 2
      %v3556 = vor.u32 %v3554, %v3555
      %v3557 = vsel %vm1453, %v3552, %v3556
      %v3558 = vrot.slane %v3285, 1
      %v3559 = vrot.slane %v3281, 2
      %v3560 = vor.u32 %v3558, %v3559
      %v3561 = vsel %vm1453, %v3556, %v3560
      %v3562 = vrot.slane %v3293, 1
      %v3563 = vrot.slane %v3289, 2
      %v3564 = vor.u32 %v3562, %v3563
      %v3565 = vsel %vm1453, %v3560, %v3564
      %v3566 = vrot.slane %v3301, 1
      %v3567 = vrot.slane %v3297, 2
      %v3568 = vor.u32 %v3566, %v3567
      %v3569 = vsel %vm1453, %v3564, %v3568
      %v3570 = vrot.slane %v3309, 1
      %v3571 = vrot.slane %v3305, 2
      %v3572 = vor.u32 %v3570, %v3571
      %v3573 = vsel %vm1453, %v3568, %v3572
      %v3574 = vrot.slane %v3317, 1
      %v3575 = vrot.slane %v3313, 2
      %v3576 = vor.u32 %v3574, %v3575
      %v3577 = vsel %vm1453, %v3572, %v3576
      %v3578 = vrot.slane %v3325, 1
      %v3579 = vrot.slane %v3321, 2
      %v3580 = vor.u32 %v3578, %v3579
      %v3581 = vsel %vm1453, %v3576, %v3580
      %v3582 = vrot.slane %v3333, 1
      %v3583 = vrot.slane %v3329, 2
      %v3584 = vor.u32 %v3582, %v3583
      %v3585 = vsel %vm1453, %v3580, %v3584
      %v3586 = vrot.slane %v3341, 1
      %v3587 = vrot.slane %v3337, 2
      %v3588 = vor.u32 %v3586, %v3587
      %v3589 = vsel %vm1453, %v3584, %v3588
      %v3590 = vrot.slane %v3349, 1
      %v3591 = vrot.slane %v3345, 2
      %v3592 = vor.u32 %v3590, %v3591
      %v3593 = vsel %vm1453, %v3588, %v3592
      %v3594 = vrot.slane %v3357, 1
      %v3595 = vrot.slane %v3353, 2
      %v3596 = vor.u32 %v3594, %v3595
      %v3597 = vsel %vm1453, %v3592, %v3596
      %v3598 = vrot.slane %v3365, 1
      %v3599 = vrot.slane %v3361, 2
      %v3600 = vor.u32 %v3598, %v3599
      %v3601 = vsel %vm1453, %v3596, %v3600
      %v3602 = vrot.slane %v3373, 1
      %v3603 = vrot.slane %v3369, 2
      %v3604 = vor.u32 %v3602, %v3603
      %v3605 = vsel %vm1453, %v3600, %v3604
      %v3606 = vrot.slane %v3381, 1
      %v3607 = vrot.slane %v3377, 2
      %v3608 = vor.u32 %v3606, %v3607
      %v3609 = vsel %vm1453, %v3604, %v3608
      %v3610 = vrot.slane %v3389, 1
      %v3611 = vrot.slane %v3385, 2
      %v3612 = vor.u32 %v3610, %v3611
      %v3613 = vsel %vm1453, %v3608, %v3612
      %v3614 = vshrl.u32 %v3242, 16
      %v3616 = vrot.slane %v3614, 1
      %v3617 = vrot.slane %v3393, 2
      %v3618 = vor.u32 %v3616, %v3617
      %v3619 = vsel %vm1453, %v3612, %v3618
      %v3621 = vshrl.u32 %v3248, 16
      %v3623 = vrot.slane %v3621, 1
      %v3624 = vshll.u32 %v3248, 16
      %v3626 = vrot.slane %v3624, 2
      %v3627 = vor.u32 %v3623, %v3626
      %v3628 = vsel %vm1453, %v3618, %v3627
      %v3629 = vrot.slane %v3247, 2
      %v3630 = vrot.slane %v3098, 2
      %v3631 = vsel %vm1731, %v3629, %v3630
      %v3632 = vrot.slane %v3107, 2
      %v3633 = vsel %vm1731, %v3630, %v3632
      %v3634 = vrot.slane %v3116, 2
      %v3635 = vsel %vm1731, %v3632, %v3634
      %v3636 = vrot.slane %v3125, 2
      %v3637 = vsel %vm1731, %v3634, %v3636
      %v3638 = vrot.slane %v3134, 2
      %v3639 = vsel %vm1731, %v3636, %v3638
      %v3640 = vrot.slane %v3143, 2
      %v3641 = vsel %vm1731, %v3638, %v3640
      %v3642 = vrot.slane %v3152, 2
      %v3643 = vsel %vm1731, %v3640, %v3642
      %v3644 = vrot.slane %v3161, 2
      %v3645 = vsel %vm1731, %v3642, %v3644
      %v3646 = vrot.slane %v3170, 2
      %v3647 = vsel %vm1731, %v3644, %v3646
      %v3648 = vrot.slane %v3179, 2
      %v3649 = vsel %vm1731, %v3646, %v3648
      %v3650 = vrot.slane %v3188, 2
      %v3651 = vsel %vm1731, %v3648, %v3650
      %v3652 = vrot.slane %v3197, 2
      %v3653 = vsel %vm1731, %v3650, %v3652
      %v3654 = vrot.slane %v3206, 2
      %v3655 = vsel %vm1731, %v3652, %v3654
      %v3656 = vrot.slane %v3215, 2
      %v3657 = vsel %vm1731, %v3654, %v3656
      %v3658 = vrot.slane %v3224, 2
      %v3659 = vsel %vm1731, %v3656, %v3658
      %v3660 = vrot.slane %v3233, 2
      %v3661 = vsel %vm1731, %v3658, %v3660
      %v3662 = vrot.slane %v3242, 2
      %v3663 = vsel %vm1731, %v3660, %v3662
      %v3664 = vrot.slane %v3248, 2
      %v3665 = vsel %vm1731, %v3662, %v3664
      %3666 = vrot.lane.b32.xlu0 %v3631, 32
      %v3667 = vpop.permute.xlu0 %3666
      %3668 = vrot.lane.b32.xlu0 %v3633, 32
      %v3669 = vpop.permute.xlu0 %3668
      %3670 = vrot.lane.b32.xlu0 %v3635, 32
      %v3671 = vpop.permute.xlu0 %3670
      %3672 = vrot.lane.b32.xlu0 %v3637, 32
      %v3673 = vpop.permute.xlu0 %3672
      %3674 = vrot.lane.b32.xlu0 %v3639, 32
      %v3675 = vpop.permute.xlu0 %3674
      %3676 = vrot.lane.b32.xlu0 %v3641, 32
      %v3677 = vpop.permute.xlu0 %3676
      %3678 = vrot.lane.b32.xlu0 %v3643, 32
      %v3679 = vpop.permute.xlu0 %3678
      %3680 = vrot.lane.b32.xlu0 %v3645, 32
      %v3681 = vpop.permute.xlu0 %3680
      %3682 = vrot.lane.b32.xlu0 %v3647, 32
      %v3683 = vpop.permute.xlu0 %3682
      %3684 = vrot.lane.b32.xlu0 %v3649, 32
      %v3685 = vpop.permute.xlu0 %3684
      %3686 = vrot.lane.b32.xlu0 %v3651, 32
      %v3687 = vpop.permute.xlu0 %3686
      %3688 = vrot.lane.b32.xlu0 %v3653, 32
      %v3689 = vpop.permute.xlu0 %3688
      %3690 = vrot.lane.b32.xlu0 %v3655, 32
      %v3691 = vpop.permute.xlu0 %3690
      %3692 = vrot.lane.b32.xlu0 %v3657, 32
      %v3693 = vpop.permute.xlu0 %3692
      %3694 = vrot.lane.b32.xlu0 %v3659, 32
      %v3695 = vpop.permute.xlu0 %3694
      %3696 = vrot.lane.b32.xlu0 %v3661, 32
      %v3697 = vpop.permute.xlu0 %3696
      %3698 = vrot.lane.b32.xlu0 %v3663, 32
      %v3699 = vpop.permute.xlu0 %3698
      %3700 = vrot.lane.b32.xlu0 %v3665, 32
      %v3701 = vpop.permute.xlu0 %3700
      %v3702 = vrot.slane 0, 2
      %v3703 = vsel %vm1731, %v3664, %v3702
      %3704 = vrot.lane.b32.xlu0 %v3633, 64
      %v3705 = vpop.permute.xlu0 %3704
      %3706 = vrot.lane.b32.xlu0 %v3635, 64
      %v3707 = vpop.permute.xlu0 %3706
      %3708 = vrot.lane.b32.xlu0 %v3637, 64
      %v3709 = vpop.permute.xlu0 %3708
      %3710 = vrot.lane.b32.xlu0 %v3639, 64
      %v3711 = vpop.permute.xlu0 %3710
      %3712 = vrot.lane.b32.xlu0 %v3641, 64
      %v3713 = vpop.permute.xlu0 %3712
      %3714 = vrot.lane.b32.xlu0 %v3643, 64
      %v3715 = vpop.permute.xlu0 %3714
      %3716 = vrot.lane.b32.xlu0 %v3645, 64
      %v3717 = vpop.permute.xlu0 %3716
      %3718 = vrot.lane.b32.xlu0 %v3647, 64
      %v3719 = vpop.permute.xlu0 %3718
      %3720 = vrot.lane.b32.xlu0 %v3649, 64
      %v3721 = vpop.permute.xlu0 %3720
      %3722 = vrot.lane.b32.xlu0 %v3651, 64
      %v3723 = vpop.permute.xlu0 %3722
      %3724 = vrot.lane.b32.xlu0 %v3653, 64
      %v3725 = vpop.permute.xlu0 %3724
      %3726 = vrot.lane.b32.xlu0 %v3655, 64
      %v3727 = vpop.permute.xlu0 %3726
      %3728 = vrot.lane.b32.xlu0 %v3657, 64
      %v3729 = vpop.permute.xlu0 %3728
      %3730 = vrot.lane.b32.xlu0 %v3659, 64
      %v3731 = vpop.permute.xlu0 %3730
      %3732 = vrot.lane.b32.xlu0 %v3661, 64
      %v3733 = vpop.permute.xlu0 %3732
      %3734 = vrot.lane.b32.xlu0 %v3663, 64
      %v3735 = vpop.permute.xlu0 %3734
      %3736 = vrot.lane.b32.xlu0 %v3665, 64
      %v3737 = vpop.permute.xlu0 %3736
      %3738 = vrot.lane.b32.xlu0 %v3703, 64
      %v3739 = vpop.permute.xlu0 %3738
      %v3740 = vrot.slane %v3269, 2
      %v3741 = vrot.slane %v3265, 3
      %v3742 = vor.u32 %v3740, %v3741
      %v3743 = vrot.slane %v3277, 2
      %v3744 = vrot.slane %v3273, 3
      %v3745 = vor.u32 %v3743, %v3744
      %v3746 = vsel %vm2115, %v3742, %v3745
      %v3747 = vrot.slane %v3285, 2
      %v3748 = vrot.slane %v3281, 3
      %v3749 = vor.u32 %v3747, %v3748
      %v3750 = vsel %vm2115, %v3745, %v3749
      %v3751 = vrot.slane %v3293, 2
      %v3752 = vrot.slane %v3289, 3
      %v3753 = vor.u32 %v3751, %v3752
      %v3754 = vsel %vm2115, %v3749, %v3753
      %v3755 = vrot.slane %v3301, 2
      %v3756 = vrot.slane %v3297, 3
      %v3757 = vor.u32 %v3755, %v3756
      %v3758 = vsel %vm2115, %v3753, %v3757
      %v3759 = vrot.slane %v3309, 2
      %v3760 = vrot.slane %v3305, 3
      %v3761 = vor.u32 %v3759, %v3760
      %v3762 = vsel %vm2115, %v3757, %v3761
      %v3763 = vrot.slane %v3317, 2
      %v3764 = vrot.slane %v3313, 3
      %v3765 = vor.u32 %v3763, %v3764
      %v3766 = vsel %vm2115, %v3761, %v3765
      %v3767 = vrot.slane %v3325, 2
      %v3768 = vrot.slane %v3321, 3
      %v3769 = vor.u32 %v3767, %v3768
      %v3770 = vsel %vm2115, %v3765, %v3769
      %v3771 = vrot.slane %v3333, 2
      %v3772 = vrot.slane %v3329, 3
      %v3773 = vor.u32 %v3771, %v3772
      %v3774 = vsel %vm2115, %v3769, %v3773
      %v3775 = vrot.slane %v3341, 2
      %v3776 = vrot.slane %v3337, 3
      %v3777 = vor.u32 %v3775, %v3776
      %v3778 = vsel %vm2115, %v3773, %v3777
      %v3779 = vrot.slane %v3349, 2
      %v3780 = vrot.slane %v3345, 3
      %v3781 = vor.u32 %v3779, %v3780
      %v3782 = vsel %vm2115, %v3777, %v3781
      %v3783 = vrot.slane %v3357, 2
      %v3784 = vrot.slane %v3353, 3
      %v3785 = vor.u32 %v3783, %v3784
      %v3786 = vsel %vm2115, %v3781, %v3785
      %v3787 = vrot.slane %v3365, 2
      %v3788 = vrot.slane %v3361, 3
      %v3789 = vor.u32 %v3787, %v3788
      %v3790 = vsel %vm2115, %v3785, %v3789
      %v3791 = vrot.slane %v3373, 2
      %v3792 = vrot.slane %v3369, 3
      %v3793 = vor.u32 %v3791, %v3792
      %v3794 = vsel %vm2115, %v3789, %v3793
      %v3795 = vrot.slane %v3381, 2
      %v3796 = vrot.slane %v3377, 3
      %v3797 = vor.u32 %v3795, %v3796
      %v3798 = vsel %vm2115, %v3793, %v3797
      %v3799 = vrot.slane %v3389, 2
      %v3800 = vrot.slane %v3385, 3
      %v3801 = vor.u32 %v3799, %v3800
      %v3802 = vsel %vm2115, %v3797, %v3801
      %v3803 = vrot.slane %v3614, 2
      %v3804 = vrot.slane %v3393, 3
      %v3805 = vor.u32 %v3803, %v3804
      %v3806 = vsel %vm2115, %v3801, %v3805
      %v3807 = vrot.slane %v3621, 2
      %v3808 = vrot.slane %v3624, 3
      %v3809 = vor.u32 %v3807, %v3808
      %v3810 = vsel %vm2115, %v3805, %v3809
      %v3811 = vrot.slane %v3250, 2
      %v3812 = vrot.slane %v3252, 3
      %v3813 = vor.u32 %v3811, %v3812
      %v3814 = vsel %vm2115, %v3809, %v3813
      %3815 = vrot.lane.b32.xlu0 %v3746, 96
      %v3816 = vpop.permute.xlu0 %3815
      %3817 = vrot.lane.b32.xlu0 %v3750, 96
      %v3818 = vpop.permute.xlu0 %3817
      %3819 = vrot.lane.b32.xlu0 %v3754, 96
      %v3820 = vpop.permute.xlu0 %3819
      %3821 = vrot.lane.b32.xlu0 %v3758, 96
      %v3822 = vpop.permute.xlu0 %3821
      %3823 = vrot.lane.b32.xlu0 %v3762, 96
      %v3824 = vpop.permute.xlu0 %3823
      %3825 = vrot.lane.b32.xlu0 %v3766, 96
      %v3826 = vpop.permute.xlu0 %3825
      %3827 = vrot.lane.b32.xlu0 %v3770, 96
      %v3828 = vpop.permute.xlu0 %3827
      %3829 = vrot.lane.b32.xlu0 %v3774, 96
      %v3830 = vpop.permute.xlu0 %3829
      %3831 = vrot.lane.b32.xlu0 %v3778, 96
      %v3832 = vpop.permute.xlu0 %3831
      %3833 = vrot.lane.b32.xlu0 %v3782, 96
      %v3834 = vpop.permute.xlu0 %3833
      %3835 = vrot.lane.b32.xlu0 %v3786, 96
      %v3836 = vpop.permute.xlu0 %3835
      %3837 = vrot.lane.b32.xlu0 %v3790, 96
      %v3838 = vpop.permute.xlu0 %3837
      %3839 = vrot.lane.b32.xlu0 %v3794, 96
      %v3840 = vpop.permute.xlu0 %3839
      %3841 = vrot.lane.b32.xlu0 %v3798, 96
      %v3842 = vpop.permute.xlu0 %3841
      %3843 = vrot.lane.b32.xlu0 %v3802, 96
      %v3844 = vpop.permute.xlu0 %3843
      %3845 = vrot.lane.b32.xlu0 %v3806, 96
      %v3846 = vpop.permute.xlu0 %3845
      %3847 = vrot.lane.b32.xlu0 %v3810, 96
      %v3848 = vpop.permute.xlu0 %3847
      %3849 = vrot.lane.b32.xlu0 %v3814, 96
      %v3850 = vpop.permute.xlu0 %3849
      %v3851 = vrot.slane %v3098, 3
      %v3852 = vrot.slane %v3107, 3
      %v3853 = vsel %vm2393, %v3851, %v3852
      %v3854 = vrot.slane %v3116, 3
      %v3855 = vsel %vm2393, %v3852, %v3854
      %v3856 = vrot.slane %v3125, 3
      %v3857 = vsel %vm2393, %v3854, %v3856
      %v3858 = vrot.slane %v3134, 3
      %v3859 = vsel %vm2393, %v3856, %v3858
      %v3860 = vrot.slane %v3143, 3
      %v3861 = vsel %vm2393, %v3858, %v3860
      %v3862 = vrot.slane %v3152, 3
      %v3863 = vsel %vm2393, %v3860, %v3862
      %v3864 = vrot.slane %v3161, 3
      %v3865 = vsel %vm2393, %v3862, %v3864
      %v3866 = vrot.slane %v3170, 3
      %v3867 = vsel %vm2393, %v3864, %v3866
      %v3868 = vrot.slane %v3179, 3
      %v3869 = vsel %vm2393, %v3866, %v3868
      %v3870 = vrot.slane %v3188, 3
      %v3871 = vsel %vm2393, %v3868, %v3870
      %v3872 = vrot.slane %v3197, 3
      %v3873 = vsel %vm2393, %v3870, %v3872
      %v3874 = vrot.slane %v3206, 3
      %v3875 = vsel %vm2393, %v3872, %v3874
      %v3876 = vrot.slane %v3215, 3
      %v3877 = vsel %vm2393, %v3874, %v3876
      %v3878 = vrot.slane %v3224, 3
      %v3879 = vsel %vm2393, %v3876, %v3878
      %v3880 = vrot.slane %v3233, 3
      %v3881 = vsel %vm2393, %v3878, %v3880
      %v3882 = vrot.slane %v3242, 3
      %v3883 = vsel %vm2393, %v3880, %v3882
      %v3884 = vrot.slane %v3248, 3
      %v3885 = vsel %vm2393, %v3882, %v3884
      %v3886 = vrot.slane 0, 3
      %v3887 = vsel %vm2393, %v3884, %v3886
      %vm3888 = vcmask 261120
      %v3890 = vsel %vm3888, 0, %v3398
      %v3892 = vsel %vm3888, %v3247, %v3400
      %v3894 = vsel %vm3888, %v3098, %v3402
      %v3896 = vsel %vm3888, %v3107, %v3404
      %v3898 = vsel %vm3888, %v3116, %v3406
      %v3900 = vsel %vm3888, %v3125, %v3408
      %v3902 = vsel %vm3888, %v3134, %v3410
      %v3904 = vsel %vm3888, %v3143, %v3412
      %v3906 = vsel %vm3888, %v3152, %v3414
      %v3908 = vsel %vm3888, %v3161, %v3416
      %v3910 = vsel %vm3888, %v3170, %v3418
      %v3912 = vsel %vm3888, %v3179, %v3420
      %v3914 = vsel %vm3888, %v3188, %v3422
      %v3916 = vsel %vm3888, %v3197, %v3424
      %v3918 = vsel %vm3888, %v3206, %v3426
      %v3920 = vsel %vm3888, %v3215, %v3428
      %v3922 = vsel %vm3888, %v3224, %v3430
      %v3924 = vsel %vm3888, %v3233, %v3432
      %vm3925 = vcmask 523264
      %v3927 = vsel %vm3925, %v3890, %v3473
      %v3929 = vsel %vm3925, %v3892, %v3475
      %v3931 = vsel %vm3925, %v3894, %v3477
      %v3933 = vsel %vm3925, %v3896, %v3479
      %v3935 = vsel %vm3925, %v3898, %v3481
      %v3937 = vsel %vm3925, %v3900, %v3483
      %v3939 = vsel %vm3925, %v3902, %v3485
      %v3941 = vsel %vm3925, %v3904, %v3487
      %v3943 = vsel %vm3925, %v3906, %v3489
      %v3945 = vsel %vm3925, %v3908, %v3491
      %v3947 = vsel %vm3925, %v3910, %v3493
      %v3949 = vsel %vm3925, %v3912, %v3495
      %v3951 = vsel %vm3925, %v3914, %v3497
      %v3953 = vsel %vm3925, %v3916, %v3499
      %v3955 = vsel %vm3925, %v3918, %v3501
      %v3957 = vsel %vm3925, %v3920, %v3503
      %v3959 = vsel %vm3925, %v3922, %v3505
      %v3961 = vsel %vm3925, %v3924, %v3507
      %vm3962 = vcmask 785408
      %v3964 = vsel %vm3962, %v3927, %v3512
      %v3967 = vsel %vm3962, %v3929, %v3514
      %v3970 = vsel %vm3962, %v3931, %v3516
      %v3973 = vsel %vm3962, %v3933, %v3518
      %v3976 = vsel %vm3962, %v3935, %v3520
      %v3979 = vsel %vm3962, %v3937, %v3522
      %v3982 = vsel %vm3962, %v3939, %v3524
      %v3985 = vsel %vm3962, %v3941, %v3526
      %v3988 = vsel %vm3962, %v3943, %v3528
      %v3991 = vsel %vm3962, %v3945, %v3530
      %v3994 = vsel %vm3962, %v3947, %v3532
      %v3997 = vsel %vm3962, %v3949, %v3534
      %v4000 = vsel %vm3962, %v3951, %v3536
      %v4003 = vsel %vm3962, %v3953, %v3538
      %v4006 = vsel %vm3962, %v3955, %v3540
      %v4009 = vsel %vm3962, %v3957, %v3542
      %v4012 = vsel %vm3962, %v3959, %v3544
      %v4015 = vsel %vm3962, %v3961, %v3546
      %v4019 = vsel %vm3888, %v3553, %v3667
      %v4022 = vsel %vm3888, %v3557, %v3669
      %v4025 = vsel %vm3888, %v3561, %v3671
      %v4028 = vsel %vm3888, %v3565, %v3673
      %v4031 = vsel %vm3888, %v3569, %v3675
      %v4034 = vsel %vm3888, %v3573, %v3677
      %v4037 = vsel %vm3888, %v3577, %v3679
      %v4040 = vsel %vm3888, %v3581, %v3681
      %v4043 = vsel %vm3888, %v3585, %v3683
      %v4046 = vsel %vm3888, %v3589, %v3685
      %v4049 = vsel %vm3888, %v3593, %v3687
      %v4052 = vsel %vm3888, %v3597, %v3689
      %v4055 = vsel %vm3888, %v3601, %v3691
      %v4058 = vsel %vm3888, %v3605, %v3693
      %v4061 = vsel %vm3888, %v3609, %v3695
      %v4064 = vsel %vm3888, %v3613, %v3697
      %v4067 = vsel %vm3888, %v3619, %v3699
      %v4070 = vsel %vm3888, %v3628, %v3701
      %v4072 = vsel %vm3925, %v4019, %v3705
      %v4074 = vsel %vm3925, %v4022, %v3707
      %v4076 = vsel %vm3925, %v4025, %v3709
      %v4078 = vsel %vm3925, %v4028, %v3711
      %v4080 = vsel %vm3925, %v4031, %v3713
      %v4082 = vsel %vm3925, %v4034, %v3715
      %v4084 = vsel %vm3925, %v4037, %v3717
      %v4086 = vsel %vm3925, %v4040, %v3719
      %v4088 = vsel %vm3925, %v4043, %v3721
      %v4090 = vsel %vm3925, %v4046, %v3723
      %v4092 = vsel %vm3925, %v4049, %v3725
      %v4094 = vsel %vm3925, %v4052, %v3727
      %v4096 = vsel %vm3925, %v4055, %v3729
      %v4098 = vsel %vm3925, %v4058, %v3731
      %v4100 = vsel %vm3925, %v4061, %v3733
      %v4102 = vsel %vm3925, %v4064, %v3735
      %v4104 = vsel %vm3925, %v4067, %v3737
      %v4106 = vsel %vm3925, %v4070, %v3739
      %v4108 = vsel %vm3962, %v4072, %v3816
      %v4111 = vsel %vm3962, %v4074, %v3818
      %v4114 = vsel %vm3962, %v4076, %v3820
      %v4117 = vsel %vm3962, %v4078, %v3822
      %v4120 = vsel %vm3962, %v4080, %v3824
      %v4123 = vsel %vm3962, %v4082, %v3826
      %v4126 = vsel %vm3962, %v4084, %v3828
      %v4129 = vsel %vm3962, %v4086, %v3830
      %v4132 = vsel %vm3962, %v4088, %v3832
      %v4135 = vsel %vm3962, %v4090, %v3834
      %v4138 = vsel %vm3962, %v4092, %v3836
      %v4141 = vsel %vm3962, %v4094, %v3838
      %v4144 = vsel %vm3962, %v4096, %v3840
      %v4147 = vsel %vm3962, %v4098, %v3842
      %v4150 = vsel %vm3962, %v4100, %v3844
      %v4153 = vsel %vm3962, %v4102, %v3846
      %v4156 = vsel %vm3962, %v4104, %v3848
      %v4159 = vsel %vm3962, %v4106, %v3850
      %v4161 = vld [vmem:[%s5] sm:$0xf]
      %v4162 = vld [vmem:[%s5 + $0x4] sm:$0xf]
      %v4163 = vld [vmem:[%s5 + $0x8] sm:$0xf]
      %v4164 = vld [vmem:[%s5 + $0xc] sm:$0xf]
      %v4165 = vld [vmem:[%s5 + $0x10] sm:$0xf]
      %v4166 = vld [vmem:[%s5 + $0x14] sm:$0xf]
      %v4167 = vld [vmem:[%s5 + $0x18] sm:$0xf]
      %v4168 = vld [vmem:[%s5 + $0x1c] sm:$0xf]
      %v4169 = vld [vmem:[%s5 + $0x20] sm:$0xf]
      %v4170 = vld [vmem:[%s5 + $0x24] sm:$0xf]
      %v4171 = vld [vmem:[%s5 + $0x28] sm:$0xf]
      %v4172 = vld [vmem:[%s5 + $0x2c] sm:$0xf]
      %v4173 = vld [vmem:[%s5 + $0x30] sm:$0xf]
      %v4174 = vld [vmem:[%s5 + $0x34] sm:$0xf]
      %v4175 = vld [vmem:[%s5 + $0x38] sm:$0xf]
      %v4176 = vld [vmem:[%s5 + $0x3c] sm:$0xf]
      %v4177 = vld [vmem:[%s5 + $0x40] sm:$0xf]
      %v4178 = vld [vmem:[%s5 + $0x44] sm:$0xf]
      %v4179 = vld [vmem:[%s5 + $0x48] sm:$0xf]
      %v4180 = vld [vmem:[%s5 + $0x4c] sm:$0xf]
      %v4181 = vld [vmem:[%s5 + $0x50] sm:$0xf]
      %v4182 = vld [vmem:[%s5 + $0x54] sm:$0xf]
      %v4183 = vld [vmem:[%s5 + $0x58] sm:$0xf]
      %v4184 = vld [vmem:[%s5 + $0x5c] sm:$0xf]
      %v4185 = vld [vmem:[%s5 + $0x60] sm:$0xf]
      %v4186 = vld [vmem:[%s5 + $0x64] sm:$0xf]
      %v4187 = vld [vmem:[%s5 + $0x68] sm:$0xf]
      %v4188 = vld [vmem:[%s5 + $0x6c] sm:$0xf]
      %v4189 = vld [vmem:[%s5 + $0x70] sm:$0xf]
      %v4190 = vld [vmem:[%s5 + $0x74] sm:$0xf]
      %v4191 = vld [vmem:[%s5 + $0x78] sm:$0xf]
      %v4192 = vld [vmem:[%s5 + $0x7c] sm:$0xf]
      %v4193 = vld [vmem:[%s5 + $0x80] sm:$0xf]
      %v4194 = vld [vmem:[%s5 + $0x84] sm:$0xf]
      %v4195 = vld [vmem:[%s5 + $0x88] sm:$0xf]
      %v4196 = vld [vmem:[%s5 + $0x8c] sm:$0xf]
      %v4233 = vunpack.c.l.b16 %v4161
      %v4234 = vunpack.c.l.b16 %v4162
      %v4235 = vunpack.c.l.b16 %v4163
      %v4236 = vunpack.c.l.b16 %v4164
      %v4237 = vunpack.c.l.b16 %v4165
      %v4238 = vunpack.c.l.b16 %v4166
      %v4239 = vunpack.c.l.b16 %v4167
      %v4240 = vunpack.c.l.b16 %v4168
      %v4241 = vunpack.c.l.b16 %v4169
      %v4242 = vunpack.c.l.b16 %v4170
      %v4243 = vunpack.c.l.b16 %v4171
      %v4244 = vunpack.c.l.b16 %v4172
      %v4245 = vunpack.c.l.b16 %v4173
      %v4246 = vunpack.c.l.b16 %v4174
      %v4247 = vunpack.c.l.b16 %v4175
      %v4248 = vunpack.c.l.b16 %v4176
      %v4249 = vunpack.c.l.b16 %v4177
      %v4250 = vunpack.c.l.b16 %v4178
      %v4251 = vunpack.c.l.b16 %v4179
      %v4252 = vunpack.c.l.b16 %v4180
      %v4253 = vunpack.c.l.b16 %v4181
      %v4254 = vunpack.c.l.b16 %v4182
      %v4255 = vunpack.c.l.b16 %v4183
      %v4256 = vunpack.c.l.b16 %v4184
      %v4257 = vunpack.c.l.b16 %v4185
      %v4258 = vunpack.c.l.b16 %v4186
      %v4259 = vunpack.c.l.b16 %v4187
      %v4260 = vunpack.c.l.b16 %v4188
      %v4261 = vunpack.c.l.b16 %v4189
      %v4262 = vunpack.c.l.b16 %v4190
      %v4263 = vunpack.c.l.b16 %v4191
      %v4264 = vunpack.c.l.b16 %v4192
      %v4265 = vunpack.c.l.b16 %v4193
      %v4266 = vunpack.c.l.b16 %v4194
      %v4267 = vunpack.c.l.b16 %v4195
      %v4268 = vunpack.c.l.b16 %v4196
      %v4269 = vpack.c.b16 %v4234, %v4233
      %v4270 = vpack.c.b16 %v4236, %v4235
      %v4271 = vpack.c.b16 %v4238, %v4237
      %v4272 = vpack.c.b16 %v4240, %v4239
      %v4273 = vpack.c.b16 %v4242, %v4241
      %v4274 = vpack.c.b16 %v4244, %v4243
      %v4275 = vpack.c.b16 %v4246, %v4245
      %v4276 = vpack.c.b16 %v4248, %v4247
      %v4277 = vpack.c.b16 %v4250, %v4249
      %v4278 = vpack.c.b16 %v4252, %v4251
      %v4279 = vpack.c.b16 %v4254, %v4253
      %v4280 = vpack.c.b16 %v4256, %v4255
      %v4281 = vpack.c.b16 %v4258, %v4257
      %v4282 = vpack.c.b16 %v4260, %v4259
      %v4283 = vpack.c.b16 %v4262, %v4261
      %v4284 = vpack.c.b16 %v4264, %v4263
      %v4285 = vpack.c.b16 %v4266, %v4265
      %v4286 = vpack.c.b16 %v4268, %v4267
      %v4306 = vsel %vm3888, %v3853, 0
      %v4309 = vsel %vm3888, %v3855, 0
      %v4312 = vsel %vm3888, %v3857, 0
      %v4315 = vsel %vm3888, %v3859, 0
      %v4318 = vsel %vm3888, %v3861, 0
      %v4321 = vsel %vm3888, %v3863, 0
      %v4324 = vsel %vm3888, %v3865, 0
      %v4327 = vsel %vm3888, %v3867, 0
      %v4330 = vsel %vm3888, %v3869, 0
      %v4333 = vsel %vm3888, %v3871, 0
      %v4336 = vsel %vm3888, %v3873, 0
      %v4339 = vsel %vm3888, %v3875, 0
      %v4342 = vsel %vm3888, %v3877, 0
      %v4345 = vsel %vm3888, %v3879, 0
      %v4348 = vsel %vm3888, %v3881, 0
      %v4351 = vsel %vm3888, %v3883, 0
      %v4354 = vsel %vm3888, %v3885, 0
      %v4357 = vsel %vm3888, %v3887, 0
      %4359 = vmatpush.bf16.msra.mxu0 %v4276
      %4360 = vmatpush.bf16.msra.mxu0 %v4275
      %4361 = vmatpush.bf16.msra.mxu0 %v4274
      %4362 = vmatpush.bf16.msra.mxu0 %v4273
      %4363 = vmatpush.bf16.msra.mxu0 %v4272
      %4364 = vmatpush.bf16.msra.mxu0 %v4271
      %4365 = vmatpush.bf16.msra.mxu0 %v4270
      %4366 = vmatpush.bf16.msra.mxu0 %v4269
      %4367 = vmatmul.bf16.gmra.mxu0 %v3964
      %v4368 = vpop.f32.mrf.mxu0
      %v4369 = vadd.f32 0.0, %v4368
      %v4370 = vpop.f32.mrf.mxu0
      %v4371 = vadd.f32 0.0, %v4370
      %4372 = vmatmul.bf16.gmra.mxu0 %v3967
      %v4373 = vpop.f32.mrf.mxu0
      %v4374 = vadd.f32 0.0, %v4373
      %v4375 = vpop.f32.mrf.mxu0
      %v4376 = vadd.f32 0.0, %v4375
      %4377 = vmatmul.bf16.gmra.mxu0 %v3970
      %v4378 = vpop.f32.mrf.mxu0
      %v4379 = vadd.f32 0.0, %v4378
      %v4380 = vpop.f32.mrf.mxu0
      %v4381 = vadd.f32 0.0, %v4380
      %4382 = vmatmul.bf16.gmra.mxu0 %v3973
      %v4383 = vpop.f32.mrf.mxu0
      %v4384 = vadd.f32 0.0, %v4383
      %v4385 = vpop.f32.mrf.mxu0
      %v4386 = vadd.f32 0.0, %v4385
      %4387 = vmatmul.bf16.gmra.mxu0 %v3976
      %v4388 = vpop.f32.mrf.mxu0
      %v4389 = vadd.f32 0.0, %v4388
      %v4390 = vpop.f32.mrf.mxu0
      %v4391 = vadd.f32 0.0, %v4390
      %4392 = vmatmul.bf16.gmra.mxu0 %v3979
      %v4393 = vpop.f32.mrf.mxu0
      %v4394 = vadd.f32 0.0, %v4393
      %v4395 = vpop.f32.mrf.mxu0
      %v4396 = vadd.f32 0.0, %v4395
      %4397 = vmatmul.bf16.gmra.mxu0 %v3982
      %v4398 = vpop.f32.mrf.mxu0
      %v4399 = vadd.f32 0.0, %v4398
      %v4400 = vpop.f32.mrf.mxu0
      %v4401 = vadd.f32 0.0, %v4400
      %4402 = vmatmul.bf16.gmra.mxu0 %v3985
      %v4403 = vpop.f32.mrf.mxu0
      %v4404 = vadd.f32 0.0, %v4403
      %v4405 = vpop.f32.mrf.mxu0
      %v4406 = vadd.f32 0.0, %v4405
      %4407 = vmatmul.bf16.gmra.mxu0 %v3988
      %v4408 = vpop.f32.mrf.mxu0
      %v4409 = vadd.f32 0.0, %v4408
      %v4410 = vpop.f32.mrf.mxu0
      %v4411 = vadd.f32 0.0, %v4410
      %4412 = vmatmul.bf16.gmra.mxu0 %v3991
      %v4413 = vpop.f32.mrf.mxu0
      %v4414 = vadd.f32 0.0, %v4413
      %v4415 = vpop.f32.mrf.mxu0
      %v4416 = vadd.f32 0.0, %v4415
      %4417 = vmatmul.bf16.gmra.mxu0 %v3994
      %v4418 = vpop.f32.mrf.mxu0
      %v4419 = vadd.f32 0.0, %v4418
      %v4420 = vpop.f32.mrf.mxu0
      %v4421 = vadd.f32 0.0, %v4420
      %4422 = vmatmul.bf16.gmra.mxu0 %v3997
      %v4423 = vpop.f32.mrf.mxu0
      %v4424 = vadd.f32 0.0, %v4423
      %v4425 = vpop.f32.mrf.mxu0
      %v4426 = vadd.f32 0.0, %v4425
      %4427 = vmatmul.bf16.gmra.mxu0 %v4000
      %v4428 = vpop.f32.mrf.mxu0
      %v4429 = vadd.f32 0.0, %v4428
      %v4430 = vpop.f32.mrf.mxu0
      %v4431 = vadd.f32 0.0, %v4430
      %4432 = vmatmul.bf16.gmra.mxu0 %v4003
      %v4433 = vpop.f32.mrf.mxu0
      %v4434 = vadd.f32 0.0, %v4433
      %v4435 = vpop.f32.mrf.mxu0
      %v4436 = vadd.f32 0.0, %v4435
      %4437 = vmatmul.bf16.gmra.mxu0 %v4006
      %v4438 = vpop.f32.mrf.mxu0
      %v4439 = vadd.f32 0.0, %v4438
      %v4440 = vpop.f32.mrf.mxu0
      %v4441 = vadd.f32 0.0, %v4440
      %4442 = vmatmul.bf16.gmra.mxu0 %v4009
      %v4443 = vpop.f32.mrf.mxu0
      %v4444 = vadd.f32 0.0, %v4443
      %v4445 = vpop.f32.mrf.mxu0
      %v4446 = vadd.f32 0.0, %v4445
      %4447 = vmatmul.bf16.gmra.mxu0 %v4012
      %v4448 = vpop.f32.mrf.mxu0
      %v4449 = vadd.f32 0.0, %v4448
      %v4450 = vpop.f32.mrf.mxu0
      %v4451 = vadd.f32 0.0, %v4450
      %4452 = vmatmul.bf16.gmra.mxu0 %v4015
      %v4453 = vpop.f32.mrf.mxu0
      %v4454 = vadd.f32 0.0, %v4453
      %v4455 = vpop.f32.mrf.mxu0
      %v4456 = vadd.f32 0.0, %v4455
      %4457 = vdwg.mxu0
      %4458 = vmatpush.bf16.msra.mxu0 %v4284
      %4459 = vmatpush.bf16.msra.mxu0 %v4283
      %4460 = vmatpush.bf16.msra.mxu0 %v4282
      %4461 = vmatpush.bf16.msra.mxu0 %v4281
      %4462 = vmatpush.bf16.msra.mxu0 %v4280
      %4463 = vmatpush.bf16.msra.mxu0 %v4279
      %4464 = vmatpush.bf16.msra.mxu0 %v4278
      %4465 = vmatpush.bf16.msra.mxu0 %v4277
      %4466 = vmatmul.bf16.gmra.mxu0 %v4108
      %v4467 = vpop.f32.mrf.mxu0
      %v4468 = vadd.f32 %v4369, %v4467
      %v4469 = vpop.f32.mrf.mxu0
      %v4470 = vadd.f32 %v4371, %v4469
      %4471 = vmatmul.bf16.gmra.mxu0 %v4111
      %v4472 = vpop.f32.mrf.mxu0
      %v4473 = vadd.f32 %v4374, %v4472
      %v4474 = vpop.f32.mrf.mxu0
      %v4475 = vadd.f32 %v4376, %v4474
      %4476 = vmatmul.bf16.gmra.mxu0 %v4114
      %v4477 = vpop.f32.mrf.mxu0
      %v4478 = vadd.f32 %v4379, %v4477
      %v4479 = vpop.f32.mrf.mxu0
      %v4480 = vadd.f32 %v4381, %v4479
      %4481 = vmatmul.bf16.gmra.mxu0 %v4117
      %v4482 = vpop.f32.mrf.mxu0
      %v4483 = vadd.f32 %v4384, %v4482
      %v4484 = vpop.f32.mrf.mxu0
      %v4485 = vadd.f32 %v4386, %v4484
      %4486 = vmatmul.bf16.gmra.mxu0 %v4120
      %v4487 = vpop.f32.mrf.mxu0
      %v4488 = vadd.f32 %v4389, %v4487
      %v4489 = vpop.f32.mrf.mxu0
      %v4490 = vadd.f32 %v4391, %v4489
      %4491 = vmatmul.bf16.gmra.mxu0 %v4123
      %v4492 = vpop.f32.mrf.mxu0
      %v4493 = vadd.f32 %v4394, %v4492
      %v4494 = vpop.f32.mrf.mxu0
      %v4495 = vadd.f32 %v4396, %v4494
      %4496 = vmatmul.bf16.gmra.mxu0 %v4126
      %v4497 = vpop.f32.mrf.mxu0
      %v4498 = vadd.f32 %v4399, %v4497
      %v4499 = vpop.f32.mrf.mxu0
      %v4500 = vadd.f32 %v4401, %v4499
      %4501 = vmatmul.bf16.gmra.mxu0 %v4129
      %v4502 = vpop.f32.mrf.mxu0
      %v4503 = vadd.f32 %v4404, %v4502
      %v4504 = vpop.f32.mrf.mxu0
      %v4505 = vadd.f32 %v4406, %v4504
      %4506 = vmatmul.bf16.gmra.mxu0 %v4132
      %v4507 = vpop.f32.mrf.mxu0
      %v4508 = vadd.f32 %v4409, %v4507
      %v4509 = vpop.f32.mrf.mxu0
      %v4510 = vadd.f32 %v4411, %v4509
      %4511 = vmatmul.bf16.gmra.mxu0 %v4135
      %v4512 = vpop.f32.mrf.mxu0
      %v4513 = vadd.f32 %v4414, %v4512
      %v4514 = vpop.f32.mrf.mxu0
      %v4515 = vadd.f32 %v4416, %v4514
      %4516 = vmatmul.bf16.gmra.mxu0 %v4138
      %v4517 = vpop.f32.mrf.mxu0
      %v4518 = vadd.f32 %v4419, %v4517
      %v4519 = vpop.f32.mrf.mxu0
      %v4520 = vadd.f32 %v4421, %v4519
      %4521 = vmatmul.bf16.gmra.mxu0 %v4141
      %v4522 = vpop.f32.mrf.mxu0
      %v4523 = vadd.f32 %v4424, %v4522
      %v4524 = vpop.f32.mrf.mxu0
      %v4525 = vadd.f32 %v4426, %v4524
      %4526 = vmatmul.bf16.gmra.mxu0 %v4144
      %v4527 = vpop.f32.mrf.mxu0
      %v4528 = vadd.f32 %v4429, %v4527
      %v4529 = vpop.f32.mrf.mxu0
      %v4530 = vadd.f32 %v4431, %v4529
      %4531 = vmatmul.bf16.gmra.mxu0 %v4147
      %v4532 = vpop.f32.mrf.mxu0
      %v4533 = vadd.f32 %v4434, %v4532
      %v4534 = vpop.f32.mrf.mxu0
      %v4535 = vadd.f32 %v4436, %v4534
      %4536 = vmatmul.bf16.gmra.mxu0 %v4150
      %v4537 = vpop.f32.mrf.mxu0
      %v4538 = vadd.f32 %v4439, %v4537
      %v4539 = vpop.f32.mrf.mxu0
      %v4540 = vadd.f32 %v4441, %v4539
      %4541 = vmatmul.bf16.gmra.mxu0 %v4153
      %v4542 = vpop.f32.mrf.mxu0
      %v4543 = vadd.f32 %v4444, %v4542
      %v4544 = vpop.f32.mrf.mxu0
      %v4545 = vadd.f32 %v4446, %v4544
      %4546 = vmatmul.bf16.gmra.mxu0 %v4156
      %v4547 = vpop.f32.mrf.mxu0
      %v4548 = vadd.f32 %v4449, %v4547
      %v4549 = vpop.f32.mrf.mxu0
      %v4550 = vadd.f32 %v4451, %v4549
      %4551 = vmatmul.bf16.gmra.mxu0 %v4159
      %v4552 = vpop.f32.mrf.mxu0
      %v4553 = vadd.f32 %v4454, %v4552
      %v4554 = vpop.f32.mrf.mxu0
      %v4555 = vadd.f32 %v4456, %v4554
      %4556 = vdwg.mxu0
      %4557 = vmatpush.bf16.msra.mxu0 0
      %4558 = vmatpush.bf16.msra.mxu0 0
      %4559 = vmatpush.bf16.msra.mxu0 0
      %4560 = vmatpush.bf16.msra.mxu0 0
      %4561 = vmatpush.bf16.msra.mxu0 0
      %4562 = vmatpush.bf16.msra.mxu0 0
      %4563 = vmatpush.bf16.msra.mxu0 %v4286
      %4564 = vmatpush.bf16.msra.mxu0 %v4285
      %4565 = vmatmul.bf16.gmra.mxu0 %v4306
      %v4566 = vpop.f32.mrf.mxu0
      %v4567 = vadd.f32 %v4468, %v4566
      %v4568 = vpop.f32.mrf.mxu0
      %v4569 = vadd.f32 %v4470, %v4568
      %4570 = vmatmul.bf16.gmra.mxu0 %v4309
      %v4571 = vpop.f32.mrf.mxu0
      %v4572 = vadd.f32 %v4473, %v4571
      %v4573 = vpop.f32.mrf.mxu0
      %v4574 = vadd.f32 %v4475, %v4573
      %4575 = vmatmul.bf16.gmra.mxu0 %v4312
      %v4576 = vpop.f32.mrf.mxu0
      %v4577 = vadd.f32 %v4478, %v4576
      %v4578 = vpop.f32.mrf.mxu0
      %v4579 = vadd.f32 %v4480, %v4578
      %4580 = vmatmul.bf16.gmra.mxu0 %v4315
      %v4581 = vpop.f32.mrf.mxu0
      %v4582 = vadd.f32 %v4483, %v4581
      %v4583 = vpop.f32.mrf.mxu0
      %v4584 = vadd.f32 %v4485, %v4583
      %4585 = vmatmul.bf16.gmra.mxu0 %v4318
      %v4586 = vpop.f32.mrf.mxu0
      %v4587 = vadd.f32 %v4488, %v4586
      %v4588 = vpop.f32.mrf.mxu0
      %v4589 = vadd.f32 %v4490, %v4588
      %4590 = vmatmul.bf16.gmra.mxu0 %v4321
      %v4591 = vpop.f32.mrf.mxu0
      %v4592 = vadd.f32 %v4493, %v4591
      %v4593 = vpop.f32.mrf.mxu0
      %v4594 = vadd.f32 %v4495, %v4593
      %4595 = vmatmul.bf16.gmra.mxu0 %v4324
      %v4596 = vpop.f32.mrf.mxu0
      %v4597 = vadd.f32 %v4498, %v4596
      %v4598 = vpop.f32.mrf.mxu0
      %v4599 = vadd.f32 %v4500, %v4598
      %4600 = vmatmul.bf16.gmra.mxu0 %v4327
      %v4601 = vpop.f32.mrf.mxu0
      %v4602 = vadd.f32 %v4503, %v4601
      %v4603 = vpop.f32.mrf.mxu0
      %v4604 = vadd.f32 %v4505, %v4603
      %4605 = vmatmul.bf16.gmra.mxu0 %v4330
      %v4606 = vpop.f32.mrf.mxu0
      %v4607 = vadd.f32 %v4508, %v4606
      %v4608 = vpop.f32.mrf.mxu0
      %v4609 = vadd.f32 %v4510, %v4608
      %4610 = vmatmul.bf16.gmra.mxu0 %v4333
      %v4611 = vpop.f32.mrf.mxu0
      %v4612 = vadd.f32 %v4513, %v4611
      %v4613 = vpop.f32.mrf.mxu0
      %v4614 = vadd.f32 %v4515, %v4613
      %4615 = vmatmul.bf16.gmra.mxu0 %v4336
      %v4616 = vpop.f32.mrf.mxu0
      %v4617 = vadd.f32 %v4518, %v4616
      %v4618 = vpop.f32.mrf.mxu0
      %v4619 = vadd.f32 %v4520, %v4618
      %4620 = vmatmul.bf16.gmra.mxu0 %v4339
      %v4621 = vpop.f32.mrf.mxu0
      %v4622 = vadd.f32 %v4523, %v4621
      %v4623 = vpop.f32.mrf.mxu0
      %v4624 = vadd.f32 %v4525, %v4623
      %4625 = vmatmul.bf16.gmra.mxu0 %v4342
      %v4626 = vpop.f32.mrf.mxu0
      %v4627 = vadd.f32 %v4528, %v4626
      %v4628 = vpop.f32.mrf.mxu0
      %v4629 = vadd.f32 %v4530, %v4628
      %4630 = vmatmul.bf16.gmra.mxu0 %v4345
      %v4631 = vpop.f32.mrf.mxu0
      %v4632 = vadd.f32 %v4533, %v4631
      %v4633 = vpop.f32.mrf.mxu0
      %v4634 = vadd.f32 %v4535, %v4633
      %4635 = vmatmul.bf16.gmra.mxu0 %v4348
      %v4636 = vpop.f32.mrf.mxu0
      %v4637 = vadd.f32 %v4538, %v4636
      %v4638 = vpop.f32.mrf.mxu0
      %v4639 = vadd.f32 %v4540, %v4638
      %4640 = vmatmul.bf16.gmra.mxu0 %v4351
      %v4641 = vpop.f32.mrf.mxu0
      %v4642 = vadd.f32 %v4543, %v4641
      %v4643 = vpop.f32.mrf.mxu0
      %v4644 = vadd.f32 %v4545, %v4643
      %4645 = vmatmul.bf16.gmra.mxu0 %v4354
      %v4646 = vpop.f32.mrf.mxu0
      %v4647 = vadd.f32 %v4548, %v4646
      %v4648 = vpop.f32.mrf.mxu0
      %v4649 = vadd.f32 %v4550, %v4648
      %4650 = vmatmul.bf16.gmra.mxu0 %v4357
      %v4651 = vpop.f32.mrf.mxu0
      %v4652 = vadd.f32 %v4553, %v4651
      %v4653 = vpop.f32.mrf.mxu0
      %v4654 = vadd.f32 %v4555, %v4653
      %4655 = vdwg.mxu0
      %v4656 = vld [vmem:[%s6] sm:$0x1]
      %v4658 = vperm.slane %v4656, 0
      %v4660 = vmul.f32 %v4567, %v4658
      %v4661 = vmul.f32 %v4569, %v4658
      %v4662 = vmul.f32 %v4572, %v4658
      %v4663 = vmul.f32 %v4574, %v4658
      %v4664 = vmul.f32 %v4577, %v4658
      %v4665 = vmul.f32 %v4579, %v4658
      %v4666 = vmul.f32 %v4582, %v4658
      %v4667 = vmul.f32 %v4584, %v4658
      %v4668 = vmul.f32 %v4587, %v4658
      %v4669 = vmul.f32 %v4589, %v4658
      %v4670 = vmul.f32 %v4592, %v4658
      %v4671 = vmul.f32 %v4594, %v4658
      %v4672 = vmul.f32 %v4597, %v4658
      %v4673 = vmul.f32 %v4599, %v4658
      %v4674 = vmul.f32 %v4602, %v4658
      %v4675 = vmul.f32 %v4604, %v4658
      %v4676 = vmul.f32 %v4607, %v4658
      %v4677 = vmul.f32 %v4609, %v4658
      %v4678 = vmul.f32 %v4612, %v4658
      %v4679 = vmul.f32 %v4614, %v4658
      %v4680 = vmul.f32 %v4617, %v4658
      %v4681 = vmul.f32 %v4619, %v4658
      %v4682 = vmul.f32 %v4622, %v4658
      %v4683 = vmul.f32 %v4624, %v4658
      %v4684 = vmul.f32 %v4627, %v4658
      %v4685 = vmul.f32 %v4629, %v4658
      %v4686 = vmul.f32 %v4632, %v4658
      %v4687 = vmul.f32 %v4634, %v4658
      %v4688 = vmul.f32 %v4637, %v4658
      %v4689 = vmul.f32 %v4639, %v4658
      %v4690 = vmul.f32 %v4642, %v4658
      %v4691 = vmul.f32 %v4644, %v4658
      %v4692 = vmul.f32 %v4647, %v4658
      %v4693 = vmul.f32 %v4649, %v4658
      %v4694 = vmul.f32 %v4652, %v4658
      %v4695 = vmul.f32 %v4654, %v4658
      %v4696 = vld [vmem:[%s7] sm:$0x1]
      %v4698 = vperm.slane %v4696, 0
      %v4700 = vadd.f32 %v4660, %v4698
      %v4701 = vadd.f32 %v4661, %v4698
      %v4702 = vadd.f32 %v4662, %v4698
      %v4703 = vadd.f32 %v4663, %v4698
      %v4704 = vadd.f32 %v4664, %v4698
      %v4705 = vadd.f32 %v4665, %v4698
      %v4706 = vadd.f32 %v4666, %v4698
      %v4707 = vadd.f32 %v4667, %v4698
      %v4708 = vadd.f32 %v4668, %v4698
      %v4709 = vadd.f32 %v4669, %v4698
      %v4710 = vadd.f32 %v4670, %v4698
      %v4711 = vadd.f32 %v4671, %v4698
      %v4712 = vadd.f32 %v4672, %v4698
      %v4713 = vadd.f32 %v4673, %v4698
      %v4714 = vadd.f32 %v4674, %v4698
      %v4715 = vadd.f32 %v4675, %v4698
      %v4716 = vadd.f32 %v4676, %v4698
      %v4717 = vadd.f32 %v4677, %v4698
      %v4718 = vadd.f32 %v4678, %v4698
      %v4719 = vadd.f32 %v4679, %v4698
      %v4720 = vadd.f32 %v4680, %v4698
      %v4721 = vadd.f32 %v4681, %v4698
      %v4722 = vadd.f32 %v4682, %v4698
      %v4723 = vadd.f32 %v4683, %v4698
      %v4724 = vadd.f32 %v4684, %v4698
      %v4725 = vadd.f32 %v4685, %v4698
      %v4726 = vadd.f32 %v4686, %v4698
      %v4727 = vadd.f32 %v4687, %v4698
      %v4728 = vadd.f32 %v4688, %v4698
      %v4729 = vadd.f32 %v4689, %v4698
      %v4730 = vadd.f32 %v4690, %v4698
      %v4731 = vadd.f32 %v4691, %v4698
      %v4732 = vadd.f32 %v4692, %v4698
      %v4733 = vadd.f32 %v4693, %v4698
      %v4734 = vadd.f32 %v4694, %v4698
      %v4735 = vadd.f32 %v4695, %v4698
      %v4736 = vmax.f32 %v4700, 0.0
      %v4737 = vmax.f32 %v4701, 0.0
      %v4738 = vmax.f32 %v4702, 0.0
      %v4739 = vmax.f32 %v4703, 0.0
      %v4740 = vmax.f32 %v4704, 0.0
      %v4741 = vmax.f32 %v4705, 0.0
      %v4742 = vmax.f32 %v4706, 0.0
      %v4743 = vmax.f32 %v4707, 0.0
      %v4744 = vmax.f32 %v4708, 0.0
      %v4745 = vmax.f32 %v4709, 0.0
      %v4746 = vmax.f32 %v4710, 0.0
      %v4747 = vmax.f32 %v4711, 0.0
      %v4748 = vmax.f32 %v4712, 0.0
      %v4749 = vmax.f32 %v4713, 0.0
      %v4750 = vmax.f32 %v4714, 0.0
      %v4751 = vmax.f32 %v4715, 0.0
      %v4752 = vmax.f32 %v4716, 0.0
      %v4753 = vmax.f32 %v4717, 0.0
      %v4754 = vmax.f32 %v4718, 0.0
      %v4755 = vmax.f32 %v4719, 0.0
      %v4756 = vmax.f32 %v4720, 0.0
      %v4757 = vmax.f32 %v4721, 0.0
      %v4758 = vmax.f32 %v4722, 0.0
      %v4759 = vmax.f32 %v4723, 0.0
      %v4760 = vmax.f32 %v4724, 0.0
      %v4761 = vmax.f32 %v4725, 0.0
      %v4762 = vmax.f32 %v4726, 0.0
      %v4763 = vmax.f32 %v4727, 0.0
      %v4764 = vmax.f32 %v4728, 0.0
      %v4765 = vmax.f32 %v4729, 0.0
      %v4766 = vmax.f32 %v4730, 0.0
      %v4767 = vmax.f32 %v4731, 0.0
      %v4768 = vmax.f32 %v4732, 0.0
      %v4769 = vmax.f32 %v4733, 0.0
      %v4770 = vmax.f32 %v4734, 0.0
      %v4771 = vmax.f32 %v4735, 0.0
      %v4772 = vmul.f32 %v4736, %v2742
      %v4773 = vmul.f32 %v4737, %v2747
      %v4774 = vmul.f32 %v4738, %v2752
      %v4775 = vmul.f32 %v4739, %v2757
      %v4776 = vmul.f32 %v4740, %v2762
      %v4777 = vmul.f32 %v4741, %v2767
      %v4778 = vmul.f32 %v4742, %v2772
      %v4779 = vmul.f32 %v4743, %v2777
      %v4780 = vmul.f32 %v4744, %v2782
      %v4781 = vmul.f32 %v4745, %v2787
      %v4782 = vmul.f32 %v4746, %v2792
      %v4783 = vmul.f32 %v4747, %v2797
      %v4784 = vmul.f32 %v4748, %v2802
      %v4785 = vmul.f32 %v4749, %v2807
      %v4786 = vmul.f32 %v4750, %v2812
      %v4787 = vmul.f32 %v4751, %v2817
      %v4788 = vmul.f32 %v4752, %v2822
      %v4789 = vmul.f32 %v4753, %v2827
      %v4790 = vmul.f32 %v4754, %v2832
      %v4791 = vmul.f32 %v4755, %v2837
      %v4792 = vmul.f32 %v4756, %v2842
      %v4793 = vmul.f32 %v4757, %v2847
      %v4794 = vmul.f32 %v4758, %v2852
      %v4795 = vmul.f32 %v4759, %v2857
      %v4796 = vmul.f32 %v4760, %v2862
      %v4797 = vmul.f32 %v4761, %v2867
      %v4798 = vmul.f32 %v4762, %v2872
      %v4799 = vmul.f32 %v4763, %v2877
      %v4800 = vmul.f32 %v4764, %v2882
      %v4801 = vmul.f32 %v4765, %v2887
      %v4802 = vmul.f32 %v4766, %v2892
      %v4803 = vmul.f32 %v4767, %v2897
      %v4804 = vmul.f32 %v4768, %v2902
      %v4805 = vmul.f32 %v4769, %v2907
      %v4806 = vmul.f32 %v4770, %v2912
      %v4807 = vmul.f32 %v4771, %v2917
      %v4808 = vpack.c.bf16 %v4772, %v4772
      %v4809 = vpack.c.bf16 %v4773, %v4773
      %v4810 = vpack.c.bf16 %v4774, %v4774
      %v4811 = vpack.c.bf16 %v4775, %v4775
      %v4812 = vpack.c.bf16 %v4776, %v4776
      %v4813 = vpack.c.bf16 %v4777, %v4777
      %v4814 = vpack.c.bf16 %v4778, %v4778
      %v4815 = vpack.c.bf16 %v4779, %v4779
      %v4816 = vpack.c.bf16 %v4780, %v4780
      %v4817 = vpack.c.bf16 %v4781, %v4781
      %v4818 = vpack.c.bf16 %v4782, %v4782
      %v4819 = vpack.c.bf16 %v4783, %v4783
      %v4820 = vpack.c.bf16 %v4784, %v4784
      %v4821 = vpack.c.bf16 %v4785, %v4785
      %v4822 = vpack.c.bf16 %v4786, %v4786
      %v4823 = vpack.c.bf16 %v4787, %v4787
      %v4824 = vpack.c.bf16 %v4788, %v4788
      %v4825 = vpack.c.bf16 %v4789, %v4789
      %v4826 = vpack.c.bf16 %v4790, %v4790
      %v4827 = vpack.c.bf16 %v4791, %v4791
      %v4828 = vpack.c.bf16 %v4792, %v4792
      %v4829 = vpack.c.bf16 %v4793, %v4793
      %v4830 = vpack.c.bf16 %v4794, %v4794
      %v4831 = vpack.c.bf16 %v4795, %v4795
      %v4832 = vpack.c.bf16 %v4796, %v4796
      %v4833 = vpack.c.bf16 %v4797, %v4797
      %v4834 = vpack.c.bf16 %v4798, %v4798
      %v4835 = vpack.c.bf16 %v4799, %v4799
      %v4836 = vpack.c.bf16 %v4800, %v4800
      %v4837 = vpack.c.bf16 %v4801, %v4801
      %v4838 = vpack.c.bf16 %v4802, %v4802
      %v4839 = vpack.c.bf16 %v4803, %v4803
      %v4840 = vpack.c.bf16 %v4804, %v4804
      %v4841 = vpack.c.bf16 %v4805, %v4805
      %v4842 = vpack.c.bf16 %v4806, %v4806
      %v4843 = vpack.c.bf16 %v4807, %v4807
      %v4880 = vunpack.c.l.b16 %v4808
      %v4881 = vunpack.c.l.b16 %v4809
      %v4882 = vunpack.c.l.b16 %v4810
      %v4883 = vunpack.c.l.b16 %v4811
      %v4884 = vunpack.c.l.b16 %v4812
      %v4885 = vunpack.c.l.b16 %v4813
      %v4886 = vunpack.c.l.b16 %v4814
      %v4887 = vunpack.c.l.b16 %v4815
      %v4888 = vunpack.c.l.b16 %v4816
      %v4889 = vunpack.c.l.b16 %v4817
      %v4890 = vunpack.c.l.b16 %v4818
      %v4891 = vunpack.c.l.b16 %v4819
      %v4892 = vunpack.c.l.b16 %v4820
      %v4893 = vunpack.c.l.b16 %v4821
      %v4894 = vunpack.c.l.b16 %v4822
      %v4895 = vunpack.c.l.b16 %v4823
      %v4896 = vunpack.c.l.b16 %v4824
      %v4897 = vunpack.c.l.b16 %v4825
      %v4898 = vunpack.c.l.b16 %v4826
      %v4899 = vunpack.c.l.b16 %v4827
      %v4900 = vunpack.c.l.b16 %v4828
      %v4901 = vunpack.c.l.b16 %v4829
      %v4902 = vunpack.c.l.b16 %v4830
      %v4903 = vunpack.c.l.b16 %v4831
      %v4904 = vunpack.c.l.b16 %v4832
      %v4905 = vunpack.c.l.b16 %v4833
      %v4906 = vunpack.c.l.b16 %v4834
      %v4907 = vunpack.c.l.b16 %v4835
      %v4908 = vunpack.c.l.b16 %v4836
      %v4909 = vunpack.c.l.b16 %v4837
      %v4910 = vunpack.c.l.b16 %v4838
      %v4911 = vunpack.c.l.b16 %v4839
      %v4912 = vunpack.c.l.b16 %v4840
      %v4913 = vunpack.c.l.b16 %v4841
      %v4914 = vunpack.c.l.b16 %v4842
      %v4915 = vunpack.c.l.b16 %v4843
      %v4916 = vpack.c.b16 %v4881, %v4880
      %v4917 = vpack.c.b16 %v4883, %v4882
      %v4918 = vpack.c.b16 %v4885, %v4884
      %v4919 = vpack.c.b16 %v4887, %v4886
      %v4920 = vpack.c.b16 %v4889, %v4888
      %v4921 = vpack.c.b16 %v4891, %v4890
      %v4922 = vpack.c.b16 %v4893, %v4892
      %v4923 = vpack.c.b16 %v4895, %v4894
      %v4924 = vpack.c.b16 %v4897, %v4896
      %v4925 = vpack.c.b16 %v4899, %v4898
      %v4926 = vpack.c.b16 %v4901, %v4900
      %v4927 = vpack.c.b16 %v4903, %v4902
      %v4928 = vpack.c.b16 %v4905, %v4904
      %v4929 = vpack.c.b16 %v4907, %v4906
      %v4930 = vpack.c.b16 %v4909, %v4908
      %v4931 = vpack.c.b16 %v4911, %v4910
      %v4932 = vpack.c.b16 %v4913, %v4912
      %v4933 = vpack.c.b16 %v4915, %v4914
      %v4935 = vshrl.u32 %v4916, 16
      %v4937 = vrot.slane %v4935, 6
      %v4938 = vshll.u32 %v4916, 16
      %v4940 = vrot.slane %v4938, 7
      %v4941 = vor.u32 %v4937, %v4940
      %v4943 = vshrl.u32 %v4917, 16
      %v4945 = vrot.slane %v4943, 6
      %v4946 = vshll.u32 %v4917, 16
      %v4948 = vrot.slane %v4946, 7
      %v4949 = vor.u32 %v4945, %v4948
      %v4950 = vsel %vm3081, %v4941, %v4949
      %v4952 = vshrl.u32 %v4918, 16
      %v4954 = vrot.slane %v4952, 6
      %v4955 = vshll.u32 %v4918, 16
      %v4957 = vrot.slane %v4955, 7
      %v4958 = vor.u32 %v4954, %v4957
      %v4959 = vsel %vm3081, %v4949, %v4958
      %v4961 = vshrl.u32 %v4919, 16
      %v4963 = vrot.slane %v4961, 6
      %v4964 = vshll.u32 %v4919, 16
      %v4966 = vrot.slane %v4964, 7
      %v4967 = vor.u32 %v4963, %v4966
      %v4968 = vsel %vm3081, %v4958, %v4967
      %v4970 = vshrl.u32 %v4920, 16
      %v4972 = vrot.slane %v4970, 6
      %v4973 = vshll.u32 %v4920, 16
      %v4975 = vrot.slane %v4973, 7
      %v4976 = vor.u32 %v4972, %v4975
      %v4977 = vsel %vm3081, %v4967, %v4976
      %v4979 = vshrl.u32 %v4921, 16
      %v4981 = vrot.slane %v4979, 6
      %v4982 = vshll.u32 %v4921, 16
      %v4984 = vrot.slane %v4982, 7
      %v4985 = vor.u32 %v4981, %v4984
      %v4986 = vsel %vm3081, %v4976, %v4985
      %v4988 = vshrl.u32 %v4922, 16
      %v4990 = vrot.slane %v4988, 6
      %v4991 = vshll.u32 %v4922, 16
      %v4993 = vrot.slane %v4991, 7
      %v4994 = vor.u32 %v4990, %v4993
      %v4995 = vsel %vm3081, %v4985, %v4994
      %v4997 = vshrl.u32 %v4923, 16
      %v4999 = vrot.slane %v4997, 6
      %v5000 = vshll.u32 %v4923, 16
      %v5002 = vrot.slane %v5000, 7
      %v5003 = vor.u32 %v4999, %v5002
      %v5004 = vsel %vm3081, %v4994, %v5003
      %v5006 = vshrl.u32 %v4924, 16
      %v5008 = vrot.slane %v5006, 6
      %v5009 = vshll.u32 %v4924, 16
      %v5011 = vrot.slane %v5009, 7
      %v5012 = vor.u32 %v5008, %v5011
      %v5013 = vsel %vm3081, %v5003, %v5012
      %v5015 = vshrl.u32 %v4925, 16
      %v5017 = vrot.slane %v5015, 6
      %v5018 = vshll.u32 %v4925, 16
      %v5020 = vrot.slane %v5018, 7
      %v5021 = vor.u32 %v5017, %v5020
      %v5022 = vsel %vm3081, %v5012, %v5021
      %v5024 = vshrl.u32 %v4926, 16
      %v5026 = vrot.slane %v5024, 6
      %v5027 = vshll.u32 %v4926, 16
      %v5029 = vrot.slane %v5027, 7
      %v5030 = vor.u32 %v5026, %v5029
      %v5031 = vsel %vm3081, %v5021, %v5030
      %v5033 = vshrl.u32 %v4927, 16
      %v5035 = vrot.slane %v5033, 6
      %v5036 = vshll.u32 %v4927, 16
      %v5038 = vrot.slane %v5036, 7
      %v5039 = vor.u32 %v5035, %v5038
      %v5040 = vsel %vm3081, %v5030, %v5039
      %v5042 = vshrl.u32 %v4928, 16
      %v5044 = vrot.slane %v5042, 6
      %v5045 = vshll.u32 %v4928, 16
      %v5047 = vrot.slane %v5045, 7
      %v5048 = vor.u32 %v5044, %v5047
      %v5049 = vsel %vm3081, %v5039, %v5048
      %v5051 = vshrl.u32 %v4929, 16
      %v5053 = vrot.slane %v5051, 6
      %v5054 = vshll.u32 %v4929, 16
      %v5056 = vrot.slane %v5054, 7
      %v5057 = vor.u32 %v5053, %v5056
      %v5058 = vsel %vm3081, %v5048, %v5057
      %v5060 = vshrl.u32 %v4930, 16
      %v5062 = vrot.slane %v5060, 6
      %v5063 = vshll.u32 %v4930, 16
      %v5065 = vrot.slane %v5063, 7
      %v5066 = vor.u32 %v5062, %v5065
      %v5067 = vsel %vm3081, %v5057, %v5066
      %v5069 = vshrl.u32 %v4931, 16
      %v5071 = vrot.slane %v5069, 6
      %v5072 = vshll.u32 %v4931, 16
      %v5074 = vrot.slane %v5072, 7
      %v5075 = vor.u32 %v5071, %v5074
      %v5076 = vsel %vm3081, %v5066, %v5075
      %v5078 = vshrl.u32 %v4932, 16
      %v5080 = vrot.slane %v5078, 6
      %v5081 = vshll.u32 %v4932, 16
      %v5083 = vrot.slane %v5081, 7
      %v5084 = vor.u32 %v5080, %v5083
      %v5085 = vsel %vm3081, %v5075, %v5084
      %v5087 = vshrl.u32 %v4933, 16
      %v5089 = vrot.slane %v5087, 6
      %v5090 = vshll.u32 %v4933, 16
      %v5092 = vrot.slane %v5090, 7
      %v5093 = vor.u32 %v5089, %v5092
      %v5094 = vsel %vm3081, %v5084, %v5093
      %v5097 = vsel %vm3246, 0, %v4941
      %v5098 = vsel %vm3246, %v5093, 0
      %v5100 = vshll.u32 %v5097, 16
      %v5102 = vrot.slane %v5100, 1
      %v5103 = vsel %vm621, %v3255, %v5102
      %v5104 = vshrl.u32 %v5097, 16
      %v5106 = vor.u32 %v5104, %v5102
      %v5108 = vshll.u32 %v4950, 16
      %v5110 = vrot.slane %v5108, 1
      %v5111 = vsel %vm621, %v5106, %v5110
      %v5112 = vshrl.u32 %v4950, 16
      %v5114 = vor.u32 %v5112, %v5110
      %v5116 = vshll.u32 %v4959, 16
      %v5118 = vrot.slane %v5116, 1
      %v5119 = vsel %vm621, %v5114, %v5118
      %v5120 = vshrl.u32 %v4959, 16
      %v5122 = vor.u32 %v5120, %v5118
      %v5124 = vshll.u32 %v4968, 16
      %v5126 = vrot.slane %v5124, 1
      %v5127 = vsel %vm621, %v5122, %v5126
      %v5128 = vshrl.u32 %v4968, 16
      %v5130 = vor.u32 %v5128, %v5126
      %v5132 = vshll.u32 %v4977, 16
      %v5134 = vrot.slane %v5132, 1
      %v5135 = vsel %vm621, %v5130, %v5134
      %v5136 = vshrl.u32 %v4977, 16
      %v5138 = vor.u32 %v5136, %v5134
      %v5140 = vshll.u32 %v4986, 16
      %v5142 = vrot.slane %v5140, 1
      %v5143 = vsel %vm621, %v5138, %v5142
      %v5144 = vshrl.u32 %v4986, 16
      %v5146 = vor.u32 %v5144, %v5142
      %v5148 = vshll.u32 %v4995, 16
      %v5150 = vrot.slane %v5148, 1
      %v5151 = vsel %vm621, %v5146, %v5150
      %v5152 = vshrl.u32 %v4995, 16
      %v5154 = vor.u32 %v5152, %v5150
      %v5156 = vshll.u32 %v5004, 16
      %v5158 = vrot.slane %v5156, 1
      %v5159 = vsel %vm621, %v5154, %v5158
      %v5160 = vshrl.u32 %v5004, 16
      %v5162 = vor.u32 %v5160, %v5158
      %v5164 = vshll.u32 %v5013, 16
      %v5166 = vrot.slane %v5164, 1
      %v5167 = vsel %vm621, %v5162, %v5166
      %v5168 = vshrl.u32 %v5013, 16
      %v5170 = vor.u32 %v5168, %v5166
      %v5172 = vshll.u32 %v5022, 16
      %v5174 = vrot.slane %v5172, 1
      %v5175 = vsel %vm621, %v5170, %v5174
      %v5176 = vshrl.u32 %v5022, 16
      %v5178 = vor.u32 %v5176, %v5174
      %v5180 = vshll.u32 %v5031, 16
      %v5182 = vrot.slane %v5180, 1
      %v5183 = vsel %vm621, %v5178, %v5182
      %v5184 = vshrl.u32 %v5031, 16
      %v5186 = vor.u32 %v5184, %v5182
      %v5188 = vshll.u32 %v5040, 16
      %v5190 = vrot.slane %v5188, 1
      %v5191 = vsel %vm621, %v5186, %v5190
      %v5192 = vshrl.u32 %v5040, 16
      %v5194 = vor.u32 %v5192, %v5190
      %v5196 = vshll.u32 %v5049, 16
      %v5198 = vrot.slane %v5196, 1
      %v5199 = vsel %vm621, %v5194, %v5198
      %v5200 = vshrl.u32 %v5049, 16
      %v5202 = vor.u32 %v5200, %v5198
      %v5204 = vshll.u32 %v5058, 16
      %v5206 = vrot.slane %v5204, 1
      %v5207 = vsel %vm621, %v5202, %v5206
      %v5208 = vshrl.u32 %v5058, 16
      %v5210 = vor.u32 %v5208, %v5206
      %v5212 = vshll.u32 %v5067, 16
      %v5214 = vrot.slane %v5212, 1
      %v5215 = vsel %vm621, %v5210, %v5214
      %v5216 = vshrl.u32 %v5067, 16
      %v5218 = vor.u32 %v5216, %v5214
      %v5220 = vshll.u32 %v5076, 16
      %v5222 = vrot.slane %v5220, 1
      %v5223 = vsel %vm621, %v5218, %v5222
      %v5224 = vshrl.u32 %v5076, 16
      %v5226 = vor.u32 %v5224, %v5222
      %v5228 = vshll.u32 %v5085, 16
      %v5230 = vrot.slane %v5228, 1
      %v5231 = vsel %vm621, %v5226, %v5230
      %v5232 = vshrl.u32 %v5085, 16
      %v5234 = vor.u32 %v5232, %v5230
      %v5236 = vshll.u32 %v5094, 16
      %v5238 = vrot.slane %v5236, 1
      %v5239 = vsel %vm621, %v5234, %v5238
      %5240 = vrot.lane.b32.xlu0 %v5103, 32
      %v5241 = vpop.permute.xlu0 %5240
      %5242 = vrot.lane.b32.xlu0 %v5111, 32
      %v5243 = vpop.permute.xlu0 %5242
      %5244 = vrot.lane.b32.xlu0 %v5119, 32
      %v5245 = vpop.permute.xlu0 %5244
      %5246 = vrot.lane.b32.xlu0 %v5127, 32
      %v5247 = vpop.permute.xlu0 %5246
      %5248 = vrot.lane.b32.xlu0 %v5135, 32
      %v5249 = vpop.permute.xlu0 %5248
      %5250 = vrot.lane.b32.xlu0 %v5143, 32
      %v5251 = vpop.permute.xlu0 %5250
      %5252 = vrot.lane.b32.xlu0 %v5151, 32
      %v5253 = vpop.permute.xlu0 %5252
      %5254 = vrot.lane.b32.xlu0 %v5159, 32
      %v5255 = vpop.permute.xlu0 %5254
      %5256 = vrot.lane.b32.xlu0 %v5167, 32
      %v5257 = vpop.permute.xlu0 %5256
      %5258 = vrot.lane.b32.xlu0 %v5175, 32
      %v5259 = vpop.permute.xlu0 %5258
      %5260 = vrot.lane.b32.xlu0 %v5183, 32
      %v5261 = vpop.permute.xlu0 %5260
      %5262 = vrot.lane.b32.xlu0 %v5191, 32
      %v5263 = vpop.permute.xlu0 %5262
      %5264 = vrot.lane.b32.xlu0 %v5199, 32
      %v5265 = vpop.permute.xlu0 %5264
      %5266 = vrot.lane.b32.xlu0 %v5207, 32
      %v5267 = vpop.permute.xlu0 %5266
      %5268 = vrot.lane.b32.xlu0 %v5215, 32
      %v5269 = vpop.permute.xlu0 %5268
      %5270 = vrot.lane.b32.xlu0 %v5223, 32
      %v5271 = vpop.permute.xlu0 %5270
      %5272 = vrot.lane.b32.xlu0 %v5231, 32
      %v5273 = vpop.permute.xlu0 %5272
      %5274 = vrot.lane.b32.xlu0 %v5239, 32
      %v5275 = vpop.permute.xlu0 %5274
      %v5277 = vrot.slane %v5097, 1
      %v5278 = vsel %vm1069, %v3435, %v5277
      %v5279 = vrot.slane %v4950, 1
      %v5280 = vsel %vm1069, %v5277, %v5279
      %v5281 = vrot.slane %v4959, 1
      %v5282 = vsel %vm1069, %v5279, %v5281
      %v5283 = vrot.slane %v4968, 1
      %v5284 = vsel %vm1069, %v5281, %v5283
      %v5285 = vrot.slane %v4977, 1
      %v5286 = vsel %vm1069, %v5283, %v5285
      %v5287 = vrot.slane %v4986, 1
      %v5288 = vsel %vm1069, %v5285, %v5287
      %v5289 = vrot.slane %v4995, 1
      %v5290 = vsel %vm1069, %v5287, %v5289
      %v5291 = vrot.slane %v5004, 1
      %v5292 = vsel %vm1069, %v5289, %v5291
      %v5293 = vrot.slane %v5013, 1
      %v5294 = vsel %vm1069, %v5291, %v5293
      %v5295 = vrot.slane %v5022, 1
      %v5296 = vsel %vm1069, %v5293, %v5295
      %v5297 = vrot.slane %v5031, 1
      %v5298 = vsel %vm1069, %v5295, %v5297
      %v5299 = vrot.slane %v5040, 1
      %v5300 = vsel %vm1069, %v5297, %v5299
      %v5301 = vrot.slane %v5049, 1
      %v5302 = vsel %vm1069, %v5299, %v5301
      %v5303 = vrot.slane %v5058, 1
      %v5304 = vsel %vm1069, %v5301, %v5303
      %v5305 = vrot.slane %v5067, 1
      %v5306 = vsel %vm1069, %v5303, %v5305
      %v5307 = vrot.slane %v5076, 1
      %v5308 = vsel %vm1069, %v5305, %v5307
      %v5309 = vrot.slane %v5085, 1
      %v5310 = vsel %vm1069, %v5307, %v5309
      %v5311 = vrot.slane %v5094, 1
      %v5312 = vsel %vm1069, %v5309, %v5311
      %5313 = vrot.lane.b32.xlu0 %v5278, 64
      %v5314 = vpop.permute.xlu0 %5313
      %5315 = vrot.lane.b32.xlu0 %v5280, 64
      %v5316 = vpop.permute.xlu0 %5315
      %5317 = vrot.lane.b32.xlu0 %v5282, 64
      %v5318 = vpop.permute.xlu0 %5317
      %5319 = vrot.lane.b32.xlu0 %v5284, 64
      %v5320 = vpop.permute.xlu0 %5319
      %5321 = vrot.lane.b32.xlu0 %v5286, 64
      %v5322 = vpop.permute.xlu0 %5321
      %5323 = vrot.lane.b32.xlu0 %v5288, 64
      %v5324 = vpop.permute.xlu0 %5323
      %5325 = vrot.lane.b32.xlu0 %v5290, 64
      %v5326 = vpop.permute.xlu0 %5325
      %5327 = vrot.lane.b32.xlu0 %v5292, 64
      %v5328 = vpop.permute.xlu0 %5327
      %5329 = vrot.lane.b32.xlu0 %v5294, 64
      %v5330 = vpop.permute.xlu0 %5329
      %5331 = vrot.lane.b32.xlu0 %v5296, 64
      %v5332 = vpop.permute.xlu0 %5331
      %5333 = vrot.lane.b32.xlu0 %v5298, 64
      %v5334 = vpop.permute.xlu0 %5333
      %5335 = vrot.lane.b32.xlu0 %v5300, 64
      %v5336 = vpop.permute.xlu0 %5335
      %5337 = vrot.lane.b32.xlu0 %v5302, 64
      %v5338 = vpop.permute.xlu0 %5337
      %5339 = vrot.lane.b32.xlu0 %v5304, 64
      %v5340 = vpop.permute.xlu0 %5339
      %5341 = vrot.lane.b32.xlu0 %v5306, 64
      %v5342 = vpop.permute.xlu0 %5341
      %5343 = vrot.lane.b32.xlu0 %v5308, 64
      %v5344 = vpop.permute.xlu0 %5343
      %5345 = vrot.lane.b32.xlu0 %v5310, 64
      %v5346 = vpop.permute.xlu0 %5345
      %5347 = vrot.lane.b32.xlu0 %v5312, 64
      %v5348 = vpop.permute.xlu0 %5347
      %v5350 = vrot.slane %v5098, 1
      %v5351 = vsel %vm1069, %v5311, %v5350
      %5352 = vrot.lane.b32.xlu0 %v5280, 96
      %v5353 = vpop.permute.xlu0 %5352
      %5354 = vrot.lane.b32.xlu0 %v5282, 96
      %v5355 = vpop.permute.xlu0 %5354
      %5356 = vrot.lane.b32.xlu0 %v5284, 96
      %v5357 = vpop.permute.xlu0 %5356
      %5358 = vrot.lane.b32.xlu0 %v5286, 96
      %v5359 = vpop.permute.xlu0 %5358
      %5360 = vrot.lane.b32.xlu0 %v5288, 96
      %v5361 = vpop.permute.xlu0 %5360
      %5362 = vrot.lane.b32.xlu0 %v5290, 96
      %v5363 = vpop.permute.xlu0 %5362
      %5364 = vrot.lane.b32.xlu0 %v5292, 96
      %v5365 = vpop.permute.xlu0 %5364
      %5366 = vrot.lane.b32.xlu0 %v5294, 96
      %v5367 = vpop.permute.xlu0 %5366
      %5368 = vrot.lane.b32.xlu0 %v5296, 96
      %v5369 = vpop.permute.xlu0 %5368
      %5370 = vrot.lane.b32.xlu0 %v5298, 96
      %v5371 = vpop.permute.xlu0 %5370
      %5372 = vrot.lane.b32.xlu0 %v5300, 96
      %v5373 = vpop.permute.xlu0 %5372
      %5374 = vrot.lane.b32.xlu0 %v5302, 96
      %v5375 = vpop.permute.xlu0 %5374
      %5376 = vrot.lane.b32.xlu0 %v5304, 96
      %v5377 = vpop.permute.xlu0 %5376
      %5378 = vrot.lane.b32.xlu0 %v5306, 96
      %v5379 = vpop.permute.xlu0 %5378
      %5380 = vrot.lane.b32.xlu0 %v5308, 96
      %v5381 = vpop.permute.xlu0 %5380
      %5382 = vrot.lane.b32.xlu0 %v5310, 96
      %v5383 = vpop.permute.xlu0 %5382
      %5384 = vrot.lane.b32.xlu0 %v5312, 96
      %v5385 = vpop.permute.xlu0 %5384
      %5386 = vrot.lane.b32.xlu0 %v5351, 96
      %v5387 = vpop.permute.xlu0 %5386
      %v5388 = vrot.slane %v5104, 1
      %v5389 = vrot.slane %v5100, 2
      %v5390 = vor.u32 %v5388, %v5389
      %v5391 = vrot.slane %v5112, 1
      %v5392 = vrot.slane %v5108, 2
      %v5393 = vor.u32 %v5391, %v5392
      %v5394 = vsel %vm1453, %v5390, %v5393
      %v5395 = vrot.slane %v5120, 1
      %v5396 = vrot.slane %v5116, 2
      %v5397 = vor.u32 %v5395, %v5396
      %v5398 = vsel %vm1453, %v5393, %v5397
      %v5399 = vrot.slane %v5128, 1
      %v5400 = vrot.slane %v5124, 2
      %v5401 = vor.u32 %v5399, %v5400
      %v5402 = vsel %vm1453, %v5397, %v5401
      %v5403 = vrot.slane %v5136, 1
      %v5404 = vrot.slane %v5132, 2
      %v5405 = vor.u32 %v5403, %v5404
      %v5406 = vsel %vm1453, %v5401, %v5405
      %v5407 = vrot.slane %v5144, 1
      %v5408 = vrot.slane %v5140, 2
      %v5409 = vor.u32 %v5407, %v5408
      %v5410 = vsel %vm1453, %v5405, %v5409
      %v5411 = vrot.slane %v5152, 1
      %v5412 = vrot.slane %v5148, 2
      %v5413 = vor.u32 %v5411, %v5412
      %v5414 = vsel %vm1453, %v5409, %v5413
      %v5415 = vrot.slane %v5160, 1
      %v5416 = vrot.slane %v5156, 2
      %v5417 = vor.u32 %v5415, %v5416
      %v5418 = vsel %vm1453, %v5413, %v5417
      %v5419 = vrot.slane %v5168, 1
      %v5420 = vrot.slane %v5164, 2
      %v5421 = vor.u32 %v5419, %v5420
      %v5422 = vsel %vm1453, %v5417, %v5421
      %v5423 = vrot.slane %v5176, 1
      %v5424 = vrot.slane %v5172, 2
      %v5425 = vor.u32 %v5423, %v5424
      %v5426 = vsel %vm1453, %v5421, %v5425
      %v5427 = vrot.slane %v5184, 1
      %v5428 = vrot.slane %v5180, 2
      %v5429 = vor.u32 %v5427, %v5428
      %v5430 = vsel %vm1453, %v5425, %v5429
      %v5431 = vrot.slane %v5192, 1
      %v5432 = vrot.slane %v5188, 2
      %v5433 = vor.u32 %v5431, %v5432
      %v5434 = vsel %vm1453, %v5429, %v5433
      %v5435 = vrot.slane %v5200, 1
      %v5436 = vrot.slane %v5196, 2
      %v5437 = vor.u32 %v5435, %v5436
      %v5438 = vsel %vm1453, %v5433, %v5437
      %v5439 = vrot.slane %v5208, 1
      %v5440 = vrot.slane %v5204, 2
      %v5441 = vor.u32 %v5439, %v5440
      %v5442 = vsel %vm1453, %v5437, %v5441
      %v5443 = vrot.slane %v5216, 1
      %v5444 = vrot.slane %v5212, 2
      %v5445 = vor.u32 %v5443, %v5444
      %v5446 = vsel %vm1453, %v5441, %v5445
      %v5447 = vrot.slane %v5224, 1
      %v5448 = vrot.slane %v5220, 2
      %v5449 = vor.u32 %v5447, %v5448
      %v5450 = vsel %vm1453, %v5445, %v5449
      %v5451 = vrot.slane %v5232, 1
      %v5452 = vrot.slane %v5228, 2
      %v5453 = vor.u32 %v5451, %v5452
      %v5454 = vsel %vm1453, %v5449, %v5453
      %v5455 = vshrl.u32 %v5094, 16
      %v5457 = vrot.slane %v5455, 1
      %v5458 = vrot.slane %v5236, 2
      %v5459 = vor.u32 %v5457, %v5458
      %v5460 = vsel %vm1453, %v5453, %v5459
      %v5462 = vshrl.u32 %v5098, 16
      %v5464 = vrot.slane %v5462, 1
      %v5465 = vshll.u32 %v5098, 16
      %v5467 = vrot.slane %v5465, 2
      %v5468 = vor.u32 %v5464, %v5467
      %v5469 = vsel %vm1453, %v5459, %v5468
      %v5470 = vrot.slane %v5097, 2
      %v5471 = vrot.slane %v4950, 2
      %v5472 = vsel %vm1731, %v5470, %v5471
      %v5473 = vrot.slane %v4959, 2
      %v5474 = vsel %vm1731, %v5471, %v5473
      %v5475 = vrot.slane %v4968, 2
      %v5476 = vsel %vm1731, %v5473, %v5475
      %v5477 = vrot.slane %v4977, 2
      %v5478 = vsel %vm1731, %v5475, %v5477
      %v5479 = vrot.slane %v4986, 2
      %v5480 = vsel %vm1731, %v5477, %v5479
      %v5481 = vrot.slane %v4995, 2
      %v5482 = vsel %vm1731, %v5479, %v5481
      %v5483 = vrot.slane %v5004, 2
      %v5484 = vsel %vm1731, %v5481, %v5483
      %v5485 = vrot.slane %v5013, 2
      %v5486 = vsel %vm1731, %v5483, %v5485
      %v5487 = vrot.slane %v5022, 2
      %v5488 = vsel %vm1731, %v5485, %v5487
      %v5489 = vrot.slane %v5031, 2
      %v5490 = vsel %vm1731, %v5487, %v5489
      %v5491 = vrot.slane %v5040, 2
      %v5492 = vsel %vm1731, %v5489, %v5491
      %v5493 = vrot.slane %v5049, 2
      %v5494 = vsel %vm1731, %v5491, %v5493
      %v5495 = vrot.slane %v5058, 2
      %v5496 = vsel %vm1731, %v5493, %v5495
      %v5497 = vrot.slane %v5067, 2
      %v5498 = vsel %vm1731, %v5495, %v5497
      %v5499 = vrot.slane %v5076, 2
      %v5500 = vsel %vm1731, %v5497, %v5499
      %v5501 = vrot.slane %v5085, 2
      %v5502 = vsel %vm1731, %v5499, %v5501
      %v5503 = vrot.slane %v5094, 2
      %v5504 = vsel %vm1731, %v5501, %v5503
      %v5505 = vrot.slane %v5098, 2
      %v5506 = vsel %vm1731, %v5503, %v5505
      %5507 = vrot.lane.b32.xlu0 %v5472, 32
      %v5508 = vpop.permute.xlu0 %5507
      %5509 = vrot.lane.b32.xlu0 %v5474, 32
      %v5510 = vpop.permute.xlu0 %5509
      %5511 = vrot.lane.b32.xlu0 %v5476, 32
      %v5512 = vpop.permute.xlu0 %5511
      %5513 = vrot.lane.b32.xlu0 %v5478, 32
      %v5514 = vpop.permute.xlu0 %5513
      %5515 = vrot.lane.b32.xlu0 %v5480, 32
      %v5516 = vpop.permute.xlu0 %5515
      %5517 = vrot.lane.b32.xlu0 %v5482, 32
      %v5518 = vpop.permute.xlu0 %5517
      %5519 = vrot.lane.b32.xlu0 %v5484, 32
      %v5520 = vpop.permute.xlu0 %5519
      %5521 = vrot.lane.b32.xlu0 %v5486, 32
      %v5522 = vpop.permute.xlu0 %5521
      %5523 = vrot.lane.b32.xlu0 %v5488, 32
      %v5524 = vpop.permute.xlu0 %5523
      %5525 = vrot.lane.b32.xlu0 %v5490, 32
      %v5526 = vpop.permute.xlu0 %5525
      %5527 = vrot.lane.b32.xlu0 %v5492, 32
      %v5528 = vpop.permute.xlu0 %5527
      %5529 = vrot.lane.b32.xlu0 %v5494, 32
      %v5530 = vpop.permute.xlu0 %5529
      %5531 = vrot.lane.b32.xlu0 %v5496, 32
      %v5532 = vpop.permute.xlu0 %5531
      %5533 = vrot.lane.b32.xlu0 %v5498, 32
      %v5534 = vpop.permute.xlu0 %5533
      %5535 = vrot.lane.b32.xlu0 %v5500, 32
      %v5536 = vpop.permute.xlu0 %5535
      %5537 = vrot.lane.b32.xlu0 %v5502, 32
      %v5538 = vpop.permute.xlu0 %5537
      %5539 = vrot.lane.b32.xlu0 %v5504, 32
      %v5540 = vpop.permute.xlu0 %5539
      %5541 = vrot.lane.b32.xlu0 %v5506, 32
      %v5542 = vpop.permute.xlu0 %5541
      %v5543 = vsel %vm1731, %v5505, %v3702
      %5544 = vrot.lane.b32.xlu0 %v5474, 64
      %v5545 = vpop.permute.xlu0 %5544
      %5546 = vrot.lane.b32.xlu0 %v5476, 64
      %v5547 = vpop.permute.xlu0 %5546
      %5548 = vrot.lane.b32.xlu0 %v5478, 64
      %v5549 = vpop.permute.xlu0 %5548
      %5550 = vrot.lane.b32.xlu0 %v5480, 64
      %v5551 = vpop.permute.xlu0 %5550
      %5552 = vrot.lane.b32.xlu0 %v5482, 64
      %v5553 = vpop.permute.xlu0 %5552
      %5554 = vrot.lane.b32.xlu0 %v5484, 64
      %v5555 = vpop.permute.xlu0 %5554
      %5556 = vrot.lane.b32.xlu0 %v5486, 64
      %v5557 = vpop.permute.xlu0 %5556
      %5558 = vrot.lane.b32.xlu0 %v5488, 64
      %v5559 = vpop.permute.xlu0 %5558
      %5560 = vrot.lane.b32.xlu0 %v5490, 64
      %v5561 = vpop.permute.xlu0 %5560
      %5562 = vrot.lane.b32.xlu0 %v5492, 64
      %v5563 = vpop.permute.xlu0 %5562
      %5564 = vrot.lane.b32.xlu0 %v5494, 64
      %v5565 = vpop.permute.xlu0 %5564
      %5566 = vrot.lane.b32.xlu0 %v5496, 64
      %v5567 = vpop.permute.xlu0 %5566
      %5568 = vrot.lane.b32.xlu0 %v5498, 64
      %v5569 = vpop.permute.xlu0 %5568
      %5570 = vrot.lane.b32.xlu0 %v5500, 64
      %v5571 = vpop.permute.xlu0 %5570
      %5572 = vrot.lane.b32.xlu0 %v5502, 64
      %v5573 = vpop.permute.xlu0 %5572
      %5574 = vrot.lane.b32.xlu0 %v5504, 64
      %v5575 = vpop.permute.xlu0 %5574
      %5576 = vrot.lane.b32.xlu0 %v5506, 64
      %v5577 = vpop.permute.xlu0 %5576
      %5578 = vrot.lane.b32.xlu0 %v5543, 64
      %v5579 = vpop.permute.xlu0 %5578
      %v5580 = vrot.slane %v5112, 2
      %v5581 = vrot.slane %v5108, 3
      %v5582 = vor.u32 %v5580, %v5581
      %v5583 = vrot.slane %v5120, 2
      %v5584 = vrot.slane %v5116, 3
      %v5585 = vor.u32 %v5583, %v5584
      %v5586 = vsel %vm2115, %v5582, %v5585
      %v5587 = vrot.slane %v5128, 2
      %v5588 = vrot.slane %v5124, 3
      %v5589 = vor.u32 %v5587, %v5588
      %v5590 = vsel %vm2115, %v5585, %v5589
      %v5591 = vrot.slane %v5136, 2
      %v5592 = vrot.slane %v5132, 3
      %v5593 = vor.u32 %v5591, %v5592
      %v5594 = vsel %vm2115, %v5589, %v5593
      %v5595 = vrot.slane %v5144, 2
      %v5596 = vrot.slane %v5140, 3
      %v5597 = vor.u32 %v5595, %v5596
      %v5598 = vsel %vm2115, %v5593, %v5597
      %v5599 = vrot.slane %v5152, 2
      %v5600 = vrot.slane %v5148, 3
      %v5601 = vor.u32 %v5599, %v5600
      %v5602 = vsel %vm2115, %v5597, %v5601
      %v5603 = vrot.slane %v5160, 2
      %v5604 = vrot.slane %v5156, 3
      %v5605 = vor.u32 %v5603, %v5604
      %v5606 = vsel %vm2115, %v5601, %v5605
      %v5607 = vrot.slane %v5168, 2
      %v5608 = vrot.slane %v5164, 3
      %v5609 = vor.u32 %v5607, %v5608
      %v5610 = vsel %vm2115, %v5605, %v5609
      %v5611 = vrot.slane %v5176, 2
      %v5612 = vrot.slane %v5172, 3
      %v5613 = vor.u32 %v5611, %v5612
      %v5614 = vsel %vm2115, %v5609, %v5613
      %v5615 = vrot.slane %v5184, 2
      %v5616 = vrot.slane %v5180, 3
      %v5617 = vor.u32 %v5615, %v5616
      %v5618 = vsel %vm2115, %v5613, %v5617
      %v5619 = vrot.slane %v5192, 2
      %v5620 = vrot.slane %v5188, 3
      %v5621 = vor.u32 %v5619, %v5620
      %v5622 = vsel %vm2115, %v5617, %v5621
      %v5623 = vrot.slane %v5200, 2
      %v5624 = vrot.slane %v5196, 3
      %v5625 = vor.u32 %v5623, %v5624
      %v5626 = vsel %vm2115, %v5621, %v5625
      %v5627 = vrot.slane %v5208, 2
      %v5628 = vrot.slane %v5204, 3
      %v5629 = vor.u32 %v5627, %v5628
      %v5630 = vsel %vm2115, %v5625, %v5629
      %v5631 = vrot.slane %v5216, 2
      %v5632 = vrot.slane %v5212, 3
      %v5633 = vor.u32 %v5631, %v5632
      %v5634 = vsel %vm2115, %v5629, %v5633
      %v5635 = vrot.slane %v5224, 2
      %v5636 = vrot.slane %v5220, 3
      %v5637 = vor.u32 %v5635, %v5636
      %v5638 = vsel %vm2115, %v5633, %v5637
      %v5639 = vrot.slane %v5232, 2
      %v5640 = vrot.slane %v5228, 3
      %v5641 = vor.u32 %v5639, %v5640
      %v5642 = vsel %vm2115, %v5637, %v5641
      %v5643 = vrot.slane %v5455, 2
      %v5644 = vrot.slane %v5236, 3
      %v5645 = vor.u32 %v5643, %v5644
      %v5646 = vsel %vm2115, %v5641, %v5645
      %v5647 = vrot.slane %v5462, 2
      %v5648 = vrot.slane %v5465, 3
      %v5649 = vor.u32 %v5647, %v5648
      %v5650 = vsel %vm2115, %v5645, %v5649
      %v5651 = vsel %vm2115, %v5649, %v3813
      %5652 = vrot.lane.b32.xlu0 %v5586, 96
      %v5653 = vpop.permute.xlu0 %5652
      %5654 = vrot.lane.b32.xlu0 %v5590, 96
      %v5655 = vpop.permute.xlu0 %5654
      %5656 = vrot.lane.b32.xlu0 %v5594, 96
      %v5657 = vpop.permute.xlu0 %5656
      %5658 = vrot.lane.b32.xlu0 %v5598, 96
      %v5659 = vpop.permute.xlu0 %5658
      %5660 = vrot.lane.b32.xlu0 %v5602, 96
      %v5661 = vpop.permute.xlu0 %5660
      %5662 = vrot.lane.b32.xlu0 %v5606, 96
      %v5663 = vpop.permute.xlu0 %5662
      %5664 = vrot.lane.b32.xlu0 %v5610, 96
      %v5665 = vpop.permute.xlu0 %5664
      %5666 = vrot.lane.b32.xlu0 %v5614, 96
      %v5667 = vpop.permute.xlu0 %5666
      %5668 = vrot.lane.b32.xlu0 %v5618, 96
      %v5669 = vpop.permute.xlu0 %5668
      %5670 = vrot.lane.b32.xlu0 %v5622, 96
      %v5671 = vpop.permute.xlu0 %5670
      %5672 = vrot.lane.b32.xlu0 %v5626, 96
      %v5673 = vpop.permute.xlu0 %5672
      %5674 = vrot.lane.b32.xlu0 %v5630, 96
      %v5675 = vpop.permute.xlu0 %5674
      %5676 = vrot.lane.b32.xlu0 %v5634, 96
      %v5677 = vpop.permute.xlu0 %5676
      %5678 = vrot.lane.b32.xlu0 %v5638, 96
      %v5679 = vpop.permute.xlu0 %5678
      %5680 = vrot.lane.b32.xlu0 %v5642, 96
      %v5681 = vpop.permute.xlu0 %5680
      %5682 = vrot.lane.b32.xlu0 %v5646, 96
      %v5683 = vpop.permute.xlu0 %5682
      %5684 = vrot.lane.b32.xlu0 %v5650, 96
      %v5685 = vpop.permute.xlu0 %5684
      %5686 = vrot.lane.b32.xlu0 %v5651, 96
      %v5687 = vpop.permute.xlu0 %5686
      %v5688 = vrot.slane %v4950, 3
      %v5689 = vrot.slane %v4959, 3
      %v5690 = vsel %vm2393, %v5688, %v5689
      %v5691 = vrot.slane %v4968, 3
      %v5692 = vsel %vm2393, %v5689, %v5691
      %v5693 = vrot.slane %v4977, 3
      %v5694 = vsel %vm2393, %v5691, %v5693
      %v5695 = vrot.slane %v4986, 3
      %v5696 = vsel %vm2393, %v5693, %v5695
      %v5697 = vrot.slane %v4995, 3
      %v5698 = vsel %vm2393, %v5695, %v5697
      %v5699 = vrot.slane %v5004, 3
      %v5700 = vsel %vm2393, %v5697, %v5699
      %v5701 = vrot.slane %v5013, 3
      %v5702 = vsel %vm2393, %v5699, %v5701
      %v5703 = vrot.slane %v5022, 3
      %v5704 = vsel %vm2393, %v5701, %v5703
      %v5705 = vrot.slane %v5031, 3
      %v5706 = vsel %vm2393, %v5703, %v5705
      %v5707 = vrot.slane %v5040, 3
      %v5708 = vsel %vm2393, %v5705, %v5707
      %v5709 = vrot.slane %v5049, 3
      %v5710 = vsel %vm2393, %v5707, %v5709
      %v5711 = vrot.slane %v5058, 3
      %v5712 = vsel %vm2393, %v5709, %v5711
      %v5713 = vrot.slane %v5067, 3
      %v5714 = vsel %vm2393, %v5711, %v5713
      %v5715 = vrot.slane %v5076, 3
      %v5716 = vsel %vm2393, %v5713, %v5715
      %v5717 = vrot.slane %v5085, 3
      %v5718 = vsel %vm2393, %v5715, %v5717
      %v5719 = vrot.slane %v5094, 3
      %v5720 = vsel %vm2393, %v5717, %v5719
      %v5721 = vrot.slane %v5098, 3
      %v5722 = vsel %vm2393, %v5719, %v5721
      %v5723 = vsel %vm2393, %v5721, %v3886
      %v5725 = vsel %vm3888, 0, %v5241
      %v5727 = vsel %vm3888, %v5097, %v5243
      %v5729 = vsel %vm3888, %v4950, %v5245
      %v5731 = vsel %vm3888, %v4959, %v5247
      %v5733 = vsel %vm3888, %v4968, %v5249
      %v5735 = vsel %vm3888, %v4977, %v5251
      %v5737 = vsel %vm3888, %v4986, %v5253
      %v5739 = vsel %vm3888, %v4995, %v5255
      %v5741 = vsel %vm3888, %v5004, %v5257
      %v5743 = vsel %vm3888, %v5013, %v5259
      %v5745 = vsel %vm3888, %v5022, %v5261
      %v5747 = vsel %vm3888, %v5031, %v5263
      %v5749 = vsel %vm3888, %v5040, %v5265
      %v5751 = vsel %vm3888, %v5049, %v5267
      %v5753 = vsel %vm3888, %v5058, %v5269
      %v5755 = vsel %vm3888, %v5067, %v5271
      %v5757 = vsel %vm3888, %v5076, %v5273
      %v5759 = vsel %vm3888, %v5085, %v5275
      %v5761 = vsel %vm3925, %v5725, %v5314
      %v5763 = vsel %vm3925, %v5727, %v5316
      %v5765 = vsel %vm3925, %v5729, %v5318
      %v5767 = vsel %vm3925, %v5731, %v5320
      %v5769 = vsel %vm3925, %v5733, %v5322
      %v5771 = vsel %vm3925, %v5735, %v5324
      %v5773 = vsel %vm3925, %v5737, %v5326
      %v5775 = vsel %vm3925, %v5739, %v5328
      %v5777 = vsel %vm3925, %v5741, %v5330
      %v5779 = vsel %vm3925, %v5743, %v5332
      %v5781 = vsel %vm3925, %v5745, %v5334
      %v5783 = vsel %vm3925, %v5747, %v5336
      %v5785 = vsel %vm3925, %v5749, %v5338
      %v5787 = vsel %vm3925, %v5751, %v5340
      %v5789 = vsel %vm3925, %v5753, %v5342
      %v5791 = vsel %vm3925, %v5755, %v5344
      %v5793 = vsel %vm3925, %v5757, %v5346
      %v5795 = vsel %vm3925, %v5759, %v5348
      %v5797 = vsel %vm3962, %v5761, %v5353
      %v5800 = vsel %vm3962, %v5763, %v5355
      %v5803 = vsel %vm3962, %v5765, %v5357
      %v5806 = vsel %vm3962, %v5767, %v5359
      %v5809 = vsel %vm3962, %v5769, %v5361
      %v5812 = vsel %vm3962, %v5771, %v5363
      %v5815 = vsel %vm3962, %v5773, %v5365
      %v5818 = vsel %vm3962, %v5775, %v5367
      %v5821 = vsel %vm3962, %v5777, %v5369
      %v5824 = vsel %vm3962, %v5779, %v5371
      %v5827 = vsel %vm3962, %v5781, %v5373
      %v5830 = vsel %vm3962, %v5783, %v5375
      %v5833 = vsel %vm3962, %v5785, %v5377
      %v5836 = vsel %vm3962, %v5787, %v5379
      %v5839 = vsel %vm3962, %v5789, %v5381
      %v5842 = vsel %vm3962, %v5791, %v5383
      %v5845 = vsel %vm3962, %v5793, %v5385
      %v5848 = vsel %vm3962, %v5795, %v5387
      %v5852 = vsel %vm3888, %v5394, %v5508
      %v5855 = vsel %vm3888, %v5398, %v5510
      %v5858 = vsel %vm3888, %v5402, %v5512
      %v5861 = vsel %vm3888, %v5406, %v5514
      %v5864 = vsel %vm3888, %v5410, %v5516
      %v5867 = vsel %vm3888, %v5414, %v5518
      %v5870 = vsel %vm3888, %v5418, %v5520
      %v5873 = vsel %vm3888, %v5422, %v5522
      %v5876 = vsel %vm3888, %v5426, %v5524
      %v5879 = vsel %vm3888, %v5430, %v5526
      %v5882 = vsel %vm3888, %v5434, %v5528
      %v5885 = vsel %vm3888, %v5438, %v5530
      %v5888 = vsel %vm3888, %v5442, %v5532
      %v5891 = vsel %vm3888, %v5446, %v5534
      %v5894 = vsel %vm3888, %v5450, %v5536
      %v5897 = vsel %vm3888, %v5454, %v5538
      %v5900 = vsel %vm3888, %v5460, %v5540
      %v5903 = vsel %vm3888, %v5469, %v5542
      %v5905 = vsel %vm3925, %v5852, %v5545
      %v5907 = vsel %vm3925, %v5855, %v5547
      %v5909 = vsel %vm3925, %v5858, %v5549
      %v5911 = vsel %vm3925, %v5861, %v5551
      %v5913 = vsel %vm3925, %v5864, %v5553
      %v5915 = vsel %vm3925, %v5867, %v5555
      %v5917 = vsel %vm3925, %v5870, %v5557
      %v5919 = vsel %vm3925, %v5873, %v5559
      %v5921 = vsel %vm3925, %v5876, %v5561
      %v5923 = vsel %vm3925, %v5879, %v5563
      %v5925 = vsel %vm3925, %v5882, %v5565
      %v5927 = vsel %vm3925, %v5885, %v5567
      %v5929 = vsel %vm3925, %v5888, %v5569
      %v5931 = vsel %vm3925, %v5891, %v5571
      %v5933 = vsel %vm3925, %v5894, %v5573
      %v5935 = vsel %vm3925, %v5897, %v5575
      %v5937 = vsel %vm3925, %v5900, %v5577
      %v5939 = vsel %vm3925, %v5903, %v5579
      %v5941 = vsel %vm3962, %v5905, %v5653
      %v5944 = vsel %vm3962, %v5907, %v5655
      %v5947 = vsel %vm3962, %v5909, %v5657
      %v5950 = vsel %vm3962, %v5911, %v5659
      %v5953 = vsel %vm3962, %v5913, %v5661
      %v5956 = vsel %vm3962, %v5915, %v5663
      %v5959 = vsel %vm3962, %v5917, %v5665
      %v5962 = vsel %vm3962, %v5919, %v5667
      %v5965 = vsel %vm3962, %v5921, %v5669
      %v5968 = vsel %vm3962, %v5923, %v5671
      %v5971 = vsel %vm3962, %v5925, %v5673
      %v5974 = vsel %vm3962, %v5927, %v5675
      %v5977 = vsel %vm3962, %v5929, %v5677
      %v5980 = vsel %vm3962, %v5931, %v5679
      %v5983 = vsel %vm3962, %v5933, %v5681
      %v5986 = vsel %vm3962, %v5935, %v5683
      %v5989 = vsel %vm3962, %v5937, %v5685
      %v5992 = vsel %vm3962, %v5939, %v5687
      %v5994 = vld [vmem:[%s8] sm:$0xf]
      %v5995 = vld [vmem:[%s8 + $0x4] sm:$0xf]
      %v5996 = vld [vmem:[%s8 + $0x8] sm:$0xf]
      %v5997 = vld [vmem:[%s8 + $0xc] sm:$0xf]
      %v5998 = vld [vmem:[%s8 + $0x10] sm:$0xf]
      %v5999 = vld [vmem:[%s8 + $0x14] sm:$0xf]
      %v6000 = vld [vmem:[%s8 + $0x18] sm:$0xf]
      %v6001 = vld [vmem:[%s8 + $0x1c] sm:$0xf]
      %v6002 = vld [vmem:[%s8 + $0x20] sm:$0xf]
      %v6003 = vld [vmem:[%s8 + $0x24] sm:$0xf]
      %v6004 = vld [vmem:[%s8 + $0x28] sm:$0xf]
      %v6005 = vld [vmem:[%s8 + $0x2c] sm:$0xf]
      %v6006 = vld [vmem:[%s8 + $0x30] sm:$0xf]
      %v6007 = vld [vmem:[%s8 + $0x34] sm:$0xf]
      %v6008 = vld [vmem:[%s8 + $0x38] sm:$0xf]
      %v6009 = vld [vmem:[%s8 + $0x3c] sm:$0xf]
      %v6010 = vld [vmem:[%s8 + $0x40] sm:$0xf]
      %v6011 = vld [vmem:[%s8 + $0x44] sm:$0xf]
      %v6012 = vld [vmem:[%s8 + $0x48] sm:$0xf]
      %v6013 = vld [vmem:[%s8 + $0x4c] sm:$0xf]
      %v6014 = vld [vmem:[%s8 + $0x50] sm:$0xf]
      %v6015 = vld [vmem:[%s8 + $0x54] sm:$0xf]
      %v6016 = vld [vmem:[%s8 + $0x58] sm:$0xf]
      %v6017 = vld [vmem:[%s8 + $0x5c] sm:$0xf]
      %v6018 = vld [vmem:[%s8 + $0x60] sm:$0xf]
      %v6019 = vld [vmem:[%s8 + $0x64] sm:$0xf]
      %v6020 = vld [vmem:[%s8 + $0x68] sm:$0xf]
      %v6021 = vld [vmem:[%s8 + $0x6c] sm:$0xf]
      %v6022 = vld [vmem:[%s8 + $0x70] sm:$0xf]
      %v6023 = vld [vmem:[%s8 + $0x74] sm:$0xf]
      %v6024 = vld [vmem:[%s8 + $0x78] sm:$0xf]
      %v6025 = vld [vmem:[%s8 + $0x7c] sm:$0xf]
      %v6026 = vld [vmem:[%s8 + $0x80] sm:$0xf]
      %v6027 = vld [vmem:[%s8 + $0x84] sm:$0xf]
      %v6028 = vld [vmem:[%s8 + $0x88] sm:$0xf]
      %v6029 = vld [vmem:[%s8 + $0x8c] sm:$0xf]
      %v6066 = vunpack.c.l.b16 %v5994
      %v6067 = vunpack.c.l.b16 %v5995
      %v6068 = vunpack.c.l.b16 %v5996
      %v6069 = vunpack.c.l.b16 %v5997
      %v6070 = vunpack.c.l.b16 %v5998
      %v6071 = vunpack.c.l.b16 %v5999
      %v6072 = vunpack.c.l.b16 %v6000
      %v6073 = vunpack.c.l.b16 %v6001
      %v6074 = vunpack.c.l.b16 %v6002
      %v6075 = vunpack.c.l.b16 %v6003
      %v6076 = vunpack.c.l.b16 %v6004
      %v6077 = vunpack.c.l.b16 %v6005
      %v6078 = vunpack.c.l.b16 %v6006
      %v6079 = vunpack.c.l.b16 %v6007
      %v6080 = vunpack.c.l.b16 %v6008
      %v6081 = vunpack.c.l.b16 %v6009
      %v6082 = vunpack.c.l.b16 %v6010
      %v6083 = vunpack.c.l.b16 %v6011
      %v6084 = vunpack.c.l.b16 %v6012
      %v6085 = vunpack.c.l.b16 %v6013
      %v6086 = vunpack.c.l.b16 %v6014
      %v6087 = vunpack.c.l.b16 %v6015
      %v6088 = vunpack.c.l.b16 %v6016
      %v6089 = vunpack.c.l.b16 %v6017
      %v6090 = vunpack.c.l.b16 %v6018
      %v6091 = vunpack.c.l.b16 %v6019
      %v6092 = vunpack.c.l.b16 %v6020
      %v6093 = vunpack.c.l.b16 %v6021
      %v6094 = vunpack.c.l.b16 %v6022
      %v6095 = vunpack.c.l.b16 %v6023
      %v6096 = vunpack.c.l.b16 %v6024
      %v6097 = vunpack.c.l.b16 %v6025
      %v6098 = vunpack.c.l.b16 %v6026
      %v6099 = vunpack.c.l.b16 %v6027
      %v6100 = vunpack.c.l.b16 %v6028
      %v6101 = vunpack.c.l.b16 %v6029
      %v6102 = vpack.c.b16 %v6067, %v6066
      %v6103 = vpack.c.b16 %v6069, %v6068
      %v6104 = vpack.c.b16 %v6071, %v6070
      %v6105 = vpack.c.b16 %v6073, %v6072
      %v6106 = vpack.c.b16 %v6075, %v6074
      %v6107 = vpack.c.b16 %v6077, %v6076
      %v6108 = vpack.c.b16 %v6079, %v6078
      %v6109 = vpack.c.b16 %v6081, %v6080
      %v6110 = vpack.c.b16 %v6083, %v6082
      %v6111 = vpack.c.b16 %v6085, %v6084
      %v6112 = vpack.c.b16 %v6087, %v6086
      %v6113 = vpack.c.b16 %v6089, %v6088
      %v6114 = vpack.c.b16 %v6091, %v6090
      %v6115 = vpack.c.b16 %v6093, %v6092
      %v6116 = vpack.c.b16 %v6095, %v6094
      %v6117 = vpack.c.b16 %v6097, %v6096
      %v6118 = vpack.c.b16 %v6099, %v6098
      %v6119 = vpack.c.b16 %v6101, %v6100
      %v6139 = vsel %vm3888, %v5690, 0
      %v6142 = vsel %vm3888, %v5692, 0
      %v6145 = vsel %vm3888, %v5694, 0
      %v6148 = vsel %vm3888, %v5696, 0
      %v6151 = vsel %vm3888, %v5698, 0
      %v6154 = vsel %vm3888, %v5700, 0
      %v6157 = vsel %vm3888, %v5702, 0
      %v6160 = vsel %vm3888, %v5704, 0
      %v6163 = vsel %vm3888, %v5706, 0
      %v6166 = vsel %vm3888, %v5708, 0
      %v6169 = vsel %vm3888, %v5710, 0
      %v6172 = vsel %vm3888, %v5712, 0
      %v6175 = vsel %vm3888, %v5714, 0
      %v6178 = vsel %vm3888, %v5716, 0
      %v6181 = vsel %vm3888, %v5718, 0
      %v6184 = vsel %vm3888, %v5720, 0
      %v6187 = vsel %vm3888, %v5722, 0
      %v6190 = vsel %vm3888, %v5723, 0
      %6192 = vmatpush.bf16.msra.mxu0 %v6109
      %6193 = vmatpush.bf16.msra.mxu0 %v6108
      %6194 = vmatpush.bf16.msra.mxu0 %v6107
      %6195 = vmatpush.bf16.msra.mxu0 %v6106
      %6196 = vmatpush.bf16.msra.mxu0 %v6105
      %6197 = vmatpush.bf16.msra.mxu0 %v6104
      %6198 = vmatpush.bf16.msra.mxu0 %v6103
      %6199 = vmatpush.bf16.msra.mxu0 %v6102
      %6200 = vmatmul.bf16.gmra.mxu0 %v5797
      %v6201 = vpop.f32.mrf.mxu0
      %v6202 = vadd.f32 0.0, %v6201
      %v6203 = vpop.f32.mrf.mxu0
      %v6204 = vadd.f32 0.0, %v6203
      %6205 = vmatmul.bf16.gmra.mxu0 %v5800
      %v6206 = vpop.f32.mrf.mxu0
      %v6207 = vadd.f32 0.0, %v6206
      %v6208 = vpop.f32.mrf.mxu0
      %v6209 = vadd.f32 0.0, %v6208
      %6210 = vmatmul.bf16.gmra.mxu0 %v5803
      %v6211 = vpop.f32.mrf.mxu0
      %v6212 = vadd.f32 0.0, %v6211
      %v6213 = vpop.f32.mrf.mxu0
      %v6214 = vadd.f32 0.0, %v6213
      %6215 = vmatmul.bf16.gmra.mxu0 %v5806
      %v6216 = vpop.f32.mrf.mxu0
      %v6217 = vadd.f32 0.0, %v6216
      %v6218 = vpop.f32.mrf.mxu0
      %v6219 = vadd.f32 0.0, %v6218
      %6220 = vmatmul.bf16.gmra.mxu0 %v5809
      %v6221 = vpop.f32.mrf.mxu0
      %v6222 = vadd.f32 0.0, %v6221
      %v6223 = vpop.f32.mrf.mxu0
      %v6224 = vadd.f32 0.0, %v6223
      %6225 = vmatmul.bf16.gmra.mxu0 %v5812
      %v6226 = vpop.f32.mrf.mxu0
      %v6227 = vadd.f32 0.0, %v6226
      %v6228 = vpop.f32.mrf.mxu0
      %v6229 = vadd.f32 0.0, %v6228
      %6230 = vmatmul.bf16.gmra.mxu0 %v5815
      %v6231 = vpop.f32.mrf.mxu0
      %v6232 = vadd.f32 0.0, %v6231
      %v6233 = vpop.f32.mrf.mxu0
      %v6234 = vadd.f32 0.0, %v6233
      %6235 = vmatmul.bf16.gmra.mxu0 %v5818
      %v6236 = vpop.f32.mrf.mxu0
      %v6237 = vadd.f32 0.0, %v6236
      %v6238 = vpop.f32.mrf.mxu0
      %v6239 = vadd.f32 0.0, %v6238
      %6240 = vmatmul.bf16.gmra.mxu0 %v5821
      %v6241 = vpop.f32.mrf.mxu0
      %v6242 = vadd.f32 0.0, %v6241
      %v6243 = vpop.f32.mrf.mxu0
      %v6244 = vadd.f32 0.0, %v6243
      %6245 = vmatmul.bf16.gmra.mxu0 %v5824
      %v6246 = vpop.f32.mrf.mxu0
      %v6247 = vadd.f32 0.0, %v6246
      %v6248 = vpop.f32.mrf.mxu0
      %v6249 = vadd.f32 0.0, %v6248
      %6250 = vmatmul.bf16.gmra.mxu0 %v5827
      %v6251 = vpop.f32.mrf.mxu0
      %v6252 = vadd.f32 0.0, %v6251
      %v6253 = vpop.f32.mrf.mxu0
      %v6254 = vadd.f32 0.0, %v6253
      %6255 = vmatmul.bf16.gmra.mxu0 %v5830
      %v6256 = vpop.f32.mrf.mxu0
      %v6257 = vadd.f32 0.0, %v6256
      %v6258 = vpop.f32.mrf.mxu0
      %v6259 = vadd.f32 0.0, %v6258
      %6260 = vmatmul.bf16.gmra.mxu0 %v5833
      %v6261 = vpop.f32.mrf.mxu0
      %v6262 = vadd.f32 0.0, %v6261
      %v6263 = vpop.f32.mrf.mxu0
      %v6264 = vadd.f32 0.0, %v6263
      %6265 = vmatmul.bf16.gmra.mxu0 %v5836
      %v6266 = vpop.f32.mrf.mxu0
      %v6267 = vadd.f32 0.0, %v6266
      %v6268 = vpop.f32.mrf.mxu0
      %v6269 = vadd.f32 0.0, %v6268
      %6270 = vmatmul.bf16.gmra.mxu0 %v5839
      %v6271 = vpop.f32.mrf.mxu0
      %v6272 = vadd.f32 0.0, %v6271
      %v6273 = vpop.f32.mrf.mxu0
      %v6274 = vadd.f32 0.0, %v6273
      %6275 = vmatmul.bf16.gmra.mxu0 %v5842
      %v6276 = vpop.f32.mrf.mxu0
      %v6277 = vadd.f32 0.0, %v6276
      %v6278 = vpop.f32.mrf.mxu0
      %v6279 = vadd.f32 0.0, %v6278
      %6280 = vmatmul.bf16.gmra.mxu0 %v5845
      %v6281 = vpop.f32.mrf.mxu0
      %v6282 = vadd.f32 0.0, %v6281
      %v6283 = vpop.f32.mrf.mxu0
      %v6284 = vadd.f32 0.0, %v6283
      %6285 = vmatmul.bf16.gmra.mxu0 %v5848
      %v6286 = vpop.f32.mrf.mxu0
      %v6287 = vadd.f32 0.0, %v6286
      %v6288 = vpop.f32.mrf.mxu0
      %v6289 = vadd.f32 0.0, %v6288
      %6290 = vdwg.mxu0
      %6291 = vmatpush.bf16.msra.mxu0 %v6117
      %6292 = vmatpush.bf16.msra.mxu0 %v6116
      %6293 = vmatpush.bf16.msra.mxu0 %v6115
      %6294 = vmatpush.bf16.msra.mxu0 %v6114
      %6295 = vmatpush.bf16.msra.mxu0 %v6113
      %6296 = vmatpush.bf16.msra.mxu0 %v6112
      %6297 = vmatpush.bf16.msra.mxu0 %v6111
      %6298 = vmatpush.bf16.msra.mxu0 %v6110
      %6299 = vmatmul.bf16.gmra.mxu0 %v5941
      %v6300 = vpop.f32.mrf.mxu0
      %v6301 = vadd.f32 %v6202, %v6300
      %v6302 = vpop.f32.mrf.mxu0
      %v6303 = vadd.f32 %v6204, %v6302
      %6304 = vmatmul.bf16.gmra.mxu0 %v5944
      %v6305 = vpop.f32.mrf.mxu0
      %v6306 = vadd.f32 %v6207, %v6305
      %v6307 = vpop.f32.mrf.mxu0
      %v6308 = vadd.f32 %v6209, %v6307
      %6309 = vmatmul.bf16.gmra.mxu0 %v5947
      %v6310 = vpop.f32.mrf.mxu0
      %v6311 = vadd.f32 %v6212, %v6310
      %v6312 = vpop.f32.mrf.mxu0
      %v6313 = vadd.f32 %v6214, %v6312
      %6314 = vmatmul.bf16.gmra.mxu0 %v5950
      %v6315 = vpop.f32.mrf.mxu0
      %v6316 = vadd.f32 %v6217, %v6315
      %v6317 = vpop.f32.mrf.mxu0
      %v6318 = vadd.f32 %v6219, %v6317
      %6319 = vmatmul.bf16.gmra.mxu0 %v5953
      %v6320 = vpop.f32.mrf.mxu0
      %v6321 = vadd.f32 %v6222, %v6320
      %v6322 = vpop.f32.mrf.mxu0
      %v6323 = vadd.f32 %v6224, %v6322
      %6324 = vmatmul.bf16.gmra.mxu0 %v5956
      %v6325 = vpop.f32.mrf.mxu0
      %v6326 = vadd.f32 %v6227, %v6325
      %v6327 = vpop.f32.mrf.mxu0
      %v6328 = vadd.f32 %v6229, %v6327
      %6329 = vmatmul.bf16.gmra.mxu0 %v5959
      %v6330 = vpop.f32.mrf.mxu0
      %v6331 = vadd.f32 %v6232, %v6330
      %v6332 = vpop.f32.mrf.mxu0
      %v6333 = vadd.f32 %v6234, %v6332
      %6334 = vmatmul.bf16.gmra.mxu0 %v5962
      %v6335 = vpop.f32.mrf.mxu0
      %v6336 = vadd.f32 %v6237, %v6335
      %v6337 = vpop.f32.mrf.mxu0
      %v6338 = vadd.f32 %v6239, %v6337
      %6339 = vmatmul.bf16.gmra.mxu0 %v5965
      %v6340 = vpop.f32.mrf.mxu0
      %v6341 = vadd.f32 %v6242, %v6340
      %v6342 = vpop.f32.mrf.mxu0
      %v6343 = vadd.f32 %v6244, %v6342
      %6344 = vmatmul.bf16.gmra.mxu0 %v5968
      %v6345 = vpop.f32.mrf.mxu0
      %v6346 = vadd.f32 %v6247, %v6345
      %v6347 = vpop.f32.mrf.mxu0
      %v6348 = vadd.f32 %v6249, %v6347
      %6349 = vmatmul.bf16.gmra.mxu0 %v5971
      %v6350 = vpop.f32.mrf.mxu0
      %v6351 = vadd.f32 %v6252, %v6350
      %v6352 = vpop.f32.mrf.mxu0
      %v6353 = vadd.f32 %v6254, %v6352
      %6354 = vmatmul.bf16.gmra.mxu0 %v5974
      %v6355 = vpop.f32.mrf.mxu0
      %v6356 = vadd.f32 %v6257, %v6355
      %v6357 = vpop.f32.mrf.mxu0
      %v6358 = vadd.f32 %v6259, %v6357
      %6359 = vmatmul.bf16.gmra.mxu0 %v5977
      %v6360 = vpop.f32.mrf.mxu0
      %v6361 = vadd.f32 %v6262, %v6360
      %v6362 = vpop.f32.mrf.mxu0
      %v6363 = vadd.f32 %v6264, %v6362
      %6364 = vmatmul.bf16.gmra.mxu0 %v5980
      %v6365 = vpop.f32.mrf.mxu0
      %v6366 = vadd.f32 %v6267, %v6365
      %v6367 = vpop.f32.mrf.mxu0
      %v6368 = vadd.f32 %v6269, %v6367
      %6369 = vmatmul.bf16.gmra.mxu0 %v5983
      %v6370 = vpop.f32.mrf.mxu0
      %v6371 = vadd.f32 %v6272, %v6370
      %v6372 = vpop.f32.mrf.mxu0
      %v6373 = vadd.f32 %v6274, %v6372
      %6374 = vmatmul.bf16.gmra.mxu0 %v5986
      %v6375 = vpop.f32.mrf.mxu0
      %v6376 = vadd.f32 %v6277, %v6375
      %v6377 = vpop.f32.mrf.mxu0
      %v6378 = vadd.f32 %v6279, %v6377
      %6379 = vmatmul.bf16.gmra.mxu0 %v5989
      %v6380 = vpop.f32.mrf.mxu0
      %v6381 = vadd.f32 %v6282, %v6380
      %v6382 = vpop.f32.mrf.mxu0
      %v6383 = vadd.f32 %v6284, %v6382
      %6384 = vmatmul.bf16.gmra.mxu0 %v5992
      %v6385 = vpop.f32.mrf.mxu0
      %v6386 = vadd.f32 %v6287, %v6385
      %v6387 = vpop.f32.mrf.mxu0
      %v6388 = vadd.f32 %v6289, %v6387
      %6389 = vdwg.mxu0
      %6390 = vmatpush.bf16.msra.mxu0 0
      %6391 = vmatpush.bf16.msra.mxu0 0
      %6392 = vmatpush.bf16.msra.mxu0 0
      %6393 = vmatpush.bf16.msra.mxu0 0
      %6394 = vmatpush.bf16.msra.mxu0 0
      %6395 = vmatpush.bf16.msra.mxu0 0
      %6396 = vmatpush.bf16.msra.mxu0 %v6119
      %6397 = vmatpush.bf16.msra.mxu0 %v6118
      %6398 = vmatmul.bf16.gmra.mxu0 %v6139
      %v6399 = vpop.f32.mrf.mxu0
      %v6400 = vadd.f32 %v6301, %v6399
      %v6401 = vpop.f32.mrf.mxu0
      %v6402 = vadd.f32 %v6303, %v6401
      %6403 = vmatmul.bf16.gmra.mxu0 %v6142
      %v6404 = vpop.f32.mrf.mxu0
      %v6405 = vadd.f32 %v6306, %v6404
      %v6406 = vpop.f32.mrf.mxu0
      %v6407 = vadd.f32 %v6308, %v6406
      %6408 = vmatmul.bf16.gmra.mxu0 %v6145
      %v6409 = vpop.f32.mrf.mxu0
      %v6410 = vadd.f32 %v6311, %v6409
      %v6411 = vpop.f32.mrf.mxu0
      %v6412 = vadd.f32 %v6313, %v6411
      %6413 = vmatmul.bf16.gmra.mxu0 %v6148
      %v6414 = vpop.f32.mrf.mxu0
      %v6415 = vadd.f32 %v6316, %v6414
      %v6416 = vpop.f32.mrf.mxu0
      %v6417 = vadd.f32 %v6318, %v6416
      %6418 = vmatmul.bf16.gmra.mxu0 %v6151
      %v6419 = vpop.f32.mrf.mxu0
      %v6420 = vadd.f32 %v6321, %v6419
      %v6421 = vpop.f32.mrf.mxu0
      %v6422 = vadd.f32 %v6323, %v6421
      %6423 = vmatmul.bf16.gmra.mxu0 %v6154
      %v6424 = vpop.f32.mrf.mxu0
      %v6425 = vadd.f32 %v6326, %v6424
      %v6426 = vpop.f32.mrf.mxu0
      %v6427 = vadd.f32 %v6328, %v6426
      %6428 = vmatmul.bf16.gmra.mxu0 %v6157
      %v6429 = vpop.f32.mrf.mxu0
      %v6430 = vadd.f32 %v6331, %v6429
      %v6431 = vpop.f32.mrf.mxu0
      %v6432 = vadd.f32 %v6333, %v6431
      %6433 = vmatmul.bf16.gmra.mxu0 %v6160
      %v6434 = vpop.f32.mrf.mxu0
      %v6435 = vadd.f32 %v6336, %v6434
      %v6436 = vpop.f32.mrf.mxu0
      %v6437 = vadd.f32 %v6338, %v6436
      %6438 = vmatmul.bf16.gmra.mxu0 %v6163
      %v6439 = vpop.f32.mrf.mxu0
      %v6440 = vadd.f32 %v6341, %v6439
      %v6441 = vpop.f32.mrf.mxu0
      %v6442 = vadd.f32 %v6343, %v6441
      %6443 = vmatmul.bf16.gmra.mxu0 %v6166
      %v6444 = vpop.f32.mrf.mxu0
      %v6445 = vadd.f32 %v6346, %v6444
      %v6446 = vpop.f32.mrf.mxu0
      %v6447 = vadd.f32 %v6348, %v6446
      %6448 = vmatmul.bf16.gmra.mxu0 %v6169
      %v6449 = vpop.f32.mrf.mxu0
      %v6450 = vadd.f32 %v6351, %v6449
      %v6451 = vpop.f32.mrf.mxu0
      %v6452 = vadd.f32 %v6353, %v6451
      %6453 = vmatmul.bf16.gmra.mxu0 %v6172
      %v6454 = vpop.f32.mrf.mxu0
      %v6455 = vadd.f32 %v6356, %v6454
      %v6456 = vpop.f32.mrf.mxu0
      %v6457 = vadd.f32 %v6358, %v6456
      %6458 = vmatmul.bf16.gmra.mxu0 %v6175
      %v6459 = vpop.f32.mrf.mxu0
      %v6460 = vadd.f32 %v6361, %v6459
      %v6461 = vpop.f32.mrf.mxu0
      %v6462 = vadd.f32 %v6363, %v6461
      %6463 = vmatmul.bf16.gmra.mxu0 %v6178
      %v6464 = vpop.f32.mrf.mxu0
      %v6465 = vadd.f32 %v6366, %v6464
      %v6466 = vpop.f32.mrf.mxu0
      %v6467 = vadd.f32 %v6368, %v6466
      %6468 = vmatmul.bf16.gmra.mxu0 %v6181
      %v6469 = vpop.f32.mrf.mxu0
      %v6470 = vadd.f32 %v6371, %v6469
      %v6471 = vpop.f32.mrf.mxu0
      %v6472 = vadd.f32 %v6373, %v6471
      %6473 = vmatmul.bf16.gmra.mxu0 %v6184
      %v6474 = vpop.f32.mrf.mxu0
      %v6475 = vadd.f32 %v6376, %v6474
      %v6476 = vpop.f32.mrf.mxu0
      %v6477 = vadd.f32 %v6378, %v6476
      %6478 = vmatmul.bf16.gmra.mxu0 %v6187
      %v6479 = vpop.f32.mrf.mxu0
      %v6480 = vadd.f32 %v6381, %v6479
      %v6481 = vpop.f32.mrf.mxu0
      %v6482 = vadd.f32 %v6383, %v6481
      %6483 = vmatmul.bf16.gmra.mxu0 %v6190
      %v6484 = vpop.f32.mrf.mxu0
      %v6485 = vadd.f32 %v6386, %v6484
      %v6486 = vpop.f32.mrf.mxu0
      %v6487 = vadd.f32 %v6388, %v6486
      %6488 = vdwg.mxu0
      %v6489 = vmul.f32 %v6400, %v2742
      %v6490 = vmul.f32 %v6402, %v2747
      %v6491 = vmul.f32 %v6405, %v2752
      %v6492 = vmul.f32 %v6407, %v2757
      %v6493 = vmul.f32 %v6410, %v2762
      %v6494 = vmul.f32 %v6412, %v2767
      %v6495 = vmul.f32 %v6415, %v2772
      %v6496 = vmul.f32 %v6417, %v2777
      %v6497 = vmul.f32 %v6420, %v2782
      %v6498 = vmul.f32 %v6422, %v2787
      %v6499 = vmul.f32 %v6425, %v2792
      %v6500 = vmul.f32 %v6427, %v2797
      %v6501 = vmul.f32 %v6430, %v2802
      %v6502 = vmul.f32 %v6432, %v2807
      %v6503 = vmul.f32 %v6435, %v2812
      %v6504 = vmul.f32 %v6437, %v2817
      %v6505 = vmul.f32 %v6440, %v2822
      %v6506 = vmul.f32 %v6442, %v2827
      %v6507 = vmul.f32 %v6445, %v2832
      %v6508 = vmul.f32 %v6447, %v2837
      %v6509 = vmul.f32 %v6450, %v2842
      %v6510 = vmul.f32 %v6452, %v2847
      %v6511 = vmul.f32 %v6455, %v2852
      %v6512 = vmul.f32 %v6457, %v2857
      %v6513 = vmul.f32 %v6460, %v2862
      %v6514 = vmul.f32 %v6462, %v2867
      %v6515 = vmul.f32 %v6465, %v2872
      %v6516 = vmul.f32 %v6467, %v2877
      %v6517 = vmul.f32 %v6470, %v2882
      %v6518 = vmul.f32 %v6472, %v2887
      %v6519 = vmul.f32 %v6475, %v2892
      %v6520 = vmul.f32 %v6477, %v2897
      %v6521 = vmul.f32 %v6480, %v2902
      %v6522 = vmul.f32 %v6482, %v2907
      %v6523 = vmul.f32 %v6485, %v2912
      %v6524 = vmul.f32 %v6487, %v2917
      %v6525 = vsel %vm3888, %v6489, 0.0
      %v6526 = vsel %vm3888, %v6490, 0.0
      %v6527 = vadd.f32 %v6525, %v6526
      %v6528 = vsel %vm3888, %v6491, 0.0
      %v6529 = vadd.f32 %v6527, %v6528
      %v6530 = vsel %vm3888, %v6492, 0.0
      %v6531 = vadd.f32 %v6529, %v6530
      %v6532 = vsel %vm3888, %v6493, 0.0
      %v6533 = vadd.f32 %v6531, %v6532
      %v6534 = vsel %vm3888, %v6494, 0.0
      %v6535 = vadd.f32 %v6533, %v6534
      %v6536 = vsel %vm3888, %v6495, 0.0
      %v6537 = vadd.f32 %v6535, %v6536
      %v6538 = vsel %vm3888, %v6496, 0.0
      %v6539 = vadd.f32 %v6537, %v6538
      %v6540 = vsel %vm3888, %v6497, 0.0
      %v6541 = vadd.f32 %v6539, %v6540
      %v6542 = vsel %vm3888, %v6498, 0.0
      %v6543 = vadd.f32 %v6541, %v6542
      %v6544 = vsel %vm3888, %v6499, 0.0
      %v6545 = vadd.f32 %v6543, %v6544
      %v6546 = vsel %vm3888, %v6500, 0.0
      %v6547 = vadd.f32 %v6545, %v6546
      %v6548 = vsel %vm3888, %v6501, 0.0
      %v6549 = vadd.f32 %v6547, %v6548
      %v6550 = vsel %vm3888, %v6502, 0.0
      %v6551 = vadd.f32 %v6549, %v6550
      %v6552 = vsel %vm3888, %v6503, 0.0
      %v6553 = vadd.f32 %v6551, %v6552
      %v6554 = vsel %vm3888, %v6504, 0.0
      %v6555 = vadd.f32 %v6553, %v6554
      %v6556 = vsel %vm3888, %v6505, 0.0
      %v6557 = vadd.f32 %v6555, %v6556
      %v6558 = vsel %vm3888, %v6506, 0.0
      %v6559 = vadd.f32 %v6557, %v6558
      %v6560 = vsel %vm3888, %v6507, 0.0
      %v6561 = vadd.f32 %v6559, %v6560
      %v6562 = vsel %vm3888, %v6508, 0.0
      %v6563 = vadd.f32 %v6561, %v6562
      %v6564 = vsel %vm3888, %v6509, 0.0
      %v6565 = vadd.f32 %v6563, %v6564
      %v6566 = vsel %vm3888, %v6510, 0.0
      %v6567 = vadd.f32 %v6565, %v6566
      %v6568 = vsel %vm3888, %v6511, 0.0
      %v6569 = vadd.f32 %v6567, %v6568
      %v6570 = vsel %vm3888, %v6512, 0.0
      %v6571 = vadd.f32 %v6569, %v6570
      %v6572 = vsel %vm3888, %v6513, 0.0
      %v6573 = vadd.f32 %v6571, %v6572
      %v6574 = vsel %vm3888, %v6514, 0.0
      %v6575 = vadd.f32 %v6573, %v6574
      %v6576 = vsel %vm3888, %v6515, 0.0
      %v6577 = vadd.f32 %v6575, %v6576
      %v6578 = vsel %vm3888, %v6516, 0.0
      %v6579 = vadd.f32 %v6577, %v6578
      %v6580 = vsel %vm3888, %v6517, 0.0
      %v6581 = vadd.f32 %v6579, %v6580
      %v6582 = vsel %vm3888, %v6518, 0.0
      %v6583 = vadd.f32 %v6581, %v6582
      %v6584 = vsel %vm3888, %v6519, 0.0
      %v6585 = vadd.f32 %v6583, %v6584
      %v6586 = vsel %vm3888, %v6520, 0.0
      %v6587 = vadd.f32 %v6585, %v6586
      %v6588 = vsel %vm3888, %v6521, 0.0
      %v6589 = vadd.f32 %v6587, %v6588
      %v6590 = vsel %vm3888, %v6522, 0.0
      %v6591 = vadd.f32 %v6589, %v6590
      %v6592 = vsel %vm3888, %v6523, 0.0
      %v6593 = vadd.f32 %v6591, %v6592
      %v6594 = vsel %vm3888, %v6524, 0.0
      %v6595 = vadd.f32 %v6593, %v6594
      %v6596 = vrot.slane %v6595, 4
      %v6597 = vadd.f32 %v6595, %v6596
      %v6598 = vrot.slane %v6597, 2
      %v6599 = vadd.f32 %v6597, %v6598
      %v6600 = vrot.slane %v6599, 1
      %v6601 = vadd.f32 %v6599, %v6600
      %v6602 = vmul.f32 %v6601, 0.00390625
      %v6603 = vld [vmem:[%s9] sm:$0xff]
      %v6604 = vld [vmem:[%s9 + $0x8] sm:$0xff]
      %v6605 = vld [vmem:[%s9 + $0x10] sm:$0xff]
      %v6606 = vld [vmem:[%s9 + $0x18] sm:$0xff]
      %v6607 = vld [vmem:[%s10] sm:$0x1]
      %v6609 = vsel %vm3888, %v6602, 0
      %6611 = vmatpush.msra.mxu0 0.0
      %6612 = vmatpush.msra.mxu0 0.0
      %6613 = vmatpush.msra.mxu0 0.0
      %6614 = vmatpush.msra.mxu0 0.0
      %6615 = vmatpush.msra.mxu0 0.0
      %6616 = vmatpush.msra.mxu0 0.0
      %6617 = vmatpush.msra.mxu0 0.0
      %6618 = vmatpush.msra.mxu0 0.0
      %6619 = vmatpush.msra.mxu0 0.0
      %6620 = vmatpush.msra.mxu0 0.0
      %6621 = vmatpush.msra.mxu0 0.0
      %6622 = vmatpush.msra.mxu0 0.0
      %6623 = vmatpush.msra.mxu0 %v6606
      %6624 = vmatpush.msra.mxu0 %v6605
      %6625 = vmatpush.msra.mxu0 %v6604
      %6626 = vmatpush.msra.mxu0 %v6603
      %6627 = vmatmul.f32.gmra.mxu0 %v6609
      %v6628 = vpop.f32.mrf.mxu0
      %v6629 = vadd.f32 %v6607, %v6628
      %6630 = vdwg.mxu0
      %v6631 = vmax.f32 %v6629, 0.0
      %v6632 = vld [vmem:[%s11] sm:$0x3]
      %v6633 = vld [vmem:[%s12] sm:$0x1]
      %vm6634 = vcmask 15360
      %v6636 = vsel %vm6634, %v6631, 0
      %v6639 = vsel %vm826, %v6632, 0
      %6641 = vmatpush.msra.mxu0 0.0
      %6642 = vmatpush.msra.mxu0 0.0
      %6643 = vmatpush.msra.mxu0 0.0
      %6644 = vmatpush.msra.mxu0 0.0
      %6645 = vmatpush.msra.mxu0 0.0
      %6646 = vmatpush.msra.mxu0 0.0
      %6647 = vmatpush.msra.mxu0 0.0
      %6648 = vmatpush.msra.mxu0 0.0
      %6649 = vmatpush.msra.mxu0 0.0
      %6650 = vmatpush.msra.mxu0 0.0
      %6651 = vmatpush.msra.mxu0 0.0
      %6652 = vmatpush.msra.mxu0 0.0
      %6653 = vmatpush.msra.mxu0 0.0
      %6654 = vmatpush.msra.mxu0 0.0
      %6655 = vmatpush.msra.mxu0 0.0
      %6656 = vmatpush.msra.mxu0 %v6639
      %6657 = vmatmul.f32.gmra.mxu0 %v6636
      %v6658 = vpop.f32.mrf.mxu0
      %v6659 = vadd.f32 %v6633, %v6658
      %6660 = vdwg.mxu0
      %v6661 = vxor.u32 %v6659, 2147483648
      %v6662 = vmul.f32 %v6661, 1.442695
      %v6663 = vpow.pop %v6662
      %v6664 = vadd.f32 %v6663, 1.0
      %v6665 = vrcp.pop %v6664
      %v6666 = vmul.f32 %v6664, %v6665
      %v6667 = vsub.f32 1.0, %v6666
      %v6668 = vmul.f32 %v6665, %v6667
      %v6669 = vadd.f32 %v6665, %v6668
      %vm6670 = vweird.f32 %v6664
      %vm6671 = vweird.f32 %v6665
      %vm6672 = vmor %vm6670, %vm6671
      %v6673 = vsel %vm6672, %v6665, %v6669
      %v6674 = vand.u32 2147483647, %v6664
      %vm6675 = vcmp.eq.f32.partialorder %v6674, 8.507059e+37
      %v6676 = vand.u32 %v6664, 2147483648
      %v6677 = vor.u32 1.1754944e-38, %v6676
      %v6678 = vsel %vm6675, %v6677, %v6673
      %v6679 = vmul.f32 1.0, %v6678
      %v6680 = vperm.slane %v6679, 0
      %v6681 = vmul.f32 %v6400, %v6680
      %v6682 = vmul.f32 %v6402, %v6680
      %v6683 = vmul.f32 %v6405, %v6680
      %v6684 = vmul.f32 %v6407, %v6680
      %v6685 = vmul.f32 %v6410, %v6680
      %v6686 = vmul.f32 %v6412, %v6680
      %v6687 = vmul.f32 %v6415, %v6680
      %v6688 = vmul.f32 %v6417, %v6680
      %v6689 = vmul.f32 %v6420, %v6680
      %v6690 = vmul.f32 %v6422, %v6680
      %v6691 = vmul.f32 %v6425, %v6680
      %v6692 = vmul.f32 %v6427, %v6680
      %v6693 = vmul.f32 %v6430, %v6680
      %v6694 = vmul.f32 %v6432, %v6680
      %v6695 = vmul.f32 %v6435, %v6680
      %v6696 = vmul.f32 %v6437, %v6680
      %v6697 = vmul.f32 %v6440, %v6680
      %v6698 = vmul.f32 %v6442, %v6680
      %v6699 = vmul.f32 %v6445, %v6680
      %v6700 = vmul.f32 %v6447, %v6680
      %v6701 = vmul.f32 %v6450, %v6680
      %v6702 = vmul.f32 %v6452, %v6680
      %v6703 = vmul.f32 %v6455, %v6680
      %v6704 = vmul.f32 %v6457, %v6680
      %v6705 = vmul.f32 %v6460, %v6680
      %v6706 = vmul.f32 %v6462, %v6680
      %v6707 = vmul.f32 %v6465, %v6680
      %v6708 = vmul.f32 %v6467, %v6680
      %v6709 = vmul.f32 %v6470, %v6680
      %v6710 = vmul.f32 %v6472, %v6680
      %v6711 = vmul.f32 %v6475, %v6680
      %v6712 = vmul.f32 %v6477, %v6680
      %v6713 = vmul.f32 %v6480, %v6680
      %v6714 = vmul.f32 %v6482, %v6680
      %v6715 = vmul.f32 %v6485, %v6680
      %v6716 = vmul.f32 %v6487, %v6680
      %v6717 = vadd.f32 %v6681, %v2587
      %v6718 = vadd.f32 %v6682, %v2588
      %v6719 = vadd.f32 %v6683, %v2589
      %v6720 = vadd.f32 %v6684, %v2590
      %v6721 = vadd.f32 %v6685, %v2591
      %v6722 = vadd.f32 %v6686, %v2592
      %v6723 = vadd.f32 %v6687, %v2593
      %v6724 = vadd.f32 %v6688, %v2594
      %v6725 = vadd.f32 %v6689, %v2595
      %v6726 = vadd.f32 %v6690, %v2596
      %v6727 = vadd.f32 %v6691, %v2597
      %v6728 = vadd.f32 %v6692, %v2598
      %v6729 = vadd.f32 %v6693, %v2599
      %v6730 = vadd.f32 %v6694, %v2600
      %v6731 = vadd.f32 %v6695, %v2601
      %v6732 = vadd.f32 %v6696, %v2602
      %v6733 = vadd.f32 %v6697, %v2603
      %v6734 = vadd.f32 %v6698, %v2604
      %v6735 = vadd.f32 %v6699, %v2605
      %v6736 = vadd.f32 %v6700, %v2606
      %v6737 = vadd.f32 %v6701, %v2607
      %v6738 = vadd.f32 %v6702, %v2608
      %v6739 = vadd.f32 %v6703, %v2609
      %v6740 = vadd.f32 %v6704, %v2610
      %v6741 = vadd.f32 %v6705, %v2611
      %v6742 = vadd.f32 %v6706, %v2612
      %v6743 = vadd.f32 %v6707, %v2613
      %v6744 = vadd.f32 %v6708, %v2614
      %v6745 = vadd.f32 %v6709, %v2615
      %v6746 = vadd.f32 %v6710, %v2616
      %v6747 = vadd.f32 %v6711, %v2617
      %v6748 = vadd.f32 %v6712, %v2618
      %v6749 = vadd.f32 %v6713, %v2619
      %v6750 = vadd.f32 %v6714, %v2620
      %v6751 = vadd.f32 %v6715, %v2621
      %v6752 = vadd.f32 %v6716, %v2622
      %v6753 = vpack.c.bf16 %v6717, %v6717
      %v6754 = vpack.c.bf16 %v6718, %v6718
      %v6755 = vpack.c.bf16 %v6719, %v6719
      %v6756 = vpack.c.bf16 %v6720, %v6720
      %v6757 = vpack.c.bf16 %v6721, %v6721
      %v6758 = vpack.c.bf16 %v6722, %v6722
      %v6759 = vpack.c.bf16 %v6723, %v6723
      %v6760 = vpack.c.bf16 %v6724, %v6724
      %v6761 = vpack.c.bf16 %v6725, %v6725
      %v6762 = vpack.c.bf16 %v6726, %v6726
      %v6763 = vpack.c.bf16 %v6727, %v6727
      %v6764 = vpack.c.bf16 %v6728, %v6728
      %v6765 = vpack.c.bf16 %v6729, %v6729
      %v6766 = vpack.c.bf16 %v6730, %v6730
      %v6767 = vpack.c.bf16 %v6731, %v6731
      %v6768 = vpack.c.bf16 %v6732, %v6732
      %v6769 = vpack.c.bf16 %v6733, %v6733
      %v6770 = vpack.c.bf16 %v6734, %v6734
      %v6771 = vpack.c.bf16 %v6735, %v6735
      %v6772 = vpack.c.bf16 %v6736, %v6736
      %v6773 = vpack.c.bf16 %v6737, %v6737
      %v6774 = vpack.c.bf16 %v6738, %v6738
      %v6775 = vpack.c.bf16 %v6739, %v6739
      %v6776 = vpack.c.bf16 %v6740, %v6740
      %v6777 = vpack.c.bf16 %v6741, %v6741
      %v6778 = vpack.c.bf16 %v6742, %v6742
      %v6779 = vpack.c.bf16 %v6743, %v6743
      %v6780 = vpack.c.bf16 %v6744, %v6744
      %v6781 = vpack.c.bf16 %v6745, %v6745
      %v6782 = vpack.c.bf16 %v6746, %v6746
      %v6783 = vpack.c.bf16 %v6747, %v6747
      %v6784 = vpack.c.bf16 %v6748, %v6748
      %v6785 = vpack.c.bf16 %v6749, %v6749
      %v6786 = vpack.c.bf16 %v6750, %v6750
      %v6787 = vpack.c.bf16 %v6751, %v6751
      %v6788 = vpack.c.bf16 %v6752, %v6752
      %vm6789 = vcmask 257024
      %6790 = vst.msk [vmem:[%s440] sm:$0xf] %vm6789, %v6753
      %6791 = vst.msk [vmem:[%s440 + $0x4] sm:$0xf] %vm6789, %v6754
      %6792 = vst.msk [vmem:[%s440 + $0x8] sm:$0xf] %vm6789, %v6755
      %6793 = vst.msk [vmem:[%s440 + $0xc] sm:$0xf] %vm6789, %v6756
      %6794 = vst.msk [vmem:[%s440 + $0x10] sm:$0xf] %vm6789, %v6757
      %6795 = vst.msk [vmem:[%s440 + $0x14] sm:$0xf] %vm6789, %v6758
      %6796 = vst.msk [vmem:[%s440 + $0x18] sm:$0xf] %vm6789, %v6759
      %6797 = vst.msk [vmem:[%s440 + $0x1c] sm:$0xf] %vm6789, %v6760
      %6798 = vst.msk [vmem:[%s440 + $0x20] sm:$0xf] %vm6789, %v6761
      %6799 = vst.msk [vmem:[%s440 + $0x24] sm:$0xf] %vm6789, %v6762
      %6800 = vst.msk [vmem:[%s440 + $0x28] sm:$0xf] %vm6789, %v6763
      %6801 = vst.msk [vmem:[%s440 + $0x2c] sm:$0xf] %vm6789, %v6764
      %6802 = vst.msk [vmem:[%s440 + $0x30] sm:$0xf] %vm6789, %v6765
      %6803 = vst.msk [vmem:[%s440 + $0x34] sm:$0xf] %vm6789, %v6766
      %6804 = vst.msk [vmem:[%s440 + $0x38] sm:$0xf] %vm6789, %v6767
      %6805 = vst.msk [vmem:[%s440 + $0x3c] sm:$0xf] %vm6789, %v6768
      %6806 = vst.msk [vmem:[%s440 + $0x40] sm:$0xf] %vm6789, %v6769
      %6807 = vst.msk [vmem:[%s440 + $0x44] sm:$0xf] %vm6789, %v6770
      %6808 = vst.msk [vmem:[%s440 + $0x48] sm:$0xf] %vm6789, %v6771
      %6809 = vst.msk [vmem:[%s440 + $0x4c] sm:$0xf] %vm6789, %v6772
      %6810 = vst.msk [vmem:[%s440 + $0x50] sm:$0xf] %vm6789, %v6773
      %6811 = vst.msk [vmem:[%s440 + $0x54] sm:$0xf] %vm6789, %v6774
      %6812 = vst.msk [vmem:[%s440 + $0x58] sm:$0xf] %vm6789, %v6775
      %6813 = vst.msk [vmem:[%s440 + $0x5c] sm:$0xf] %vm6789, %v6776
      %6814 = vst.msk [vmem:[%s440 + $0x60] sm:$0xf] %vm6789, %v6777
      %6815 = vst.msk [vmem:[%s440 + $0x64] sm:$0xf] %vm6789, %v6778
      %6816 = vst.msk [vmem:[%s440 + $0x68] sm:$0xf] %vm6789, %v6779
      %6817 = vst.msk [vmem:[%s440 + $0x6c] sm:$0xf] %vm6789, %v6780
      %6818 = vst.msk [vmem:[%s440 + $0x70] sm:$0xf] %vm6789, %v6781
      %6819 = vst.msk [vmem:[%s440 + $0x74] sm:$0xf] %vm6789, %v6782
      %6820 = vst.msk [vmem:[%s440 + $0x78] sm:$0xf] %vm6789, %v6783
      %6821 = vst.msk [vmem:[%s440 + $0x7c] sm:$0xf] %vm6789, %v6784
      %6822 = vst.msk [vmem:[%s440 + $0x80] sm:$0xf] %vm6789, %v6785
      %6823 = vst.msk [vmem:[%s440 + $0x84] sm:$0xf] %vm6789, %v6786
      %6824 = vst.msk [vmem:[%s440 + $0x88] sm:$0xf] %vm6789, %v6787
      %6825 = vst.msk [vmem:[%s440 + $0x8c] sm:$0xf] %vm6789, %v6788
      %p6826 = scmp.lt.s32.totalorder %s24, 1
      %s6827 = scalar_select %p6826, %s24, 1
      %s6828 = smul.addr %s6827, 36
      %s6829 = smul.addr %s6828, 4
      %s6830 = scalar_lea.vmem %s13, %s6829
      // Predicated region
      $region73: #{cifar_se_preact_resnet_forward.3} parent=71 // pred_check
        %p6831 = pneg %p320
      $region74: #{cifar_se_preact_resnet_forward.3} parent=71 // pred_check_branch
        %6833 = sbr.rel (%p6831) target = $region76
      $region75: #{cifar_se_preact_resnet_forward.3} parent=71 // pred_region
        _
      $region76: #{cifar_se_preact_resnet_forward.3} parent=71 // pred_fallthru
        _
    $region72: #{cifar_se_preact_resnet_forward.3} parent=5 // pred_fallthru
      _
    %p6834 = scmp.le.s32.totalorder 2, %s19
    // Predicated region
    $region77: #{cifar_se_preact_resnet_forward.3} parent=5 // pred_check
      %p6835 = pneg %p6834
    $region78: #{cifar_se_preact_resnet_forward.3} parent=5 // pred_check_branch
      %6837 = sbr.rel (%p6835) target = $region80
    $region79: #{cifar_se_preact_resnet_forward.3} parent=5 // pred_region
      %s6838 = ssub.s32 %s19, 2
      // Predicated region
      $region81: #{cifar_se_preact_resnet_forward.3} parent=79 // pred_check
        %p6839 = pneg %p326
      $region82: #{cifar_se_preact_resnet_forward.3} parent=79 // pred_check_branch
        %6841 = sbr.rel (%p6839) target = $region84
      $region83: #{cifar_se_preact_resnet_forward.3} parent=79 // pred_region
        %p6842 = scmp.lt.s32.totalorder %s25, 1
        %s6843 = scalar_select %p6842, %s25, 1
        %s6844 = smul.addr %s6843, 36
        %s6845 = smul.addr %s6844, 4
        %s6846 = scalar_lea.vmem %s13, %s6845
      $region84: #{cifar_se_preact_resnet_forward.3} parent=79 // pred_fallthru
        _
    $region80: #{cifar_se_preact_resnet_forward.3} parent=5 // pred_fallthru
      _
  $region6: #{cifar_se_preact_resnet_forward.3} parent=0 // loop_footer
    %s23 = sadd.s32 1, %s19
  $region7: #{cifar_se_preact_resnet_forward.3} parent=0 // loop_footer_branch
    %18 = sbr.rel target = $region3
  $region8: #{cifar_se_preact_resnet_forward.3} parent=0 // loop_exit
    _

// kernel: cifar_se_preact_resnet_forward.4
$region0: #{cifar_se_preact_resnet_forward.4}
  #allocation0 [shape = 'u32[]', space=smem, size = 0x4, offset = 0x4, fixed_abs, tag = 'smem constant byte address 0x4 - core index']
  #allocation1 [shape = 'u32[72,128]{1,0:T(1,128)}', space=vmem, size = 0x9000, scoped, tag = 'internal scratch']
  %s0 = inlined_call_operand.vmem [shape: bf16[2,92,128], index: 0, kind: input, shape index: {}]
  %s1 = inlined_call_operand.vmem [shape: f32[80,1], index: 1, kind: input, shape index: {}]
  %s2 = inlined_call_operand.vmem [shape: bf16[512,64], index: 2, kind: input, shape index: {}]
  %s3 = inlined_call_operand.vmem [shape: f32[1,64], index: 3, kind: input, shape index: {}]
  %s4 = inlined_call_operand.vmem [shape: f32[1,64], index: 4, kind: input, shape index: {}]
  %s5 = inlined_call_operand.vmem [shape: bf16[576,64], index: 5, kind: input, shape index: {}]
  %s6 = inlined_call_operand.vmem [shape: bf16[2,80,32], index: 6, kind: input, shape index: {}]
  %s7 = inlined_call_operand.vmem [shape: bf16[32,64], index: 7, kind: input, shape index: {}]
  %s8 = inlined_call_operand.vmem [shape: f32[1,64], index: 8, kind: input, shape index: {}]
  %s9 = inlined_call_operand.vmem [shape: f32[1,64], index: 9, kind: input, shape index: {}]
  %s10 = inlined_call_operand.vmem [shape: f32[64,4], index: 10, kind: input, shape index: {}]
  %s11 = inlined_call_operand.vmem [shape: f32[1,4], index: 11, kind: input, shape index: {}]
  %s12 = inlined_call_operand.vmem [shape: f32[4,64], index: 12, kind: input, shape index: {}]
  %s13 = inlined_call_operand.vmem [shape: f32[1,64], index: 13, kind: input, shape index: {}]
  %s14 = inlined_call_operand.vmem [shape: bf16[2,80,64], index: 14, kind: output, shape index: {}]
  %s15 = sld [smem:[#allocation0]]
  $region89: #{cifar_se_preact_resnet_forward.4} parent=0
    _
  %s17 = ssub.s32 1, %s15
  %s18 = scalar_select 0, %s17, %s15
  loop: start=0, step=1, limit=4
  $region2: #{cifar_se_preact_resnet_forward.4} parent=0 // loop_pre_header
    _
  $region3: #{cifar_se_preact_resnet_forward.4} parent=0 // loop_header
    %s20 = sphi 0, %s24
    %p21 = scmp.ge.s32.totalorder %s20, 4
    %s30 = sphi 0, %s32
    %s33 = sphi 0, %s30
    %s34 = sphi 0, %s33
    %s50 = sphi 0, %s34
    %s54 = sphi 0, %s54
    %s56 = sphi 0, %s54
    %s57 = sphi 0, %s56
    %s71 = sphi 0, %s57
    %s75 = sphi 0, %s75
    %s77 = sphi 0, %s75
    %s78 = sphi 0, %s77
    %s92 = sphi 0, %s78
    %s96 = sphi 0, %s96
    %s98 = sphi 0, %s96
    %s99 = sphi 0, %s98
    %s113 = sphi 0, %s99
    %s117 = sphi 0, %s117
    %s119 = sphi 0, %s117
    %s120 = sphi 0, %s119
    %s134 = sphi 0, %s120
    %s138 = sphi 0, %s138
    %s140 = sphi 0, %s138
    %s141 = sphi 0, %s140
    %s155 = sphi 0, %s141
    %s161 = sphi 0, %s163
    %s164 = sphi 0, %s161
    %s165 = sphi 0, %s164
    %s181 = sphi 0, %s165
    %s185 = sphi 0, %s185
    %s187 = sphi 0, %s185
    %s188 = sphi 0, %s187
    %s202 = sphi 0, %s188
    %s206 = sphi 0, %s206
    %s208 = sphi 0, %s206
    %s209 = sphi 0, %s208
    %s223 = sphi 0, %s209
    %s227 = sphi 0, %s227
    %s229 = sphi 0, %s227
    %s230 = sphi 0, %s229
    %s244 = sphi 0, %s230
    %s248 = sphi 0, %s248
    %s250 = sphi 0, %s248
    %s251 = sphi 0, %s250
    %s265 = sphi 0, %s251
    %s269 = sphi 0, %s269
    %s271 = sphi 0, %s269
    %s272 = sphi 0, %s271
    %s286 = sphi 0, %s272
    %s290 = sphi 0, %s290
    %s292 = sphi 0, %s290
    %s293 = sphi 0, %s292
    %s307 = sphi 0, %s293
    %s311 = sphi 0, %s311
    %s313 = sphi 0, %s311
    %s314 = sphi 0, %s313
    %s328 = sphi 0, %s314
    %s334 = sphi 0, %s336
    %s337 = sphi 0, %s334
    %s338 = sphi 0, %s337
    %s354 = sphi 0, %s338
  $region4: #{cifar_se_preact_resnet_forward.4} parent=0 // loop_header_branch
    %23 = sbr.rel (%p21) target = $region8
  $region5: #{cifar_se_preact_resnet_forward.4} parent=0 // loop_body
    %s25 = ssub.s32 %s20, 1
    %s26 = ssub.s32 %s20, 2
    %s27 = sadd.s32 %s20, 1
    %s28 = ssub.s32 %s20, %s27
    %p29 = scmp.eq.s32.totalorder %s28, 0
    %s31 = sadd.s32 %s30, 1
    %s32 = scalar_select %p29, %s30, %s31
    %p35 = pneg %p29
    %p36 = scmp.eq.s32.totalorder %s20, 1
    %p37 = por %p35, %p36
    %p38 = scmp.ne.s32.totalorder %s30, %s33
    %p39 = scmp.eq.s32.totalorder %s20, 0
    %p40 = por %p38, %p39
    %p41 = scmp.ne.s32.totalorder %s30, %s33
    %p42 = scmp.eq.s32.totalorder %s25, 1
    %p43 = por %p41, %p42
    %p44 = scmp.ne.s32.totalorder %s33, %s34
    %p45 = scmp.eq.s32.totalorder %s25, 0
    %p46 = por %p44, %p45
    %p47 = scmp.ne.s32.totalorder %s33, %s34
    %p48 = scmp.eq.s32.totalorder %s26, 1
    %p49 = por %p47, %p48
    %p51 = scmp.ne.s32.totalorder %s34, %s50
    %p52 = scmp.eq.s32.totalorder %s26, 0
    %p53 = por %p51, %p52
    %s55 = sadd.s32 %s54, 1
    %p58 = scmp.eq.s32.totalorder %s20, 1
    %p59 = scmp.ne.s32.totalorder %s54, %s56
    %p60 = scmp.eq.s32.totalorder %s20, 0
    %p61 = por %p59, %p60
    %p62 = scmp.ne.s32.totalorder %s54, %s56
    %p63 = scmp.eq.s32.totalorder %s25, 1
    %p64 = por %p62, %p63
    %p65 = scmp.ne.s32.totalorder %s56, %s57
    %p66 = scmp.eq.s32.totalorder %s25, 0
    %p67 = por %p65, %p66
    %p68 = scmp.ne.s32.totalorder %s56, %s57
    %p69 = scmp.eq.s32.totalorder %s26, 1
    %p70 = por %p68, %p69
    %p72 = scmp.ne.s32.totalorder %s57, %s71
    %p73 = scmp.eq.s32.totalorder %s26, 0
    %p74 = por %p72, %p73
    %s76 = sadd.s32 %s75, 1
    %p79 = scmp.eq.s32.totalorder %s20, 1
    %p80 = scmp.ne.s32.totalorder %s75, %s77
    %p81 = scmp.eq.s32.totalorder %s20, 0
    %p82 = por %p80, %p81
    %p83 = scmp.ne.s32.totalorder %s75, %s77
    %p84 = scmp.eq.s32.totalorder %s25, 1
    %p85 = por %p83, %p84
    %p86 = scmp.ne.s32.totalorder %s77, %s78
    %p87 = scmp.eq.s32.totalorder %s25, 0
    %p88 = por %p86, %p87
    %p89 = scmp.ne.s32.totalorder %s77, %s78
    %p90 = scmp.eq.s32.totalorder %s26, 1
    %p91 = por %p89, %p90
    %p93 = scmp.ne.s32.totalorder %s78, %s92
    %p94 = scmp.eq.s32.totalorder %s26, 0
    %p95 = por %p93, %p94
    %s97 = sadd.s32 %s96, 1
    %p100 = scmp.eq.s32.totalorder %s20, 1
    %p101 = scmp.ne.s32.totalorder %s96, %s98
    %p102 = scmp.eq.s32.totalorder %s20, 0
    %p103 = por %p101, %p102
    %p104 = scmp.ne.s32.totalorder %s96, %s98
    %p105 = scmp.eq.s32.totalorder %s25, 1
    %p106 = por %p104, %p105
    %p107 = scmp.ne.s32.totalorder %s98, %s99
    %p108 = scmp.eq.s32.totalorder %s25, 0
    %p109 = por %p107, %p108
    %p110 = scmp.ne.s32.totalorder %s98, %s99
    %p111 = scmp.eq.s32.totalorder %s26, 1
    %p112 = por %p110, %p111
    %p114 = scmp.ne.s32.totalorder %s99, %s113
    %p115 = scmp.eq.s32.totalorder %s26, 0
    %p116 = por %p114, %p115
    %s118 = sadd.s32 %s117, 1
    %p121 = scmp.eq.s32.totalorder %s20, 1
    %p122 = scmp.ne.s32.totalorder %s117, %s119
    %p123 = scmp.eq.s32.totalorder %s20, 0
    %p124 = por %p122, %p123
    %p125 = scmp.ne.s32.totalorder %s117, %s119
    %p126 = scmp.eq.s32.totalorder %s25, 1
    %p127 = por %p125, %p126
    %p128 = scmp.ne.s32.totalorder %s119, %s120
    %p129 = scmp.eq.s32.totalorder %s25, 0
    %p130 = por %p128, %p129
    %p131 = scmp.ne.s32.totalorder %s119, %s120
    %p132 = scmp.eq.s32.totalorder %s26, 1
    %p133 = por %p131, %p132
    %p135 = scmp.ne.s32.totalorder %s120, %s134
    %p136 = scmp.eq.s32.totalorder %s26, 0
    %p137 = por %p135, %p136
    %s139 = sadd.s32 %s138, 1
    %p142 = scmp.eq.s32.totalorder %s20, 1
    %p143 = scmp.ne.s32.totalorder %s138, %s140
    %p144 = scmp.eq.s32.totalorder %s20, 0
    %p145 = por %p143, %p144
    %p146 = scmp.ne.s32.totalorder %s138, %s140
    %p147 = scmp.eq.s32.totalorder %s25, 1
    %p148 = por %p146, %p147
    %p149 = scmp.ne.s32.totalorder %s140, %s141
    %p150 = scmp.eq.s32.totalorder %s25, 0
    %p151 = por %p149, %p150
    %p152 = scmp.ne.s32.totalorder %s140, %s141
    %p153 = scmp.eq.s32.totalorder %s26, 1
    %p154 = por %p152, %p153
    %p156 = scmp.ne.s32.totalorder %s141, %s155
    %p157 = scmp.eq.s32.totalorder %s26, 0
    %p158 = por %p156, %p157
    %s159 = ssub.s32 %s20, %s27
    %p160 = scmp.eq.s32.totalorder %s159, 0
    %s162 = sadd.s32 %s161, 1
    %s163 = scalar_select %p160, %s161, %s162
    %p166 = pneg %p160
    %p167 = scmp.eq.s32.totalorder %s20, 1
    %p168 = por %p166, %p167
    %p169 = scmp.ne.s32.totalorder %s161, %s164
    %p170 = scmp.eq.s32.totalorder %s20, 0
    %p171 = por %p169, %p170
    %p172 = scmp.ne.s32.totalorder %s161, %s164
    %p173 = scmp.eq.s32.totalorder %s25, 1
    %p174 = por %p172, %p173
    %p175 = scmp.ne.s32.totalorder %s164, %s165
    %p176 = scmp.eq.s32.totalorder %s25, 0
    %p177 = por %p175, %p176
    %p178 = scmp.ne.s32.totalorder %s164, %s165
    %p179 = scmp.eq.s32.totalorder %s26, 1
    %p180 = por %p178, %p179
    %p182 = scmp.ne.s32.totalorder %s165, %s181
    %p183 = scmp.eq.s32.totalorder %s26, 0
    %p184 = por %p182, %p183
    %s186 = sadd.s32 %s185, 1
    %p189 = scmp.eq.s32.totalorder %s20, 1
    %p190 = scmp.ne.s32.totalorder %s185, %s187
    %p191 = scmp.eq.s32.totalorder %s20, 0
    %p192 = por %p190, %p191
    %p193 = scmp.ne.s32.totalorder %s185, %s187
    %p194 = scmp.eq.s32.totalorder %s25, 1
    %p195 = por %p193, %p194
    %p196 = scmp.ne.s32.totalorder %s187, %s188
    %p197 = scmp.eq.s32.totalorder %s25, 0
    %p198 = por %p196, %p197
    %p199 = scmp.ne.s32.totalorder %s187, %s188
    %p200 = scmp.eq.s32.totalorder %s26, 1
    %p201 = por %p199, %p200
    %p203 = scmp.ne.s32.totalorder %s188, %s202
    %p204 = scmp.eq.s32.totalorder %s26, 0
    %p205 = por %p203, %p204
    %s207 = sadd.s32 %s206, 1
    %p210 = scmp.eq.s32.totalorder %s20, 1
    %p211 = scmp.ne.s32.totalorder %s206, %s208
    %p212 = scmp.eq.s32.totalorder %s20, 0
    %p213 = por %p211, %p212
    %p214 = scmp.ne.s32.totalorder %s206, %s208
    %p215 = scmp.eq.s32.totalorder %s25, 1
    %p216 = por %p214, %p215
    %p217 = scmp.ne.s32.totalorder %s208, %s209
    %p218 = scmp.eq.s32.totalorder %s25, 0
    %p219 = por %p217, %p218
    %p220 = scmp.ne.s32.totalorder %s208, %s209
    %p221 = scmp.eq.s32.totalorder %s26, 1
    %p222 = por %p220, %p221
    %p224 = scmp.ne.s32.totalorder %s209, %s223
    %p225 = scmp.eq.s32.totalorder %s26, 0
    %p226 = por %p224, %p225
    %s228 = sadd.s32 %s227, 1
    %p231 = scmp.eq.s32.totalorder %s20, 1
    %p232 = scmp.ne.s32.totalorder %s227, %s229
    %p233 = scmp.eq.s32.totalorder %s20, 0
    %p234 = por %p232, %p233
    %p235 = scmp.ne.s32.totalorder %s227, %s229
    %p236 = scmp.eq.s32.totalorder %s25, 1
    %p237 = por %p235, %p236
    %p238 = scmp.ne.s32.totalorder %s229, %s230
    %p239 = scmp.eq.s32.totalorder %s25, 0
    %p240 = por %p238, %p239
    %p241 = scmp.ne.s32.totalorder %s229, %s230
    %p242 = scmp.eq.s32.totalorder %s26, 1
    %p243 = por %p241, %p242
    %p245 = scmp.ne.s32.totalorder %s230, %s244
    %p246 = scmp.eq.s32.totalorder %s26, 0
    %p247 = por %p245, %p246
    %s249 = sadd.s32 %s248, 1
    %p252 = scmp.eq.s32.totalorder %s20, 1
    %p253 = scmp.ne.s32.totalorder %s248, %s250
    %p254 = scmp.eq.s32.totalorder %s20, 0
    %p255 = por %p253, %p254
    %p256 = scmp.ne.s32.totalorder %s248, %s250
    %p257 = scmp.eq.s32.totalorder %s25, 1
    %p258 = por %p256, %p257
    %p259 = scmp.ne.s32.totalorder %s250, %s251
    %p260 = scmp.eq.s32.totalorder %s25, 0
    %p261 = por %p259, %p260
    %p262 = scmp.ne.s32.totalorder %s250, %s251
    %p263 = scmp.eq.s32.totalorder %s26, 1
    %p264 = por %p262, %p263
    %p266 = scmp.ne.s32.totalorder %s251, %s265
    %p267 = scmp.eq.s32.totalorder %s26, 0
    %p268 = por %p266, %p267
    %s270 = sadd.s32 %s269, 1
    %p273 = scmp.eq.s32.totalorder %s20, 1
    %p274 = scmp.ne.s32.totalorder %s269, %s271
    %p275 = scmp.eq.s32.totalorder %s20, 0
    %p276 = por %p274, %p275
    %p277 = scmp.ne.s32.totalorder %s269, %s271
    %p278 = scmp.eq.s32.totalorder %s25, 1
    %p279 = por %p277, %p278
    %p280 = scmp.ne.s32.totalorder %s271, %s272
    %p281 = scmp.eq.s32.totalorder %s25, 0
    %p282 = por %p280, %p281
    %p283 = scmp.ne.s32.totalorder %s271, %s272
    %p284 = scmp.eq.s32.totalorder %s26, 1
    %p285 = por %p283, %p284
    %p287 = scmp.ne.s32.totalorder %s272, %s286
    %p288 = scmp.eq.s32.totalorder %s26, 0
    %p289 = por %p287, %p288
    %s291 = sadd.s32 %s290, 1
    %p294 = scmp.eq.s32.totalorder %s20, 1
    %p295 = scmp.ne.s32.totalorder %s290, %s292
    %p296 = scmp.eq.s32.totalorder %s20, 0
    %p297 = por %p295, %p296
    %p298 = scmp.ne.s32.totalorder %s290, %s292
    %p299 = scmp.eq.s32.totalorder %s25, 1
    %p300 = por %p298, %p299
    %p301 = scmp.ne.s32.totalorder %s292, %s293
    %p302 = scmp.eq.s32.totalorder %s25, 0
    %p303 = por %p301, %p302
    %p304 = scmp.ne.s32.totalorder %s292, %s293
    %p305 = scmp.eq.s32.totalorder %s26, 1
    %p306 = por %p304, %p305
    %p308 = scmp.ne.s32.totalorder %s293, %s307
    %p309 = scmp.eq.s32.totalorder %s26, 0
    %p310 = por %p308, %p309
    %s312 = sadd.s32 %s311, 1
    %p315 = scmp.eq.s32.totalorder %s20, 1
    %p316 = scmp.ne.s32.totalorder %s311, %s313
    %p317 = scmp.eq.s32.totalorder %s20, 0
    %p318 = por %p316, %p317
    %p319 = scmp.ne.s32.totalorder %s311, %s313
    %p320 = scmp.eq.s32.totalorder %s25, 1
    %p321 = por %p319, %p320
    %p322 = scmp.ne.s32.totalorder %s313, %s314
    %p323 = scmp.eq.s32.totalorder %s25, 0
    %p324 = por %p322, %p323
    %p325 = scmp.ne.s32.totalorder %s313, %s314
    %p326 = scmp.eq.s32.totalorder %s26, 1
    %p327 = por %p325, %p326
    %p329 = scmp.ne.s32.totalorder %s314, %s328
    %p330 = scmp.eq.s32.totalorder %s26, 0
    %p331 = por %p329, %p330
    %s332 = ssub.s32 %s20, %s27
    %p333 = scmp.eq.s32.totalorder %s332, 0
    %s335 = sadd.s32 %s334, 1
    %s336 = scalar_select %p333, %s334, %s335
    %p339 = pneg %p333
    %p340 = scmp.eq.s32.totalorder %s20, 1
    %p341 = por %p339, %p340
    %p342 = scmp.ne.s32.totalorder %s334, %s337
    %p343 = scmp.eq.s32.totalorder %s20, 0
    %p344 = por %p342, %p343
    %p345 = scmp.ne.s32.totalorder %s334, %s337
    %p346 = scmp.eq.s32.totalorder %s25, 1
    %p347 = por %p345, %p346
    %p348 = scmp.ne.s32.totalorder %s337, %s338
    %p349 = scmp.eq.s32.totalorder %s25, 0
    %p350 = por %p348, %p349
    %p351 = scmp.ne.s32.totalorder %s337, %s338
    %p352 = scmp.eq.s32.totalorder %s26, 1
    %p353 = por %p351, %p352
    %p355 = scmp.ne.s32.totalorder %s338, %s354
    %p356 = scmp.eq.s32.totalorder %s26, 0
    %p357 = por %p355, %p356
    %p358 = scmp.le.s32.totalorder 1, %s20
    %p359 = scmp.lt.s32.totalorder %s20, 3
    %p360 = pnand %p358, %p359
    %p361 = pneg %p360
    // Predicated region
    $region9: #{cifar_se_preact_resnet_forward.4} parent=5 // pred_check
      _
    $region10: #{cifar_se_preact_resnet_forward.4} parent=5 // pred_check_branch
      %363 = sbr.rel (%p360) target = $region12
    $region11: #{cifar_se_preact_resnet_forward.4} parent=5 // pred_region
      %s364 = ssub.s32 %s20, 1
      // Predicated region
      $region13: #{cifar_se_preact_resnet_forward.4} parent=11 // pred_check
        %p365 = pneg %p67
      $region14: #{cifar_se_preact_resnet_forward.4} parent=11 // pred_check_branch
        %367 = sbr.rel (%p365) target = $region16
      $region15: #{cifar_se_preact_resnet_forward.4} parent=11 // pred_region
        _
      $region16: #{cifar_se_preact_resnet_forward.4} parent=11 // pred_fallthru
        _
      // Predicated region
      $region17: #{cifar_se_preact_resnet_forward.4} parent=11 // pred_check
        %p368 = pneg %p88
      $region18: #{cifar_se_preact_resnet_forward.4} parent=11 // pred_check_branch
        %370 = sbr.rel (%p368) target = $region20
      $region19: #{cifar_se_preact_resnet_forward.4} parent=11 // pred_region
        _
      $region20: #{cifar_se_preact_resnet_forward.4} parent=11 // pred_fallthru
        _
      // Predicated region
      $region21: #{cifar_se_preact_resnet_forward.4} parent=11 // pred_check
        %p371 = pneg %p109
      $region22: #{cifar_se_preact_resnet_forward.4} parent=11 // pred_check_branch
        %373 = sbr.rel (%p371) target = $region24
      $region23: #{cifar_se_preact_resnet_forward.4} parent=11 // pred_region
        _
      $region24: #{cifar_se_preact_resnet_forward.4} parent=11 // pred_fallthru
        _
      // Predicated region
      $region25: #{cifar_se_preact_resnet_forward.4} parent=11 // pred_check
        %p374 = pneg %p130
      $region26: #{cifar_se_preact_resnet_forward.4} parent=11 // pred_check_branch
        %376 = sbr.rel (%p374) target = $region28
      $region27: #{cifar_se_preact_resnet_forward.4} parent=11 // pred_region
        _
      $region28: #{cifar_se_preact_resnet_forward.4} parent=11 // pred_fallthru
        _
      // Predicated region
      $region29: #{cifar_se_preact_resnet_forward.4} parent=11 // pred_check
        %p377 = pneg %p151
      $region30: #{cifar_se_preact_resnet_forward.4} parent=11 // pred_check_branch
        %379 = sbr.rel (%p377) target = $region32
      $region31: #{cifar_se_preact_resnet_forward.4} parent=11 // pred_region
        _
      $region32: #{cifar_se_preact_resnet_forward.4} parent=11 // pred_fallthru
        _
      // Predicated region
      $region33: #{cifar_se_preact_resnet_forward.4} parent=11 // pred_check
        %p380 = pneg %p198
      $region34: #{cifar_se_preact_resnet_forward.4} parent=11 // pred_check_branch
        %382 = sbr.rel (%p380) target = $region36
      $region35: #{cifar_se_preact_resnet_forward.4} parent=11 // pred_region
        _
      $region36: #{cifar_se_preact_resnet_forward.4} parent=11 // pred_fallthru
        _
      // Predicated region
      $region37: #{cifar_se_preact_resnet_forward.4} parent=11 // pred_check
        %p383 = pneg %p219
      $region38: #{cifar_se_preact_resnet_forward.4} parent=11 // pred_check_branch
        %385 = sbr.rel (%p383) target = $region40
      $region39: #{cifar_se_preact_resnet_forward.4} parent=11 // pred_region
        _
      $region40: #{cifar_se_preact_resnet_forward.4} parent=11 // pred_fallthru
        _
      // Predicated region
      $region41: #{cifar_se_preact_resnet_forward.4} parent=11 // pred_check
        %p386 = pneg %p240
      $region42: #{cifar_se_preact_resnet_forward.4} parent=11 // pred_check_branch
        %388 = sbr.rel (%p386) target = $region44
      $region43: #{cifar_se_preact_resnet_forward.4} parent=11 // pred_region
        _
      $region44: #{cifar_se_preact_resnet_forward.4} parent=11 // pred_fallthru
        _
      // Predicated region
      $region45: #{cifar_se_preact_resnet_forward.4} parent=11 // pred_check
        %p389 = pneg %p261
      $region46: #{cifar_se_preact_resnet_forward.4} parent=11 // pred_check_branch
        %391 = sbr.rel (%p389) target = $region48
      $region47: #{cifar_se_preact_resnet_forward.4} parent=11 // pred_region
        _
      $region48: #{cifar_se_preact_resnet_forward.4} parent=11 // pred_fallthru
        _
      // Predicated region
      $region49: #{cifar_se_preact_resnet_forward.4} parent=11 // pred_check
        %p392 = pneg %p282
      $region50: #{cifar_se_preact_resnet_forward.4} parent=11 // pred_check_branch
        %394 = sbr.rel (%p392) target = $region52
      $region51: #{cifar_se_preact_resnet_forward.4} parent=11 // pred_region
        _
      $region52: #{cifar_se_preact_resnet_forward.4} parent=11 // pred_fallthru
        _
      // Predicated region
      $region53: #{cifar_se_preact_resnet_forward.4} parent=11 // pred_check
        %p395 = pneg %p303
      $region54: #{cifar_se_preact_resnet_forward.4} parent=11 // pred_check_branch
        %397 = sbr.rel (%p395) target = $region56
      $region55: #{cifar_se_preact_resnet_forward.4} parent=11 // pred_region
        _
      $region56: #{cifar_se_preact_resnet_forward.4} parent=11 // pred_fallthru
        _
      // Predicated region
      $region57: #{cifar_se_preact_resnet_forward.4} parent=11 // pred_check
        %p398 = pneg %p324
      $region58: #{cifar_se_preact_resnet_forward.4} parent=11 // pred_check_branch
        %400 = sbr.rel (%p398) target = $region60
      $region59: #{cifar_se_preact_resnet_forward.4} parent=11 // pred_region
        _
      $region60: #{cifar_se_preact_resnet_forward.4} parent=11 // pred_fallthru
        _
    $region12: #{cifar_se_preact_resnet_forward.4} parent=5 // pred_fallthru
      _
    %p401 = scmp.lt.s32.totalorder %s20, 2
    // Predicated region
    $region61: #{cifar_se_preact_resnet_forward.4} parent=5 // pred_check
      %p402 = pneg %p401
    $region62: #{cifar_se_preact_resnet_forward.4} parent=5 // pred_check_branch
      %404 = sbr.rel (%p402) target = $region64
    $region63: #{cifar_se_preact_resnet_forward.4} parent=5 // pred_region
      // Predicated region
      $region65: #{cifar_se_preact_resnet_forward.4} parent=63 // pred_check
        %p405 = pneg %p40
      $region66: #{cifar_se_preact_resnet_forward.4} parent=63 // pred_check_branch
        %407 = sbr.rel (%p405) target = $region68
      $region67: #{cifar_se_preact_resnet_forward.4} parent=63 // pred_region
        %p408 = scmp.lt.s32.totalorder %s20, 1
        %s409 = scalar_select %p408, %s20, 1
        %s410 = smul.addr %s409, 12
        %s411 = smul.addr %s410, 4
        %s412 = scalar_lea.vmem %s0, %s411
      $region68: #{cifar_se_preact_resnet_forward.4} parent=63 // pred_fallthru
        _
      // Predicated region
      $region69: #{cifar_se_preact_resnet_forward.4} parent=63 // pred_check
        %p413 = pneg %p171
      $region70: #{cifar_se_preact_resnet_forward.4} parent=63 // pred_check_branch
        %415 = sbr.rel (%p413) target = $region72
      $region71: #{cifar_se_preact_resnet_forward.4} parent=63 // pred_region
        %p416 = scmp.lt.s32.totalorder %s20, 1
        %s417 = scalar_select %p416, %s20, 1
        %s418 = smul.addr %s417, 10
        %s419 = smul.addr %s418, 4
        %s420 = scalar_lea.vmem %s6, %s419
      $region72: #{cifar_se_preact_resnet_forward.4} parent=63 // pred_fallthru
        _
    $region64: #{cifar_se_preact_resnet_forward.4} parent=5 // pred_fallthru
      _
    %p421 = scmp.le.s32.totalorder 1, %s20
    %p422 = scmp.lt.s32.totalorder %s20, 3
    %p423 = pnand %p421, %p422
    %p424 = pneg %p423
    // Predicated region
    $region73: #{cifar_se_preact_resnet_forward.4} parent=5 // pred_check
      _
    $region74: #{cifar_se_preact_resnet_forward.4} parent=5 // pred_check_branch
      %426 = sbr.rel (%p423) target = $region76
    $region75: #{cifar_se_preact_resnet_forward.4} parent=5 // pred_region
      %s427 = ssub.s32 %s20, 1
      %p428 = scmp.lt.s32.totalorder %s25, 1
      %s429 = scalar_select %p428, %s25, 1
      %s430 = smul.addr %s429, 12
      %s431 = smul.addr %s430, 4
      %s432 = scalar_lea.vmem %s0, %s431
      %p433 = pneg %p46
      %p434 = pneg %p43
      %p435 = pneg %p67
      %p436 = pneg %p64
      %p437 = pneg %p88
      %p438 = pneg %p85
      %p439 = pneg %p109
      %p440 = pneg %p106
      %p441 = pneg %p130
      %p442 = pneg %p127
      %p443 = pneg %p151
      %p444 = pneg %p148
      %p445 = scmp.lt.s32.totalorder %s25, 1
      %s446 = scalar_select %p445, %s25, 1
      %s447 = smul.addr %s446, 10
      %s448 = smul.addr %s447, 4
      %s449 = scalar_lea.vmem %s6, %s448
      %p450 = pneg %p177
      %p451 = pneg %p174
      %p452 = pneg %p198
      %p453 = pneg %p195
      %p454 = pneg %p219
      %p455 = pneg %p216
      %p456 = pneg %p240
      %p457 = pneg %p237
      %p458 = pneg %p261
      %p459 = pneg %p258
      %p460 = pneg %p282
      %p461 = pneg %p279
      %p462 = pneg %p303
      %p463 = pneg %p300
      %p464 = pneg %p324
      %p465 = pneg %p321
      %p466 = pneg %p350
      %p467 = pneg %p347
      %p468 = scmp.lt.s32.totalorder %s25, 1
      %s469 = scalar_select %p468, %s25, 1
      %s470 = smul.addr %s469, 10
      %s471 = smul.addr %s470, 4
      %s472 = scalar_lea.vmem %s14, %s471
      %p473 = scmp.lt.s32.totalorder %s25, 1
      %s474 = scalar_select %p473, %s25, 1
      %s475 = smul.addr %s474, 12
      %s476 = smul.addr %s475, 4
      %s477 = scalar_lea.vmem %s0, %s476
      %p478 = scmp.lt.s32.totalorder %s25, 1
      %s479 = scalar_select %p478, %s25, 1
      %s480 = smul.addr %s479, 10
      %s481 = smul.addr %s480, 4
      %s482 = scalar_lea.vmem %s6, %s481
      %p483 = scmp.lt.s32.totalorder %s25, 1
      %s484 = scalar_select %p483, %s25, 1
      %s485 = smul.addr %s484, 10
      %s486 = smul.addr %s485, 4
      %s487 = scalar_lea.vmem %s14, %s486
      %v489 = vld [vmem:[%s1] sm:$0xff]
      %v490 = vld [vmem:[%s1 + $0x8] sm:$0xff]
      %v491 = vld [vmem:[%s1 + $0x10] sm:$0xff]
      %v492 = vld [vmem:[%s1 + $0x18] sm:$0xff]
      %v493 = vld [vmem:[%s1 + $0x20] sm:$0xff]
      %v494 = vld [vmem:[%s1 + $0x28] sm:$0xff]
      %v495 = vld [vmem:[%s1 + $0x30] sm:$0xff]
      %v496 = vld [vmem:[%s1 + $0x38] sm:$0xff]
      %v497 = vld [vmem:[%s1 + $0x40] sm:$0xff]
      %v498 = vld [vmem:[%s1 + $0x48] sm:$0xff]
      %v499 = vld [vmem:[%s477] sm:$0xf]
      %v500 = vld [vmem:[%s477 + $0x4] sm:$0xf]
      %v501 = vld [vmem:[%s477 + $0x8] sm:$0xf]
      %v502 = vld [vmem:[%s477 + $0xc] sm:$0xf]
      %v503 = vld [vmem:[%s477 + $0x10] sm:$0xf]
      %v504 = vld [vmem:[%s477 + $0x14] sm:$0xf]
      %v505 = vld [vmem:[%s477 + $0x18] sm:$0xf]
      %v506 = vld [vmem:[%s477 + $0x1c] sm:$0xf]
      %v507 = vld [vmem:[%s477 + $0x20] sm:$0xf]
      %v508 = vld [vmem:[%s477 + $0x24] sm:$0xf]
      %v509 = vld [vmem:[%s477 + $0x28] sm:$0xf]
      %v510 = vld [vmem:[%s477 + $0x2c] sm:$0x3]
      %v521 = vunpack.c.l.b16 %v499
      %v522 = vunpack.c.l.b16 %v500
      %v523 = vunpack.c.l.b16 %v501
      %v524 = vunpack.c.l.b16 %v502
      %v525 = vunpack.c.l.b16 %v503
      %v526 = vunpack.c.l.b16 %v504
      %v527 = vunpack.c.l.b16 %v505
      %v528 = vunpack.c.l.b16 %v506
      %v529 = vunpack.c.l.b16 %v507
      %v530 = vunpack.c.l.b16 %v508
      %v531 = vpack.c.b16 %v522, %v521
      %v532 = vpack.c.b16 %v524, %v523
      %v533 = vpack.c.b16 %v526, %v525
      %v534 = vpack.c.b16 %v528, %v527
      %v535 = vpack.c.b16 %v530, %v529
      %v542 = vunpack.c.l.b16 %v509
      %v543 = vpack.c.b16 %v542, %v542
      %vm544 = vsmask.f32 7424
      %v546 = vshrl.u32 %v531, 16
      %v548 = vshll.u32 %v531, 16
      %v550 = vrot.slane %v548, 1
      %v551 = vor.u32 %v546, %v550
      %v553 = vshll.u32 %v532, 16
      %v555 = vrot.slane %v553, 1
      %v556 = vsel %vm544, %v551, %v555
      %v557 = vshrl.u32 %v532, 16
      %v559 = vor.u32 %v557, %v555
      %v561 = vshll.u32 %v533, 16
      %v563 = vrot.slane %v561, 1
      %v564 = vsel %vm544, %v559, %v563
      %v565 = vshrl.u32 %v533, 16
      %v567 = vor.u32 %v565, %v563
      %v569 = vshll.u32 %v534, 16
      %v571 = vrot.slane %v569, 1
      %v572 = vsel %vm544, %v567, %v571
      %v573 = vshrl.u32 %v534, 16
      %v575 = vor.u32 %v573, %v571
      %v577 = vshll.u32 %v535, 16
      %v579 = vrot.slane %v577, 1
      %v580 = vsel %vm544, %v575, %v579
      %v581 = vshrl.u32 %v535, 16
      %v583 = vor.u32 %v581, %v579
      %v585 = vshll.u32 %v543, 16
      %v587 = vrot.slane %v585, 1
      %v588 = vsel %vm544, %v583, %v587
      %v595 = vunpack.c.l.b16 %v510
      %v596 = vpack.c.b16 %v523, %v522
      %v597 = vpack.c.b16 %v525, %v524
      %v598 = vpack.c.b16 %v527, %v526
      %v599 = vpack.c.b16 %v529, %v528
      %v600 = vpack.c.b16 %v542, %v530
      %v601 = vpack.c.b16 %v595, %v595
      %vm602 = vcmask 1046528
      %v603 = vrot.slane %v596, 1
      %v604 = vrot.slane %v597, 1
      %v605 = vsel %vm602, %v603, %v604
      %v606 = vrot.slane %v598, 1
      %v607 = vsel %vm602, %v604, %v606
      %v608 = vrot.slane %v599, 1
      %v609 = vsel %vm602, %v606, %v608
      %v610 = vrot.slane %v600, 1
      %v611 = vsel %vm602, %v608, %v610
      %v612 = vrot.slane %v601, 1
      %v613 = vsel %vm602, %v610, %v612
      %vm619 = vsmask.f32 6400
      %v621 = vshrl.u32 %v596, 16
      %v623 = vrot.slane %v621, 1
      %v624 = vshll.u32 %v596, 16
      %v626 = vrot.slane %v624, 2
      %v627 = vor.u32 %v623, %v626
      %v629 = vshrl.u32 %v597, 16
      %v631 = vrot.slane %v629, 1
      %v632 = vshll.u32 %v597, 16
      %v634 = vrot.slane %v632, 2
      %v635 = vor.u32 %v631, %v634
      %v636 = vsel %vm619, %v627, %v635
      %v638 = vshrl.u32 %v598, 16
      %v640 = vrot.slane %v638, 1
      %v641 = vshll.u32 %v598, 16
      %v643 = vrot.slane %v641, 2
      %v644 = vor.u32 %v640, %v643
      %v645 = vsel %vm619, %v635, %v644
      %v647 = vshrl.u32 %v599, 16
      %v649 = vrot.slane %v647, 1
      %v650 = vshll.u32 %v599, 16
      %v652 = vrot.slane %v650, 2
      %v653 = vor.u32 %v649, %v652
      %v654 = vsel %vm619, %v644, %v653
      %v656 = vshrl.u32 %v600, 16
      %v658 = vrot.slane %v656, 1
      %v659 = vshll.u32 %v600, 16
      %v661 = vrot.slane %v659, 2
      %v662 = vor.u32 %v658, %v661
      %v663 = vsel %vm619, %v653, %v662
      %v665 = vshrl.u32 %v601, 16
      %v667 = vrot.slane %v665, 1
      %v668 = vshll.u32 %v601, 16
      %v670 = vrot.slane %v668, 2
      %v671 = vor.u32 %v667, %v670
      %v672 = vsel %vm619, %v662, %v671
      %v678 = vld [vmem:[%s2] sm:$0xf]
      %v679 = vld [vmem:[%s2 + $0x4] sm:$0xf]
      %v680 = vld [vmem:[%s2 + $0x8] sm:$0xf]
      %v681 = vld [vmem:[%s2 + $0xc] sm:$0xf]
      %v682 = vld [vmem:[%s2 + $0x10] sm:$0xf]
      %v683 = vld [vmem:[%s2 + $0x14] sm:$0xf]
      %v684 = vld [vmem:[%s2 + $0x18] sm:$0xf]
      %v685 = vld [vmem:[%s2 + $0x1c] sm:$0xf]
      %v686 = vld [vmem:[%s2 + $0x20] sm:$0xf]
      %v687 = vld [vmem:[%s2 + $0x24] sm:$0xf]
      %v688 = vld [vmem:[%s2 + $0x28] sm:$0xf]
      %v689 = vld [vmem:[%s2 + $0x2c] sm:$0xf]
      %v690 = vld [vmem:[%s2 + $0x30] sm:$0xf]
      %v691 = vld [vmem:[%s2 + $0x34] sm:$0xf]
      %v692 = vld [vmem:[%s2 + $0x38] sm:$0xf]
      %v693 = vld [vmem:[%s2 + $0x3c] sm:$0xf]
      %v694 = vld [vmem:[%s2 + $0x40] sm:$0xf]
      %v695 = vld [vmem:[%s2 + $0x44] sm:$0xf]
      %v696 = vld [vmem:[%s2 + $0x48] sm:$0xf]
      %v697 = vld [vmem:[%s2 + $0x4c] sm:$0xf]
      %v698 = vld [vmem:[%s2 + $0x50] sm:$0xf]
      %v699 = vld [vmem:[%s2 + $0x54] sm:$0xf]
      %v700 = vld [vmem:[%s2 + $0x58] sm:$0xf]
      %v701 = vld [vmem:[%s2 + $0x5c] sm:$0xf]
      %v702 = vld [vmem:[%s2 + $0x60] sm:$0xf]
      %v703 = vld [vmem:[%s2 + $0x64] sm:$0xf]
      %v704 = vld [vmem:[%s2 + $0x68] sm:$0xf]
      %v705 = vld [vmem:[%s2 + $0x6c] sm:$0xf]
      %v706 = vld [vmem:[%s2 + $0x70] sm:$0xf]
      %v707 = vld [vmem:[%s2 + $0x74] sm:$0xf]
      %v708 = vld [vmem:[%s2 + $0x78] sm:$0xf]
      %v709 = vld [vmem:[%s2 + $0x7c] sm:$0xf]
      %v710 = vld [vmem:[%s2 + $0x80] sm:$0xf]
      %v711 = vld [vmem:[%s2 + $0x84] sm:$0xf]
      %v712 = vld [vmem:[%s2 + $0x88] sm:$0xf]
      %v713 = vld [vmem:[%s2 + $0x8c] sm:$0xf]
      %v714 = vld [vmem:[%s2 + $0x90] sm:$0xf]
      %v715 = vld [vmem:[%s2 + $0x94] sm:$0xf]
      %v716 = vld [vmem:[%s2 + $0x98] sm:$0xf]
      %v717 = vld [vmem:[%s2 + $0x9c] sm:$0xf]
      %v718 = vld [vmem:[%s2 + $0xa0] sm:$0xf]
      %v719 = vld [vmem:[%s2 + $0xa4] sm:$0xf]
      %v720 = vld [vmem:[%s2 + $0xa8] sm:$0xf]
      %v721 = vld [vmem:[%s2 + $0xac] sm:$0xf]
      %v722 = vld [vmem:[%s2 + $0xb0] sm:$0xf]
      %v723 = vld [vmem:[%s2 + $0xb4] sm:$0xf]
      %v724 = vld [vmem:[%s2 + $0xb8] sm:$0xf]
      %v725 = vld [vmem:[%s2 + $0xbc] sm:$0xf]
      %v726 = vld [vmem:[%s2 + $0xc0] sm:$0xf]
      %v727 = vld [vmem:[%s2 + $0xc4] sm:$0xf]
      %v728 = vld [vmem:[%s2 + $0xc8] sm:$0xf]
      %v729 = vld [vmem:[%s2 + $0xcc] sm:$0xf]
      %v730 = vld [vmem:[%s2 + $0xd0] sm:$0xf]
      %v731 = vld [vmem:[%s2 + $0xd4] sm:$0xf]
      %v732 = vld [vmem:[%s2 + $0xd8] sm:$0xf]
      %v733 = vld [vmem:[%s2 + $0xdc] sm:$0xf]
      %v734 = vld [vmem:[%s2 + $0xe0] sm:$0xf]
      %v735 = vld [vmem:[%s2 + $0xe4] sm:$0xf]
      %v736 = vld [vmem:[%s2 + $0xe8] sm:$0xf]
      %v737 = vld [vmem:[%s2 + $0xec] sm:$0xf]
      %v738 = vld [vmem:[%s2 + $0xf0] sm:$0xf]
      %v739 = vld [vmem:[%s2 + $0xf4] sm:$0xf]
      %v740 = vld [vmem:[%s2 + $0xf8] sm:$0xf]
      %v741 = vld [vmem:[%s2 + $0xfc] sm:$0xf]
      %v806 = vunpack.c.l.b16 %v678
      %v807 = vunpack.c.l.b16 %v679
      %v808 = vunpack.c.l.b16 %v680
      %v809 = vunpack.c.l.b16 %v681
      %v810 = vunpack.c.l.b16 %v682
      %v811 = vunpack.c.l.b16 %v683
      %v812 = vunpack.c.l.b16 %v684
      %v813 = vunpack.c.l.b16 %v685
      %v814 = vunpack.c.l.b16 %v686
      %v815 = vunpack.c.l.b16 %v687
      %v816 = vunpack.c.l.b16 %v688
      %v817 = vunpack.c.l.b16 %v689
      %v818 = vunpack.c.l.b16 %v690
      %v819 = vunpack.c.l.b16 %v691
      %v820 = vunpack.c.l.b16 %v692
      %v821 = vunpack.c.l.b16 %v693
      %v822 = vunpack.c.l.b16 %v694
      %v823 = vunpack.c.l.b16 %v695
      %v824 = vunpack.c.l.b16 %v696
      %v825 = vunpack.c.l.b16 %v697
      %v826 = vunpack.c.l.b16 %v698
      %v827 = vunpack.c.l.b16 %v699
      %v828 = vunpack.c.l.b16 %v700
      %v829 = vunpack.c.l.b16 %v701
      %v830 = vunpack.c.l.b16 %v702
      %v831 = vunpack.c.l.b16 %v703
      %v832 = vunpack.c.l.b16 %v704
      %v833 = vunpack.c.l.b16 %v705
      %v834 = vunpack.c.l.b16 %v706
      %v835 = vunpack.c.l.b16 %v707
      %v836 = vunpack.c.l.b16 %v708
      %v837 = vunpack.c.l.b16 %v709
      %v838 = vunpack.c.l.b16 %v710
      %v839 = vunpack.c.l.b16 %v711
      %v840 = vunpack.c.l.b16 %v712
      %v841 = vunpack.c.l.b16 %v713
      %v842 = vunpack.c.l.b16 %v714
      %v843 = vunpack.c.l.b16 %v715
      %v844 = vunpack.c.l.b16 %v716
      %v845 = vunpack.c.l.b16 %v717
      %v846 = vunpack.c.l.b16 %v718
      %v847 = vunpack.c.l.b16 %v719
      %v848 = vunpack.c.l.b16 %v720
      %v849 = vunpack.c.l.b16 %v721
      %v850 = vunpack.c.l.b16 %v722
      %v851 = vunpack.c.l.b16 %v723
      %v852 = vunpack.c.l.b16 %v724
      %v853 = vunpack.c.l.b16 %v725
      %v854 = vunpack.c.l.b16 %v726
      %v855 = vunpack.c.l.b16 %v727
      %v856 = vunpack.c.l.b16 %v728
      %v857 = vunpack.c.l.b16 %v729
      %v858 = vunpack.c.l.b16 %v730
      %v859 = vunpack.c.l.b16 %v731
      %v860 = vunpack.c.l.b16 %v732
      %v861 = vunpack.c.l.b16 %v733
      %v862 = vunpack.c.l.b16 %v734
      %v863 = vunpack.c.l.b16 %v735
      %v864 = vunpack.c.l.b16 %v736
      %v865 = vunpack.c.l.b16 %v737
      %v866 = vunpack.c.l.b16 %v738
      %v867 = vunpack.c.l.b16 %v739
      %v868 = vunpack.c.l.b16 %v740
      %v869 = vunpack.c.l.b16 %v741
      %v870 = vpack.c.b16 %v807, %v806
      %v871 = vpack.c.b16 %v809, %v808
      %v872 = vpack.c.b16 %v811, %v810
      %v873 = vpack.c.b16 %v813, %v812
      %v874 = vpack.c.b16 %v815, %v814
      %v875 = vpack.c.b16 %v817, %v816
      %v876 = vpack.c.b16 %v819, %v818
      %v877 = vpack.c.b16 %v821, %v820
      %v878 = vpack.c.b16 %v823, %v822
      %v879 = vpack.c.b16 %v825, %v824
      %v880 = vpack.c.b16 %v827, %v826
      %v881 = vpack.c.b16 %v829, %v828
      %v882 = vpack.c.b16 %v831, %v830
      %v883 = vpack.c.b16 %v833, %v832
      %v884 = vpack.c.b16 %v835, %v834
      %v885 = vpack.c.b16 %v837, %v836
      %v886 = vpack.c.b16 %v839, %v838
      %v887 = vpack.c.b16 %v841, %v840
      %v888 = vpack.c.b16 %v843, %v842
      %v889 = vpack.c.b16 %v845, %v844
      %v890 = vpack.c.b16 %v847, %v846
      %v891 = vpack.c.b16 %v849, %v848
      %v892 = vpack.c.b16 %v851, %v850
      %v893 = vpack.c.b16 %v853, %v852
      %v894 = vpack.c.b16 %v855, %v854
      %v895 = vpack.c.b16 %v857, %v856
      %v896 = vpack.c.b16 %v859, %v858
      %v897 = vpack.c.b16 %v861, %v860
      %v898 = vpack.c.b16 %v863, %v862
      %v899 = vpack.c.b16 %v865, %v864
      %v900 = vpack.c.b16 %v867, %v866
      %v901 = vpack.c.b16 %v869, %v868
      %934 = vmatpush.bf16.msra.mxu0 %v877
      %935 = vmatpush.bf16.msra.mxu0 %v876
      %936 = vmatpush.bf16.msra.mxu0 %v875
      %937 = vmatpush.bf16.msra.mxu0 %v874
      %938 = vmatpush.bf16.msra.mxu0 %v873
      %939 = vmatpush.bf16.msra.mxu0 %v872
      %940 = vmatpush.bf16.msra.mxu0 %v871
      %941 = vmatpush.bf16.msra.mxu0 %v870
      %942 = vmatmul.bf16.gmra.mxu0 %v531
      %v943 = vpop.f32.mrf.mxu0
      %v944 = vadd.f32 0.0, %v943
      %v945 = vpop.f32.mrf.mxu0
      %v946 = vadd.f32 0.0, %v945
      %947 = vmatmul.bf16.gmra.mxu0 %v532
      %v948 = vpop.f32.mrf.mxu0
      %v949 = vadd.f32 0.0, %v948
      %v950 = vpop.f32.mrf.mxu0
      %v951 = vadd.f32 0.0, %v950
      %952 = vmatmul.bf16.gmra.mxu0 %v533
      %v953 = vpop.f32.mrf.mxu0
      %v954 = vadd.f32 0.0, %v953
      %v955 = vpop.f32.mrf.mxu0
      %v956 = vadd.f32 0.0, %v955
      %957 = vmatmul.bf16.gmra.mxu0 %v534
      %v958 = vpop.f32.mrf.mxu0
      %v959 = vadd.f32 0.0, %v958
      %v960 = vpop.f32.mrf.mxu0
      %v961 = vadd.f32 0.0, %v960
      %962 = vmatmul.bf16.gmra.mxu0 %v535
      %v963 = vpop.f32.mrf.mxu0
      %v964 = vadd.f32 0.0, %v963
      %v965 = vpop.f32.mrf.mxu0
      %v966 = vadd.f32 0.0, %v965
      %967 = vdwg.mxu0
      %968 = vmatpush.bf16.msra.mxu0 %v885
      %969 = vmatpush.bf16.msra.mxu0 %v884
      %970 = vmatpush.bf16.msra.mxu0 %v883
      %971 = vmatpush.bf16.msra.mxu0 %v882
      %972 = vmatpush.bf16.msra.mxu0 %v881
      %973 = vmatpush.bf16.msra.mxu0 %v880
      %974 = vmatpush.bf16.msra.mxu0 %v879
      %975 = vmatpush.bf16.msra.mxu0 %v878
      %976 = vmatmul.bf16.gmra.mxu0 %v556
      %v977 = vpop.f32.mrf.mxu0
      %v978 = vadd.f32 %v944, %v977
      %v979 = vpop.f32.mrf.mxu0
      %v980 = vadd.f32 %v946, %v979
      %981 = vmatmul.bf16.gmra.mxu0 %v564
      %v982 = vpop.f32.mrf.mxu0
      %v983 = vadd.f32 %v949, %v982
      %v984 = vpop.f32.mrf.mxu0
      %v985 = vadd.f32 %v951, %v984
      %986 = vmatmul.bf16.gmra.mxu0 %v572
      %v987 = vpop.f32.mrf.mxu0
      %v988 = vadd.f32 %v954, %v987
      %v989 = vpop.f32.mrf.mxu0
      %v990 = vadd.f32 %v956, %v989
      %991 = vmatmul.bf16.gmra.mxu0 %v580
      %v992 = vpop.f32.mrf.mxu0
      %v993 = vadd.f32 %v959, %v992
      %v994 = vpop.f32.mrf.mxu0
      %v995 = vadd.f32 %v961, %v994
      %996 = vmatmul.bf16.gmra.mxu0 %v588
      %v997 = vpop.f32.mrf.mxu0
      %v998 = vadd.f32 %v964, %v997
      %v999 = vpop.f32.mrf.mxu0
      %v1000 = vadd.f32 %v966, %v999
      %1001 = vdwg.mxu0
      %1002 = vmatpush.bf16.msra.mxu0 %v893
      %1003 = vmatpush.bf16.msra.mxu0 %v892
      %1004 = vmatpush.bf16.msra.mxu0 %v891
      %1005 = vmatpush.bf16.msra.mxu0 %v890
      %1006 = vmatpush.bf16.msra.mxu0 %v889
      %1007 = vmatpush.bf16.msra.mxu0 %v888
      %1008 = vmatpush.bf16.msra.mxu0 %v887
      %1009 = vmatpush.bf16.msra.mxu0 %v886
      %1010 = vmatmul.bf16.gmra.mxu0 %v605
      %v1011 = vpop.f32.mrf.mxu0
      %v1012 = vadd.f32 %v978, %v1011
      %v1013 = vpop.f32.mrf.mxu0
      %v1014 = vadd.f32 %v980, %v1013
      %1015 = vmatmul.bf16.gmra.mxu0 %v607
      %v1016 = vpop.f32.mrf.mxu0
      %v1017 = vadd.f32 %v983, %v1016
      %v1018 = vpop.f32.mrf.mxu0
      %v1019 = vadd.f32 %v985, %v1018
      %1020 = vmatmul.bf16.gmra.mxu0 %v609
      %v1021 = vpop.f32.mrf.mxu0
      %v1022 = vadd.f32 %v988, %v1021
      %v1023 = vpop.f32.mrf.mxu0
      %v1024 = vadd.f32 %v990, %v1023
      %1025 = vmatmul.bf16.gmra.mxu0 %v611
      %v1026 = vpop.f32.mrf.mxu0
      %v1027 = vadd.f32 %v993, %v1026
      %v1028 = vpop.f32.mrf.mxu0
      %v1029 = vadd.f32 %v995, %v1028
      %1030 = vmatmul.bf16.gmra.mxu0 %v613
      %v1031 = vpop.f32.mrf.mxu0
      %v1032 = vadd.f32 %v998, %v1031
      %v1033 = vpop.f32.mrf.mxu0
      %v1034 = vadd.f32 %v1000, %v1033
      %1035 = vdwg.mxu0
      %1036 = vmatpush.bf16.msra.mxu0 %v901
      %1037 = vmatpush.bf16.msra.mxu0 %v900
      %1038 = vmatpush.bf16.msra.mxu0 %v899
      %1039 = vmatpush.bf16.msra.mxu0 %v898
      %1040 = vmatpush.bf16.msra.mxu0 %v897
      %1041 = vmatpush.bf16.msra.mxu0 %v896
      %1042 = vmatpush.bf16.msra.mxu0 %v895
      %1043 = vmatpush.bf16.msra.mxu0 %v894
      %1044 = vmatmul.bf16.gmra.mxu0 %v636
      %v1045 = vpop.f32.mrf.mxu0
      %v1046 = vadd.f32 %v1012, %v1045
      %v1047 = vpop.f32.mrf.mxu0
      %v1048 = vadd.f32 %v1014, %v1047
      %1049 = vmatmul.bf16.gmra.mxu0 %v645
      %v1050 = vpop.f32.mrf.mxu0
      %v1051 = vadd.f32 %v1017, %v1050
      %v1052 = vpop.f32.mrf.mxu0
      %v1053 = vadd.f32 %v1019, %v1052
      %1054 = vmatmul.bf16.gmra.mxu0 %v654
      %v1055 = vpop.f32.mrf.mxu0
      %v1056 = vadd.f32 %v1022, %v1055
      %v1057 = vpop.f32.mrf.mxu0
      %v1058 = vadd.f32 %v1024, %v1057
      %1059 = vmatmul.bf16.gmra.mxu0 %v663
      %v1060 = vpop.f32.mrf.mxu0
      %v1061 = vadd.f32 %v1027, %v1060
      %v1062 = vpop.f32.mrf.mxu0
      %v1063 = vadd.f32 %v1029, %v1062
      %1064 = vmatmul.bf16.gmra.mxu0 %v672
      %v1065 = vpop.f32.mrf.mxu0
      %v1066 = vadd.f32 %v1032, %v1065
      %v1067 = vpop.f32.mrf.mxu0
      %v1068 = vadd.f32 %v1034, %v1067
      %1069 = vdwg.mxu0
      %v1070 = vld [vmem:[%s3] sm:$0x1]
      %v1072 = vperm.slane %v1070, 0
      %v1074 = vmul.f32 %v1046, %v1072
      %v1075 = vmul.f32 %v1048, %v1072
      %v1076 = vmul.f32 %v1051, %v1072
      %v1077 = vmul.f32 %v1053, %v1072
      %v1078 = vmul.f32 %v1056, %v1072
      %v1079 = vmul.f32 %v1058, %v1072
      %v1080 = vmul.f32 %v1061, %v1072
      %v1081 = vmul.f32 %v1063, %v1072
      %v1082 = vmul.f32 %v1066, %v1072
      %v1083 = vmul.f32 %v1068, %v1072
      %v1084 = vld [vmem:[%s4] sm:$0x1]
      %v1086 = vperm.slane %v1084, 0
      %v1088 = vadd.f32 %v1074, %v1086
      %v1089 = vadd.f32 %v1075, %v1086
      %v1090 = vadd.f32 %v1076, %v1086
      %v1091 = vadd.f32 %v1077, %v1086
      %v1092 = vadd.f32 %v1078, %v1086
      %v1093 = vadd.f32 %v1079, %v1086
      %v1094 = vadd.f32 %v1080, %v1086
      %v1095 = vadd.f32 %v1081, %v1086
      %v1096 = vadd.f32 %v1082, %v1086
      %v1097 = vadd.f32 %v1083, %v1086
      %v1098 = vmax.f32 %v1088, 0.0
      %v1099 = vmax.f32 %v1089, 0.0
      %v1100 = vmax.f32 %v1090, 0.0
      %v1101 = vmax.f32 %v1091, 0.0
      %v1102 = vmax.f32 %v1092, 0.0
      %v1103 = vmax.f32 %v1093, 0.0
      %v1104 = vmax.f32 %v1094, 0.0
      %v1105 = vmax.f32 %v1095, 0.0
      %v1106 = vmax.f32 %v1096, 0.0
      %v1107 = vmax.f32 %v1097, 0.0
      %1109 = vset.pattern.permute.xlu0 0
      %1110 = vperm.xlu0 %1109, %v489
      %v1111 = vpop.permute.xlu0 %1110
      %1114 = vset.pattern.permute.xlu0 0
      %1115 = vperm.xlu0 %1114, %v490
      %v1116 = vpop.permute.xlu0 %1115
      %1119 = vset.pattern.permute.xlu0 0
      %1120 = vperm.xlu0 %1119, %v491
      %v1121 = vpop.permute.xlu0 %1120
      %1124 = vset.pattern.permute.xlu0 0
      %1125 = vperm.xlu0 %1124, %v492
      %v1126 = vpop.permute.xlu0 %1125
      %1129 = vset.pattern.permute.xlu0 0
      %1130 = vperm.xlu0 %1129, %v493
      %v1131 = vpop.permute.xlu0 %1130
      %1134 = vset.pattern.permute.xlu0 0
      %1135 = vperm.xlu0 %1134, %v494
      %v1136 = vpop.permute.xlu0 %1135
      %1139 = vset.pattern.permute.xlu0 0
      %1140 = vperm.xlu0 %1139, %v495
      %v1141 = vpop.permute.xlu0 %1140
      %1144 = vset.pattern.permute.xlu0 0
      %1145 = vperm.xlu0 %1144, %v496
      %v1146 = vpop.permute.xlu0 %1145
      %1149 = vset.pattern.permute.xlu0 0
      %1150 = vperm.xlu0 %1149, %v497
      %v1151 = vpop.permute.xlu0 %1150
      %1154 = vset.pattern.permute.xlu0 0
      %1155 = vperm.xlu0 %1154, %v498
      %v1156 = vpop.permute.xlu0 %1155
      %v1158 = vmul.f32 %v1098, %v1111
      %v1159 = vmul.f32 %v1099, %v1116
      %v1160 = vmul.f32 %v1100, %v1121
      %v1161 = vmul.f32 %v1101, %v1126
      %v1162 = vmul.f32 %v1102, %v1131
      %v1163 = vmul.f32 %v1103, %v1136
      %v1164 = vmul.f32 %v1104, %v1141
      %v1165 = vmul.f32 %v1105, %v1146
      %v1166 = vmul.f32 %v1106, %v1151
      %v1167 = vmul.f32 %v1107, %v1156
      %v1168 = vpack.c.bf16 %v1158, %v1158
      %v1169 = vpack.c.bf16 %v1159, %v1159
      %v1170 = vpack.c.bf16 %v1160, %v1160
      %v1171 = vpack.c.bf16 %v1161, %v1161
      %v1172 = vpack.c.bf16 %v1162, %v1162
      %v1173 = vpack.c.bf16 %v1163, %v1163
      %v1174 = vpack.c.bf16 %v1164, %v1164
      %v1175 = vpack.c.bf16 %v1165, %v1165
      %v1176 = vpack.c.bf16 %v1166, %v1166
      %v1177 = vpack.c.bf16 %v1167, %v1167
      %v1188 = vunpack.c.l.b16 %v1168
      %v1189 = vunpack.c.l.b16 %v1169
      %v1190 = vunpack.c.l.b16 %v1170
      %v1191 = vunpack.c.l.b16 %v1171
      %v1192 = vunpack.c.l.b16 %v1172
      %v1193 = vunpack.c.l.b16 %v1173
      %v1194 = vunpack.c.l.b16 %v1174
      %v1195 = vunpack.c.l.b16 %v1175
      %v1196 = vunpack.c.l.b16 %v1176
      %v1197 = vunpack.c.l.b16 %v1177
      %v1198 = vpack.c.b16 %v1189, %v1188
      %v1199 = vpack.c.b16 %v1191, %v1190
      %v1200 = vpack.c.b16 %v1193, %v1192
      %v1201 = vpack.c.b16 %v1195, %v1194
      %v1202 = vpack.c.b16 %v1197, %v1196
      %vm1203 = vsmask.f32 5376
      %v1205 = vshrl.u32 %v1198, 16
      %v1207 = vrot.slane %v1205, 2
      %v1208 = vshll.u32 %v1198, 16
      %v1210 = vrot.slane %v1208, 3
      %v1211 = vor.u32 %v1207, %v1210
      %v1213 = vshrl.u32 %v1199, 16
      %v1215 = vrot.slane %v1213, 2
      %v1216 = vshll.u32 %v1199, 16
      %v1218 = vrot.slane %v1216, 3
      %v1219 = vor.u32 %v1215, %v1218
      %v1220 = vsel %vm1203, %v1211, %v1219
      %v1222 = vshrl.u32 %v1200, 16
      %v1224 = vrot.slane %v1222, 2
      %v1225 = vshll.u32 %v1200, 16
      %v1227 = vrot.slane %v1225, 3
      %v1228 = vor.u32 %v1224, %v1227
      %v1229 = vsel %vm1203, %v1219, %v1228
      %v1231 = vshrl.u32 %v1201, 16
      %v1233 = vrot.slane %v1231, 2
      %v1234 = vshll.u32 %v1201, 16
      %v1236 = vrot.slane %v1234, 3
      %v1237 = vor.u32 %v1233, %v1236
      %v1238 = vsel %vm1203, %v1228, %v1237
      %v1240 = vshrl.u32 %v1202, 16
      %v1242 = vrot.slane %v1240, 2
      %v1243 = vshll.u32 %v1202, 16
      %v1245 = vrot.slane %v1243, 3
      %v1246 = vor.u32 %v1242, %v1245
      %v1247 = vsel %vm1203, %v1237, %v1246
      %vm1250 = vcmask 1045504
      %vm1251 = vmand %vm1250, %vm1203
      %v1252 = vsel %vm1251, 0, %v1211
      %v1253 = vsel %vm1251, %v1246, 0
      %v1255 = vshrl.u32 %v1252, 16
      %v1257 = vshll.u32 %v1252, 16
      %v1259 = vrot.slane %v1257, 1
      %v1260 = vor.u32 %v1255, %v1259
      %v1262 = vshll.u32 %v1220, 16
      %v1264 = vrot.slane %v1262, 1
      %v1265 = vsel %vm544, %v1260, %v1264
      %v1266 = vshrl.u32 %v1220, 16
      %v1268 = vor.u32 %v1266, %v1264
      %v1270 = vshll.u32 %v1229, 16
      %v1272 = vrot.slane %v1270, 1
      %v1273 = vsel %vm544, %v1268, %v1272
      %v1274 = vshrl.u32 %v1229, 16
      %v1276 = vor.u32 %v1274, %v1272
      %v1278 = vshll.u32 %v1238, 16
      %v1280 = vrot.slane %v1278, 1
      %v1281 = vsel %vm544, %v1276, %v1280
      %v1282 = vshrl.u32 %v1238, 16
      %v1284 = vor.u32 %v1282, %v1280
      %v1286 = vshll.u32 %v1247, 16
      %v1288 = vrot.slane %v1286, 1
      %v1289 = vsel %vm544, %v1284, %v1288
      %v1290 = vshrl.u32 %v1247, 16
      %v1292 = vor.u32 %v1290, %v1288
      %v1294 = vshll.u32 %v1253, 16
      %v1296 = vrot.slane %v1294, 1
      %v1297 = vsel %vm544, %v1292, %v1296
      %1298 = vrot.lane.b32.xlu0 %v1265, 64
      %v1299 = vpop.permute.xlu0 %1298
      %1300 = vrot.lane.b32.xlu0 %v1273, 64
      %v1301 = vpop.permute.xlu0 %1300
      %1302 = vrot.lane.b32.xlu0 %v1281, 64
      %v1303 = vpop.permute.xlu0 %1302
      %1304 = vrot.lane.b32.xlu0 %v1289, 64
      %v1305 = vpop.permute.xlu0 %1304
      %1306 = vrot.lane.b32.xlu0 %v1297, 64
      %v1307 = vpop.permute.xlu0 %1306
      %v1310 = vrot.slane %v1252, 1
      %v1311 = vrot.slane %v1220, 1
      %v1312 = vsel %vm602, %v1310, %v1311
      %v1313 = vrot.slane %v1229, 1
      %v1314 = vsel %vm602, %v1311, %v1313
      %v1315 = vrot.slane %v1238, 1
      %v1316 = vsel %vm602, %v1313, %v1315
      %v1317 = vrot.slane %v1247, 1
      %v1318 = vsel %vm602, %v1315, %v1317
      %v1319 = vrot.slane %v1253, 1
      %v1320 = vsel %vm602, %v1317, %v1319
      %vm1321 = vcmask 1042432
      %v1322 = vrot.slane %v1252, 5
      %v1323 = vrot.slane %v1220, 5
      %v1324 = vsel %vm1321, %v1322, %v1323
      %v1325 = vrot.slane %v1229, 5
      %v1326 = vsel %vm1321, %v1323, %v1325
      %v1327 = vrot.slane %v1238, 5
      %v1328 = vsel %vm1321, %v1325, %v1327
      %v1329 = vrot.slane %v1247, 5
      %v1330 = vsel %vm1321, %v1327, %v1329
      %v1331 = vrot.slane %v1253, 5
      %v1332 = vsel %vm1321, %v1329, %v1331
      %1333 = vrot.lane.b32.xlu0 %v1324, 64
      %v1334 = vpop.permute.xlu0 %1333
      %1335 = vrot.lane.b32.xlu0 %v1326, 64
      %v1336 = vpop.permute.xlu0 %1335
      %1337 = vrot.lane.b32.xlu0 %v1328, 64
      %v1338 = vpop.permute.xlu0 %1337
      %1339 = vrot.lane.b32.xlu0 %v1330, 64
      %v1340 = vpop.permute.xlu0 %1339
      %1341 = vrot.lane.b32.xlu0 %v1332, 64
      %v1342 = vpop.permute.xlu0 %1341
      %vm1343 = vsmask.f32 2304
      %v1344 = vrot.slane %v1255, 5
      %v1345 = vrot.slane %v1257, 6
      %v1346 = vor.u32 %v1344, %v1345
      %v1347 = vrot.slane %v1266, 5
      %v1348 = vrot.slane %v1262, 6
      %v1349 = vor.u32 %v1347, %v1348
      %v1350 = vsel %vm1343, %v1346, %v1349
      %v1351 = vrot.slane %v1274, 5
      %v1352 = vrot.slane %v1270, 6
      %v1353 = vor.u32 %v1351, %v1352
      %v1354 = vsel %vm1343, %v1349, %v1353
      %v1355 = vrot.slane %v1282, 5
      %v1356 = vrot.slane %v1278, 6
      %v1357 = vor.u32 %v1355, %v1356
      %v1358 = vsel %vm1343, %v1353, %v1357
      %v1359 = vrot.slane %v1290, 5
      %v1360 = vrot.slane %v1286, 6
      %v1361 = vor.u32 %v1359, %v1360
      %v1362 = vsel %vm1343, %v1357, %v1361
      %v1363 = vshrl.u32 %v1253, 16
      %v1365 = vrot.slane %v1363, 5
      %v1366 = vrot.slane %v1294, 6
      %v1367 = vor.u32 %v1365, %v1366
      %v1368 = vsel %vm1343, %v1361, %v1367
      %vm1369 = vcmask 1041408
      %v1370 = vrot.slane %v1252, 6
      %v1371 = vrot.slane %v1220, 6
      %v1372 = vsel %vm1369, %v1370, %v1371
      %v1373 = vrot.slane %v1229, 6
      %v1374 = vsel %vm1369, %v1371, %v1373
      %v1375 = vrot.slane %v1238, 6
      %v1376 = vsel %vm1369, %v1373, %v1375
      %v1377 = vrot.slane %v1247, 6
      %v1378 = vsel %vm1369, %v1375, %v1377
      %v1379 = vrot.slane %v1253, 6
      %v1380 = vsel %vm1369, %v1377, %v1379
      %1381 = vrot.lane.b32.xlu0 %v1372, 64
      %v1382 = vpop.permute.xlu0 %1381
      %1383 = vrot.lane.b32.xlu0 %v1374, 64
      %v1384 = vpop.permute.xlu0 %1383
      %1385 = vrot.lane.b32.xlu0 %v1376, 64
      %v1386 = vpop.permute.xlu0 %1385
      %1387 = vrot.lane.b32.xlu0 %v1378, 64
      %v1388 = vpop.permute.xlu0 %1387
      %1389 = vrot.lane.b32.xlu0 %v1380, 64
      %v1390 = vpop.permute.xlu0 %1389
      %v1392 = vrot.slane %v1220, 2
      %v1393 = vrot.slane %v1229, 2
      %v1394 = vsel %vm1250, %v1392, %v1393
      %v1395 = vrot.slane %v1238, 2
      %v1396 = vsel %vm1250, %v1393, %v1395
      %v1397 = vrot.slane %v1247, 2
      %v1398 = vsel %vm1250, %v1395, %v1397
      %v1399 = vrot.slane %v1253, 2
      %v1400 = vsel %vm1250, %v1397, %v1399
      %v1401 = vrot.slane 0, 2
      %v1402 = vsel %vm1250, %v1399, %v1401
      %v1403 = vrot.slane %v1266, 2
      %v1404 = vrot.slane %v1262, 3
      %v1405 = vor.u32 %v1403, %v1404
      %v1406 = vrot.slane %v1274, 2
      %v1407 = vrot.slane %v1270, 3
      %v1408 = vor.u32 %v1406, %v1407
      %v1409 = vsel %vm1203, %v1405, %v1408
      %v1410 = vrot.slane %v1282, 2
      %v1411 = vrot.slane %v1278, 3
      %v1412 = vor.u32 %v1410, %v1411
      %v1413 = vsel %vm1203, %v1408, %v1412
      %v1414 = vrot.slane %v1290, 2
      %v1415 = vrot.slane %v1286, 3
      %v1416 = vor.u32 %v1414, %v1415
      %v1417 = vsel %vm1203, %v1412, %v1416
      %v1418 = vrot.slane %v1363, 2
      %v1419 = vrot.slane %v1294, 3
      %v1420 = vor.u32 %v1418, %v1419
      %v1421 = vsel %vm1203, %v1416, %v1420
      %v1423 = vshrl.u32 0, 16
      %v1425 = vrot.slane %v1423, 2
      %v1426 = vshll.u32 0, 16
      %v1428 = vrot.slane %v1426, 3
      %v1429 = vor.u32 %v1425, %v1428
      %v1430 = vsel %vm1203, %v1420, %v1429
      %1431 = vrot.lane.b32.xlu0 %v1409, 64
      %v1432 = vpop.permute.xlu0 %1431
      %1433 = vrot.lane.b32.xlu0 %v1413, 64
      %v1434 = vpop.permute.xlu0 %1433
      %1435 = vrot.lane.b32.xlu0 %v1417, 64
      %v1436 = vpop.permute.xlu0 %1435
      %1437 = vrot.lane.b32.xlu0 %v1421, 64
      %v1438 = vpop.permute.xlu0 %1437
      %1439 = vrot.lane.b32.xlu0 %v1430, 64
      %v1440 = vpop.permute.xlu0 %1439
      %vm1441 = vcmask 1044480
      %v1442 = vrot.slane %v1220, 3
      %v1443 = vrot.slane %v1229, 3
      %v1444 = vsel %vm1441, %v1442, %v1443
      %v1445 = vrot.slane %v1238, 3
      %v1446 = vsel %vm1441, %v1443, %v1445
      %v1447 = vrot.slane %v1247, 3
      %v1448 = vsel %vm1441, %v1445, %v1447
      %v1449 = vrot.slane %v1253, 3
      %v1450 = vsel %vm1441, %v1447, %v1449
      %v1451 = vrot.slane 0, 3
      %v1452 = vsel %vm1441, %v1449, %v1451
      %vm1453 = vcmask 523264
      %v1455 = vsel %vm1453, %v1252, %v1299
      %v1458 = vsel %vm1453, %v1220, %v1301
      %v1461 = vsel %vm1453, %v1229, %v1303
      %v1464 = vsel %vm1453, %v1238, %v1305
      %v1467 = vsel %vm1453, %v1247, %v1307
      %v1471 = vsel %vm1453, %v1312, %v1334
      %v1475 = vsel %vm1453, %v1314, %v1336
      %v1479 = vsel %vm1453, %v1316, %v1338
      %v1483 = vsel %vm1453, %v1318, %v1340
      %v1487 = vsel %vm1453, %v1320, %v1342
      %v1491 = vsel %vm1453, %v1350, %v1382
      %v1495 = vsel %vm1453, %v1354, %v1384
      %v1499 = vsel %vm1453, %v1358, %v1386
      %v1503 = vsel %vm1453, %v1362, %v1388
      %v1507 = vsel %vm1453, %v1368, %v1390
      %v1511 = vsel %vm1453, %v1394, %v1432
      %v1515 = vsel %vm1453, %v1396, %v1434
      %v1519 = vsel %vm1453, %v1398, %v1436
      %v1523 = vsel %vm1453, %v1400, %v1438
      %v1527 = vsel %vm1453, %v1402, %v1440
      %v1529 = vld [vmem:[%s5] sm:$0xf]
      %v1530 = vld [vmem:[%s5 + $0x4] sm:$0xf]
      %v1531 = vld [vmem:[%s5 + $0x8] sm:$0xf]
      %v1532 = vld [vmem:[%s5 + $0xc] sm:$0xf]
      %v1533 = vld [vmem:[%s5 + $0x10] sm:$0xf]
      %v1534 = vld [vmem:[%s5 + $0x14] sm:$0xf]
      %v1535 = vld [vmem:[%s5 + $0x18] sm:$0xf]
      %v1536 = vld [vmem:[%s5 + $0x1c] sm:$0xf]
      %v1537 = vld [vmem:[%s5 + $0x20] sm:$0xf]
      %v1538 = vld [vmem:[%s5 + $0x24] sm:$0xf]
      %v1539 = vld [vmem:[%s5 + $0x28] sm:$0xf]
      %v1540 = vld [vmem:[%s5 + $0x2c] sm:$0xf]
      %v1541 = vld [vmem:[%s5 + $0x30] sm:$0xf]
      %v1542 = vld [vmem:[%s5 + $0x34] sm:$0xf]
      %v1543 = vld [vmem:[%s5 + $0x38] sm:$0xf]
      %v1544 = vld [vmem:[%s5 + $0x3c] sm:$0xf]
      %v1545 = vld [vmem:[%s5 + $0x40] sm:$0xf]
      %v1546 = vld [vmem:[%s5 + $0x44] sm:$0xf]
      %v1547 = vld [vmem:[%s5 + $0x48] sm:$0xf]
      %v1548 = vld [vmem:[%s5 + $0x4c] sm:$0xf]
      %v1549 = vld [vmem:[%s5 + $0x50] sm:$0xf]
      %v1550 = vld [vmem:[%s5 + $0x54] sm:$0xf]
      %v1551 = vld [vmem:[%s5 + $0x58] sm:$0xf]
      %v1552 = vld [vmem:[%s5 + $0x5c] sm:$0xf]
      %v1553 = vld [vmem:[%s5 + $0x60] sm:$0xf]
      %v1554 = vld [vmem:[%s5 + $0x64] sm:$0xf]
      %v1555 = vld [vmem:[%s5 + $0x68] sm:$0xf]
      %v1556 = vld [vmem:[%s5 + $0x6c] sm:$0xf]
      %v1557 = vld [vmem:[%s5 + $0x70] sm:$0xf]
      %v1558 = vld [vmem:[%s5 + $0x74] sm:$0xf]
      %v1559 = vld [vmem:[%s5 + $0x78] sm:$0xf]
      %v1560 = vld [vmem:[%s5 + $0x7c] sm:$0xf]
      %v1561 = vld [vmem:[%s5 + $0x80] sm:$0xf]
      %v1562 = vld [vmem:[%s5 + $0x84] sm:$0xf]
      %v1563 = vld [vmem:[%s5 + $0x88] sm:$0xf]
      %v1564 = vld [vmem:[%s5 + $0x8c] sm:$0xf]
      %v1565 = vld [vmem:[%s5 + $0x90] sm:$0xf]
      %v1566 = vld [vmem:[%s5 + $0x94] sm:$0xf]
      %v1567 = vld [vmem:[%s5 + $0x98] sm:$0xf]
      %v1568 = vld [vmem:[%s5 + $0x9c] sm:$0xf]
      %v1569 = vld [vmem:[%s5 + $0xa0] sm:$0xf]
      %v1570 = vld [vmem:[%s5 + $0xa4] sm:$0xf]
      %v1571 = vld [vmem:[%s5 + $0xa8] sm:$0xf]
      %v1572 = vld [vmem:[%s5 + $0xac] sm:$0xf]
      %v1573 = vld [vmem:[%s5 + $0xb0] sm:$0xf]
      %v1574 = vld [vmem:[%s5 + $0xb4] sm:$0xf]
      %v1575 = vld [vmem:[%s5 + $0xb8] sm:$0xf]
      %v1576 = vld [vmem:[%s5 + $0xbc] sm:$0xf]
      %v1577 = vld [vmem:[%s5 + $0xc0] sm:$0xf]
      %v1578 = vld [vmem:[%s5 + $0xc4] sm:$0xf]
      %v1579 = vld [vmem:[%s5 + $0xc8] sm:$0xf]
      %v1580 = vld [vmem:[%s5 + $0xcc] sm:$0xf]
      %v1581 = vld [vmem:[%s5 + $0xd0] sm:$0xf]
      %v1582 = vld [vmem:[%s5 + $0xd4] sm:$0xf]
      %v1583 = vld [vmem:[%s5 + $0xd8] sm:$0xf]
      %v1584 = vld [vmem:[%s5 + $0xdc] sm:$0xf]
      %v1585 = vld [vmem:[%s5 + $0xe0] sm:$0xf]
      %v1586 = vld [vmem:[%s5 + $0xe4] sm:$0xf]
      %v1587 = vld [vmem:[%s5 + $0xe8] sm:$0xf]
      %v1588 = vld [vmem:[%s5 + $0xec] sm:$0xf]
      %v1589 = vld [vmem:[%s5 + $0xf0] sm:$0xf]
      %v1590 = vld [vmem:[%s5 + $0xf4] sm:$0xf]
      %v1591 = vld [vmem:[%s5 + $0xf8] sm:$0xf]
      %v1592 = vld [vmem:[%s5 + $0xfc] sm:$0xf]
      %v1593 = vld [vmem:[%s5 + $0x100] sm:$0xf]
      %v1594 = vld [vmem:[%s5 + $0x104] sm:$0xf]
      %v1595 = vld [vmem:[%s5 + $0x108] sm:$0xf]
      %v1596 = vld [vmem:[%s5 + $0x10c] sm:$0xf]
      %v1597 = vld [vmem:[%s5 + $0x110] sm:$0xf]
      %v1598 = vld [vmem:[%s5 + $0x114] sm:$0xf]
      %v1599 = vld [vmem:[%s5 + $0x118] sm:$0xf]
      %v1600 = vld [vmem:[%s5 + $0x11c] sm:$0xf]
      %v1673 = vunpack.c.l.b16 %v1529
      %v1674 = vunpack.c.l.b16 %v1530
      %v1675 = vunpack.c.l.b16 %v1531
      %v1676 = vunpack.c.l.b16 %v1532
      %v1677 = vunpack.c.l.b16 %v1533
      %v1678 = vunpack.c.l.b16 %v1534
      %v1679 = vunpack.c.l.b16 %v1535
      %v1680 = vunpack.c.l.b16 %v1536
      %v1681 = vunpack.c.l.b16 %v1537
      %v1682 = vunpack.c.l.b16 %v1538
      %v1683 = vunpack.c.l.b16 %v1539
      %v1684 = vunpack.c.l.b16 %v1540
      %v1685 = vunpack.c.l.b16 %v1541
      %v1686 = vunpack.c.l.b16 %v1542
      %v1687 = vunpack.c.l.b16 %v1543
      %v1688 = vunpack.c.l.b16 %v1544
      %v1689 = vunpack.c.l.b16 %v1545
      %v1690 = vunpack.c.l.b16 %v1546
      %v1691 = vunpack.c.l.b16 %v1547
      %v1692 = vunpack.c.l.b16 %v1548
      %v1693 = vunpack.c.l.b16 %v1549
      %v1694 = vunpack.c.l.b16 %v1550
      %v1695 = vunpack.c.l.b16 %v1551
      %v1696 = vunpack.c.l.b16 %v1552
      %v1697 = vunpack.c.l.b16 %v1553
      %v1698 = vunpack.c.l.b16 %v1554
      %v1699 = vunpack.c.l.b16 %v1555
      %v1700 = vunpack.c.l.b16 %v1556
      %v1701 = vunpack.c.l.b16 %v1557
      %v1702 = vunpack.c.l.b16 %v1558
      %v1703 = vunpack.c.l.b16 %v1559
      %v1704 = vunpack.c.l.b16 %v1560
      %v1705 = vunpack.c.l.b16 %v1561
      %v1706 = vunpack.c.l.b16 %v1562
      %v1707 = vunpack.c.l.b16 %v1563
      %v1708 = vunpack.c.l.b16 %v1564
      %v1709 = vunpack.c.l.b16 %v1565
      %v1710 = vunpack.c.l.b16 %v1566
      %v1711 = vunpack.c.l.b16 %v1567
      %v1712 = vunpack.c.l.b16 %v1568
      %v1713 = vunpack.c.l.b16 %v1569
      %v1714 = vunpack.c.l.b16 %v1570
      %v1715 = vunpack.c.l.b16 %v1571
      %v1716 = vunpack.c.l.b16 %v1572
      %v1717 = vunpack.c.l.b16 %v1573
      %v1718 = vunpack.c.l.b16 %v1574
      %v1719 = vunpack.c.l.b16 %v1575
      %v1720 = vunpack.c.l.b16 %v1576
      %v1721 = vunpack.c.l.b16 %v1577
      %v1722 = vunpack.c.l.b16 %v1578
      %v1723 = vunpack.c.l.b16 %v1579
      %v1724 = vunpack.c.l.b16 %v1580
      %v1725 = vunpack.c.l.b16 %v1581
      %v1726 = vunpack.c.l.b16 %v1582
      %v1727 = vunpack.c.l.b16 %v1583
      %v1728 = vunpack.c.l.b16 %v1584
      %v1729 = vunpack.c.l.b16 %v1585
      %v1730 = vunpack.c.l.b16 %v1586
      %v1731 = vunpack.c.l.b16 %v1587
      %v1732 = vunpack.c.l.b16 %v1588
      %v1733 = vunpack.c.l.b16 %v1589
      %v1734 = vunpack.c.l.b16 %v1590
      %v1735 = vunpack.c.l.b16 %v1591
      %v1736 = vunpack.c.l.b16 %v1592
      %v1737 = vunpack.c.l.b16 %v1593
      %v1738 = vunpack.c.l.b16 %v1594
      %v1739 = vunpack.c.l.b16 %v1595
      %v1740 = vunpack.c.l.b16 %v1596
      %v1741 = vunpack.c.l.b16 %v1597
      %v1742 = vunpack.c.l.b16 %v1598
      %v1743 = vunpack.c.l.b16 %v1599
      %v1744 = vunpack.c.l.b16 %v1600
      %v1745 = vpack.c.b16 %v1674, %v1673
      %v1746 = vpack.c.b16 %v1676, %v1675
      %v1747 = vpack.c.b16 %v1678, %v1677
      %v1748 = vpack.c.b16 %v1680, %v1679
      %v1749 = vpack.c.b16 %v1682, %v1681
      %v1750 = vpack.c.b16 %v1684, %v1683
      %v1751 = vpack.c.b16 %v1686, %v1685
      %v1752 = vpack.c.b16 %v1688, %v1687
      %v1753 = vpack.c.b16 %v1690, %v1689
      %v1754 = vpack.c.b16 %v1692, %v1691
      %v1755 = vpack.c.b16 %v1694, %v1693
      %v1756 = vpack.c.b16 %v1696, %v1695
      %v1757 = vpack.c.b16 %v1698, %v1697
      %v1758 = vpack.c.b16 %v1700, %v1699
      %v1759 = vpack.c.b16 %v1702, %v1701
      %v1760 = vpack.c.b16 %v1704, %v1703
      %v1761 = vpack.c.b16 %v1706, %v1705
      %v1762 = vpack.c.b16 %v1708, %v1707
      %v1763 = vpack.c.b16 %v1710, %v1709
      %v1764 = vpack.c.b16 %v1712, %v1711
      %v1765 = vpack.c.b16 %v1714, %v1713
      %v1766 = vpack.c.b16 %v1716, %v1715
      %v1767 = vpack.c.b16 %v1718, %v1717
      %v1768 = vpack.c.b16 %v1720, %v1719
      %v1769 = vpack.c.b16 %v1722, %v1721
      %v1770 = vpack.c.b16 %v1724, %v1723
      %v1771 = vpack.c.b16 %v1726, %v1725
      %v1772 = vpack.c.b16 %v1728, %v1727
      %v1773 = vpack.c.b16 %v1730, %v1729
      %v1774 = vpack.c.b16 %v1732, %v1731
      %v1775 = vpack.c.b16 %v1734, %v1733
      %v1776 = vpack.c.b16 %v1736, %v1735
      %v1777 = vpack.c.b16 %v1738, %v1737
      %v1778 = vpack.c.b16 %v1740, %v1739
      %v1779 = vpack.c.b16 %v1742, %v1741
      %v1780 = vpack.c.b16 %v1744, %v1743
      %v1818 = vsel %vm1453, %v1444, 0
      %v1821 = vsel %vm1453, %v1446, 0
      %v1824 = vsel %vm1453, %v1448, 0
      %v1827 = vsel %vm1453, %v1450, 0
      %v1830 = vsel %vm1453, %v1452, 0
      %1832 = vmatpush.bf16.msra.mxu0 %v1752
      %1833 = vmatpush.bf16.msra.mxu0 %v1751
      %1834 = vmatpush.bf16.msra.mxu0 %v1750
      %1835 = vmatpush.bf16.msra.mxu0 %v1749
      %1836 = vmatpush.bf16.msra.mxu0 %v1748
      %1837 = vmatpush.bf16.msra.mxu0 %v1747
      %1838 = vmatpush.bf16.msra.mxu0 %v1746
      %1839 = vmatpush.bf16.msra.mxu0 %v1745
      %1840 = vmatmul.bf16.gmra.mxu0 %v1455
      %v1841 = vpop.f32.mrf.mxu0
      %v1842 = vadd.f32 0.0, %v1841
      %v1843 = vpop.f32.mrf.mxu0
      %v1844 = vadd.f32 0.0, %v1843
      %1845 = vmatmul.bf16.gmra.mxu0 %v1458
      %v1846 = vpop.f32.mrf.mxu0
      %v1847 = vadd.f32 0.0, %v1846
      %v1848 = vpop.f32.mrf.mxu0
      %v1849 = vadd.f32 0.0, %v1848
      %1850 = vmatmul.bf16.gmra.mxu0 %v1461
      %v1851 = vpop.f32.mrf.mxu0
      %v1852 = vadd.f32 0.0, %v1851
      %v1853 = vpop.f32.mrf.mxu0
      %v1854 = vadd.f32 0.0, %v1853
      %1855 = vmatmul.bf16.gmra.mxu0 %v1464
      %v1856 = vpop.f32.mrf.mxu0
      %v1857 = vadd.f32 0.0, %v1856
      %v1858 = vpop.f32.mrf.mxu0
      %v1859 = vadd.f32 0.0, %v1858
      %1860 = vmatmul.bf16.gmra.mxu0 %v1467
      %v1861 = vpop.f32.mrf.mxu0
      %v1862 = vadd.f32 0.0, %v1861
      %v1863 = vpop.f32.mrf.mxu0
      %v1864 = vadd.f32 0.0, %v1863
      %1865 = vdwg.mxu0
      %1866 = vmatpush.bf16.msra.mxu0 %v1760
      %1867 = vmatpush.bf16.msra.mxu0 %v1759
      %1868 = vmatpush.bf16.msra.mxu0 %v1758
      %1869 = vmatpush.bf16.msra.mxu0 %v1757
      %1870 = vmatpush.bf16.msra.mxu0 %v1756
      %1871 = vmatpush.bf16.msra.mxu0 %v1755
      %1872 = vmatpush.bf16.msra.mxu0 %v1754
      %1873 = vmatpush.bf16.msra.mxu0 %v1753
      %1874 = vmatmul.bf16.gmra.mxu0 %v1471
      %v1875 = vpop.f32.mrf.mxu0
      %v1876 = vadd.f32 %v1842, %v1875
      %v1877 = vpop.f32.mrf.mxu0
      %v1878 = vadd.f32 %v1844, %v1877
      %1879 = vmatmul.bf16.gmra.mxu0 %v1475
      %v1880 = vpop.f32.mrf.mxu0
      %v1881 = vadd.f32 %v1847, %v1880
      %v1882 = vpop.f32.mrf.mxu0
      %v1883 = vadd.f32 %v1849, %v1882
      %1884 = vmatmul.bf16.gmra.mxu0 %v1479
      %v1885 = vpop.f32.mrf.mxu0
      %v1886 = vadd.f32 %v1852, %v1885
      %v1887 = vpop.f32.mrf.mxu0
      %v1888 = vadd.f32 %v1854, %v1887
      %1889 = vmatmul.bf16.gmra.mxu0 %v1483
      %v1890 = vpop.f32.mrf.mxu0
      %v1891 = vadd.f32 %v1857, %v1890
      %v1892 = vpop.f32.mrf.mxu0
      %v1893 = vadd.f32 %v1859, %v1892
      %1894 = vmatmul.bf16.gmra.mxu0 %v1487
      %v1895 = vpop.f32.mrf.mxu0
      %v1896 = vadd.f32 %v1862, %v1895
      %v1897 = vpop.f32.mrf.mxu0
      %v1898 = vadd.f32 %v1864, %v1897
      %1899 = vdwg.mxu0
      %1900 = vmatpush.bf16.msra.mxu0 %v1768
      %1901 = vmatpush.bf16.msra.mxu0 %v1767
      %1902 = vmatpush.bf16.msra.mxu0 %v1766
      %1903 = vmatpush.bf16.msra.mxu0 %v1765
      %1904 = vmatpush.bf16.msra.mxu0 %v1764
      %1905 = vmatpush.bf16.msra.mxu0 %v1763
      %1906 = vmatpush.bf16.msra.mxu0 %v1762
      %1907 = vmatpush.bf16.msra.mxu0 %v1761
      %1908 = vmatmul.bf16.gmra.mxu0 %v1491
      %v1909 = vpop.f32.mrf.mxu0
      %v1910 = vadd.f32 %v1876, %v1909
      %v1911 = vpop.f32.mrf.mxu0
      %v1912 = vadd.f32 %v1878, %v1911
      %1913 = vmatmul.bf16.gmra.mxu0 %v1495
      %v1914 = vpop.f32.mrf.mxu0
      %v1915 = vadd.f32 %v1881, %v1914
      %v1916 = vpop.f32.mrf.mxu0
      %v1917 = vadd.f32 %v1883, %v1916
      %1918 = vmatmul.bf16.gmra.mxu0 %v1499
      %v1919 = vpop.f32.mrf.mxu0
      %v1920 = vadd.f32 %v1886, %v1919
      %v1921 = vpop.f32.mrf.mxu0
      %v1922 = vadd.f32 %v1888, %v1921
      %1923 = vmatmul.bf16.gmra.mxu0 %v1503
      %v1924 = vpop.f32.mrf.mxu0
      %v1925 = vadd.f32 %v1891, %v1924
      %v1926 = vpop.f32.mrf.mxu0
      %v1927 = vadd.f32 %v1893, %v1926
      %1928 = vmatmul.bf16.gmra.mxu0 %v1507
      %v1929 = vpop.f32.mrf.mxu0
      %v1930 = vadd.f32 %v1896, %v1929
      %v1931 = vpop.f32.mrf.mxu0
      %v1932 = vadd.f32 %v1898, %v1931
      %1933 = vdwg.mxu0
      %1934 = vmatpush.bf16.msra.mxu0 %v1776
      %1935 = vmatpush.bf16.msra.mxu0 %v1775
      %1936 = vmatpush.bf16.msra.mxu0 %v1774
      %1937 = vmatpush.bf16.msra.mxu0 %v1773
      %1938 = vmatpush.bf16.msra.mxu0 %v1772
      %1939 = vmatpush.bf16.msra.mxu0 %v1771
      %1940 = vmatpush.bf16.msra.mxu0 %v1770
      %1941 = vmatpush.bf16.msra.mxu0 %v1769
      %1942 = vmatmul.bf16.gmra.mxu0 %v1511
      %v1943 = vpop.f32.mrf.mxu0
      %v1944 = vadd.f32 %v1910, %v1943
      %v1945 = vpop.f32.mrf.mxu0
      %v1946 = vadd.f32 %v1912, %v1945
      %1947 = vmatmul.bf16.gmra.mxu0 %v1515
      %v1948 = vpop.f32.mrf.mxu0
      %v1949 = vadd.f32 %v1915, %v1948
      %v1950 = vpop.f32.mrf.mxu0
      %v1951 = vadd.f32 %v1917, %v1950
      %1952 = vmatmul.bf16.gmra.mxu0 %v1519
      %v1953 = vpop.f32.mrf.mxu0
      %v1954 = vadd.f32 %v1920, %v1953
      %v1955 = vpop.f32.mrf.mxu0
      %v1956 = vadd.f32 %v1922, %v1955
      %1957 = vmatmul.bf16.gmra.mxu0 %v1523
      %v1958 = vpop.f32.mrf.mxu0
      %v1959 = vadd.f32 %v1925, %v1958
      %v1960 = vpop.f32.mrf.mxu0
      %v1961 = vadd.f32 %v1927, %v1960
      %1962 = vmatmul.bf16.gmra.mxu0 %v1527
      %v1963 = vpop.f32.mrf.mxu0
      %v1964 = vadd.f32 %v1930, %v1963
      %v1965 = vpop.f32.mrf.mxu0
      %v1966 = vadd.f32 %v1932, %v1965
      %1967 = vdwg.mxu0
      %1968 = vmatpush.bf16.msra.mxu0 0
      %1969 = vmatpush.bf16.msra.mxu0 0
      %1970 = vmatpush.bf16.msra.mxu0 0
      %1971 = vmatpush.bf16.msra.mxu0 0
      %1972 = vmatpush.bf16.msra.mxu0 %v1780
      %1973 = vmatpush.bf16.msra.mxu0 %v1779
      %1974 = vmatpush.bf16.msra.mxu0 %v1778
      %1975 = vmatpush.bf16.msra.mxu0 %v1777
      %1976 = vmatmul.bf16.gmra.mxu0 %v1818
      %v1977 = vpop.f32.mrf.mxu0
      %v1978 = vadd.f32 %v1944, %v1977
      %v1979 = vpop.f32.mrf.mxu0
      %v1980 = vadd.f32 %v1946, %v1979
      %1981 = vmatmul.bf16.gmra.mxu0 %v1821
      %v1982 = vpop.f32.mrf.mxu0
      %v1983 = vadd.f32 %v1949, %v1982
      %v1984 = vpop.f32.mrf.mxu0
      %v1985 = vadd.f32 %v1951, %v1984
      %1986 = vmatmul.bf16.gmra.mxu0 %v1824
      %v1987 = vpop.f32.mrf.mxu0
      %v1988 = vadd.f32 %v1954, %v1987
      %v1989 = vpop.f32.mrf.mxu0
      %v1990 = vadd.f32 %v1956, %v1989
      %1991 = vmatmul.bf16.gmra.mxu0 %v1827
      %v1992 = vpop.f32.mrf.mxu0
      %v1993 = vadd.f32 %v1959, %v1992
      %v1994 = vpop.f32.mrf.mxu0
      %v1995 = vadd.f32 %v1961, %v1994
      %1996 = vmatmul.bf16.gmra.mxu0 %v1830
      %v1997 = vpop.f32.mrf.mxu0
      %v1998 = vadd.f32 %v1964, %v1997
      %v1999 = vpop.f32.mrf.mxu0
      %v2000 = vadd.f32 %v1966, %v1999
      %2001 = vdwg.mxu0
      %v2002 = vld [vmem:[%s482] sm:$0xf]
      %v2003 = vld [vmem:[%s482 + $0x4] sm:$0xf]
      %v2004 = vld [vmem:[%s482 + $0x8] sm:$0xf]
      %v2005 = vld [vmem:[%s482 + $0xc] sm:$0xf]
      %v2006 = vld [vmem:[%s482 + $0x10] sm:$0xf]
      %v2007 = vld [vmem:[%s482 + $0x14] sm:$0xf]
      %v2008 = vld [vmem:[%s482 + $0x18] sm:$0xf]
      %v2009 = vld [vmem:[%s482 + $0x1c] sm:$0xf]
      %v2010 = vld [vmem:[%s482 + $0x20] sm:$0xf]
      %v2011 = vld [vmem:[%s482 + $0x24] sm:$0xf]
      %v2012 = vld [vmem:[%s7] sm:$0xf]
      %v2013 = vld [vmem:[%s7 + $0x4] sm:$0xf]
      %v2014 = vld [vmem:[%s7 + $0x8] sm:$0xf]
      %v2015 = vld [vmem:[%s7 + $0xc] sm:$0xf]
      %v2026 = vunpack.c.l.b16 %v2002
      %v2027 = vunpack.c.l.b16 %v2003
      %v2028 = vunpack.c.l.b16 %v2004
      %v2029 = vunpack.c.l.b16 %v2005
      %v2030 = vunpack.c.l.b16 %v2006
      %v2031 = vunpack.c.l.b16 %v2007
      %v2032 = vunpack.c.l.b16 %v2008
      %v2033 = vunpack.c.l.b16 %v2009
      %v2034 = vunpack.c.l.b16 %v2010
      %v2035 = vunpack.c.l.b16 %v2011
      %v2036 = vpack.c.b16 %v2027, %v2026
      %v2037 = vpack.c.b16 %v2029, %v2028
      %v2038 = vpack.c.b16 %v2031, %v2030
      %v2039 = vpack.c.b16 %v2033, %v2032
      %v2040 = vpack.c.b16 %v2035, %v2034
      %v2045 = vunpack.c.l.b16 %v2012
      %v2046 = vunpack.c.l.b16 %v2013
      %v2047 = vunpack.c.l.b16 %v2014
      %v2048 = vunpack.c.l.b16 %v2015
      %v2049 = vpack.c.b16 %v2046, %v2045
      %v2050 = vpack.c.b16 %v2048, %v2047
      %vm2053 = vcmask 261120
      %v2055 = vsel %vm2053, %v2036, 0
      %v2058 = vsel %vm2053, %v2037, 0
      %v2061 = vsel %vm2053, %v2038, 0
      %v2064 = vsel %vm2053, %v2039, 0
      %v2067 = vsel %vm2053, %v2040, 0
      %2069 = vmatpush.bf16.msra.mxu0 0
      %2070 = vmatpush.bf16.msra.mxu0 0
      %2071 = vmatpush.bf16.msra.mxu0 0
      %2072 = vmatpush.bf16.msra.mxu0 0
      %2073 = vmatpush.bf16.msra.mxu0 0
      %2074 = vmatpush.bf16.msra.mxu0 0
      %2075 = vmatpush.bf16.msra.mxu0 %v2050
      %2076 = vmatpush.bf16.msra.mxu0 %v2049
      %2077 = vmatmul.bf16.gmra.mxu0 %v2055
      %v2078 = vpop.f32.mrf.mxu0
      %v2079 = vadd.f32 0.0, %v2078
      %v2080 = vpop.f32.mrf.mxu0
      %v2081 = vadd.f32 0.0, %v2080
      %2082 = vmatmul.bf16.gmra.mxu0 %v2058
      %v2083 = vpop.f32.mrf.mxu0
      %v2084 = vadd.f32 0.0, %v2083
      %v2085 = vpop.f32.mrf.mxu0
      %v2086 = vadd.f32 0.0, %v2085
      %2087 = vmatmul.bf16.gmra.mxu0 %v2061
      %v2088 = vpop.f32.mrf.mxu0
      %v2089 = vadd.f32 0.0, %v2088
      %v2090 = vpop.f32.mrf.mxu0
      %v2091 = vadd.f32 0.0, %v2090
      %2092 = vmatmul.bf16.gmra.mxu0 %v2064
      %v2093 = vpop.f32.mrf.mxu0
      %v2094 = vadd.f32 0.0, %v2093
      %v2095 = vpop.f32.mrf.mxu0
      %v2096 = vadd.f32 0.0, %v2095
      %2097 = vmatmul.bf16.gmra.mxu0 %v2067
      %v2098 = vpop.f32.mrf.mxu0
      %v2099 = vadd.f32 0.0, %v2098
      %v2100 = vpop.f32.mrf.mxu0
      %v2101 = vadd.f32 0.0, %v2100
      %2102 = vdwg.mxu0
      %v2103 = vld [vmem:[%s8] sm:$0x1]
      %v2105 = vperm.slane %v2103, 0
      %v2107 = vmul.f32 %v2079, %v2105
      %v2108 = vmul.f32 %v2081, %v2105
      %v2109 = vmul.f32 %v2084, %v2105
      %v2110 = vmul.f32 %v2086, %v2105
      %v2111 = vmul.f32 %v2089, %v2105
      %v2112 = vmul.f32 %v2091, %v2105
      %v2113 = vmul.f32 %v2094, %v2105
      %v2114 = vmul.f32 %v2096, %v2105
      %v2115 = vmul.f32 %v2099, %v2105
      %v2116 = vmul.f32 %v2101, %v2105
      %v2117 = vld [vmem:[%s9] sm:$0x1]
      %v2119 = vperm.slane %v2117, 0
      %v2121 = vadd.f32 %v2107, %v2119
      %v2122 = vadd.f32 %v2108, %v2119
      %v2123 = vadd.f32 %v2109, %v2119
      %v2124 = vadd.f32 %v2110, %v2119
      %v2125 = vadd.f32 %v2111, %v2119
      %v2126 = vadd.f32 %v2112, %v2119
      %v2127 = vadd.f32 %v2113, %v2119
      %v2128 = vadd.f32 %v2114, %v2119
      %v2129 = vadd.f32 %v2115, %v2119
      %v2130 = vadd.f32 %v2116, %v2119
      %v2131 = vmul.f32 %v1978, %v1111
      %v2132 = vmul.f32 %v1980, %v1116
      %v2133 = vmul.f32 %v1983, %v1121
      %v2134 = vmul.f32 %v1985, %v1126
      %v2135 = vmul.f32 %v1988, %v1131
      %v2136 = vmul.f32 %v1990, %v1136
      %v2137 = vmul.f32 %v1993, %v1141
      %v2138 = vmul.f32 %v1995, %v1146
      %v2139 = vmul.f32 %v1998, %v1151
      %v2140 = vmul.f32 %v2000, %v1156
      %v2141 = vsel %vm1453, %v2131, 0.0
      %v2142 = vsel %vm1453, %v2132, 0.0
      %v2143 = vadd.f32 %v2141, %v2142
      %v2144 = vsel %vm1453, %v2133, 0.0
      %v2145 = vadd.f32 %v2143, %v2144
      %v2146 = vsel %vm1453, %v2134, 0.0
      %v2147 = vadd.f32 %v2145, %v2146
      %v2148 = vsel %vm1453, %v2135, 0.0
      %v2149 = vadd.f32 %v2147, %v2148
      %v2150 = vsel %vm1453, %v2136, 0.0
      %v2151 = vadd.f32 %v2149, %v2150
      %v2152 = vsel %vm1453, %v2137, 0.0
      %v2153 = vadd.f32 %v2151, %v2152
      %v2154 = vsel %vm1453, %v2138, 0.0
      %v2155 = vadd.f32 %v2153, %v2154
      %v2156 = vsel %vm1453, %v2139, 0.0
      %v2157 = vadd.f32 %v2155, %v2156
      %v2158 = vsel %vm1453, %v2140, 0.0
      %v2159 = vadd.f32 %v2157, %v2158
      %v2160 = vrot.slane %v2159, 4
      %v2161 = vadd.f32 %v2159, %v2160
      %v2162 = vrot.slane %v2161, 2
      %v2163 = vadd.f32 %v2161, %v2162
      %v2164 = vrot.slane %v2163, 1
      %v2165 = vadd.f32 %v2163, %v2164
      %v2166 = vmul.f32 %v2165, 0.015625
      %v2167 = vld [vmem:[%s10] sm:$0xff]
      %v2168 = vld [vmem:[%s10 + $0x8] sm:$0xff]
      %v2169 = vld [vmem:[%s10 + $0x10] sm:$0xff]
      %v2170 = vld [vmem:[%s10 + $0x18] sm:$0xff]
      %v2171 = vld [vmem:[%s10 + $0x20] sm:$0xff]
      %v2172 = vld [vmem:[%s10 + $0x28] sm:$0xff]
      %v2173 = vld [vmem:[%s10 + $0x30] sm:$0xff]
      %v2174 = vld [vmem:[%s10 + $0x38] sm:$0xff]
      %v2175 = vld [vmem:[%s11] sm:$0x1]
      %v2177 = vsel %vm1453, %v2166, 0
      %2179 = vmatpush.msra.mxu0 0.0
      %2180 = vmatpush.msra.mxu0 0.0
      %2181 = vmatpush.msra.mxu0 0.0
      %2182 = vmatpush.msra.mxu0 0.0
      %2183 = vmatpush.msra.mxu0 0.0
      %2184 = vmatpush.msra.mxu0 0.0
      %2185 = vmatpush.msra.mxu0 0.0
      %2186 = vmatpush.msra.mxu0 0.0
      %2187 = vmatpush.msra.mxu0 %v2174
      %2188 = vmatpush.msra.mxu0 %v2173
      %2189 = vmatpush.msra.mxu0 %v2172
      %2190 = vmatpush.msra.mxu0 %v2171
      %2191 = vmatpush.msra.mxu0 %v2170
      %2192 = vmatpush.msra.mxu0 %v2169
      %2193 = vmatpush.msra.mxu0 %v2168
      %2194 = vmatpush.msra.mxu0 %v2167
      %2195 = vmatmul.f32.gmra.mxu0 %v2177
      %v2196 = vpop.f32.mrf.mxu0
      %v2197 = vadd.f32 %v2175, %v2196
      %2198 = vdwg.mxu0
      %v2199 = vmax.f32 %v2197, 0.0
      %v2200 = vld [vmem:[%s12] sm:$0xf]
      %v2201 = vld [vmem:[%s13] sm:$0x1]
      %vm2202 = vcmask 31744
      %v2204 = vsel %vm2202, %v2199, 0
      %vm2206 = vcmask 1043456
      %v2208 = vsel %vm2206, %v2200, 0
      %2210 = vmatpush.msra.mxu0 0.0
      %2211 = vmatpush.msra.mxu0 0.0
      %2212 = vmatpush.msra.mxu0 0.0
      %2213 = vmatpush.msra.mxu0 0.0
      %2214 = vmatpush.msra.mxu0 0.0
      %2215 = vmatpush.msra.mxu0 0.0
      %2216 = vmatpush.msra.mxu0 0.0
      %2217 = vmatpush.msra.mxu0 0.0
      %2218 = vmatpush.msra.mxu0 0.0
      %2219 = vmatpush.msra.mxu0 0.0
      %2220 = vmatpush.msra.mxu0 0.0
      %2221 = vmatpush.msra.mxu0 0.0
      %2222 = vmatpush.msra.mxu0 0.0
      %2223 = vmatpush.msra.mxu0 0.0
      %2224 = vmatpush.msra.mxu0 0.0
      %2225 = vmatpush.msra.mxu0 %v2208
      %2226 = vmatmul.f32.gmra.mxu0 %v2204
      %v2227 = vpop.f32.mrf.mxu0
      %v2228 = vadd.f32 %v2201, %v2227
      %2229 = vdwg.mxu0
      %v2230 = vxor.u32 %v2228, 2147483648
      %v2231 = vmul.f32 %v2230, 1.442695
      %v2232 = vpow.pop %v2231
      %v2233 = vadd.f32 %v2232, 1.0
      %v2234 = vrcp.pop %v2233
      %v2235 = vmul.f32 %v2233, %v2234
      %v2236 = vsub.f32 1.0, %v2235
      %v2237 = vmul.f32 %v2234, %v2236
      %v2238 = vadd.f32 %v2234, %v2237
      %vm2239 = vweird.f32 %v2233
      %vm2240 = vweird.f32 %v2234
      %vm2241 = vmor %vm2239, %vm2240
      %v2242 = vsel %vm2241, %v2234, %v2238
      %v2243 = vand.u32 2147483647, %v2233
      %vm2244 = vcmp.eq.f32.partialorder %v2243, 8.507059e+37
      %v2245 = vand.u32 %v2233, 2147483648
      %v2246 = vor.u32 1.1754944e-38, %v2245
      %v2247 = vsel %vm2244, %v2246, %v2242
      %v2248 = vmul.f32 1.0, %v2247
      %v2249 = vperm.slane %v2248, 0
      %v2250 = vmul.f32 %v1978, %v2249
      %v2251 = vmul.f32 %v1980, %v2249
      %v2252 = vmul.f32 %v1983, %v2249
      %v2253 = vmul.f32 %v1985, %v2249
      %v2254 = vmul.f32 %v1988, %v2249
      %v2255 = vmul.f32 %v1990, %v2249
      %v2256 = vmul.f32 %v1993, %v2249
      %v2257 = vmul.f32 %v1995, %v2249
      %v2258 = vmul.f32 %v1998, %v2249
      %v2259 = vmul.f32 %v2000, %v2249
      %v2260 = vadd.f32 %v2250, %v2121
      %v2261 = vadd.f32 %v2251, %v2122
      %v2262 = vadd.f32 %v2252, %v2123
      %v2263 = vadd.f32 %v2253, %v2124
      %v2264 = vadd.f32 %v2254, %v2125
      %v2265 = vadd.f32 %v2255, %v2126
      %v2266 = vadd.f32 %v2256, %v2127
      %v2267 = vadd.f32 %v2257, %v2128
      %v2268 = vadd.f32 %v2258, %v2129
      %v2269 = vadd.f32 %v2259, %v2130
      %v2270 = vpack.c.bf16 %v2260, %v2260
      %v2271 = vpack.c.bf16 %v2261, %v2261
      %v2272 = vpack.c.bf16 %v2262, %v2262
      %v2273 = vpack.c.bf16 %v2263, %v2263
      %v2274 = vpack.c.bf16 %v2264, %v2264
      %v2275 = vpack.c.bf16 %v2265, %v2265
      %v2276 = vpack.c.bf16 %v2266, %v2266
      %v2277 = vpack.c.bf16 %v2267, %v2267
      %v2278 = vpack.c.bf16 %v2268, %v2268
      %v2279 = vpack.c.bf16 %v2269, %v2269
      %vm2280 = vcmask 519168
      %2281 = vst.msk [vmem:[%s487] sm:$0xf] %vm2280, %v2270
      %2282 = vst.msk [vmem:[%s487 + $0x4] sm:$0xf] %vm2280, %v2271
      %2283 = vst.msk [vmem:[%s487 + $0x8] sm:$0xf] %vm2280, %v2272
      %2284 = vst.msk [vmem:[%s487 + $0xc] sm:$0xf] %vm2280, %v2273
      %2285 = vst.msk [vmem:[%s487 + $0x10] sm:$0xf] %vm2280, %v2274
      %2286 = vst.msk [vmem:[%s487 + $0x14] sm:$0xf] %vm2280, %v2275
      %2287 = vst.msk [vmem:[%s487 + $0x18] sm:$0xf] %vm2280, %v2276
      %2288 = vst.msk [vmem:[%s487 + $0x1c] sm:$0xf] %vm2280, %v2277
      %2289 = vst.msk [vmem:[%s487 + $0x20] sm:$0xf] %vm2280, %v2278
      %2290 = vst.msk [vmem:[%s487 + $0x24] sm:$0xf] %vm2280, %v2279
      %p2291 = scmp.lt.s32.totalorder %s25, 1
      %s2292 = scalar_select %p2291, %s25, 1
      %s2293 = smul.addr %s2292, 10
      %s2294 = smul.addr %s2293, 4
      %s2295 = scalar_lea.vmem %s14, %s2294
      // Predicated region
      $region77: #{cifar_se_preact_resnet_forward.4} parent=75 // pred_check
        %p2296 = pneg %p347
      $region78: #{cifar_se_preact_resnet_forward.4} parent=75 // pred_check_branch
        %2298 = sbr.rel (%p2296) target = $region80
      $region79: #{cifar_se_preact_resnet_forward.4} parent=75 // pred_region
        _
      $region80: #{cifar_se_preact_resnet_forward.4} parent=75 // pred_fallthru
        _
    $region76: #{cifar_se_preact_resnet_forward.4} parent=5 // pred_fallthru
      _
    %p2299 = scmp.le.s32.totalorder 2, %s20
    // Predicated region
    $region81: #{cifar_se_preact_resnet_forward.4} parent=5 // pred_check
      %p2300 = pneg %p2299
    $region82: #{cifar_se_preact_resnet_forward.4} parent=5 // pred_check_branch
      %2302 = sbr.rel (%p2300) target = $region84
    $region83: #{cifar_se_preact_resnet_forward.4} parent=5 // pred_region
      %s2303 = ssub.s32 %s20, 2
      // Predicated region
      $region85: #{cifar_se_preact_resnet_forward.4} parent=83 // pred_check
        %p2304 = pneg %p353
      $region86: #{cifar_se_preact_resnet_forward.4} parent=83 // pred_check_branch
        %2306 = sbr.rel (%p2304) target = $region88
      $region87: #{cifar_se_preact_resnet_forward.4} parent=83 // pred_region
        %p2307 = scmp.lt.s32.totalorder %s26, 1
        %s2308 = scalar_select %p2307, %s26, 1
        %s2309 = smul.addr %s2308, 10
        %s2310 = smul.addr %s2309, 4
        %s2311 = scalar_lea.vmem %s14, %s2310
      $region88: #{cifar_se_preact_resnet_forward.4} parent=83 // pred_fallthru
        _
    $region84: #{cifar_se_preact_resnet_forward.4} parent=5 // pred_fallthru
      _
  $region6: #{cifar_se_preact_resnet_forward.4} parent=0 // loop_footer
    %s24 = sadd.s32 1, %s20
  $region7: #{cifar_se_preact_resnet_forward.4} parent=0 // loop_footer_branch
    %19 = sbr.rel target = $region3
  $region8: #{cifar_se_preact_resnet_forward.4} parent=0 // loop_exit
    _

// kernel: cifar_se_preact_resnet_forward.5
$region0: #{cifar_se_preact_resnet_forward.5}
  #allocation0 [shape = 'u32[]', space=smem, size = 0x4, offset = 0x4, fixed_abs, tag = 'smem constant byte address 0x4 - core index']
  #allocation1 [shape = 'u32[72,128]{1,0:T(1,128)}', space=vmem, size = 0x9000, scoped, tag = 'internal scratch']
  %s0 = inlined_call_operand.vmem [shape: bf16[2,32,256], index: 0, kind: input, shape index: {}]
  %s1 = inlined_call_operand.vmem [shape: f32[24,1], index: 1, kind: input, shape index: {}]
  %s2 = inlined_call_operand.vmem [shape: bf16[1024,128], index: 2, kind: input, shape index: {}]
  %s3 = inlined_call_operand.vmem [shape: f32[1,128], index: 3, kind: input, shape index: {}]
  %s4 = inlined_call_operand.vmem [shape: f32[1,128], index: 4, kind: input, shape index: {}]
  %s5 = inlined_call_operand.vmem [shape: bf16[1152,128], index: 5, kind: input, shape index: {}]
  %s6 = inlined_call_operand.vmem [shape: bf16[2,24,64], index: 6, kind: input, shape index: {}]
  %s7 = inlined_call_operand.vmem [shape: bf16[64,128], index: 7, kind: input, shape index: {}]
  %s8 = inlined_call_operand.vmem [shape: f32[1,128], index: 8, kind: input, shape index: {}]
  %s9 = inlined_call_operand.vmem [shape: f32[1,128], index: 9, kind: input, shape index: {}]
  %s10 = inlined_call_operand.vmem [shape: f32[128,8], index: 10, kind: input, shape index: {}]
  %s11 = inlined_call_operand.vmem [shape: f32[1,8], index: 11, kind: input, shape index: {}]
  %s12 = inlined_call_operand.vmem [shape: f32[8,128], index: 12, kind: input, shape index: {}]
  %s13 = inlined_call_operand.vmem [shape: f32[1,128], index: 13, kind: input, shape index: {}]
  %s14 = inlined_call_operand.vmem [shape: f32[1,128], index: 14, kind: input, shape index: {}]
  %s15 = inlined_call_operand.vmem [shape: f32[1,128], index: 15, kind: input, shape index: {}]
  %s16 = inlined_call_operand.vmem [shape: f32[128,10], index: 16, kind: input, shape index: {}]
  %s17 = inlined_call_operand.vmem [shape: f32[1,10], index: 17, kind: input, shape index: {}]
  %s18 = inlined_call_operand.hbm [shape: f32[2,1,10], index: 18, kind: output, shape index: {}]
  %s19 = sld [smem:[#allocation0]]
  $region105: #{cifar_se_preact_resnet_forward.5} parent=0
    _
  %s21 = ssub.s32 1, %s19
  %s22 = scalar_select 0, %s21, %s19
  $region1: #{cifar_se_preact_resnet_forward.5} parent=0
    #allocation2 [shape = 'u8[1024]{0}', space=vmem, size = 0x400, scoped, tag = 'output window, operand 0']
    #allocation3 [shape = 's32[2]{0}', space=sflag, size = 0x8, scoped, tag = 'scoped memory for cifar_se_preact_resnet_forward.5']
    %23 = vsyncpa [#allocation3], 0
    %s24 = scalar_lea.sflag [#allocation3], 1
    %25 = vsyncpa %s24, 0
    loop: start=0, step=1, limit=4
    $region2: #{cifar_se_preact_resnet_forward.5} parent=1 // loop_pre_header
      _
    $region3: #{cifar_se_preact_resnet_forward.5} parent=1 // loop_header
      %s27 = sphi 0, %s31
      %p28 = scmp.ge.s32.totalorder %s27, 4
      %s37 = sphi 0, %s39
      %s40 = sphi 0, %s37
      %s41 = sphi 0, %s40
      %s57 = sphi 0, %s41
      %s61 = sphi 0, %s61
      %s63 = sphi 0, %s61
      %s64 = sphi 0, %s63
      %s78 = sphi 0, %s64
      %s82 = sphi 0, %s82
      %s84 = sphi 0, %s82
      %s85 = sphi 0, %s84
      %s99 = sphi 0, %s85
      %s103 = sphi 0, %s103
      %s105 = sphi 0, %s103
      %s106 = sphi 0, %s105
      %s120 = sphi 0, %s106
      %s124 = sphi 0, %s124
      %s126 = sphi 0, %s124
      %s127 = sphi 0, %s126
      %s141 = sphi 0, %s127
      %s145 = sphi 0, %s145
      %s147 = sphi 0, %s145
      %s148 = sphi 0, %s147
      %s162 = sphi 0, %s148
      %s168 = sphi 0, %s170
      %s171 = sphi 0, %s168
      %s172 = sphi 0, %s171
      %s188 = sphi 0, %s172
      %s192 = sphi 0, %s192
      %s194 = sphi 0, %s192
      %s195 = sphi 0, %s194
      %s209 = sphi 0, %s195
      %s213 = sphi 0, %s213
      %s215 = sphi 0, %s213
      %s216 = sphi 0, %s215
      %s230 = sphi 0, %s216
      %s234 = sphi 0, %s234
      %s236 = sphi 0, %s234
      %s237 = sphi 0, %s236
      %s251 = sphi 0, %s237
      %s255 = sphi 0, %s255
      %s257 = sphi 0, %s255
      %s258 = sphi 0, %s257
      %s272 = sphi 0, %s258
      %s276 = sphi 0, %s276
      %s278 = sphi 0, %s276
      %s279 = sphi 0, %s278
      %s293 = sphi 0, %s279
      %s297 = sphi 0, %s297
      %s299 = sphi 0, %s297
      %s300 = sphi 0, %s299
      %s314 = sphi 0, %s300
      %s318 = sphi 0, %s318
      %s320 = sphi 0, %s318
      %s321 = sphi 0, %s320
      %s335 = sphi 0, %s321
      %s339 = sphi 0, %s339
      %s341 = sphi 0, %s339
      %s342 = sphi 0, %s341
      %s356 = sphi 0, %s342
      %s360 = sphi 0, %s360
      %s362 = sphi 0, %s360
      %s363 = sphi 0, %s362
      %s377 = sphi 0, %s363
      %s381 = sphi 0, %s381
      %s383 = sphi 0, %s381
      %s384 = sphi 0, %s383
      %s398 = sphi 0, %s384
      %s402 = sphi 0, %s402
      %s404 = sphi 0, %s402
      %s405 = sphi 0, %s404
      %s419 = sphi 0, %s405
      %s425 = sphi 0, %s427
      %s428 = sphi 0, %s425
      %s429 = sphi 0, %s428
      %s445 = sphi 0, %s429
    $region4: #{cifar_se_preact_resnet_forward.5} parent=1 // loop_header_branch
      %30 = sbr.rel (%p28) target = $region8
    $region5: #{cifar_se_preact_resnet_forward.5} parent=1 // loop_body
      %s32 = ssub.s32 %s27, 1
      %s33 = ssub.s32 %s27, 2
      %s34 = sadd.s32 %s27, 1
      %s35 = ssub.s32 %s27, %s34
      %p36 = scmp.eq.s32.totalorder %s35, 0
      %s38 = sadd.s32 %s37, 1
      %s39 = scalar_select %p36, %s37, %s38
      %p42 = pneg %p36
      %p43 = scmp.eq.s32.totalorder %s27, 1
      %p44 = por %p42, %p43
      %p45 = scmp.ne.s32.totalorder %s37, %s40
      %p46 = scmp.eq.s32.totalorder %s27, 0
      %p47 = por %p45, %p46
      %p48 = scmp.ne.s32.totalorder %s37, %s40
      %p49 = scmp.eq.s32.totalorder %s32, 1
      %p50 = por %p48, %p49
      %p51 = scmp.ne.s32.totalorder %s40, %s41
      %p52 = scmp.eq.s32.totalorder %s32, 0
      %p53 = por %p51, %p52
      %p54 = scmp.ne.s32.totalorder %s40, %s41
      %p55 = scmp.eq.s32.totalorder %s33, 1
      %p56 = por %p54, %p55
      %p58 = scmp.ne.s32.totalorder %s41, %s57
      %p59 = scmp.eq.s32.totalorder %s33, 0
      %p60 = por %p58, %p59
      %s62 = sadd.s32 %s61, 1
      %p65 = scmp.eq.s32.totalorder %s27, 1
      %p66 = scmp.ne.s32.totalorder %s61, %s63
      %p67 = scmp.eq.s32.totalorder %s27, 0
      %p68 = por %p66, %p67
      %p69 = scmp.ne.s32.totalorder %s61, %s63
      %p70 = scmp.eq.s32.totalorder %s32, 1
      %p71 = por %p69, %p70
      %p72 = scmp.ne.s32.totalorder %s63, %s64
      %p73 = scmp.eq.s32.totalorder %s32, 0
      %p74 = por %p72, %p73
      %p75 = scmp.ne.s32.totalorder %s63, %s64
      %p76 = scmp.eq.s32.totalorder %s33, 1
      %p77 = por %p75, %p76
      %p79 = scmp.ne.s32.totalorder %s64, %s78
      %p80 = scmp.eq.s32.totalorder %s33, 0
      %p81 = por %p79, %p80
      %s83 = sadd.s32 %s82, 1
      %p86 = scmp.eq.s32.totalorder %s27, 1
      %p87 = scmp.ne.s32.totalorder %s82, %s84
      %p88 = scmp.eq.s32.totalorder %s27, 0
      %p89 = por %p87, %p88
      %p90 = scmp.ne.s32.totalorder %s82, %s84
      %p91 = scmp.eq.s32.totalorder %s32, 1
      %p92 = por %p90, %p91
      %p93 = scmp.ne.s32.totalorder %s84, %s85
      %p94 = scmp.eq.s32.totalorder %s32, 0
      %p95 = por %p93, %p94
      %p96 = scmp.ne.s32.totalorder %s84, %s85
      %p97 = scmp.eq.s32.totalorder %s33, 1
      %p98 = por %p96, %p97
      %p100 = scmp.ne.s32.totalorder %s85, %s99
      %p101 = scmp.eq.s32.totalorder %s33, 0
      %p102 = por %p100, %p101
      %s104 = sadd.s32 %s103, 1
      %p107 = scmp.eq.s32.totalorder %s27, 1
      %p108 = scmp.ne.s32.totalorder %s103, %s105
      %p109 = scmp.eq.s32.totalorder %s27, 0
      %p110 = por %p108, %p109
      %p111 = scmp.ne.s32.totalorder %s103, %s105
      %p112 = scmp.eq.s32.totalorder %s32, 1
      %p113 = por %p111, %p112
      %p114 = scmp.ne.s32.totalorder %s105, %s106
      %p115 = scmp.eq.s32.totalorder %s32, 0
      %p116 = por %p114, %p115
      %p117 = scmp.ne.s32.totalorder %s105, %s106
      %p118 = scmp.eq.s32.totalorder %s33, 1
      %p119 = por %p117, %p118
      %p121 = scmp.ne.s32.totalorder %s106, %s120
      %p122 = scmp.eq.s32.totalorder %s33, 0
      %p123 = por %p121, %p122
      %s125 = sadd.s32 %s124, 1
      %p128 = scmp.eq.s32.totalorder %s27, 1
      %p129 = scmp.ne.s32.totalorder %s124, %s126
      %p130 = scmp.eq.s32.totalorder %s27, 0
      %p131 = por %p129, %p130
      %p132 = scmp.ne.s32.totalorder %s124, %s126
      %p133 = scmp.eq.s32.totalorder %s32, 1
      %p134 = por %p132, %p133
      %p135 = scmp.ne.s32.totalorder %s126, %s127
      %p136 = scmp.eq.s32.totalorder %s32, 0
      %p137 = por %p135, %p136
      %p138 = scmp.ne.s32.totalorder %s126, %s127
      %p139 = scmp.eq.s32.totalorder %s33, 1
      %p140 = por %p138, %p139
      %p142 = scmp.ne.s32.totalorder %s127, %s141
      %p143 = scmp.eq.s32.totalorder %s33, 0
      %p144 = por %p142, %p143
      %s146 = sadd.s32 %s145, 1
      %p149 = scmp.eq.s32.totalorder %s27, 1
      %p150 = scmp.ne.s32.totalorder %s145, %s147
      %p151 = scmp.eq.s32.totalorder %s27, 0
      %p152 = por %p150, %p151
      %p153 = scmp.ne.s32.totalorder %s145, %s147
      %p154 = scmp.eq.s32.totalorder %s32, 1
      %p155 = por %p153, %p154
      %p156 = scmp.ne.s32.totalorder %s147, %s148
      %p157 = scmp.eq.s32.totalorder %s32, 0
      %p158 = por %p156, %p157
      %p159 = scmp.ne.s32.totalorder %s147, %s148
      %p160 = scmp.eq.s32.totalorder %s33, 1
      %p161 = por %p159, %p160
      %p163 = scmp.ne.s32.totalorder %s148, %s162
      %p164 = scmp.eq.s32.totalorder %s33, 0
      %p165 = por %p163, %p164
      %s166 = ssub.s32 %s27, %s34
      %p167 = scmp.eq.s32.totalorder %s166, 0
      %s169 = sadd.s32 %s168, 1
      %s170 = scalar_select %p167, %s168, %s169
      %p173 = pneg %p167
      %p174 = scmp.eq.s32.totalorder %s27, 1
      %p175 = por %p173, %p174
      %p176 = scmp.ne.s32.totalorder %s168, %s171
      %p177 = scmp.eq.s32.totalorder %s27, 0
      %p178 = por %p176, %p177
      %p179 = scmp.ne.s32.totalorder %s168, %s171
      %p180 = scmp.eq.s32.totalorder %s32, 1
      %p181 = por %p179, %p180
      %p182 = scmp.ne.s32.totalorder %s171, %s172
      %p183 = scmp.eq.s32.totalorder %s32, 0
      %p184 = por %p182, %p183
      %p185 = scmp.ne.s32.totalorder %s171, %s172
      %p186 = scmp.eq.s32.totalorder %s33, 1
      %p187 = por %p185, %p186
      %p189 = scmp.ne.s32.totalorder %s172, %s188
      %p190 = scmp.eq.s32.totalorder %s33, 0
      %p191 = por %p189, %p190
      %s193 = sadd.s32 %s192, 1
      %p196 = scmp.eq.s32.totalorder %s27, 1
      %p197 = scmp.ne.s32.totalorder %s192, %s194
      %p198 = scmp.eq.s32.totalorder %s27, 0
      %p199 = por %p197, %p198
      %p200 = scmp.ne.s32.totalorder %s192, %s194
      %p201 = scmp.eq.s32.totalorder %s32, 1
      %p202 = por %p200, %p201
      %p203 = scmp.ne.s32.totalorder %s194, %s195
      %p204 = scmp.eq.s32.totalorder %s32, 0
      %p205 = por %p203, %p204
      %p206 = scmp.ne.s32.totalorder %s194, %s195
      %p207 = scmp.eq.s32.totalorder %s33, 1
      %p208 = por %p206, %p207
      %p210 = scmp.ne.s32.totalorder %s195, %s209
      %p211 = scmp.eq.s32.totalorder %s33, 0
      %p212 = por %p210, %p211
      %s214 = sadd.s32 %s213, 1
      %p217 = scmp.eq.s32.totalorder %s27, 1
      %p218 = scmp.ne.s32.totalorder %s213, %s215
      %p219 = scmp.eq.s32.totalorder %s27, 0
      %p220 = por %p218, %p219
      %p221 = scmp.ne.s32.totalorder %s213, %s215
      %p222 = scmp.eq.s32.totalorder %s32, 1
      %p223 = por %p221, %p222
      %p224 = scmp.ne.s32.totalorder %s215, %s216
      %p225 = scmp.eq.s32.totalorder %s32, 0
      %p226 = por %p224, %p225
      %p227 = scmp.ne.s32.totalorder %s215, %s216
      %p228 = scmp.eq.s32.totalorder %s33, 1
      %p229 = por %p227, %p228
      %p231 = scmp.ne.s32.totalorder %s216, %s230
      %p232 = scmp.eq.s32.totalorder %s33, 0
      %p233 = por %p231, %p232
      %s235 = sadd.s32 %s234, 1
      %p238 = scmp.eq.s32.totalorder %s27, 1
      %p239 = scmp.ne.s32.totalorder %s234, %s236
      %p240 = scmp.eq.s32.totalorder %s27, 0
      %p241 = por %p239, %p240
      %p242 = scmp.ne.s32.totalorder %s234, %s236
      %p243 = scmp.eq.s32.totalorder %s32, 1
      %p244 = por %p242, %p243
      %p245 = scmp.ne.s32.totalorder %s236, %s237
      %p246 = scmp.eq.s32.totalorder %s32, 0
      %p247 = por %p245, %p246
      %p248 = scmp.ne.s32.totalorder %s236, %s237
      %p249 = scmp.eq.s32.totalorder %s33, 1
      %p250 = por %p248, %p249
      %p252 = scmp.ne.s32.totalorder %s237, %s251
      %p253 = scmp.eq.s32.totalorder %s33, 0
      %p254 = por %p252, %p253
      %s256 = sadd.s32 %s255, 1
      %p259 = scmp.eq.s32.totalorder %s27, 1
      %p260 = scmp.ne.s32.totalorder %s255, %s257
      %p261 = scmp.eq.s32.totalorder %s27, 0
      %p262 = por %p260, %p261
      %p263 = scmp.ne.s32.totalorder %s255, %s257
      %p264 = scmp.eq.s32.totalorder %s32, 1
      %p265 = por %p263, %p264
      %p266 = scmp.ne.s32.totalorder %s257, %s258
      %p267 = scmp.eq.s32.totalorder %s32, 0
      %p268 = por %p266, %p267
      %p269 = scmp.ne.s32.totalorder %s257, %s258
      %p270 = scmp.eq.s32.totalorder %s33, 1
      %p271 = por %p269, %p270
      %p273 = scmp.ne.s32.totalorder %s258, %s272
      %p274 = scmp.eq.s32.totalorder %s33, 0
      %p275 = por %p273, %p274
      %s277 = sadd.s32 %s276, 1
      %p280 = scmp.eq.s32.totalorder %s27, 1
      %p281 = scmp.ne.s32.totalorder %s276, %s278
      %p282 = scmp.eq.s32.totalorder %s27, 0
      %p283 = por %p281, %p282
      %p284 = scmp.ne.s32.totalorder %s276, %s278
      %p285 = scmp.eq.s32.totalorder %s32, 1
      %p286 = por %p284, %p285
      %p287 = scmp.ne.s32.totalorder %s278, %s279
      %p288 = scmp.eq.s32.totalorder %s32, 0
      %p289 = por %p287, %p288
      %p290 = scmp.ne.s32.totalorder %s278, %s279
      %p291 = scmp.eq.s32.totalorder %s33, 1
      %p292 = por %p290, %p291
      %p294 = scmp.ne.s32.totalorder %s279, %s293
      %p295 = scmp.eq.s32.totalorder %s33, 0
      %p296 = por %p294, %p295
      %s298 = sadd.s32 %s297, 1
      %p301 = scmp.eq.s32.totalorder %s27, 1
      %p302 = scmp.ne.s32.totalorder %s297, %s299
      %p303 = scmp.eq.s32.totalorder %s27, 0
      %p304 = por %p302, %p303
      %p305 = scmp.ne.s32.totalorder %s297, %s299
      %p306 = scmp.eq.s32.totalorder %s32, 1
      %p307 = por %p305, %p306
      %p308 = scmp.ne.s32.totalorder %s299, %s300
      %p309 = scmp.eq.s32.totalorder %s32, 0
      %p310 = por %p308, %p309
      %p311 = scmp.ne.s32.totalorder %s299, %s300
      %p312 = scmp.eq.s32.totalorder %s33, 1
      %p313 = por %p311, %p312
      %p315 = scmp.ne.s32.totalorder %s300, %s314
      %p316 = scmp.eq.s32.totalorder %s33, 0
      %p317 = por %p315, %p316
      %s319 = sadd.s32 %s318, 1
      %p322 = scmp.eq.s32.totalorder %s27, 1
      %p323 = scmp.ne.s32.totalorder %s318, %s320
      %p324 = scmp.eq.s32.totalorder %s27, 0
      %p325 = por %p323, %p324
      %p326 = scmp.ne.s32.totalorder %s318, %s320
      %p327 = scmp.eq.s32.totalorder %s32, 1
      %p328 = por %p326, %p327
      %p329 = scmp.ne.s32.totalorder %s320, %s321
      %p330 = scmp.eq.s32.totalorder %s32, 0
      %p331 = por %p329, %p330
      %p332 = scmp.ne.s32.totalorder %s320, %s321
      %p333 = scmp.eq.s32.totalorder %s33, 1
      %p334 = por %p332, %p333
      %p336 = scmp.ne.s32.totalorder %s321, %s335
      %p337 = scmp.eq.s32.totalorder %s33, 0
      %p338 = por %p336, %p337
      %s340 = sadd.s32 %s339, 1
      %p343 = scmp.eq.s32.totalorder %s27, 1
      %p344 = scmp.ne.s32.totalorder %s339, %s341
      %p345 = scmp.eq.s32.totalorder %s27, 0
      %p346 = por %p344, %p345
      %p347 = scmp.ne.s32.totalorder %s339, %s341
      %p348 = scmp.eq.s32.totalorder %s32, 1
      %p349 = por %p347, %p348
      %p350 = scmp.ne.s32.totalorder %s341, %s342
      %p351 = scmp.eq.s32.totalorder %s32, 0
      %p352 = por %p350, %p351
      %p353 = scmp.ne.s32.totalorder %s341, %s342
      %p354 = scmp.eq.s32.totalorder %s33, 1
      %p355 = por %p353, %p354
      %p357 = scmp.ne.s32.totalorder %s342, %s356
      %p358 = scmp.eq.s32.totalorder %s33, 0
      %p359 = por %p357, %p358
      %s361 = sadd.s32 %s360, 1
      %p364 = scmp.eq.s32.totalorder %s27, 1
      %p365 = scmp.ne.s32.totalorder %s360, %s362
      %p366 = scmp.eq.s32.totalorder %s27, 0
      %p367 = por %p365, %p366
      %p368 = scmp.ne.s32.totalorder %s360, %s362
      %p369 = scmp.eq.s32.totalorder %s32, 1
      %p370 = por %p368, %p369
      %p371 = scmp.ne.s32.totalorder %s362, %s363
      %p372 = scmp.eq.s32.totalorder %s32, 0
      %p373 = por %p371, %p372
      %p374 = scmp.ne.s32.totalorder %s362, %s363
      %p375 = scmp.eq.s32.totalorder %s33, 1
      %p376 = por %p374, %p375
      %p378 = scmp.ne.s32.totalorder %s363, %s377
      %p379 = scmp.eq.s32.totalorder %s33, 0
      %p380 = por %p378, %p379
      %s382 = sadd.s32 %s381, 1
      %p385 = scmp.eq.s32.totalorder %s27, 1
      %p386 = scmp.ne.s32.totalorder %s381, %s383
      %p387 = scmp.eq.s32.totalorder %s27, 0
      %p388 = por %p386, %p387
      %p389 = scmp.ne.s32.totalorder %s381, %s383
      %p390 = scmp.eq.s32.totalorder %s32, 1
      %p391 = por %p389, %p390
      %p392 = scmp.ne.s32.totalorder %s383, %s384
      %p393 = scmp.eq.s32.totalorder %s32, 0
      %p394 = por %p392, %p393
      %p395 = scmp.ne.s32.totalorder %s383, %s384
      %p396 = scmp.eq.s32.totalorder %s33, 1
      %p397 = por %p395, %p396
      %p399 = scmp.ne.s32.totalorder %s384, %s398
      %p400 = scmp.eq.s32.totalorder %s33, 0
      %p401 = por %p399, %p400
      %s403 = sadd.s32 %s402, 1
      %p406 = scmp.eq.s32.totalorder %s27, 1
      %p407 = scmp.ne.s32.totalorder %s402, %s404
      %p408 = scmp.eq.s32.totalorder %s27, 0
      %p409 = por %p407, %p408
      %p410 = scmp.ne.s32.totalorder %s402, %s404
      %p411 = scmp.eq.s32.totalorder %s32, 1
      %p412 = por %p410, %p411
      %p413 = scmp.ne.s32.totalorder %s404, %s405
      %p414 = scmp.eq.s32.totalorder %s32, 0
      %p415 = por %p413, %p414
      %p416 = scmp.ne.s32.totalorder %s404, %s405
      %p417 = scmp.eq.s32.totalorder %s33, 1
      %p418 = por %p416, %p417
      %p420 = scmp.ne.s32.totalorder %s405, %s419
      %p421 = scmp.eq.s32.totalorder %s33, 0
      %p422 = por %p420, %p421
      %s423 = ssub.s32 %s27, %s34
      %p424 = scmp.eq.s32.totalorder %s423, 0
      %s426 = sadd.s32 %s425, 1
      %s427 = scalar_select %p424, %s425, %s426
      %p430 = pneg %p424
      %p431 = scmp.eq.s32.totalorder %s27, 1
      %p432 = por %p430, %p431
      %p433 = scmp.ne.s32.totalorder %s425, %s428
      %p434 = scmp.eq.s32.totalorder %s27, 0
      %p435 = por %p433, %p434
      %p436 = scmp.ne.s32.totalorder %s425, %s428
      %p437 = scmp.eq.s32.totalorder %s32, 1
      %p438 = por %p436, %p437
      %p439 = scmp.ne.s32.totalorder %s428, %s429
      %p440 = scmp.eq.s32.totalorder %s32, 0
      %p441 = por %p439, %p440
      %p442 = scmp.ne.s32.totalorder %s428, %s429
      %p443 = scmp.eq.s32.totalorder %s33, 1
      %p444 = por %p442, %p443
      %p446 = scmp.ne.s32.totalorder %s429, %s445
      %p447 = scmp.eq.s32.totalorder %s33, 0
      %p448 = por %p446, %p447
      %p449 = scmp.le.s32.totalorder 1, %s27
      %p450 = scmp.lt.s32.totalorder %s27, 3
      %p451 = pnand %p449, %p450
      %p452 = pneg %p451
      // Predicated region
      $region9: #{cifar_se_preact_resnet_forward.5} parent=5 // pred_check
        _
      $region10: #{cifar_se_preact_resnet_forward.5} parent=5 // pred_check_branch
        %454 = sbr.rel (%p451) target = $region12
      $region11: #{cifar_se_preact_resnet_forward.5} parent=5 // pred_region
        %s455 = ssub.s32 %s27, 1
        // Predicated region
        $region13: #{cifar_se_preact_resnet_forward.5} parent=11 // pred_check
          %p456 = pneg %p74
        $region14: #{cifar_se_preact_resnet_forward.5} parent=11 // pred_check_branch
          %458 = sbr.rel (%p456) target = $region16
        $region15: #{cifar_se_preact_resnet_forward.5} parent=11 // pred_region
          _
        $region16: #{cifar_se_preact_resnet_forward.5} parent=11 // pred_fallthru
          _
        // Predicated region
        $region17: #{cifar_se_preact_resnet_forward.5} parent=11 // pred_check
          %p459 = pneg %p95
        $region18: #{cifar_se_preact_resnet_forward.5} parent=11 // pred_check_branch
          %461 = sbr.rel (%p459) target = $region20
        $region19: #{cifar_se_preact_resnet_forward.5} parent=11 // pred_region
          _
        $region20: #{cifar_se_preact_resnet_forward.5} parent=11 // pred_fallthru
          _
        // Predicated region
        $region21: #{cifar_se_preact_resnet_forward.5} parent=11 // pred_check
          %p462 = pneg %p116
        $region22: #{cifar_se_preact_resnet_forward.5} parent=11 // pred_check_branch
          %464 = sbr.rel (%p462) target = $region24
        $region23: #{cifar_se_preact_resnet_forward.5} parent=11 // pred_region
          _
        $region24: #{cifar_se_preact_resnet_forward.5} parent=11 // pred_fallthru
          _
        // Predicated region
        $region25: #{cifar_se_preact_resnet_forward.5} parent=11 // pred_check
          %p465 = pneg %p137
        $region26: #{cifar_se_preact_resnet_forward.5} parent=11 // pred_check_branch
          %467 = sbr.rel (%p465) target = $region28
        $region27: #{cifar_se_preact_resnet_forward.5} parent=11 // pred_region
          _
        $region28: #{cifar_se_preact_resnet_forward.5} parent=11 // pred_fallthru
          _
        // Predicated region
        $region29: #{cifar_se_preact_resnet_forward.5} parent=11 // pred_check
          %p468 = pneg %p158
        $region30: #{cifar_se_preact_resnet_forward.5} parent=11 // pred_check_branch
          %470 = sbr.rel (%p468) target = $region32
        $region31: #{cifar_se_preact_resnet_forward.5} parent=11 // pred_region
          _
        $region32: #{cifar_se_preact_resnet_forward.5} parent=11 // pred_fallthru
          _
        // Predicated region
        $region33: #{cifar_se_preact_resnet_forward.5} parent=11 // pred_check
          %p471 = pneg %p205
        $region34: #{cifar_se_preact_resnet_forward.5} parent=11 // pred_check_branch
          %473 = sbr.rel (%p471) target = $region36
        $region35: #{cifar_se_preact_resnet_forward.5} parent=11 // pred_region
          _
        $region36: #{cifar_se_preact_resnet_forward.5} parent=11 // pred_fallthru
          _
        // Predicated region
        $region37: #{cifar_se_preact_resnet_forward.5} parent=11 // pred_check
          %p474 = pneg %p226
        $region38: #{cifar_se_preact_resnet_forward.5} parent=11 // pred_check_branch
          %476 = sbr.rel (%p474) target = $region40
        $region39: #{cifar_se_preact_resnet_forward.5} parent=11 // pred_region
          _
        $region40: #{cifar_se_preact_resnet_forward.5} parent=11 // pred_fallthru
          _
        // Predicated region
        $region41: #{cifar_se_preact_resnet_forward.5} parent=11 // pred_check
          %p477 = pneg %p247
        $region42: #{cifar_se_preact_resnet_forward.5} parent=11 // pred_check_branch
          %479 = sbr.rel (%p477) target = $region44
        $region43: #{cifar_se_preact_resnet_forward.5} parent=11 // pred_region
          _
        $region44: #{cifar_se_preact_resnet_forward.5} parent=11 // pred_fallthru
          _
        // Predicated region
        $region45: #{cifar_se_preact_resnet_forward.5} parent=11 // pred_check
          %p480 = pneg %p268
        $region46: #{cifar_se_preact_resnet_forward.5} parent=11 // pred_check_branch
          %482 = sbr.rel (%p480) target = $region48
        $region47: #{cifar_se_preact_resnet_forward.5} parent=11 // pred_region
          _
        $region48: #{cifar_se_preact_resnet_forward.5} parent=11 // pred_fallthru
          _
        // Predicated region
        $region49: #{cifar_se_preact_resnet_forward.5} parent=11 // pred_check
          %p483 = pneg %p289
        $region50: #{cifar_se_preact_resnet_forward.5} parent=11 // pred_check_branch
          %485 = sbr.rel (%p483) target = $region52
        $region51: #{cifar_se_preact_resnet_forward.5} parent=11 // pred_region
          _
        $region52: #{cifar_se_preact_resnet_forward.5} parent=11 // pred_fallthru
          _
        // Predicated region
        $region53: #{cifar_se_preact_resnet_forward.5} parent=11 // pred_check
          %p486 = pneg %p310
        $region54: #{cifar_se_preact_resnet_forward.5} parent=11 // pred_check_branch
          %488 = sbr.rel (%p486) target = $region56
        $region55: #{cifar_se_preact_resnet_forward.5} parent=11 // pred_region
          _
        $region56: #{cifar_se_preact_resnet_forward.5} parent=11 // pred_fallthru
          _
        // Predicated region
        $region57: #{cifar_se_preact_resnet_forward.5} parent=11 // pred_check
          %p489 = pneg %p331
        $region58: #{cifar_se_preact_resnet_forward.5} parent=11 // pred_check_branch
          %491 = sbr.rel (%p489) target = $region60
        $region59: #{cifar_se_preact_resnet_forward.5} parent=11 // pred_region
          _
        $region60: #{cifar_se_preact_resnet_forward.5} parent=11 // pred_fallthru
          _
        // Predicated region
        $region61: #{cifar_se_preact_resnet_forward.5} parent=11 // pred_check
          %p492 = pneg %p352
        $region62: #{cifar_se_preact_resnet_forward.5} parent=11 // pred_check_branch
          %494 = sbr.rel (%p492) target = $region64
        $region63: #{cifar_se_preact_resnet_forward.5} parent=11 // pred_region
          _
        $region64: #{cifar_se_preact_resnet_forward.5} parent=11 // pred_fallthru
          _
        // Predicated region
        $region65: #{cifar_se_preact_resnet_forward.5} parent=11 // pred_check
          %p495 = pneg %p373
        $region66: #{cifar_se_preact_resnet_forward.5} parent=11 // pred_check_branch
          %497 = sbr.rel (%p495) target = $region68
        $region67: #{cifar_se_preact_resnet_forward.5} parent=11 // pred_region
          _
        $region68: #{cifar_se_preact_resnet_forward.5} parent=11 // pred_fallthru
          _
        // Predicated region
        $region69: #{cifar_se_preact_resnet_forward.5} parent=11 // pred_check
          %p498 = pneg %p394
        $region70: #{cifar_se_preact_resnet_forward.5} parent=11 // pred_check_branch
          %500 = sbr.rel (%p498) target = $region72
        $region71: #{cifar_se_preact_resnet_forward.5} parent=11 // pred_region
          _
        $region72: #{cifar_se_preact_resnet_forward.5} parent=11 // pred_fallthru
          _
        // Predicated region
        $region73: #{cifar_se_preact_resnet_forward.5} parent=11 // pred_check
          %p501 = pneg %p415
        $region74: #{cifar_se_preact_resnet_forward.5} parent=11 // pred_check_branch
          %503 = sbr.rel (%p501) target = $region76
        $region75: #{cifar_se_preact_resnet_forward.5} parent=11 // pred_region
          _
        $region76: #{cifar_se_preact_resnet_forward.5} parent=11 // pred_fallthru
          _
      $region12: #{cifar_se_preact_resnet_forward.5} parent=5 // pred_fallthru
        _
      %p504 = scmp.lt.s32.totalorder %s27, 2
      // Predicated region
      $region77: #{cifar_se_preact_resnet_forward.5} parent=5 // pred_check
        %p505 = pneg %p504
      $region78: #{cifar_se_preact_resnet_forward.5} parent=5 // pred_check_branch
        %507 = sbr.rel (%p505) target = $region80
      $region79: #{cifar_se_preact_resnet_forward.5} parent=5 // pred_region
        // Predicated region
        $region81: #{cifar_se_preact_resnet_forward.5} parent=79 // pred_check
          %p508 = pneg %p47
        $region82: #{cifar_se_preact_resnet_forward.5} parent=79 // pred_check_branch
          %510 = sbr.rel (%p508) target = $region84
        $region83: #{cifar_se_preact_resnet_forward.5} parent=79 // pred_region
          %p511 = scmp.lt.s32.totalorder %s27, 1
          %s512 = scalar_select %p511, %s27, 1
          %s513 = smul.addr %s512, 8
          %s514 = smul.addr %s513, 4
          %s515 = scalar_lea.vmem %s0, %s514
        $region84: #{cifar_se_preact_resnet_forward.5} parent=79 // pred_fallthru
          _
        // Predicated region
        $region85: #{cifar_se_preact_resnet_forward.5} parent=79 // pred_check
          %p516 = pneg %p178
        $region86: #{cifar_se_preact_resnet_forward.5} parent=79 // pred_check_branch
          %518 = sbr.rel (%p516) target = $region88
        $region87: #{cifar_se_preact_resnet_forward.5} parent=79 // pred_region
          %p519 = scmp.lt.s32.totalorder %s27, 1
          %s520 = scalar_select %p519, %s27, 1
          %s521 = smul.addr %s520, 3
          %s522 = smul.addr %s521, 4
          %s523 = scalar_lea.vmem %s6, %s522
        $region88: #{cifar_se_preact_resnet_forward.5} parent=79 // pred_fallthru
          _
      $region80: #{cifar_se_preact_resnet_forward.5} parent=5 // pred_fallthru
        _
      %p524 = scmp.le.s32.totalorder 1, %s27
      %p525 = scmp.lt.s32.totalorder %s27, 3
      %p526 = pnand %p524, %p525
      %p527 = pneg %p526
      // Predicated region
      $region89: #{cifar_se_preact_resnet_forward.5} parent=5 // pred_check
        _
      $region90: #{cifar_se_preact_resnet_forward.5} parent=5 // pred_check_branch
        %529 = sbr.rel (%p526) target = $region92
      $region91: #{cifar_se_preact_resnet_forward.5} parent=5 // pred_region
        %s530 = ssub.s32 %s27, 1
        %p531 = scmp.lt.s32.totalorder %s32, 1
        %s532 = scalar_select %p531, %s32, 1
        %s533 = smul.addr %s532, 8
        %s534 = smul.addr %s533, 4
        %s535 = scalar_lea.vmem %s0, %s534
        %p536 = pneg %p53
        %p537 = pneg %p50
        %p538 = pneg %p74
        %p539 = pneg %p71
        %p540 = pneg %p95
        %p541 = pneg %p92
        %p542 = pneg %p116
        %p543 = pneg %p113
        %p544 = pneg %p137
        %p545 = pneg %p134
        %p546 = pneg %p158
        %p547 = pneg %p155
        %p548 = scmp.lt.s32.totalorder %s32, 1
        %s549 = scalar_select %p548, %s32, 1
        %s550 = smul.addr %s549, 3
        %s551 = smul.addr %s550, 4
        %s552 = scalar_lea.vmem %s6, %s551
        %p553 = pneg %p184
        %p554 = pneg %p181
        %p555 = pneg %p205
        %p556 = pneg %p202
        %p557 = pneg %p226
        %p558 = pneg %p223
        %p559 = pneg %p247
        %p560 = pneg %p244
        %p561 = pneg %p268
        %p562 = pneg %p265
        %p563 = pneg %p289
        %p564 = pneg %p286
        %p565 = pneg %p310
        %p566 = pneg %p307
        %p567 = pneg %p331
        %p568 = pneg %p328
        %p569 = pneg %p352
        %p570 = pneg %p349
        %p571 = pneg %p373
        %p572 = pneg %p370
        %p573 = pneg %p394
        %p574 = pneg %p391
        %p575 = pneg %p415
        %p576 = pneg %p412
        %p577 = pneg %p441
        %p578 = pneg %p438
        %s579 = sand.u32 %s428, 1
        %s580 = scalar_lea.sflag [#allocation3], %s579
        %s581 = sand.u32 %s428, 1
        %s582 = scalar_lea.vmem [#allocation2], %s581
        %p583 = scmp.lt.s32.totalorder %s32, 1
        %s584 = scalar_select %p583, %s32, 1
        %s585 = smul.addr %s584, 8
        %s586 = smul.addr %s585, 4
        %s587 = scalar_lea.vmem %s0, %s586
        %p588 = scmp.lt.s32.totalorder %s32, 1
        %s589 = scalar_select %p588, %s32, 1
        %s590 = smul.addr %s589, 3
        %s591 = smul.addr %s590, 4
        %s592 = scalar_lea.vmem %s6, %s591
        %v594 = vld [vmem:[%s1] sm:$0xff]
        %v595 = vld [vmem:[%s1 + $0x8] sm:$0xff]
        %v596 = vld [vmem:[%s1 + $0x10] sm:$0xff]
        %v597 = vld [vmem:[%s587] sm:$0xff]
        %v598 = vld [vmem:[%s587 + $0x8] sm:$0xff]
        %v599 = vld [vmem:[%s587 + $0x10] sm:$0xff]
        %v600 = vld [vmem:[%s587 + $0x18] sm:$0xff]
        %v604 = vunpack.c.l.b16 %v597
        %v605 = vunpack.c.h.b16 %v597
        %v606 = vunpack.c.l.b16 %v598
        %v607 = vunpack.c.h.b16 %v598
        %v608 = vunpack.c.l.b16 %v599
        %v609 = vunpack.c.h.b16 %v599
        %v610 = vpack.c.b16 %v606, %v604
        %v611 = vpack.c.b16 %v607, %v605
        %v612 = vpack.c.b16 %v608, %v608
        %v613 = vpack.c.b16 %v609, %v609
        %v619 = vunpack.c.l.b16 %v600
        %v620 = vunpack.c.h.b16 %v600
        %v621 = vpack.c.b16 %v619, %v608
        %v622 = vpack.c.b16 %v620, %v609
        %vm623 = vsmask.f32 7424
        %v625 = vshrl.u32 %v610, 16
        %v627 = vshll.u32 %v610, 16
        %v629 = vrot.slane %v627, 1
        %v630 = vor.u32 %v625, %v629
        %v632 = vshll.u32 %v621, 16
        %v634 = vrot.slane %v632, 1
        %v635 = vsel %vm623, %v630, %v634
        %v637 = vshrl.u32 %v611, 16
        %v639 = vshll.u32 %v611, 16
        %v641 = vrot.slane %v639, 1
        %v642 = vor.u32 %v637, %v641
        %v644 = vshll.u32 %v622, 16
        %v646 = vrot.slane %v644, 1
        %v647 = vsel %vm623, %v642, %v646
        %v648 = vshrl.u32 %v621, 16
        %v650 = vor.u32 %v648, %v634
        %v651 = vshrl.u32 %v622, 16
        %v653 = vor.u32 %v651, %v646
        %vm658 = vcmask 1044480
        %v659 = vrot.slane %v610, 3
        %v660 = vrot.slane %v621, 3
        %v661 = vsel %vm658, %v659, %v660
        %v662 = vrot.slane %v611, 3
        %v663 = vrot.slane %v622, 3
        %v664 = vsel %vm658, %v662, %v663
        %vm669 = vsmask.f32 4352
        %v670 = vrot.slane %v625, 3
        %v671 = vrot.slane %v627, 4
        %v672 = vor.u32 %v670, %v671
        %v673 = vrot.slane %v648, 3
        %v674 = vrot.slane %v632, 4
        %v675 = vor.u32 %v673, %v674
        %v676 = vsel %vm669, %v672, %v675
        %v677 = vrot.slane %v637, 3
        %v678 = vrot.slane %v639, 4
        %v679 = vor.u32 %v677, %v678
        %v680 = vrot.slane %v651, 3
        %v681 = vrot.slane %v644, 4
        %v682 = vor.u32 %v680, %v681
        %v683 = vsel %vm669, %v679, %v682
        %v688 = vld [vmem:[%s2] sm:$0xf]
        %v689 = vld [vmem:[%s2 + $0x4] sm:$0xf]
        %v690 = vld [vmem:[%s2 + $0x8] sm:$0xf]
        %v691 = vld [vmem:[%s2 + $0xc] sm:$0xf]
        %v692 = vld [vmem:[%s2 + $0x10] sm:$0xf]
        %v693 = vld [vmem:[%s2 + $0x14] sm:$0xf]
        %v694 = vld [vmem:[%s2 + $0x18] sm:$0xf]
        %v695 = vld [vmem:[%s2 + $0x1c] sm:$0xf]
        %v696 = vld [vmem:[%s2 + $0x20] sm:$0xf]
        %v697 = vld [vmem:[%s2 + $0x24] sm:$0xf]
        %v698 = vld [vmem:[%s2 + $0x28] sm:$0xf]
        %v699 = vld [vmem:[%s2 + $0x2c] sm:$0xf]
        %v700 = vld [vmem:[%s2 + $0x30] sm:$0xf]
        %v701 = vld [vmem:[%s2 + $0x34] sm:$0xf]
        %v702 = vld [vmem:[%s2 + $0x38] sm:$0xf]
        %v703 = vld [vmem:[%s2 + $0x3c] sm:$0xf]
        %v704 = vld [vmem:[%s2 + $0x40] sm:$0xf]
        %v705 = vld [vmem:[%s2 + $0x44] sm:$0xf]
        %v706 = vld [vmem:[%s2 + $0x48] sm:$0xf]
        %v707 = vld [vmem:[%s2 + $0x4c] sm:$0xf]
        %v708 = vld [vmem:[%s2 + $0x50] sm:$0xf]
        %v709 = vld [vmem:[%s2 + $0x54] sm:$0xf]
        %v710 = vld [vmem:[%s2 + $0x58] sm:$0xf]
        %v711 = vld [vmem:[%s2 + $0x5c] sm:$0xf]
        %v712 = vld [vmem:[%s2 + $0x60] sm:$0xf]
        %v713 = vld [vmem:[%s2 + $0x64] sm:$0xf]
        %v714 = vld [vmem:[%s2 + $0x68] sm:$0xf]
        %v715 = vld [vmem:[%s2 + $0x6c] sm:$0xf]
        %v716 = vld [vmem:[%s2 + $0x70] sm:$0xf]
        %v717 = vld [vmem:[%s2 + $0x74] sm:$0xf]
        %v718 = vld [vmem:[%s2 + $0x78] sm:$0xf]
        %v719 = vld [vmem:[%s2 + $0x7c] sm:$0xf]
        %v720 = vld [vmem:[%s2 + $0x80] sm:$0xf]
        %v721 = vld [vmem:[%s2 + $0x84] sm:$0xf]
        %v722 = vld [vmem:[%s2 + $0x88] sm:$0xf]
        %v723 = vld [vmem:[%s2 + $0x8c] sm:$0xf]
        %v724 = vld [vmem:[%s2 + $0x90] sm:$0xf]
        %v725 = vld [vmem:[%s2 + $0x94] sm:$0xf]
        %v726 = vld [vmem:[%s2 + $0x98] sm:$0xf]
        %v727 = vld [vmem:[%s2 + $0x9c] sm:$0xf]
        %v728 = vld [vmem:[%s2 + $0xa0] sm:$0xf]
        %v729 = vld [vmem:[%s2 + $0xa4] sm:$0xf]
        %v730 = vld [vmem:[%s2 + $0xa8] sm:$0xf]
        %v731 = vld [vmem:[%s2 + $0xac] sm:$0xf]
        %v732 = vld [vmem:[%s2 + $0xb0] sm:$0xf]
        %v733 = vld [vmem:[%s2 + $0xb4] sm:$0xf]
        %v734 = vld [vmem:[%s2 + $0xb8] sm:$0xf]
        %v735 = vld [vmem:[%s2 + $0xbc] sm:$0xf]
        %v736 = vld [vmem:[%s2 + $0xc0] sm:$0xf]
        %v737 = vld [vmem:[%s2 + $0xc4] sm:$0xf]
        %v738 = vld [vmem:[%s2 + $0xc8] sm:$0xf]
        %v739 = vld [vmem:[%s2 + $0xcc] sm:$0xf]
        %v740 = vld [vmem:[%s2 + $0xd0] sm:$0xf]
        %v741 = vld [vmem:[%s2 + $0xd4] sm:$0xf]
        %v742 = vld [vmem:[%s2 + $0xd8] sm:$0xf]
        %v743 = vld [vmem:[%s2 + $0xdc] sm:$0xf]
        %v744 = vld [vmem:[%s2 + $0xe0] sm:$0xf]
        %v745 = vld [vmem:[%s2 + $0xe4] sm:$0xf]
        %v746 = vld [vmem:[%s2 + $0xe8] sm:$0xf]
        %v747 = vld [vmem:[%s2 + $0xec] sm:$0xf]
        %v748 = vld [vmem:[%s2 + $0xf0] sm:$0xf]
        %v749 = vld [vmem:[%s2 + $0xf4] sm:$0xf]
        %v750 = vld [vmem:[%s2 + $0xf8] sm:$0xf]
        %v751 = vld [vmem:[%s2 + $0xfc] sm:$0xf]
        %v752 = vld [vmem:[%s2 + $0x100] sm:$0xf]
        %v753 = vld [vmem:[%s2 + $0x104] sm:$0xf]
        %v754 = vld [vmem:[%s2 + $0x108] sm:$0xf]
        %v755 = vld [vmem:[%s2 + $0x10c] sm:$0xf]
        %v756 = vld [vmem:[%s2 + $0x110] sm:$0xf]
        %v757 = vld [vmem:[%s2 + $0x114] sm:$0xf]
        %v758 = vld [vmem:[%s2 + $0x118] sm:$0xf]
        %v759 = vld [vmem:[%s2 + $0x11c] sm:$0xf]
        %v760 = vld [vmem:[%s2 + $0x120] sm:$0xf]
        %v761 = vld [vmem:[%s2 + $0x124] sm:$0xf]
        %v762 = vld [vmem:[%s2 + $0x128] sm:$0xf]
        %v763 = vld [vmem:[%s2 + $0x12c] sm:$0xf]
        %v764 = vld [vmem:[%s2 + $0x130] sm:$0xf]
        %v765 = vld [vmem:[%s2 + $0x134] sm:$0xf]
        %v766 = vld [vmem:[%s2 + $0x138] sm:$0xf]
        %v767 = vld [vmem:[%s2 + $0x13c] sm:$0xf]
        %v768 = vld [vmem:[%s2 + $0x140] sm:$0xf]
        %v769 = vld [vmem:[%s2 + $0x144] sm:$0xf]
        %v770 = vld [vmem:[%s2 + $0x148] sm:$0xf]
        %v771 = vld [vmem:[%s2 + $0x14c] sm:$0xf]
        %v772 = vld [vmem:[%s2 + $0x150] sm:$0xf]
        %v773 = vld [vmem:[%s2 + $0x154] sm:$0xf]
        %v774 = vld [vmem:[%s2 + $0x158] sm:$0xf]
        %v775 = vld [vmem:[%s2 + $0x15c] sm:$0xf]
        %v776 = vld [vmem:[%s2 + $0x160] sm:$0xf]
        %v777 = vld [vmem:[%s2 + $0x164] sm:$0xf]
        %v778 = vld [vmem:[%s2 + $0x168] sm:$0xf]
        %v779 = vld [vmem:[%s2 + $0x16c] sm:$0xf]
        %v780 = vld [vmem:[%s2 + $0x170] sm:$0xf]
        %v781 = vld [vmem:[%s2 + $0x174] sm:$0xf]
        %v782 = vld [vmem:[%s2 + $0x178] sm:$0xf]
        %v783 = vld [vmem:[%s2 + $0x17c] sm:$0xf]
        %v784 = vld [vmem:[%s2 + $0x180] sm:$0xf]
        %v785 = vld [vmem:[%s2 + $0x184] sm:$0xf]
        %v786 = vld [vmem:[%s2 + $0x188] sm:$0xf]
        %v787 = vld [vmem:[%s2 + $0x18c] sm:$0xf]
        %v788 = vld [vmem:[%s2 + $0x190] sm:$0xf]
        %v789 = vld [vmem:[%s2 + $0x194] sm:$0xf]
        %v790 = vld [vmem:[%s2 + $0x198] sm:$0xf]
        %v791 = vld [vmem:[%s2 + $0x19c] sm:$0xf]
        %v792 = vld [vmem:[%s2 + $0x1a0] sm:$0xf]
        %v793 = vld [vmem:[%s2 + $0x1a4] sm:$0xf]
        %v794 = vld [vmem:[%s2 + $0x1a8] sm:$0xf]
        %v795 = vld [vmem:[%s2 + $0x1ac] sm:$0xf]
        %v796 = vld [vmem:[%s2 + $0x1b0] sm:$0xf]
        %v797 = vld [vmem:[%s2 + $0x1b4] sm:$0xf]
        %v798 = vld [vmem:[%s2 + $0x1b8] sm:$0xf]
        %v799 = vld [vmem:[%s2 + $0x1bc] sm:$0xf]
        %v800 = vld [vmem:[%s2 + $0x1c0] sm:$0xf]
        %v801 = vld [vmem:[%s2 + $0x1c4] sm:$0xf]
        %v802 = vld [vmem:[%s2 + $0x1c8] sm:$0xf]
        %v803 = vld [vmem:[%s2 + $0x1cc] sm:$0xf]
        %v804 = vld [vmem:[%s2 + $0x1d0] sm:$0xf]
        %v805 = vld [vmem:[%s2 + $0x1d4] sm:$0xf]
        %v806 = vld [vmem:[%s2 + $0x1d8] sm:$0xf]
        %v807 = vld [vmem:[%s2 + $0x1dc] sm:$0xf]
        %v808 = vld [vmem:[%s2 + $0x1e0] sm:$0xf]
        %v809 = vld [vmem:[%s2 + $0x1e4] sm:$0xf]
        %v810 = vld [vmem:[%s2 + $0x1e8] sm:$0xf]
        %v811 = vld [vmem:[%s2 + $0x1ec] sm:$0xf]
        %v812 = vld [vmem:[%s2 + $0x1f0] sm:$0xf]
        %v813 = vld [vmem:[%s2 + $0x1f4] sm:$0xf]
        %v814 = vld [vmem:[%s2 + $0x1f8] sm:$0xf]
        %v815 = vld [vmem:[%s2 + $0x1fc] sm:$0xf]
        %v944 = vunpack.c.l.b16 %v688
        %v945 = vunpack.c.l.b16 %v689
        %v946 = vunpack.c.l.b16 %v690
        %v947 = vunpack.c.l.b16 %v691
        %v948 = vunpack.c.l.b16 %v692
        %v949 = vunpack.c.l.b16 %v693
        %v950 = vunpack.c.l.b16 %v694
        %v951 = vunpack.c.l.b16 %v695
        %v952 = vunpack.c.l.b16 %v696
        %v953 = vunpack.c.l.b16 %v697
        %v954 = vunpack.c.l.b16 %v698
        %v955 = vunpack.c.l.b16 %v699
        %v956 = vunpack.c.l.b16 %v700
        %v957 = vunpack.c.l.b16 %v701
        %v958 = vunpack.c.l.b16 %v702
        %v959 = vunpack.c.l.b16 %v703
        %v960 = vunpack.c.l.b16 %v704
        %v961 = vunpack.c.l.b16 %v705
        %v962 = vunpack.c.l.b16 %v706
        %v963 = vunpack.c.l.b16 %v707
        %v964 = vunpack.c.l.b16 %v708
        %v965 = vunpack.c.l.b16 %v709
        %v966 = vunpack.c.l.b16 %v710
        %v967 = vunpack.c.l.b16 %v711
        %v968 = vunpack.c.l.b16 %v712
        %v969 = vunpack.c.l.b16 %v713
        %v970 = vunpack.c.l.b16 %v714
        %v971 = vunpack.c.l.b16 %v715
        %v972 = vunpack.c.l.b16 %v716
        %v973 = vunpack.c.l.b16 %v717
        %v974 = vunpack.c.l.b16 %v718
        %v975 = vunpack.c.l.b16 %v719
        %v976 = vunpack.c.l.b16 %v720
        %v977 = vunpack.c.l.b16 %v721
        %v978 = vunpack.c.l.b16 %v722
        %v979 = vunpack.c.l.b16 %v723
        %v980 = vunpack.c.l.b16 %v724
        %v981 = vunpack.c.l.b16 %v725
        %v982 = vunpack.c.l.b16 %v726
        %v983 = vunpack.c.l.b16 %v727
        %v984 = vunpack.c.l.b16 %v728
        %v985 = vunpack.c.l.b16 %v729
        %v986 = vunpack.c.l.b16 %v730
        %v987 = vunpack.c.l.b16 %v731
        %v988 = vunpack.c.l.b16 %v732
        %v989 = vunpack.c.l.b16 %v733
        %v990 = vunpack.c.l.b16 %v734
        %v991 = vunpack.c.l.b16 %v735
        %v992 = vunpack.c.l.b16 %v736
        %v993 = vunpack.c.l.b16 %v737
        %v994 = vunpack.c.l.b16 %v738
        %v995 = vunpack.c.l.b16 %v739
        %v996 = vunpack.c.l.b16 %v740
        %v997 = vunpack.c.l.b16 %v741
        %v998 = vunpack.c.l.b16 %v742
        %v999 = vunpack.c.l.b16 %v743
        %v1000 = vunpack.c.l.b16 %v744
        %v1001 = vunpack.c.l.b16 %v745
        %v1002 = vunpack.c.l.b16 %v746
        %v1003 = vunpack.c.l.b16 %v747
        %v1004 = vunpack.c.l.b16 %v748
        %v1005 = vunpack.c.l.b16 %v749
        %v1006 = vunpack.c.l.b16 %v750
        %v1007 = vunpack.c.l.b16 %v751
        %v1008 = vunpack.c.l.b16 %v752
        %v1009 = vunpack.c.l.b16 %v753
        %v1010 = vunpack.c.l.b16 %v754
        %v1011 = vunpack.c.l.b16 %v755
        %v1012 = vunpack.c.l.b16 %v756
        %v1013 = vunpack.c.l.b16 %v757
        %v1014 = vunpack.c.l.b16 %v758
        %v1015 = vunpack.c.l.b16 %v759
        %v1016 = vunpack.c.l.b16 %v760
        %v1017 = vunpack.c.l.b16 %v761
        %v1018 = vunpack.c.l.b16 %v762
        %v1019 = vunpack.c.l.b16 %v763
        %v1020 = vunpack.c.l.b16 %v764
        %v1021 = vunpack.c.l.b16 %v765
        %v1022 = vunpack.c.l.b16 %v766
        %v1023 = vunpack.c.l.b16 %v767
        %v1024 = vunpack.c.l.b16 %v768
        %v1025 = vunpack.c.l.b16 %v769
        %v1026 = vunpack.c.l.b16 %v770
        %v1027 = vunpack.c.l.b16 %v771
        %v1028 = vunpack.c.l.b16 %v772
        %v1029 = vunpack.c.l.b16 %v773
        %v1030 = vunpack.c.l.b16 %v774
        %v1031 = vunpack.c.l.b16 %v775
        %v1032 = vunpack.c.l.b16 %v776
        %v1033 = vunpack.c.l.b16 %v777
        %v1034 = vunpack.c.l.b16 %v778
        %v1035 = vunpack.c.l.b16 %v779
        %v1036 = vunpack.c.l.b16 %v780
        %v1037 = vunpack.c.l.b16 %v781
        %v1038 = vunpack.c.l.b16 %v782
        %v1039 = vunpack.c.l.b16 %v783
        %v1040 = vunpack.c.l.b16 %v784
        %v1041 = vunpack.c.l.b16 %v785
        %v1042 = vunpack.c.l.b16 %v786
        %v1043 = vunpack.c.l.b16 %v787
        %v1044 = vunpack.c.l.b16 %v788
        %v1045 = vunpack.c.l.b16 %v789
        %v1046 = vunpack.c.l.b16 %v790
        %v1047 = vunpack.c.l.b16 %v791
        %v1048 = vunpack.c.l.b16 %v792
        %v1049 = vunpack.c.l.b16 %v793
        %v1050 = vunpack.c.l.b16 %v794
        %v1051 = vunpack.c.l.b16 %v795
        %v1052 = vunpack.c.l.b16 %v796
        %v1053 = vunpack.c.l.b16 %v797
        %v1054 = vunpack.c.l.b16 %v798
        %v1055 = vunpack.c.l.b16 %v799
        %v1056 = vunpack.c.l.b16 %v800
        %v1057 = vunpack.c.l.b16 %v801
        %v1058 = vunpack.c.l.b16 %v802
        %v1059 = vunpack.c.l.b16 %v803
        %v1060 = vunpack.c.l.b16 %v804
        %v1061 = vunpack.c.l.b16 %v805
        %v1062 = vunpack.c.l.b16 %v806
        %v1063 = vunpack.c.l.b16 %v807
        %v1064 = vunpack.c.l.b16 %v808
        %v1065 = vunpack.c.l.b16 %v809
        %v1066 = vunpack.c.l.b16 %v810
        %v1067 = vunpack.c.l.b16 %v811
        %v1068 = vunpack.c.l.b16 %v812
        %v1069 = vunpack.c.l.b16 %v813
        %v1070 = vunpack.c.l.b16 %v814
        %v1071 = vunpack.c.l.b16 %v815
        %v1072 = vpack.c.b16 %v945, %v944
        %v1073 = vpack.c.b16 %v947, %v946
        %v1074 = vpack.c.b16 %v949, %v948
        %v1075 = vpack.c.b16 %v951, %v950
        %v1076 = vpack.c.b16 %v953, %v952
        %v1077 = vpack.c.b16 %v955, %v954
        %v1078 = vpack.c.b16 %v957, %v956
        %v1079 = vpack.c.b16 %v959, %v958
        %v1080 = vpack.c.b16 %v961, %v960
        %v1081 = vpack.c.b16 %v963, %v962
        %v1082 = vpack.c.b16 %v965, %v964
        %v1083 = vpack.c.b16 %v967, %v966
        %v1084 = vpack.c.b16 %v969, %v968
        %v1085 = vpack.c.b16 %v971, %v970
        %v1086 = vpack.c.b16 %v973, %v972
        %v1087 = vpack.c.b16 %v975, %v974
        %v1088 = vpack.c.b16 %v977, %v976
        %v1089 = vpack.c.b16 %v979, %v978
        %v1090 = vpack.c.b16 %v981, %v980
        %v1091 = vpack.c.b16 %v983, %v982
        %v1092 = vpack.c.b16 %v985, %v984
        %v1093 = vpack.c.b16 %v987, %v986
        %v1094 = vpack.c.b16 %v989, %v988
        %v1095 = vpack.c.b16 %v991, %v990
        %v1096 = vpack.c.b16 %v993, %v992
        %v1097 = vpack.c.b16 %v995, %v994
        %v1098 = vpack.c.b16 %v997, %v996
        %v1099 = vpack.c.b16 %v999, %v998
        %v1100 = vpack.c.b16 %v1001, %v1000
        %v1101 = vpack.c.b16 %v1003, %v1002
        %v1102 = vpack.c.b16 %v1005, %v1004
        %v1103 = vpack.c.b16 %v1007, %v1006
        %v1104 = vpack.c.b16 %v1009, %v1008
        %v1105 = vpack.c.b16 %v1011, %v1010
        %v1106 = vpack.c.b16 %v1013, %v1012
        %v1107 = vpack.c.b16 %v1015, %v1014
        %v1108 = vpack.c.b16 %v1017, %v1016
        %v1109 = vpack.c.b16 %v1019, %v1018
        %v1110 = vpack.c.b16 %v1021, %v1020
        %v1111 = vpack.c.b16 %v1023, %v1022
        %v1112 = vpack.c.b16 %v1025, %v1024
        %v1113 = vpack.c.b16 %v1027, %v1026
        %v1114 = vpack.c.b16 %v1029, %v1028
        %v1115 = vpack.c.b16 %v1031, %v1030
        %v1116 = vpack.c.b16 %v1033, %v1032
        %v1117 = vpack.c.b16 %v1035, %v1034
        %v1118 = vpack.c.b16 %v1037, %v1036
        %v1119 = vpack.c.b16 %v1039, %v1038
        %v1120 = vpack.c.b16 %v1041, %v1040
        %v1121 = vpack.c.b16 %v1043, %v1042
        %v1122 = vpack.c.b16 %v1045, %v1044
        %v1123 = vpack.c.b16 %v1047, %v1046
        %v1124 = vpack.c.b16 %v1049, %v1048
        %v1125 = vpack.c.b16 %v1051, %v1050
        %v1126 = vpack.c.b16 %v1053, %v1052
        %v1127 = vpack.c.b16 %v1055, %v1054
        %v1128 = vpack.c.b16 %v1057, %v1056
        %v1129 = vpack.c.b16 %v1059, %v1058
        %v1130 = vpack.c.b16 %v1061, %v1060
        %v1131 = vpack.c.b16 %v1063, %v1062
        %v1132 = vpack.c.b16 %v1065, %v1064
        %v1133 = vpack.c.b16 %v1067, %v1066
        %v1134 = vpack.c.b16 %v1069, %v1068
        %v1135 = vpack.c.b16 %v1071, %v1070
        %1200 = vmatpush.bf16.msra.mxu0 %v1079
        %1201 = vmatpush.bf16.msra.mxu0 %v1078
        %1202 = vmatpush.bf16.msra.mxu0 %v1077
        %1203 = vmatpush.bf16.msra.mxu0 %v1076
        %1204 = vmatpush.bf16.msra.mxu0 %v1075
        %1205 = vmatpush.bf16.msra.mxu0 %v1074
        %1206 = vmatpush.bf16.msra.mxu0 %v1073
        %1207 = vmatpush.bf16.msra.mxu0 %v1072
        %1208 = vmatmul.bf16.gmra.mxu0 %v610
        %v1209 = vpop.f32.mrf.mxu0
        %v1210 = vadd.f32 0.0, %v1209
        %v1211 = vpop.f32.mrf.mxu0
        %v1212 = vadd.f32 0.0, %v1211
        %1213 = vmatmul.bf16.gmra.mxu0 %v612
        %v1214 = vpop.f32.mrf.mxu0
        %v1215 = vadd.f32 0.0, %v1214
        %v1216 = vpop.f32.mrf.mxu0
        %1217 = vdwg.mxu0
        %1218 = vmatpush.bf16.msra.mxu0 %v1087
        %1219 = vmatpush.bf16.msra.mxu0 %v1086
        %1220 = vmatpush.bf16.msra.mxu0 %v1085
        %1221 = vmatpush.bf16.msra.mxu0 %v1084
        %1222 = vmatpush.bf16.msra.mxu0 %v1083
        %1223 = vmatpush.bf16.msra.mxu0 %v1082
        %1224 = vmatpush.bf16.msra.mxu0 %v1081
        %1225 = vmatpush.bf16.msra.mxu0 %v1080
        %1226 = vmatmul.bf16.gmra.mxu0 %v611
        %v1227 = vpop.f32.mrf.mxu0
        %v1228 = vadd.f32 %v1210, %v1227
        %v1229 = vpop.f32.mrf.mxu0
        %v1230 = vadd.f32 %v1212, %v1229
        %1231 = vmatmul.bf16.gmra.mxu0 %v613
        %v1232 = vpop.f32.mrf.mxu0
        %v1233 = vadd.f32 %v1215, %v1232
        %v1234 = vpop.f32.mrf.mxu0
        %1235 = vdwg.mxu0
        %1236 = vmatpush.bf16.msra.mxu0 %v1095
        %1237 = vmatpush.bf16.msra.mxu0 %v1094
        %1238 = vmatpush.bf16.msra.mxu0 %v1093
        %1239 = vmatpush.bf16.msra.mxu0 %v1092
        %1240 = vmatpush.bf16.msra.mxu0 %v1091
        %1241 = vmatpush.bf16.msra.mxu0 %v1090
        %1242 = vmatpush.bf16.msra.mxu0 %v1089
        %1243 = vmatpush.bf16.msra.mxu0 %v1088
        %1244 = vmatmul.bf16.gmra.mxu0 %v635
        %v1245 = vpop.f32.mrf.mxu0
        %v1246 = vadd.f32 %v1228, %v1245
        %v1247 = vpop.f32.mrf.mxu0
        %v1248 = vadd.f32 %v1230, %v1247
        %1249 = vmatmul.bf16.gmra.mxu0 %v650
        %v1250 = vpop.f32.mrf.mxu0
        %v1251 = vadd.f32 %v1233, %v1250
        %v1252 = vpop.f32.mrf.mxu0
        %1253 = vdwg.mxu0
        %1254 = vmatpush.bf16.msra.mxu0 %v1103
        %1255 = vmatpush.bf16.msra.mxu0 %v1102
        %1256 = vmatpush.bf16.msra.mxu0 %v1101
        %1257 = vmatpush.bf16.msra.mxu0 %v1100
        %1258 = vmatpush.bf16.msra.mxu0 %v1099
        %1259 = vmatpush.bf16.msra.mxu0 %v1098
        %1260 = vmatpush.bf16.msra.mxu0 %v1097
        %1261 = vmatpush.bf16.msra.mxu0 %v1096
        %1262 = vmatmul.bf16.gmra.mxu0 %v647
        %v1263 = vpop.f32.mrf.mxu0
        %v1264 = vadd.f32 %v1246, %v1263
        %v1265 = vpop.f32.mrf.mxu0
        %v1266 = vadd.f32 %v1248, %v1265
        %1267 = vmatmul.bf16.gmra.mxu0 %v653
        %v1268 = vpop.f32.mrf.mxu0
        %v1269 = vadd.f32 %v1251, %v1268
        %v1270 = vpop.f32.mrf.mxu0
        %1271 = vdwg.mxu0
        %1272 = vmatpush.bf16.msra.mxu0 %v1111
        %1273 = vmatpush.bf16.msra.mxu0 %v1110
        %1274 = vmatpush.bf16.msra.mxu0 %v1109
        %1275 = vmatpush.bf16.msra.mxu0 %v1108
        %1276 = vmatpush.bf16.msra.mxu0 %v1107
        %1277 = vmatpush.bf16.msra.mxu0 %v1106
        %1278 = vmatpush.bf16.msra.mxu0 %v1105
        %1279 = vmatpush.bf16.msra.mxu0 %v1104
        %1280 = vmatmul.bf16.gmra.mxu0 %v661
        %v1281 = vpop.f32.mrf.mxu0
        %v1282 = vadd.f32 %v1264, %v1281
        %v1283 = vpop.f32.mrf.mxu0
        %v1284 = vadd.f32 %v1266, %v1283
        %1285 = vmatmul.bf16.gmra.mxu0 %v660
        %v1286 = vpop.f32.mrf.mxu0
        %v1287 = vadd.f32 %v1269, %v1286
        %v1288 = vpop.f32.mrf.mxu0
        %1289 = vdwg.mxu0
        %1290 = vmatpush.bf16.msra.mxu0 %v1119
        %1291 = vmatpush.bf16.msra.mxu0 %v1118
        %1292 = vmatpush.bf16.msra.mxu0 %v1117
        %1293 = vmatpush.bf16.msra.mxu0 %v1116
        %1294 = vmatpush.bf16.msra.mxu0 %v1115
        %1295 = vmatpush.bf16.msra.mxu0 %v1114
        %1296 = vmatpush.bf16.msra.mxu0 %v1113
        %1297 = vmatpush.bf16.msra.mxu0 %v1112
        %1298 = vmatmul.bf16.gmra.mxu0 %v664
        %v1299 = vpop.f32.mrf.mxu0
        %v1300 = vadd.f32 %v1282, %v1299
        %v1301 = vpop.f32.mrf.mxu0
        %v1302 = vadd.f32 %v1284, %v1301
        %1303 = vmatmul.bf16.gmra.mxu0 %v663
        %v1304 = vpop.f32.mrf.mxu0
        %v1305 = vadd.f32 %v1287, %v1304
        %v1306 = vpop.f32.mrf.mxu0
        %1307 = vdwg.mxu0
        %1308 = vmatpush.bf16.msra.mxu0 %v1127
        %1309 = vmatpush.bf16.msra.mxu0 %v1126
        %1310 = vmatpush.bf16.msra.mxu0 %v1125
        %1311 = vmatpush.bf16.msra.mxu0 %v1124
        %1312 = vmatpush.bf16.msra.mxu0 %v1123
        %1313 = vmatpush.bf16.msra.mxu0 %v1122
        %1314 = vmatpush.bf16.msra.mxu0 %v1121
        %1315 = vmatpush.bf16.msra.mxu0 %v1120
        %1316 = vmatmul.bf16.gmra.mxu0 %v676
        %v1317 = vpop.f32.mrf.mxu0
        %v1318 = vadd.f32 %v1300, %v1317
        %v1319 = vpop.f32.mrf.mxu0
        %v1320 = vadd.f32 %v1302, %v1319
        %1321 = vmatmul.bf16.gmra.mxu0 %v675
        %v1322 = vpop.f32.mrf.mxu0
        %v1323 = vadd.f32 %v1305, %v1322
        %v1324 = vpop.f32.mrf.mxu0
        %1325 = vdwg.mxu0
        %1326 = vmatpush.bf16.msra.mxu0 %v1135
        %1327 = vmatpush.bf16.msra.mxu0 %v1134
        %1328 = vmatpush.bf16.msra.mxu0 %v1133
        %1329 = vmatpush.bf16.msra.mxu0 %v1132
        %1330 = vmatpush.bf16.msra.mxu0 %v1131
        %1331 = vmatpush.bf16.msra.mxu0 %v1130
        %1332 = vmatpush.bf16.msra.mxu0 %v1129
        %1333 = vmatpush.bf16.msra.mxu0 %v1128
        %1334 = vmatmul.bf16.gmra.mxu0 %v683
        %v1335 = vpop.f32.mrf.mxu0
        %v1336 = vadd.f32 %v1318, %v1335
        %v1337 = vpop.f32.mrf.mxu0
        %v1338 = vadd.f32 %v1320, %v1337
        %1339 = vmatmul.bf16.gmra.mxu0 %v682
        %v1340 = vpop.f32.mrf.mxu0
        %v1341 = vadd.f32 %v1323, %v1340
        %v1342 = vpop.f32.mrf.mxu0
        %1343 = vdwg.mxu0
        %v1344 = vld [vmem:[%s3] sm:$0x1]
        %v1346 = vperm.slane %v1344, 0
        %v1348 = vmul.f32 %v1336, %v1346
        %v1349 = vmul.f32 %v1338, %v1346
        %v1350 = vmul.f32 %v1341, %v1346
        %v1351 = vld [vmem:[%s4] sm:$0x1]
        %v1353 = vperm.slane %v1351, 0
        %v1355 = vadd.f32 %v1348, %v1353
        %v1356 = vadd.f32 %v1349, %v1353
        %v1357 = vadd.f32 %v1350, %v1353
        %v1358 = vmax.f32 %v1355, 0.0
        %v1359 = vmax.f32 %v1356, 0.0
        %v1360 = vmax.f32 %v1357, 0.0
        %1362 = vset.pattern.permute.xlu0 0
        %1363 = vperm.xlu0 %1362, %v594
        %v1364 = vpop.permute.xlu0 %1363
        %1367 = vset.pattern.permute.xlu0 0
        %1368 = vperm.xlu0 %1367, %v595
        %v1369 = vpop.permute.xlu0 %1368
        %1372 = vset.pattern.permute.xlu0 0
        %1373 = vperm.xlu0 %1372, %v596
        %v1374 = vpop.permute.xlu0 %1373
        %v1376 = vmul.f32 %v1358, %v1364
        %v1377 = vmul.f32 %v1359, %v1369
        %v1378 = vmul.f32 %v1360, %v1374
        %v1379 = vpack.c.bf16 %v1376, %v1376
        %v1380 = vpack.c.bf16 %v1377, %v1377
        %v1381 = vpack.c.bf16 %v1378, %v1378
        %v1385 = vunpack.c.l.b16 %v1379
        %v1386 = vunpack.c.l.b16 %v1380
        %v1387 = vunpack.c.l.b16 %v1381
        %v1388 = vpack.c.b16 %v1386, %v1385
        %v1389 = vpack.c.b16 %v1387, %v1387
        %vm1390 = vsmask.f32 3328
        %v1392 = vshrl.u32 %v1388, 16
        %v1394 = vrot.slane %v1392, 4
        %v1395 = vshll.u32 %v1388, 16
        %v1397 = vrot.slane %v1395, 5
        %v1398 = vor.u32 %v1394, %v1397
        %v1400 = vshrl.u32 %v1389, 16
        %v1402 = vrot.slane %v1400, 4
        %v1403 = vshll.u32 %v1389, 16
        %v1405 = vrot.slane %v1403, 5
        %v1406 = vor.u32 %v1402, %v1405
        %v1407 = vsel %vm1390, %v1398, %v1406
        %vm1410 = vcmask 1043456
        %vm1411 = vmand %vm1410, %vm1390
        %v1412 = vsel %vm1411, 0, %v1398
        %vm1413 = vcmask 1047552
        %vm1414 = vmand %vm1413, %vm623
        %v1415 = vsel %vm1414, %v1407, 0
        %v1417 = vshrl.u32 %v1412, 16
        %v1419 = vshll.u32 %v1412, 16
        %v1421 = vrot.slane %v1419, 1
        %v1422 = vor.u32 %v1417, %v1421
        %v1424 = vshll.u32 %v1415, 16
        %v1426 = vrot.slane %v1424, 1
        %v1427 = vsel %vm623, %v1422, %v1426
        %v1428 = vshrl.u32 %v1415, 16
        %v1430 = vor.u32 %v1428, %v1426
        %vm1435 = vcmask 1046528
        %v1436 = vrot.slane %v1412, 1
        %v1437 = vrot.slane %v1415, 1
        %v1438 = vsel %vm1435, %v1436, %v1437
        %v1441 = vrot.slane %v1412, 3
        %v1442 = vrot.slane %v1415, 3
        %v1443 = vsel %vm658, %v1441, %v1442
        %v1446 = vrot.slane %v1417, 3
        %v1447 = vrot.slane %v1419, 4
        %v1448 = vor.u32 %v1446, %v1447
        %v1449 = vrot.slane %v1428, 3
        %v1450 = vrot.slane %v1424, 4
        %v1451 = vor.u32 %v1449, %v1450
        %v1452 = vsel %vm669, %v1448, %v1451
        %v1455 = vrot.slane %v1412, 4
        %v1456 = vrot.slane %v1415, 4
        %v1457 = vsel %vm1410, %v1455, %v1456
        %vm1461 = vcmask 1041408
        %v1462 = vrot.slane %v1412, 6
        %v1463 = vrot.slane %v1415, 6
        %v1464 = vsel %vm1461, %v1462, %v1463
        %v1465 = vrot.slane 0, 6
        %v1466 = vsel %vm1461, %v1463, %v1465
        %vm1469 = vsmask.f32 1280
        %v1470 = vrot.slane %v1417, 6
        %v1471 = vrot.slane %v1419, 7
        %v1472 = vor.u32 %v1470, %v1471
        %v1473 = vrot.slane %v1428, 6
        %v1474 = vrot.slane %v1424, 7
        %v1475 = vor.u32 %v1473, %v1474
        %v1476 = vsel %vm1469, %v1472, %v1475
        %v1478 = vshrl.u32 0, 16
        %v1480 = vrot.slane %v1478, 6
        %v1481 = vshll.u32 0, 16
        %v1483 = vrot.slane %v1481, 7
        %v1484 = vor.u32 %v1480, %v1483
        %v1485 = vsel %vm1469, %v1475, %v1484
        %vm1488 = vcmask 1040384
        %v1489 = vrot.slane %v1412, 7
        %v1490 = vrot.slane %v1415, 7
        %v1491 = vsel %vm1488, %v1489, %v1490
        %v1492 = vrot.slane 0, 7
        %v1493 = vsel %vm1488, %v1490, %v1492
        %v1496 = vld [vmem:[%s5] sm:$0xf]
        %v1497 = vld [vmem:[%s5 + $0x4] sm:$0xf]
        %v1498 = vld [vmem:[%s5 + $0x8] sm:$0xf]
        %v1499 = vld [vmem:[%s5 + $0xc] sm:$0xf]
        %v1500 = vld [vmem:[%s5 + $0x10] sm:$0xf]
        %v1501 = vld [vmem:[%s5 + $0x14] sm:$0xf]
        %v1502 = vld [vmem:[%s5 + $0x18] sm:$0xf]
        %v1503 = vld [vmem:[%s5 + $0x1c] sm:$0xf]
        %v1504 = vld [vmem:[%s5 + $0x20] sm:$0xf]
        %v1505 = vld [vmem:[%s5 + $0x24] sm:$0xf]
        %v1506 = vld [vmem:[%s5 + $0x28] sm:$0xf]
        %v1507 = vld [vmem:[%s5 + $0x2c] sm:$0xf]
        %v1508 = vld [vmem:[%s5 + $0x30] sm:$0xf]
        %v1509 = vld [vmem:[%s5 + $0x34] sm:$0xf]
        %v1510 = vld [vmem:[%s5 + $0x38] sm:$0xf]
        %v1511 = vld [vmem:[%s5 + $0x3c] sm:$0xf]
        %v1512 = vld [vmem:[%s5 + $0x40] sm:$0xf]
        %v1513 = vld [vmem:[%s5 + $0x44] sm:$0xf]
        %v1514 = vld [vmem:[%s5 + $0x48] sm:$0xf]
        %v1515 = vld [vmem:[%s5 + $0x4c] sm:$0xf]
        %v1516 = vld [vmem:[%s5 + $0x50] sm:$0xf]
        %v1517 = vld [vmem:[%s5 + $0x54] sm:$0xf]
        %v1518 = vld [vmem:[%s5 + $0x58] sm:$0xf]
        %v1519 = vld [vmem:[%s5 + $0x5c] sm:$0xf]
        %v1520 = vld [vmem:[%s5 + $0x60] sm:$0xf]
        %v1521 = vld [vmem:[%s5 + $0x64] sm:$0xf]
        %v1522 = vld [vmem:[%s5 + $0x68] sm:$0xf]
        %v1523 = vld [vmem:[%s5 + $0x6c] sm:$0xf]
        %v1524 = vld [vmem:[%s5 + $0x70] sm:$0xf]
        %v1525 = vld [vmem:[%s5 + $0x74] sm:$0xf]
        %v1526 = vld [vmem:[%s5 + $0x78] sm:$0xf]
        %v1527 = vld [vmem:[%s5 + $0x7c] sm:$0xf]
        %v1528 = vld [vmem:[%s5 + $0x80] sm:$0xf]
        %v1529 = vld [vmem:[%s5 + $0x84] sm:$0xf]
        %v1530 = vld [vmem:[%s5 + $0x88] sm:$0xf]
        %v1531 = vld [vmem:[%s5 + $0x8c] sm:$0xf]
        %v1532 = vld [vmem:[%s5 + $0x90] sm:$0xf]
        %v1533 = vld [vmem:[%s5 + $0x94] sm:$0xf]
        %v1534 = vld [vmem:[%s5 + $0x98] sm:$0xf]
        %v1535 = vld [vmem:[%s5 + $0x9c] sm:$0xf]
        %v1536 = vld [vmem:[%s5 + $0xa0] sm:$0xf]
        %v1537 = vld [vmem:[%s5 + $0xa4] sm:$0xf]
        %v1538 = vld [vmem:[%s5 + $0xa8] sm:$0xf]
        %v1539 = vld [vmem:[%s5 + $0xac] sm:$0xf]
        %v1540 = vld [vmem:[%s5 + $0xb0] sm:$0xf]
        %v1541 = vld [vmem:[%s5 + $0xb4] sm:$0xf]
        %v1542 = vld [vmem:[%s5 + $0xb8] sm:$0xf]
        %v1543 = vld [vmem:[%s5 + $0xbc] sm:$0xf]
        %v1544 = vld [vmem:[%s5 + $0xc0] sm:$0xf]
        %v1545 = vld [vmem:[%s5 + $0xc4] sm:$0xf]
        %v1546 = vld [vmem:[%s5 + $0xc8] sm:$0xf]
        %v1547 = vld [vmem:[%s5 + $0xcc] sm:$0xf]
        %v1548 = vld [vmem:[%s5 + $0xd0] sm:$0xf]
        %v1549 = vld [vmem:[%s5 + $0xd4] sm:$0xf]
        %v1550 = vld [vmem:[%s5 + $0xd8] sm:$0xf]
        %v1551 = vld [vmem:[%s5 + $0xdc] sm:$0xf]
        %v1552 = vld [vmem:[%s5 + $0xe0] sm:$0xf]
        %v1553 = vld [vmem:[%s5 + $0xe4] sm:$0xf]
        %v1554 = vld [vmem:[%s5 + $0xe8] sm:$0xf]
        %v1555 = vld [vmem:[%s5 + $0xec] sm:$0xf]
        %v1556 = vld [vmem:[%s5 + $0xf0] sm:$0xf]
        %v1557 = vld [vmem:[%s5 + $0xf4] sm:$0xf]
        %v1558 = vld [vmem:[%s5 + $0xf8] sm:$0xf]
        %v1559 = vld [vmem:[%s5 + $0xfc] sm:$0xf]
        %v1560 = vld [vmem:[%s5 + $0x100] sm:$0xf]
        %v1561 = vld [vmem:[%s5 + $0x104] sm:$0xf]
        %v1562 = vld [vmem:[%s5 + $0x108] sm:$0xf]
        %v1563 = vld [vmem:[%s5 + $0x10c] sm:$0xf]
        %v1564 = vld [vmem:[%s5 + $0x110] sm:$0xf]
        %v1565 = vld [vmem:[%s5 + $0x114] sm:$0xf]
        %v1566 = vld [vmem:[%s5 + $0x118] sm:$0xf]
        %v1567 = vld [vmem:[%s5 + $0x11c] sm:$0xf]
        %v1568 = vld [vmem:[%s5 + $0x120] sm:$0xf]
        %v1569 = vld [vmem:[%s5 + $0x124] sm:$0xf]
        %v1570 = vld [vmem:[%s5 + $0x128] sm:$0xf]
        %v1571 = vld [vmem:[%s5 + $0x12c] sm:$0xf]
        %v1572 = vld [vmem:[%s5 + $0x130] sm:$0xf]
        %v1573 = vld [vmem:[%s5 + $0x134] sm:$0xf]
        %v1574 = vld [vmem:[%s5 + $0x138] sm:$0xf]
        %v1575 = vld [vmem:[%s5 + $0x13c] sm:$0xf]
        %v1576 = vld [vmem:[%s5 + $0x140] sm:$0xf]
        %v1577 = vld [vmem:[%s5 + $0x144] sm:$0xf]
        %v1578 = vld [vmem:[%s5 + $0x148] sm:$0xf]
        %v1579 = vld [vmem:[%s5 + $0x14c] sm:$0xf]
        %v1580 = vld [vmem:[%s5 + $0x150] sm:$0xf]
        %v1581 = vld [vmem:[%s5 + $0x154] sm:$0xf]
        %v1582 = vld [vmem:[%s5 + $0x158] sm:$0xf]
        %v1583 = vld [vmem:[%s5 + $0x15c] sm:$0xf]
        %v1584 = vld [vmem:[%s5 + $0x160] sm:$0xf]
        %v1585 = vld [vmem:[%s5 + $0x164] sm:$0xf]
        %v1586 = vld [vmem:[%s5 + $0x168] sm:$0xf]
        %v1587 = vld [vmem:[%s5 + $0x16c] sm:$0xf]
        %v1588 = vld [vmem:[%s5 + $0x170] sm:$0xf]
        %v1589 = vld [vmem:[%s5 + $0x174] sm:$0xf]
        %v1590 = vld [vmem:[%s5 + $0x178] sm:$0xf]
        %v1591 = vld [vmem:[%s5 + $0x17c] sm:$0xf]
        %v1592 = vld [vmem:[%s5 + $0x180] sm:$0xf]
        %v1593 = vld [vmem:[%s5 + $0x184] sm:$0xf]
        %v1594 = vld [vmem:[%s5 + $0x188] sm:$0xf]
        %v1595 = vld [vmem:[%s5 + $0x18c] sm:$0xf]
        %v1596 = vld [vmem:[%s5 + $0x190] sm:$0xf]
        %v1597 = vld [vmem:[%s5 + $0x194] sm:$0xf]
        %v1598 = vld [vmem:[%s5 + $0x198] sm:$0xf]
        %v1599 = vld [vmem:[%s5 + $0x19c] sm:$0xf]
        %v1600 = vld [vmem:[%s5 + $0x1a0] sm:$0xf]
        %v1601 = vld [vmem:[%s5 + $0x1a4] sm:$0xf]
        %v1602 = vld [vmem:[%s5 + $0x1a8] sm:$0xf]
        %v1603 = vld [vmem:[%s5 + $0x1ac] sm:$0xf]
        %v1604 = vld [vmem:[%s5 + $0x1b0] sm:$0xf]
        %v1605 = vld [vmem:[%s5 + $0x1b4] sm:$0xf]
        %v1606 = vld [vmem:[%s5 + $0x1b8] sm:$0xf]
        %v1607 = vld [vmem:[%s5 + $0x1bc] sm:$0xf]
        %v1608 = vld [vmem:[%s5 + $0x1c0] sm:$0xf]
        %v1609 = vld [vmem:[%s5 + $0x1c4] sm:$0xf]
        %v1610 = vld [vmem:[%s5 + $0x1c8] sm:$0xf]
        %v1611 = vld [vmem:[%s5 + $0x1cc] sm:$0xf]
        %v1612 = vld [vmem:[%s5 + $0x1d0] sm:$0xf]
        %v1613 = vld [vmem:[%s5 + $0x1d4] sm:$0xf]
        %v1614 = vld [vmem:[%s5 + $0x1d8] sm:$0xf]
        %v1615 = vld [vmem:[%s5 + $0x1dc] sm:$0xf]
        %v1616 = vld [vmem:[%s5 + $0x1e0] sm:$0xf]
        %v1617 = vld [vmem:[%s5 + $0x1e4] sm:$0xf]
        %v1618 = vld [vmem:[%s5 + $0x1e8] sm:$0xf]
        %v1619 = vld [vmem:[%s5 + $0x1ec] sm:$0xf]
        %v1620 = vld [vmem:[%s5 + $0x1f0] sm:$0xf]
        %v1621 = vld [vmem:[%s5 + $0x1f4] sm:$0xf]
        %v1622 = vld [vmem:[%s5 + $0x1f8] sm:$0xf]
        %v1623 = vld [vmem:[%s5 + $0x1fc] sm:$0xf]
        %v1624 = vld [vmem:[%s5 + $0x200] sm:$0xf]
        %v1625 = vld [vmem:[%s5 + $0x204] sm:$0xf]
        %v1626 = vld [vmem:[%s5 + $0x208] sm:$0xf]
        %v1627 = vld [vmem:[%s5 + $0x20c] sm:$0xf]
        %v1628 = vld [vmem:[%s5 + $0x210] sm:$0xf]
        %v1629 = vld [vmem:[%s5 + $0x214] sm:$0xf]
        %v1630 = vld [vmem:[%s5 + $0x218] sm:$0xf]
        %v1631 = vld [vmem:[%s5 + $0x21c] sm:$0xf]
        %v1632 = vld [vmem:[%s5 + $0x220] sm:$0xf]
        %v1633 = vld [vmem:[%s5 + $0x224] sm:$0xf]
        %v1634 = vld [vmem:[%s5 + $0x228] sm:$0xf]
        %v1635 = vld [vmem:[%s5 + $0x22c] sm:$0xf]
        %v1636 = vld [vmem:[%s5 + $0x230] sm:$0xf]
        %v1637 = vld [vmem:[%s5 + $0x234] sm:$0xf]
        %v1638 = vld [vmem:[%s5 + $0x238] sm:$0xf]
        %v1639 = vld [vmem:[%s5 + $0x23c] sm:$0xf]
        %v1784 = vunpack.c.l.b16 %v1496
        %v1785 = vunpack.c.l.b16 %v1497
        %v1786 = vunpack.c.l.b16 %v1498
        %v1787 = vunpack.c.l.b16 %v1499
        %v1788 = vunpack.c.l.b16 %v1500
        %v1789 = vunpack.c.l.b16 %v1501
        %v1790 = vunpack.c.l.b16 %v1502
        %v1791 = vunpack.c.l.b16 %v1503
        %v1792 = vunpack.c.l.b16 %v1504
        %v1793 = vunpack.c.l.b16 %v1505
        %v1794 = vunpack.c.l.b16 %v1506
        %v1795 = vunpack.c.l.b16 %v1507
        %v1796 = vunpack.c.l.b16 %v1508
        %v1797 = vunpack.c.l.b16 %v1509
        %v1798 = vunpack.c.l.b16 %v1510
        %v1799 = vunpack.c.l.b16 %v1511
        %v1800 = vunpack.c.l.b16 %v1512
        %v1801 = vunpack.c.l.b16 %v1513
        %v1802 = vunpack.c.l.b16 %v1514
        %v1803 = vunpack.c.l.b16 %v1515
        %v1804 = vunpack.c.l.b16 %v1516
        %v1805 = vunpack.c.l.b16 %v1517
        %v1806 = vunpack.c.l.b16 %v1518
        %v1807 = vunpack.c.l.b16 %v1519
        %v1808 = vunpack.c.l.b16 %v1520
        %v1809 = vunpack.c.l.b16 %v1521
        %v1810 = vunpack.c.l.b16 %v1522
        %v1811 = vunpack.c.l.b16 %v1523
        %v1812 = vunpack.c.l.b16 %v1524
        %v1813 = vunpack.c.l.b16 %v1525
        %v1814 = vunpack.c.l.b16 %v1526
        %v1815 = vunpack.c.l.b16 %v1527
        %v1816 = vunpack.c.l.b16 %v1528
        %v1817 = vunpack.c.l.b16 %v1529
        %v1818 = vunpack.c.l.b16 %v1530
        %v1819 = vunpack.c.l.b16 %v1531
        %v1820 = vunpack.c.l.b16 %v1532
        %v1821 = vunpack.c.l.b16 %v1533
        %v1822 = vunpack.c.l.b16 %v1534
        %v1823 = vunpack.c.l.b16 %v1535
        %v1824 = vunpack.c.l.b16 %v1536
        %v1825 = vunpack.c.l.b16 %v1537
        %v1826 = vunpack.c.l.b16 %v1538
        %v1827 = vunpack.c.l.b16 %v1539
        %v1828 = vunpack.c.l.b16 %v1540
        %v1829 = vunpack.c.l.b16 %v1541
        %v1830 = vunpack.c.l.b16 %v1542
        %v1831 = vunpack.c.l.b16 %v1543
        %v1832 = vunpack.c.l.b16 %v1544
        %v1833 = vunpack.c.l.b16 %v1545
        %v1834 = vunpack.c.l.b16 %v1546
        %v1835 = vunpack.c.l.b16 %v1547
        %v1836 = vunpack.c.l.b16 %v1548
        %v1837 = vunpack.c.l.b16 %v1549
        %v1838 = vunpack.c.l.b16 %v1550
        %v1839 = vunpack.c.l.b16 %v1551
        %v1840 = vunpack.c.l.b16 %v1552
        %v1841 = vunpack.c.l.b16 %v1553
        %v1842 = vunpack.c.l.b16 %v1554
        %v1843 = vunpack.c.l.b16 %v1555
        %v1844 = vunpack.c.l.b16 %v1556
        %v1845 = vunpack.c.l.b16 %v1557
        %v1846 = vunpack.c.l.b16 %v1558
        %v1847 = vunpack.c.l.b16 %v1559
        %v1848 = vunpack.c.l.b16 %v1560
        %v1849 = vunpack.c.l.b16 %v1561
        %v1850 = vunpack.c.l.b16 %v1562
        %v1851 = vunpack.c.l.b16 %v1563
        %v1852 = vunpack.c.l.b16 %v1564
        %v1853 = vunpack.c.l.b16 %v1565
        %v1854 = vunpack.c.l.b16 %v1566
        %v1855 = vunpack.c.l.b16 %v1567
        %v1856 = vunpack.c.l.b16 %v1568
        %v1857 = vunpack.c.l.b16 %v1569
        %v1858 = vunpack.c.l.b16 %v1570
        %v1859 = vunpack.c.l.b16 %v1571
        %v1860 = vunpack.c.l.b16 %v1572
        %v1861 = vunpack.c.l.b16 %v1573
        %v1862 = vunpack.c.l.b16 %v1574
        %v1863 = vunpack.c.l.b16 %v1575
        %v1864 = vunpack.c.l.b16 %v1576
        %v1865 = vunpack.c.l.b16 %v1577
        %v1866 = vunpack.c.l.b16 %v1578
        %v1867 = vunpack.c.l.b16 %v1579
        %v1868 = vunpack.c.l.b16 %v1580
        %v1869 = vunpack.c.l.b16 %v1581
        %v1870 = vunpack.c.l.b16 %v1582
        %v1871 = vunpack.c.l.b16 %v1583
        %v1872 = vunpack.c.l.b16 %v1584
        %v1873 = vunpack.c.l.b16 %v1585
        %v1874 = vunpack.c.l.b16 %v1586
        %v1875 = vunpack.c.l.b16 %v1587
        %v1876 = vunpack.c.l.b16 %v1588
        %v1877 = vunpack.c.l.b16 %v1589
        %v1878 = vunpack.c.l.b16 %v1590
        %v1879 = vunpack.c.l.b16 %v1591
        %v1880 = vunpack.c.l.b16 %v1592
        %v1881 = vunpack.c.l.b16 %v1593
        %v1882 = vunpack.c.l.b16 %v1594
        %v1883 = vunpack.c.l.b16 %v1595
        %v1884 = vunpack.c.l.b16 %v1596
        %v1885 = vunpack.c.l.b16 %v1597
        %v1886 = vunpack.c.l.b16 %v1598
        %v1887 = vunpack.c.l.b16 %v1599
        %v1888 = vunpack.c.l.b16 %v1600
        %v1889 = vunpack.c.l.b16 %v1601
        %v1890 = vunpack.c.l.b16 %v1602
        %v1891 = vunpack.c.l.b16 %v1603
        %v1892 = vunpack.c.l.b16 %v1604
        %v1893 = vunpack.c.l.b16 %v1605
        %v1894 = vunpack.c.l.b16 %v1606
        %v1895 = vunpack.c.l.b16 %v1607
        %v1896 = vunpack.c.l.b16 %v1608
        %v1897 = vunpack.c.l.b16 %v1609
        %v1898 = vunpack.c.l.b16 %v1610
        %v1899 = vunpack.c.l.b16 %v1611
        %v1900 = vunpack.c.l.b16 %v1612
        %v1901 = vunpack.c.l.b16 %v1613
        %v1902 = vunpack.c.l.b16 %v1614
        %v1903 = vunpack.c.l.b16 %v1615
        %v1904 = vunpack.c.l.b16 %v1616
        %v1905 = vunpack.c.l.b16 %v1617
        %v1906 = vunpack.c.l.b16 %v1618
        %v1907 = vunpack.c.l.b16 %v1619
        %v1908 = vunpack.c.l.b16 %v1620
        %v1909 = vunpack.c.l.b16 %v1621
        %v1910 = vunpack.c.l.b16 %v1622
        %v1911 = vunpack.c.l.b16 %v1623
        %v1912 = vunpack.c.l.b16 %v1624
        %v1913 = vunpack.c.l.b16 %v1625
        %v1914 = vunpack.c.l.b16 %v1626
        %v1915 = vunpack.c.l.b16 %v1627
        %v1916 = vunpack.c.l.b16 %v1628
        %v1917 = vunpack.c.l.b16 %v1629
        %v1918 = vunpack.c.l.b16 %v1630
        %v1919 = vunpack.c.l.b16 %v1631
        %v1920 = vunpack.c.l.b16 %v1632
        %v1921 = vunpack.c.l.b16 %v1633
        %v1922 = vunpack.c.l.b16 %v1634
        %v1923 = vunpack.c.l.b16 %v1635
        %v1924 = vunpack.c.l.b16 %v1636
        %v1925 = vunpack.c.l.b16 %v1637
        %v1926 = vunpack.c.l.b16 %v1638
        %v1927 = vunpack.c.l.b16 %v1639
        %v1928 = vpack.c.b16 %v1785, %v1784
        %v1929 = vpack.c.b16 %v1787, %v1786
        %v1930 = vpack.c.b16 %v1789, %v1788
        %v1931 = vpack.c.b16 %v1791, %v1790
        %v1932 = vpack.c.b16 %v1793, %v1792
        %v1933 = vpack.c.b16 %v1795, %v1794
        %v1934 = vpack.c.b16 %v1797, %v1796
        %v1935 = vpack.c.b16 %v1799, %v1798
        %v1936 = vpack.c.b16 %v1801, %v1800
        %v1937 = vpack.c.b16 %v1803, %v1802
        %v1938 = vpack.c.b16 %v1805, %v1804
        %v1939 = vpack.c.b16 %v1807, %v1806
        %v1940 = vpack.c.b16 %v1809, %v1808
        %v1941 = vpack.c.b16 %v1811, %v1810
        %v1942 = vpack.c.b16 %v1813, %v1812
        %v1943 = vpack.c.b16 %v1815, %v1814
        %v1944 = vpack.c.b16 %v1817, %v1816
        %v1945 = vpack.c.b16 %v1819, %v1818
        %v1946 = vpack.c.b16 %v1821, %v1820
        %v1947 = vpack.c.b16 %v1823, %v1822
        %v1948 = vpack.c.b16 %v1825, %v1824
        %v1949 = vpack.c.b16 %v1827, %v1826
        %v1950 = vpack.c.b16 %v1829, %v1828
        %v1951 = vpack.c.b16 %v1831, %v1830
        %v1952 = vpack.c.b16 %v1833, %v1832
        %v1953 = vpack.c.b16 %v1835, %v1834
        %v1954 = vpack.c.b16 %v1837, %v1836
        %v1955 = vpack.c.b16 %v1839, %v1838
        %v1956 = vpack.c.b16 %v1841, %v1840
        %v1957 = vpack.c.b16 %v1843, %v1842
        %v1958 = vpack.c.b16 %v1845, %v1844
        %v1959 = vpack.c.b16 %v1847, %v1846
        %v1960 = vpack.c.b16 %v1849, %v1848
        %v1961 = vpack.c.b16 %v1851, %v1850
        %v1962 = vpack.c.b16 %v1853, %v1852
        %v1963 = vpack.c.b16 %v1855, %v1854
        %v1964 = vpack.c.b16 %v1857, %v1856
        %v1965 = vpack.c.b16 %v1859, %v1858
        %v1966 = vpack.c.b16 %v1861, %v1860
        %v1967 = vpack.c.b16 %v1863, %v1862
        %v1968 = vpack.c.b16 %v1865, %v1864
        %v1969 = vpack.c.b16 %v1867, %v1866
        %v1970 = vpack.c.b16 %v1869, %v1868
        %v1971 = vpack.c.b16 %v1871, %v1870
        %v1972 = vpack.c.b16 %v1873, %v1872
        %v1973 = vpack.c.b16 %v1875, %v1874
        %v1974 = vpack.c.b16 %v1877, %v1876
        %v1975 = vpack.c.b16 %v1879, %v1878
        %v1976 = vpack.c.b16 %v1881, %v1880
        %v1977 = vpack.c.b16 %v1883, %v1882
        %v1978 = vpack.c.b16 %v1885, %v1884
        %v1979 = vpack.c.b16 %v1887, %v1886
        %v1980 = vpack.c.b16 %v1889, %v1888
        %v1981 = vpack.c.b16 %v1891, %v1890
        %v1982 = vpack.c.b16 %v1893, %v1892
        %v1983 = vpack.c.b16 %v1895, %v1894
        %v1984 = vpack.c.b16 %v1897, %v1896
        %v1985 = vpack.c.b16 %v1899, %v1898
        %v1986 = vpack.c.b16 %v1901, %v1900
        %v1987 = vpack.c.b16 %v1903, %v1902
        %v1988 = vpack.c.b16 %v1905, %v1904
        %v1989 = vpack.c.b16 %v1907, %v1906
        %v1990 = vpack.c.b16 %v1909, %v1908
        %v1991 = vpack.c.b16 %v1911, %v1910
        %v1992 = vpack.c.b16 %v1913, %v1912
        %v1993 = vpack.c.b16 %v1915, %v1914
        %v1994 = vpack.c.b16 %v1917, %v1916
        %v1995 = vpack.c.b16 %v1919, %v1918
        %v1996 = vpack.c.b16 %v1921, %v1920
        %v1997 = vpack.c.b16 %v1923, %v1922
        %v1998 = vpack.c.b16 %v1925, %v1924
        %v1999 = vpack.c.b16 %v1927, %v1926
        %2072 = vmatpush.bf16.msra.mxu0 %v1935
        %2073 = vmatpush.bf16.msra.mxu0 %v1934
        %2074 = vmatpush.bf16.msra.mxu0 %v1933
        %2075 = vmatpush.bf16.msra.mxu0 %v1932
        %2076 = vmatpush.bf16.msra.mxu0 %v1931
        %2077 = vmatpush.bf16.msra.mxu0 %v1930
        %2078 = vmatpush.bf16.msra.mxu0 %v1929
        %2079 = vmatpush.bf16.msra.mxu0 %v1928
        %2080 = vmatmul.bf16.gmra.mxu0 %v1412
        %v2081 = vpop.f32.mrf.mxu0
        %v2082 = vadd.f32 0.0, %v2081
        %v2083 = vpop.f32.mrf.mxu0
        %v2084 = vadd.f32 0.0, %v2083
        %2085 = vmatmul.bf16.gmra.mxu0 %v1415
        %v2086 = vpop.f32.mrf.mxu0
        %v2087 = vadd.f32 0.0, %v2086
        %v2088 = vpop.f32.mrf.mxu0
        %2089 = vdwg.mxu0
        %2090 = vmatpush.bf16.msra.mxu0 %v1943
        %2091 = vmatpush.bf16.msra.mxu0 %v1942
        %2092 = vmatpush.bf16.msra.mxu0 %v1941
        %2093 = vmatpush.bf16.msra.mxu0 %v1940
        %2094 = vmatpush.bf16.msra.mxu0 %v1939
        %2095 = vmatpush.bf16.msra.mxu0 %v1938
        %2096 = vmatpush.bf16.msra.mxu0 %v1937
        %2097 = vmatpush.bf16.msra.mxu0 %v1936
        %2098 = vmatmul.bf16.gmra.mxu0 %v1427
        %v2099 = vpop.f32.mrf.mxu0
        %v2100 = vadd.f32 %v2082, %v2099
        %v2101 = vpop.f32.mrf.mxu0
        %v2102 = vadd.f32 %v2084, %v2101
        %2103 = vmatmul.bf16.gmra.mxu0 %v1430
        %v2104 = vpop.f32.mrf.mxu0
        %v2105 = vadd.f32 %v2087, %v2104
        %v2106 = vpop.f32.mrf.mxu0
        %2107 = vdwg.mxu0
        %2108 = vmatpush.bf16.msra.mxu0 %v1951
        %2109 = vmatpush.bf16.msra.mxu0 %v1950
        %2110 = vmatpush.bf16.msra.mxu0 %v1949
        %2111 = vmatpush.bf16.msra.mxu0 %v1948
        %2112 = vmatpush.bf16.msra.mxu0 %v1947
        %2113 = vmatpush.bf16.msra.mxu0 %v1946
        %2114 = vmatpush.bf16.msra.mxu0 %v1945
        %2115 = vmatpush.bf16.msra.mxu0 %v1944
        %2116 = vmatmul.bf16.gmra.mxu0 %v1438
        %v2117 = vpop.f32.mrf.mxu0
        %v2118 = vadd.f32 %v2100, %v2117
        %v2119 = vpop.f32.mrf.mxu0
        %v2120 = vadd.f32 %v2102, %v2119
        %2121 = vmatmul.bf16.gmra.mxu0 %v1437
        %v2122 = vpop.f32.mrf.mxu0
        %v2123 = vadd.f32 %v2105, %v2122
        %v2124 = vpop.f32.mrf.mxu0
        %2125 = vdwg.mxu0
        %2126 = vmatpush.bf16.msra.mxu0 %v1959
        %2127 = vmatpush.bf16.msra.mxu0 %v1958
        %2128 = vmatpush.bf16.msra.mxu0 %v1957
        %2129 = vmatpush.bf16.msra.mxu0 %v1956
        %2130 = vmatpush.bf16.msra.mxu0 %v1955
        %2131 = vmatpush.bf16.msra.mxu0 %v1954
        %2132 = vmatpush.bf16.msra.mxu0 %v1953
        %2133 = vmatpush.bf16.msra.mxu0 %v1952
        %2134 = vmatmul.bf16.gmra.mxu0 %v1443
        %v2135 = vpop.f32.mrf.mxu0
        %v2136 = vadd.f32 %v2118, %v2135
        %v2137 = vpop.f32.mrf.mxu0
        %v2138 = vadd.f32 %v2120, %v2137
        %2139 = vmatmul.bf16.gmra.mxu0 %v1442
        %v2140 = vpop.f32.mrf.mxu0
        %v2141 = vadd.f32 %v2123, %v2140
        %v2142 = vpop.f32.mrf.mxu0
        %2143 = vdwg.mxu0
        %2144 = vmatpush.bf16.msra.mxu0 %v1967
        %2145 = vmatpush.bf16.msra.mxu0 %v1966
        %2146 = vmatpush.bf16.msra.mxu0 %v1965
        %2147 = vmatpush.bf16.msra.mxu0 %v1964
        %2148 = vmatpush.bf16.msra.mxu0 %v1963
        %2149 = vmatpush.bf16.msra.mxu0 %v1962
        %2150 = vmatpush.bf16.msra.mxu0 %v1961
        %2151 = vmatpush.bf16.msra.mxu0 %v1960
        %2152 = vmatmul.bf16.gmra.mxu0 %v1452
        %v2153 = vpop.f32.mrf.mxu0
        %v2154 = vadd.f32 %v2136, %v2153
        %v2155 = vpop.f32.mrf.mxu0
        %v2156 = vadd.f32 %v2138, %v2155
        %2157 = vmatmul.bf16.gmra.mxu0 %v1451
        %v2158 = vpop.f32.mrf.mxu0
        %v2159 = vadd.f32 %v2141, %v2158
        %v2160 = vpop.f32.mrf.mxu0
        %2161 = vdwg.mxu0
        %2162 = vmatpush.bf16.msra.mxu0 %v1975
        %2163 = vmatpush.bf16.msra.mxu0 %v1974
        %2164 = vmatpush.bf16.msra.mxu0 %v1973
        %2165 = vmatpush.bf16.msra.mxu0 %v1972
        %2166 = vmatpush.bf16.msra.mxu0 %v1971
        %2167 = vmatpush.bf16.msra.mxu0 %v1970
        %2168 = vmatpush.bf16.msra.mxu0 %v1969
        %2169 = vmatpush.bf16.msra.mxu0 %v1968
        %2170 = vmatmul.bf16.gmra.mxu0 %v1457
        %v2171 = vpop.f32.mrf.mxu0
        %v2172 = vadd.f32 %v2154, %v2171
        %v2173 = vpop.f32.mrf.mxu0
        %v2174 = vadd.f32 %v2156, %v2173
        %2175 = vmatmul.bf16.gmra.mxu0 %v1456
        %v2176 = vpop.f32.mrf.mxu0
        %v2177 = vadd.f32 %v2159, %v2176
        %v2178 = vpop.f32.mrf.mxu0
        %2179 = vdwg.mxu0
        %2180 = vmatpush.bf16.msra.mxu0 %v1983
        %2181 = vmatpush.bf16.msra.mxu0 %v1982
        %2182 = vmatpush.bf16.msra.mxu0 %v1981
        %2183 = vmatpush.bf16.msra.mxu0 %v1980
        %2184 = vmatpush.bf16.msra.mxu0 %v1979
        %2185 = vmatpush.bf16.msra.mxu0 %v1978
        %2186 = vmatpush.bf16.msra.mxu0 %v1977
        %2187 = vmatpush.bf16.msra.mxu0 %v1976
        %2188 = vmatmul.bf16.gmra.mxu0 %v1464
        %v2189 = vpop.f32.mrf.mxu0
        %v2190 = vadd.f32 %v2172, %v2189
        %v2191 = vpop.f32.mrf.mxu0
        %v2192 = vadd.f32 %v2174, %v2191
        %2193 = vmatmul.bf16.gmra.mxu0 %v1466
        %v2194 = vpop.f32.mrf.mxu0
        %v2195 = vadd.f32 %v2177, %v2194
        %v2196 = vpop.f32.mrf.mxu0
        %2197 = vdwg.mxu0
        %2198 = vmatpush.bf16.msra.mxu0 %v1991
        %2199 = vmatpush.bf16.msra.mxu0 %v1990
        %2200 = vmatpush.bf16.msra.mxu0 %v1989
        %2201 = vmatpush.bf16.msra.mxu0 %v1988
        %2202 = vmatpush.bf16.msra.mxu0 %v1987
        %2203 = vmatpush.bf16.msra.mxu0 %v1986
        %2204 = vmatpush.bf16.msra.mxu0 %v1985
        %2205 = vmatpush.bf16.msra.mxu0 %v1984
        %2206 = vmatmul.bf16.gmra.mxu0 %v1476
        %v2207 = vpop.f32.mrf.mxu0
        %v2208 = vadd.f32 %v2190, %v2207
        %v2209 = vpop.f32.mrf.mxu0
        %v2210 = vadd.f32 %v2192, %v2209
        %2211 = vmatmul.bf16.gmra.mxu0 %v1485
        %v2212 = vpop.f32.mrf.mxu0
        %v2213 = vadd.f32 %v2195, %v2212
        %v2214 = vpop.f32.mrf.mxu0
        %2215 = vdwg.mxu0
        %2216 = vmatpush.bf16.msra.mxu0 %v1999
        %2217 = vmatpush.bf16.msra.mxu0 %v1998
        %2218 = vmatpush.bf16.msra.mxu0 %v1997
        %2219 = vmatpush.bf16.msra.mxu0 %v1996
        %2220 = vmatpush.bf16.msra.mxu0 %v1995
        %2221 = vmatpush.bf16.msra.mxu0 %v1994
        %2222 = vmatpush.bf16.msra.mxu0 %v1993
        %2223 = vmatpush.bf16.msra.mxu0 %v1992
        %2224 = vmatmul.bf16.gmra.mxu0 %v1491
        %v2225 = vpop.f32.mrf.mxu0
        %v2226 = vadd.f32 %v2208, %v2225
        %v2227 = vpop.f32.mrf.mxu0
        %v2228 = vadd.f32 %v2210, %v2227
        %2229 = vmatmul.bf16.gmra.mxu0 %v1493
        %v2230 = vpop.f32.mrf.mxu0
        %v2231 = vadd.f32 %v2213, %v2230
        %v2232 = vpop.f32.mrf.mxu0
        %2233 = vdwg.mxu0
        %v2234 = vld [vmem:[%s592] sm:$0xf]
        %v2235 = vld [vmem:[%s592 + $0x4] sm:$0xf]
        %v2236 = vld [vmem:[%s592 + $0x8] sm:$0xf]
        %v2237 = vld [vmem:[%s7] sm:$0xf]
        %v2238 = vld [vmem:[%s7 + $0x4] sm:$0xf]
        %v2239 = vld [vmem:[%s7 + $0x8] sm:$0xf]
        %v2240 = vld [vmem:[%s7 + $0xc] sm:$0xf]
        %v2241 = vld [vmem:[%s7 + $0x10] sm:$0xf]
        %v2242 = vld [vmem:[%s7 + $0x14] sm:$0xf]
        %v2243 = vld [vmem:[%s7 + $0x18] sm:$0xf]
        %v2244 = vld [vmem:[%s7 + $0x1c] sm:$0xf]
        %v2248 = vunpack.c.l.b16 %v2234
        %v2249 = vunpack.c.l.b16 %v2235
        %v2250 = vunpack.c.l.b16 %v2236
        %v2251 = vpack.c.b16 %v2249, %v2248
        %v2252 = vpack.c.b16 %v2250, %v2250
        %v2261 = vunpack.c.l.b16 %v2237
        %v2262 = vunpack.c.l.b16 %v2238
        %v2263 = vunpack.c.l.b16 %v2239
        %v2264 = vunpack.c.l.b16 %v2240
        %v2265 = vunpack.c.l.b16 %v2241
        %v2266 = vunpack.c.l.b16 %v2242
        %v2267 = vunpack.c.l.b16 %v2243
        %v2268 = vunpack.c.l.b16 %v2244
        %v2269 = vpack.c.b16 %v2262, %v2261
        %v2270 = vpack.c.b16 %v2264, %v2263
        %v2271 = vpack.c.b16 %v2266, %v2265
        %v2272 = vpack.c.b16 %v2268, %v2267
        %vm2277 = vcmask 523264
        %v2279 = vsel %vm2277, %v2251, 0
        %v2282 = vsel %vm2277, %v2252, 0
        %2284 = vmatpush.bf16.msra.mxu0 0
        %2285 = vmatpush.bf16.msra.mxu0 0
        %2286 = vmatpush.bf16.msra.mxu0 0
        %2287 = vmatpush.bf16.msra.mxu0 0
        %2288 = vmatpush.bf16.msra.mxu0 %v2272
        %2289 = vmatpush.bf16.msra.mxu0 %v2271
        %2290 = vmatpush.bf16.msra.mxu0 %v2270
        %2291 = vmatpush.bf16.msra.mxu0 %v2269
        %2292 = vmatmul.bf16.gmra.mxu0 %v2279
        %v2293 = vpop.f32.mrf.mxu0
        %v2294 = vadd.f32 0.0, %v2293
        %v2295 = vpop.f32.mrf.mxu0
        %v2296 = vadd.f32 0.0, %v2295
        %2297 = vmatmul.bf16.gmra.mxu0 %v2282
        %v2298 = vpop.f32.mrf.mxu0
        %v2299 = vadd.f32 0.0, %v2298
        %v2300 = vpop.f32.mrf.mxu0
        %2301 = vdwg.mxu0
        %v2302 = vld [vmem:[%s8] sm:$0x1]
        %v2304 = vperm.slane %v2302, 0
        %v2306 = vmul.f32 %v2294, %v2304
        %v2307 = vmul.f32 %v2296, %v2304
        %v2308 = vmul.f32 %v2299, %v2304
        %v2309 = vld [vmem:[%s9] sm:$0x1]
        %v2311 = vperm.slane %v2309, 0
        %v2313 = vadd.f32 %v2306, %v2311
        %v2314 = vadd.f32 %v2307, %v2311
        %v2315 = vadd.f32 %v2308, %v2311
        %v2316 = vmul.f32 %v2226, %v1364
        %v2317 = vmul.f32 %v2228, %v1369
        %v2318 = vmul.f32 %v2231, %v1374
        %v2319 = vadd.f32 %v2316, %v2317
        %v2320 = vadd.f32 %v2319, %v2318
        %v2321 = vrot.slane %v2320, 4
        %v2322 = vadd.f32 %v2320, %v2321
        %v2323 = vrot.slane %v2322, 2
        %v2324 = vadd.f32 %v2322, %v2323
        %v2325 = vrot.slane %v2324, 1
        %v2326 = vadd.f32 %v2324, %v2325
        %v2327 = vmul.f32 %v2326, 0.0625
        %v2328 = vld [vmem:[%s10] sm:$0xff]
        %v2329 = vld [vmem:[%s10 + $0x8] sm:$0xff]
        %v2330 = vld [vmem:[%s10 + $0x10] sm:$0xff]
        %v2331 = vld [vmem:[%s10 + $0x18] sm:$0xff]
        %v2332 = vld [vmem:[%s10 + $0x20] sm:$0xff]
        %v2333 = vld [vmem:[%s10 + $0x28] sm:$0xff]
        %v2334 = vld [vmem:[%s10 + $0x30] sm:$0xff]
        %v2335 = vld [vmem:[%s10 + $0x38] sm:$0xff]
        %v2336 = vld [vmem:[%s10 + $0x40] sm:$0xff]
        %v2337 = vld [vmem:[%s10 + $0x48] sm:$0xff]
        %v2338 = vld [vmem:[%s10 + $0x50] sm:$0xff]
        %v2339 = vld [vmem:[%s10 + $0x58] sm:$0xff]
        %v2340 = vld [vmem:[%s10 + $0x60] sm:$0xff]
        %v2341 = vld [vmem:[%s10 + $0x68] sm:$0xff]
        %v2342 = vld [vmem:[%s10 + $0x70] sm:$0xff]
        %v2343 = vld [vmem:[%s10 + $0x78] sm:$0xff]
        %v2344 = vld [vmem:[%s11] sm:$0x1]
        %2345 = vmatpush.msra.mxu0 %v2343
        %2346 = vmatpush.msra.mxu0 %v2342
        %2347 = vmatpush.msra.mxu0 %v2341
        %2348 = vmatpush.msra.mxu0 %v2340
        %2349 = vmatpush.msra.mxu0 %v2339
        %2350 = vmatpush.msra.mxu0 %v2338
        %2351 = vmatpush.msra.mxu0 %v2337
        %2352 = vmatpush.msra.mxu0 %v2336
        %2353 = vmatpush.msra.mxu0 %v2335
        %2354 = vmatpush.msra.mxu0 %v2334
        %2355 = vmatpush.msra.mxu0 %v2333
        %2356 = vmatpush.msra.mxu0 %v2332
        %2357 = vmatpush.msra.mxu0 %v2331
        %2358 = vmatpush.msra.mxu0 %v2330
        %2359 = vmatpush.msra.mxu0 %v2329
        %2360 = vmatpush.msra.mxu0 %v2328
        %2361 = vmatmul.f32.gmra.mxu0 %v2327
        %v2362 = vpop.f32.mrf.mxu0
        %v2363 = vadd.f32 %v2344, %v2362
        %2364 = vdwg.mxu0
        %v2365 = vmax.f32 %v2363, 0.0
        %v2366 = vld [vmem:[%s12] sm:$0xff]
        %v2367 = vld [vmem:[%s13] sm:$0x1]
        %vm2368 = vcmask 64512
        %v2370 = vsel %vm2368, %v2365, 0
        %2372 = vmatpush.msra.mxu0 0.0
        %2373 = vmatpush.msra.mxu0 0.0
        %2374 = vmatpush.msra.mxu0 0.0
        %2375 = vmatpush.msra.mxu0 0.0
        %2376 = vmatpush.msra.mxu0 0.0
        %2377 = vmatpush.msra.mxu0 0.0
        %2378 = vmatpush.msra.mxu0 0.0
        %2379 = vmatpush.msra.mxu0 0.0
        %2380 = vmatpush.msra.mxu0 0.0
        %2381 = vmatpush.msra.mxu0 0.0
        %2382 = vmatpush.msra.mxu0 0.0
        %2383 = vmatpush.msra.mxu0 0.0
        %2384 = vmatpush.msra.mxu0 0.0
        %2385 = vmatpush.msra.mxu0 0.0
        %2386 = vmatpush.msra.mxu0 0.0
        %2387 = vmatpush.msra.mxu0 %v2366
        %2388 = vmatmul.f32.gmra.mxu0 %v2370
        %v2389 = vpop.f32.mrf.mxu0
        %v2390 = vadd.f32 %v2367, %v2389
        %2391 = vdwg.mxu0
        %v2392 = vxor.u32 %v2390, 2147483648
        %v2393 = vmul.f32 %v2392, 1.442695
        %v2394 = vpow.pop %v2393
        %v2395 = vadd.f32 %v2394, 1.0
        %v2396 = vrcp.pop %v2395
        %v2397 = vmul.f32 %v2395, %v2396
        %v2398 = vsub.f32 1.0, %v2397
        %v2399 = vmul.f32 %v2396, %v2398
        %v2400 = vadd.f32 %v2396, %v2399
        %vm2401 = vweird.f32 %v2395
        %vm2402 = vweird.f32 %v2396
        %vm2403 = vmor %vm2401, %vm2402
        %v2404 = vsel %vm2403, %v2396, %v2400
        %v2405 = vand.u32 2147483647, %v2395
        %vm2406 = vcmp.eq.f32.partialorder %v2405, 8.507059e+37
        %v2407 = vand.u32 %v2395, 2147483648
        %v2408 = vor.u32 1.1754944e-38, %v2407
        %v2409 = vsel %vm2406, %v2408, %v2404
        %v2410 = vmul.f32 1.0, %v2409
        %v2411 = vperm.slane %v2410, 0
        %v2412 = vmul.f32 %v2226, %v2411
        %v2413 = vmul.f32 %v2228, %v2411
        %v2414 = vmul.f32 %v2231, %v2411
        %v2415 = vadd.f32 %v2412, %v2313
        %v2416 = vadd.f32 %v2413, %v2314
        %v2417 = vadd.f32 %v2414, %v2315
        %v2418 = vld [vmem:[%s14] sm:$0x1]
        %v2420 = vperm.slane %v2418, 0
        %v2422 = vmul.f32 %v2415, %v2420
        %v2423 = vmul.f32 %v2416, %v2420
        %v2424 = vmul.f32 %v2417, %v2420
        %v2425 = vld [vmem:[%s15] sm:$0x1]
        %v2427 = vperm.slane %v2425, 0
        %v2429 = vadd.f32 %v2422, %v2427
        %v2430 = vadd.f32 %v2423, %v2427
        %v2431 = vadd.f32 %v2424, %v2427
        %v2432 = vmax.f32 %v2429, 0.0
        %v2433 = vmax.f32 %v2430, 0.0
        %v2434 = vmax.f32 %v2431, 0.0
        %v2435 = vmul.f32 %v2432, %v1364
        %v2436 = vmul.f32 %v2433, %v1369
        %v2437 = vmul.f32 %v2434, %v1374
        %v2438 = vadd.f32 %v2435, %v2436
        %v2439 = vadd.f32 %v2438, %v2437
        %v2440 = vrot.slane %v2439, 4
        %v2441 = vadd.f32 %v2439, %v2440
        %v2442 = vrot.slane %v2441, 2
        %v2443 = vadd.f32 %v2441, %v2442
        %v2444 = vrot.slane %v2443, 1
        %v2445 = vadd.f32 %v2443, %v2444
        %v2446 = vmul.f32 %v2445, 0.0625
        %v2447 = vld [vmem:[%s16] sm:$0xff]
        %v2448 = vld [vmem:[%s16 + $0x8] sm:$0xff]
        %v2449 = vld [vmem:[%s16 + $0x10] sm:$0xff]
        %v2450 = vld [vmem:[%s16 + $0x18] sm:$0xff]
        %v2451 = vld [vmem:[%s16 + $0x20] sm:$0xff]
        %v2452 = vld [vmem:[%s16 + $0x28] sm:$0xff]
        %v2453 = vld [vmem:[%s16 + $0x30] sm:$0xff]
        %v2454 = vld [vmem:[%s16 + $0x38] sm:$0xff]
        %v2455 = vld [vmem:[%s16 + $0x40] sm:$0xff]
        %v2456 = vld [vmem:[%s16 + $0x48] sm:$0xff]
        %v2457 = vld [vmem:[%s16 + $0x50] sm:$0xff]
        %v2458 = vld [vmem:[%s16 + $0x58] sm:$0xff]
        %v2459 = vld [vmem:[%s16 + $0x60] sm:$0xff]
        %v2460 = vld [vmem:[%s16 + $0x68] sm:$0xff]
        %v2461 = vld [vmem:[%s16 + $0x70] sm:$0xff]
        %v2462 = vld [vmem:[%s16 + $0x78] sm:$0xff]
        %v2463 = vld [vmem:[%s17] sm:$0x1]
        %2464 = vmatpush.msra.mxu0 %v2462
        %2465 = vmatpush.msra.mxu0 %v2461
        %2466 = vmatpush.msra.mxu0 %v2460
        %2467 = vmatpush.msra.mxu0 %v2459
        %2468 = vmatpush.msra.mxu0 %v2458
        %2469 = vmatpush.msra.mxu0 %v2457
        %2470 = vmatpush.msra.mxu0 %v2456
        %2471 = vmatpush.msra.mxu0 %v2455
        %2472 = vmatpush.msra.mxu0 %v2454
        %2473 = vmatpush.msra.mxu0 %v2453
        %2474 = vmatpush.msra.mxu0 %v2452
        %2475 = vmatpush.msra.mxu0 %v2451
        %2476 = vmatpush.msra.mxu0 %v2450
        %2477 = vmatpush.msra.mxu0 %v2449
        %2478 = vmatpush.msra.mxu0 %v2448
        %2479 = vmatpush.msra.mxu0 %v2447
        %2480 = vmatmul.f32.gmra.mxu0 %v2446
        %v2481 = vpop.f32.mrf.mxu0
        %v2482 = vadd.f32 %v2463, %v2481
        %2483 = vdwg.mxu0
        %vm2484 = vcmask 73728
        %2485 = vst.msk [vmem:[%s582] sm:$0x1] %vm2484, %v2482
        %s2486 = sand.u32 %s428, 1
        %s2487 = scalar_lea.sflag [#allocation3], %s2486
        %s2488 = sand.u32 %s428, 1
        %s2489 = scalar_lea.vmem [#allocation2], %s2488
        // Predicated region
        $region93: #{cifar_se_preact_resnet_forward.5} parent=91 // pred_check
          %p2490 = pneg %p438
        $region94: #{cifar_se_preact_resnet_forward.5} parent=91 // pred_check_branch
          %2492 = sbr.rel (%p2490) target = $region96
        $region95: #{cifar_se_preact_resnet_forward.5} parent=91 // pred_region
          %2494 = vsyncadd %s2487, 0
          %s2495 = scalar_lea.hbm %s18, %s32
          %s2497 = sshll.u32 %s2489, 4
          %s2498 = int_to_ptr.vmem [resolvable:$true] %s2497
          %s2499 = sshll.u32 %s2495, 4
          %s2500 = int_to_ptr.hbm [resolvable:$true] %s2499
          %2502 = dma.vmem_to_hbm [thread:$0]  %s2498, 16, %s2500, %s2487
        $region96: #{cifar_se_preact_resnet_forward.5} parent=91 // pred_fallthru
          _
      $region92: #{cifar_se_preact_resnet_forward.5} parent=5 // pred_fallthru
        _
      %p2503 = scmp.le.s32.totalorder 2, %s27
      // Predicated region
      $region97: #{cifar_se_preact_resnet_forward.5} parent=5 // pred_check
        %p2504 = pneg %p2503
      $region98: #{cifar_se_preact_resnet_forward.5} parent=5 // pred_check_branch
        %2506 = sbr.rel (%p2504) target = $region100
      $region99: #{cifar_se_preact_resnet_forward.5} parent=5 // pred_region
        %s2507 = ssub.s32 %s27, 2
        // Predicated region
        $region101: #{cifar_se_preact_resnet_forward.5} parent=99 // pred_check
          %p2508 = pneg %p444
        $region102: #{cifar_se_preact_resnet_forward.5} parent=99 // pred_check_branch
          %2510 = sbr.rel (%p2508) target = $region104
        $region103: #{cifar_se_preact_resnet_forward.5} parent=99 // pred_region
          %s2511 = sand.u32 %s429, 1
          %s2512 = scalar_lea.sflag [#allocation3], %s2511
          %s2513 = sand.u32 %s429, 1
          %s2514 = scalar_lea.vmem [#allocation2], %s2513
          %2516 = dma.done %s2512, 16
        $region104: #{cifar_se_preact_resnet_forward.5} parent=99 // pred_fallthru
          _
      $region100: #{cifar_se_preact_resnet_forward.5} parent=5 // pred_fallthru
        _
    $region6: #{cifar_se_preact_resnet_forward.5} parent=1 // loop_footer
      %s31 = sadd.s32 1, %s27
    $region7: #{cifar_se_preact_resnet_forward.5} parent=1 // loop_footer_branch
      %26 = sbr.rel target = $region3
    $region8: #{cifar_se_preact_resnet_forward.5} parent=1 // loop_exit
      _
    %2517 = vsyncpa [#allocation3], 1
    %s2518 = scalar_lea.sflag [#allocation3], 1
    %2519 = vsyncpa %s2518, 1

</llo_original>
